<compile_context>
chip_gen: v7x
topology: tpu7x:2x2x1
jax: 0.10.0
libtpu: 0.0.40
codegen_flags: <defaults>
</compile_context>

<pallas_src>
import math

import numpy as np
import jax
import jax.numpy as jnp
from jax import lax
from jax.experimental import pallas as pl
from jax.experimental.pallas import tpu as pltpu


# -------------------- host-side weight preprocessing (runs once) -------------
def _conv_toeplitz(w, w_in):
    """Column-parity-split Toeplitz matrices for a VALID KxK conv.

    w: [Cout, Cin, KH, KW] (PyTorch layout), w_in: input width.
    Returns T [2, KH, W_in*Cin, (Wout//2)*Cout] (f32) such that, for flattened
    input rows X[r, w*Cin+ci] and output column index n = w2*Cout + co:
        sum_di  X[ho+di, :] @ T[p, di]  ==  conv(X)[ho, 2*w2 + p, co]   (no bias)
    """
    cout, cin, kh, kw = (int(s) for s in w.shape)
    wo_half = (w_in - kw + 1) // 2
    K, N = w_in * cin, wo_half * cout
    k = np.arange(K)
    n = np.arange(N)
    wpos, ci = k // cin, k % cin                  # input column / input channel
    w2, co = n // cout, n % cout                  # pooled output column / out channel
    p = np.arange(2)
    dj = wpos[None, :, None] - (2 * w2[None, None, :] + p[:, None, None])   # [2,K,N]
    valid = (dj >= 0) & (dj < kw)
    djc = np.clip(dj, 0, kw - 1)
    co_b = np.broadcast_to(co[None, None, :], valid.shape)
    ci_b = np.broadcast_to(ci[None, :, None], valid.shape)
    di_b = np.arange(kh)[None, :, None, None]                               # [1,KH,1,1]
    w32 = jnp.asarray(w, jnp.float32)
    gathered = w32[co_b[:, None], ci_b[:, None], di_b, djc[:, None]]        # [2,KH,K,N]
    return jnp.where(jnp.asarray(valid)[:, None], gathered, 0.0).astype(jnp.float32)


def _fc1_perm():
    """perm[h, w*16 + c] = torch flat index c*25 + h*5 + w of the fc1 input."""
    perm = np.empty((5, 80), dtype=np.int32)
    for h in range(5):
        for w in range(5):
            for c in range(16):
                perm[h, w * 16 + c] = c * 25 + h * 5 + w
    return perm


def prepare_params(params):
    f32 = jnp.float32
    return {
        "t1": _conv_toeplitz(params["conv1_w"], 32),                        # [2,5,96,84]
        "b1": jnp.tile(params["conv1_b"].astype(f32), 14).reshape(1, 84),
        "t2": _conv_toeplitz(params["conv2_w"], 14),                        # [2,5,84,80]
        "b2": jnp.tile(params["conv2_b"].astype(f32), 5).reshape(1, 80),
        "wf1": params["fc1_w"].astype(f32)[_fc1_perm()],                    # [5,80,120]
        "bf1": params["fc1_b"].astype(f32).reshape(1, 120),
        "wf2": params["fc2_w"].astype(f32),                                 # [120,84]
        "bf2": params["fc2_b"].astype(f32).reshape(1, 84),
        "wf3": jnp.pad(params["fc3_w"].astype(f32), ((0, 0), (0, 125))),    # [84,128]
        "bf3": jnp.pad(params["fc3_b"].astype(f32), (0, 125)).reshape(1, 128),
    }


# ------------------------------ fused Pallas kernel ---------------------------
def _habs_fused_kernel(x_ref, t1_ref, b1_ref, t2_ref, b2_ref,
                       wf1_ref, bf1_ref, wf2_ref, bf2_ref, wf3_ref, bf3_ref,
                       o_ref):
    f32 = jnp.float32

    # ---- conv1 + ReLU + 2x2 max-pool ----------------------------------------
    # x_ref block: [1, 4, 8, 96]; x_ref[0, q, m, :] = input row 4*m + q (flat W*C).
    # conv1_rows(r)[j, w2*6+co] = max-over-column-parity ReLU(conv1)[4j+r, 2*w2(+p), co]
    def conv1_rows(phase):
        acc_e = jnp.zeros((7, 84), f32)
        acc_o = jnp.zeros((7, 84), f32)
        for di in range(5):
            s = phase + di
            xs = x_ref[0, s % 4, (s // 4):(s // 4) + 7, :]                  # [7, 96]
            acc_e = acc_e + jnp.dot(xs, t1_ref[0, di], preferred_element_type=f32)
            acc_o = acc_o + jnp.dot(xs, t1_ref[1, di], preferred_element_type=f32)
        return jnp.maximum(jnp.maximum(acc_e, acc_o) + b1_ref[...], 0.0)

    q0 = conv1_rows(0)
    q1 = conv1_rows(1)
    q2 = conv1_rows(2)
    q3 = conv1_rows(3)
    e1 = jnp.maximum(q0, q1)      # pooled conv1 rows 0,2,...,12  -> [7, 84]
    o1 = jnp.maximum(q2, q3)      # pooled conv1 rows 1,3,...,13  -> [7, 84]

    # ---- conv2 + ReLU + 2x2 max-pool ----------------------------------------
    # conv2_rows(parity)[j, w2*16+co] = col-pooled ReLU(conv2) at output row 2j+parity.
    def conv2_rows(parity):
        acc_e = jnp.zeros((5, 80), f32)
        acc_o = jnp.zeros((5, 80), f32)
        for di in range(5):
            if parity == 0:
                src = e1 if di % 2 == 0 else o1
                off = di // 2
            else:
                src = o1 if di % 2 == 0 else e1
                off = (di + 1) // 2
            ps = src[off:off + 5, :]                                        # [5, 84]
            acc_e = acc_e + jnp.dot(ps, t2_ref[0, di], preferred_element_type=f32)
            acc_o = acc_o + jnp.dot(ps, t2_ref[1, di], preferred_element_type=f32)
        return jnp.maximum(jnp.maximum(acc_e, acc_o) + b2_ref[...], 0.0)

    p2 = jnp.maximum(conv2_rows(0), conv2_rows(1))                          # [5, 80]

    # ---- FC head (fc1 accumulated over the 5 pooled rows; weight pre-permuted)
    h = bf1_ref[...]                                                        # [1, 120]
    for r in range(5):
        h = h + jnp.dot(p2[r:r + 1, :], wf1_ref[r], preferred_element_type=f32)
    h = jnp.maximum(h, 0.0)
    h = jnp.maximum(jnp.dot(h, wf2_ref[...], preferred_element_type=f32) + bf2_ref[...], 0.0)
    o_ref[0] = jnp.dot(h, wf3_ref[...], preferred_element_type=f32) + bf3_ref[...]


def habs_cnn_forward(prep, x_nchw):
    n = x_nchw.shape[0]
    x = jnp.transpose(x_nchw, (0, 2, 3, 1)).astype(jnp.float32)   # NCHW -> NHWC
    x = x.reshape(n, 32, 96)                                      # [N, H, W*C]
    # De-interleave rows by (row mod 4) so all in-kernel row accesses are
    # contiguous slices: x4[:, q, m, :] == x[:, 4*m + q, :].
    x4 = x.reshape(n, 8, 4, 96).transpose(0, 2, 1, 3)             # [N, 4, 8, 96]

    out = pl.pallas_call(
        _habs_fused_kernel,
        out_shape=jax.ShapeDtypeStruct((n, 1, 128), jnp.float32),
        grid=(n,),
        in_specs=[
            pl.BlockSpec((1, 4, 8, 96), lambda b: (b, 0, 0, 0)),      # x4 (per image)
            pl.BlockSpec((2, 5, 96, 84), lambda b: (0, 0, 0, 0)),     # t1 (resident)
            pl.BlockSpec((1, 84), lambda b: (0, 0)),                  # b1 tile
            pl.BlockSpec((2, 5, 84, 80), lambda b: (0, 0, 0, 0)),     # t2 (resident)
            pl.BlockSpec((1, 80), lambda b: (0, 0)),                  # b2 tile
            pl.BlockSpec((5, 80, 120), lambda b: (0, 0, 0)),          # fc1 (permuted)
            pl.BlockSpec((1, 120), lambda b: (0, 0)),                 # fc1 bias
            pl.BlockSpec((120, 84), lambda b: (0, 0)),                # fc2
            pl.BlockSpec((1, 84), lambda b: (0, 0)),                  # fc2 bias
            pl.BlockSpec((84, 128), lambda b: (0, 0)),                # fc3 (padded)
            pl.BlockSpec((1, 128), lambda b: (0, 0)),                 # fc3 bias (padded)
        ],
        out_specs=pl.BlockSpec((1, 1, 128), lambda b: (b, 0, 0)),
        compiler_params=pltpu.CompilerParams(dimension_semantics=("parallel",)),
    )(x4, prep["t1"], prep["b1"], prep["t2"], prep["b2"],
      prep["wf1"], prep["bf1"], prep["wf2"], prep["bf2"], prep["wf3"], prep["bf3"])
    return out[:, 0, :3]


# ------------------------------ parameter init -------------------------------
def _uniform(key, shape, bound):
    return jax.random.uniform(key, shape, jnp.float32, -bound, bound)


def init_params(key):
    """PyTorch-default-style init (uniform +-1/sqrt(fan_in)). fc weights stored [in, out]."""
    ks = jax.random.split(key, 10)
    p = {}
    b = 1.0 / math.sqrt(3 * 5 * 5)
    p["conv1_w"] = _uniform(ks[0], (6, 3, 5, 5), b)
    p["conv1_b"] = _uniform(ks[1], (6,), b)
    b = 1.0 / math.sqrt(6 * 5 * 5)
    p["conv2_w"] = _uniform(ks[2], (16, 6, 5, 5), b)
    p["conv2_b"] = _uniform(ks[3], (16,), b)
    b = 1.0 / math.sqrt(16 * 5 * 5)
    p["fc1_w"] = _uniform(ks[4], (400, 120), b)
    p["fc1_b"] = _uniform(ks[5], (120,), b)
    b = 1.0 / math.sqrt(120)
    p["fc2_w"] = _uniform(ks[6], (120, 84), b)
    p["fc2_b"] = _uniform(ks[7], (84,), b)
    b = 1.0 / math.sqrt(84)
    p["fc3_w"] = _uniform(ks[8], (84, 3), b)
    p["fc3_b"] = _uniform(ks[9], (3,), b)
    return p


# ------------------------------ pure-JAX reference ---------------------------
def ref_forward(params, x_nchw):
    x = jnp.transpose(x_nchw, (0, 2, 3, 1))

    def conv(x, w, b):
        y = lax.conv_general_dilated(
            x, jnp.transpose(w, (2, 3, 1, 0)), (1, 1), "VALID",
            dimension_numbers=("NHWC", "HWIO", "NHWC"),
            precision=lax.Precision.HIGHEST,
        ) + b
        return jnp.maximum(y, 0.0)

    def pool(x):
        return lax.reduce_window(
            x, -jnp.inf, lax.max, (1, 2, 2, 1), (1, 2, 2, 1), "VALID"
        )

    x = pool(conv(x, params["conv1_w"], params["conv1_b"]))
    x = pool(conv(x, params["conv2_w"], params["conv2_b"]))
    feat = jnp.transpose(x, (0, 3, 1, 2)).reshape(x.shape[0], -1)
    h = jnp.maximum(
        jnp.dot(feat, params["fc1_w"], precision=lax.Precision.HIGHEST)
        + params["fc1_b"], 0.0)
    h = jnp.maximum(
        jnp.dot(h, params["fc2_w"], precision=lax.Precision.HIGHEST)
        + params["fc2_b"], 0.0)
    return (
        jnp.dot(h, params["fc3_w"], precision=lax.Precision.HIGHEST)
        + params["fc3_b"]
    )


# ----------------------------------- main ------------------------------------
if __name__ == "__main__":
    key = jax.random.PRNGKey(0)
    pkey, xkey = jax.random.split(key)
    params = init_params(pkey)
    # Input spatial size 32x32 is implied by the module's view(-1, 16*5*5).
    x = jax.random.normal(xkey, (2, 3, 32, 32), jnp.float32)  # NCHW, like PyTorch

    prep = prepare_params(params)        # one-time weight layout transform
    fwd = jax.jit(habs_cnn_forward)
    out = jax.block_until_ready(fwd(prep, x))
    assert out.shape == (2, 3), out.shape

    ref = jax.block_until_ready(jax.jit(ref_forward)(params, x))
    assert bool(jnp.allclose(out, ref, rtol=1e-2, atol=1e-2)), (out, ref)

    print("KERNEL_OK")
</pallas_src>

<mosaic_0001>
module attributes {stable_mosaic.version = 11 : i64} {
  func.func @_habs_fused_kernel(%arg0: i32, %arg1: memref<1x4x8x96xf32, #tpu.memory_space<vmem>>, %arg2: memref<2x5x96x84xf32, #tpu.memory_space<vmem>>, %arg3: memref<1x84xf32, #tpu.memory_space<vmem>>, %arg4: memref<2x5x84x80xf32, #tpu.memory_space<vmem>>, %arg5: memref<1x80xf32, #tpu.memory_space<vmem>>, %arg6: memref<5x80x120xf32, #tpu.memory_space<vmem>>, %arg7: memref<1x120xf32, #tpu.memory_space<vmem>>, %arg8: memref<120x84xf32, #tpu.memory_space<vmem>>, %arg9: memref<1x84xf32, #tpu.memory_space<vmem>>, %arg10: memref<84x128xf32, #tpu.memory_space<vmem>>, %arg11: memref<1x128xf32, #tpu.memory_space<vmem>>, %arg12: memref<1x1x128xf32, #tpu.memory_space<vmem>>) attributes {dimension_semantics = [#tpu.dimension_semantics<parallel>], iteration_bounds = array<i64: 2>, scalar_prefetch = 0 : i64, scratch_operands = 0 : i64, tpu.core_type = #tpu.core_type<tc>, window_params = [{transform_indices = @transform_0, window_bounds = array<i64: 1, 4, 8, 96>}, {pipeline_mode = #tpu.pipeline_mode<synchronous>, transform_indices = @transform_1, window_bounds = array<i64: 2, 5, 96, 84>}, {pipeline_mode = #tpu.pipeline_mode<synchronous>, transform_indices = @transform_2, window_bounds = array<i64: 1, 84>}, {pipeline_mode = #tpu.pipeline_mode<synchronous>, transform_indices = @transform_3, window_bounds = array<i64: 2, 5, 84, 80>}, {pipeline_mode = #tpu.pipeline_mode<synchronous>, transform_indices = @transform_4, window_bounds = array<i64: 1, 80>}, {pipeline_mode = #tpu.pipeline_mode<synchronous>, transform_indices = @transform_5, window_bounds = array<i64: 5, 80, 120>}, {pipeline_mode = #tpu.pipeline_mode<synchronous>, transform_indices = @transform_6, window_bounds = array<i64: 1, 120>}, {pipeline_mode = #tpu.pipeline_mode<synchronous>, transform_indices = @transform_7, window_bounds = array<i64: 120, 84>}, {pipeline_mode = #tpu.pipeline_mode<synchronous>, transform_indices = @transform_8, window_bounds = array<i64: 1, 84>}, {pipeline_mode = #tpu.pipeline_mode<synchronous>, transform_indices = @transform_9, window_bounds = array<i64: 84, 128>}, {pipeline_mode = #tpu.pipeline_mode<synchronous>, transform_indices = @transform_10, window_bounds = array<i64: 1, 128>}, {transform_indices = @transform_11, window_bounds = array<i64: 1, 1, 128>}]} {
    %cst = arith.constant 0.000000e+00 : f32
    %0 = vector.broadcast %cst : f32 to vector<7x84xf32>
    %cst_0 = arith.constant 0.000000e+00 : f32
    %1 = vector.broadcast %cst_0 : f32 to vector<7x84xf32>
    %c0 = arith.constant 0 : index
    %c0_1 = arith.constant 0 : index
    %c0_2 = arith.constant 0 : index
    %c0_3 = arith.constant 0 : index
    %2 = vector.load %arg1[%c0, %c0_1, %c0_2, %c0_3] : memref<1x4x8x96xf32, #tpu.memory_space<vmem>>, vector<1x1x7x96xf32>
    %3 = vector.shape_cast %2 : vector<1x1x7x96xf32> to vector<7x96xf32>
    %c0_4 = arith.constant 0 : index
    %c0_5 = arith.constant 0 : index
    %c0_6 = arith.constant 0 : index
    %c0_7 = arith.constant 0 : index
    %4 = vector.load %arg2[%c0_4, %c0_5, %c0_6, %c0_7] : memref<2x5x96x84xf32, #tpu.memory_space<vmem>>, vector<1x1x96x84xf32>
    %5 = vector.shape_cast %4 : vector<1x1x96x84xf32> to vector<96x84xf32>
    %cst_8 = arith.constant dense<0.000000e+00> : vector<7x84xf32>
    %6 = tpu.matmul %3, %5, %cst_8 {dimension_numbers = #tpu.dot_dimension_numbers<[1], [0], [0], [1], [0, 0, 1, 1], [], []>} : vector<7x96xf32>, vector<96x84xf32>, vector<7x84xf32> -> vector<7x84xf32>
    %7 = arith.addf %0, %6 : vector<7x84xf32>
    %c1 = arith.constant 1 : index
    %c0_9 = arith.constant 0 : index
    %c0_10 = arith.constant 0 : index
    %c0_11 = arith.constant 0 : index
    %8 = vector.load %arg2[%c1, %c0_9, %c0_10, %c0_11] : memref<2x5x96x84xf32, #tpu.memory_space<vmem>>, vector<1x1x96x84xf32>
    %9 = vector.shape_cast %8 : vector<1x1x96x84xf32> to vector<96x84xf32>
    %cst_12 = arith.constant dense<0.000000e+00> : vector<7x84xf32>
    %10 = tpu.matmul %3, %9, %cst_12 {dimension_numbers = #tpu.dot_dimension_numbers<[1], [0], [0], [1], [0, 0, 1, 1], [], []>} : vector<7x96xf32>, vector<96x84xf32>, vector<7x84xf32> -> vector<7x84xf32>
    %11 = arith.addf %1, %10 : vector<7x84xf32>
    %c0_13 = arith.constant 0 : index
    %c1_14 = arith.constant 1 : index
    %c0_15 = arith.constant 0 : index
    %c0_16 = arith.constant 0 : index
    %12 = vector.load %arg1[%c0_13, %c1_14, %c0_15, %c0_16] : memref<1x4x8x96xf32, #tpu.memory_space<vmem>>, vector<1x1x7x96xf32>
    %13 = vector.shape_cast %12 : vector<1x1x7x96xf32> to vector<7x96xf32>
    %c0_17 = arith.constant 0 : index
    %c1_18 = arith.constant 1 : index
    %c0_19 = arith.constant 0 : index
    %c0_20 = arith.constant 0 : index
    %14 = vector.load %arg2[%c0_17, %c1_18, %c0_19, %c0_20] : memref<2x5x96x84xf32, #tpu.memory_space<vmem>>, vector<1x1x96x84xf32>
    %15 = vector.shape_cast %14 : vector<1x1x96x84xf32> to vector<96x84xf32>
    %cst_21 = arith.constant dense<0.000000e+00> : vector<7x84xf32>
    %16 = tpu.matmul %13, %15, %cst_21 {dimension_numbers = #tpu.dot_dimension_numbers<[1], [0], [0], [1], [0, 0, 1, 1], [], []>} : vector<7x96xf32>, vector<96x84xf32>, vector<7x84xf32> -> vector<7x84xf32>
    %17 = arith.addf %7, %16 : vector<7x84xf32>
    %c1_22 = arith.constant 1 : index
    %c1_23 = arith.constant 1 : index
    %c0_24 = arith.constant 0 : index
    %c0_25 = arith.constant 0 : index
    %18 = vector.load %arg2[%c1_22, %c1_23, %c0_24, %c0_25] : memref<2x5x96x84xf32, #tpu.memory_space<vmem>>, vector<1x1x96x84xf32>
    %19 = vector.shape_cast %18 : vector<1x1x96x84xf32> to vector<96x84xf32>
    %cst_26 = arith.constant dense<0.000000e+00> : vector<7x84xf32>
    %20 = tpu.matmul %13, %19, %cst_26 {dimension_numbers = #tpu.dot_dimension_numbers<[1], [0], [0], [1], [0, 0, 1, 1], [], []>} : vector<7x96xf32>, vector<96x84xf32>, vector<7x84xf32> -> vector<7x84xf32>
    %21 = arith.addf %11, %20 : vector<7x84xf32>
    %c0_27 = arith.constant 0 : index
    %c2 = arith.constant 2 : index
    %c0_28 = arith.constant 0 : index
    %c0_29 = arith.constant 0 : index
    %22 = vector.load %arg1[%c0_27, %c2, %c0_28, %c0_29] : memref<1x4x8x96xf32, #tpu.memory_space<vmem>>, vector<1x1x7x96xf32>
    %23 = vector.shape_cast %22 : vector<1x1x7x96xf32> to vector<7x96xf32>
    %c0_30 = arith.constant 0 : index
    %c2_31 = arith.constant 2 : index
    %c0_32 = arith.constant 0 : index
    %c0_33 = arith.constant 0 : index
    %24 = vector.load %arg2[%c0_30, %c2_31, %c0_32, %c0_33] : memref<2x5x96x84xf32, #tpu.memory_space<vmem>>, vector<1x1x96x84xf32>
    %25 = vector.shape_cast %24 : vector<1x1x96x84xf32> to vector<96x84xf32>
    %cst_34 = arith.constant dense<0.000000e+00> : vector<7x84xf32>
    %26 = tpu.matmul %23, %25, %cst_34 {dimension_numbers = #tpu.dot_dimension_numbers<[1], [0], [0], [1], [0, 0, 1, 1], [], []>} : vector<7x96xf32>, vector<96x84xf32>, vector<7x84xf32> -> vector<7x84xf32>
    %27 = arith.addf %17, %26 : vector<7x84xf32>
    %c1_35 = arith.constant 1 : index
    %c2_36 = arith.constant 2 : index
    %c0_37 = arith.constant 0 : index
    %c0_38 = arith.constant 0 : index
    %28 = vector.load %arg2[%c1_35, %c2_36, %c0_37, %c0_38] : memref<2x5x96x84xf32, #tpu.memory_space<vmem>>, vector<1x1x96x84xf32>
    %29 = vector.shape_cast %28 : vector<1x1x96x84xf32> to vector<96x84xf32>
    %cst_39 = arith.constant dense<0.000000e+00> : vector<7x84xf32>
    %30 = tpu.matmul %23, %29, %cst_39 {dimension_numbers = #tpu.dot_dimension_numbers<[1], [0], [0], [1], [0, 0, 1, 1], [], []>} : vector<7x96xf32>, vector<96x84xf32>, vector<7x84xf32> -> vector<7x84xf32>
    %31 = arith.addf %21, %30 : vector<7x84xf32>
    %c0_40 = arith.constant 0 : index
    %c3 = arith.constant 3 : index
    %c0_41 = arith.constant 0 : index
    %c0_42 = arith.constant 0 : index
    %32 = vector.load %arg1[%c0_40, %c3, %c0_41, %c0_42] : memref<1x4x8x96xf32, #tpu.memory_space<vmem>>, vector<1x1x7x96xf32>
    %33 = vector.shape_cast %32 : vector<1x1x7x96xf32> to vector<7x96xf32>
    %c0_43 = arith.constant 0 : index
    %c3_44 = arith.constant 3 : index
    %c0_45 = arith.constant 0 : index
    %c0_46 = arith.constant 0 : index
    %34 = vector.load %arg2[%c0_43, %c3_44, %c0_45, %c0_46] : memref<2x5x96x84xf32, #tpu.memory_space<vmem>>, vector<1x1x96x84xf32>
    %35 = vector.shape_cast %34 : vector<1x1x96x84xf32> to vector<96x84xf32>
    %cst_47 = arith.constant dense<0.000000e+00> : vector<7x84xf32>
    %36 = tpu.matmul %33, %35, %cst_47 {dimension_numbers = #tpu.dot_dimension_numbers<[1], [0], [0], [1], [0, 0, 1, 1], [], []>} : vector<7x96xf32>, vector<96x84xf32>, vector<7x84xf32> -> vector<7x84xf32>
    %37 = arith.addf %27, %36 : vector<7x84xf32>
    %c1_48 = arith.constant 1 : index
    %c3_49 = arith.constant 3 : index
    %c0_50 = arith.constant 0 : index
    %c0_51 = arith.constant 0 : index
    %38 = vector.load %arg2[%c1_48, %c3_49, %c0_50, %c0_51] : memref<2x5x96x84xf32, #tpu.memory_space<vmem>>, vector<1x1x96x84xf32>
    %39 = vector.shape_cast %38 : vector<1x1x96x84xf32> to vector<96x84xf32>
    %cst_52 = arith.constant dense<0.000000e+00> : vector<7x84xf32>
    %40 = tpu.matmul %33, %39, %cst_52 {dimension_numbers = #tpu.dot_dimension_numbers<[1], [0], [0], [1], [0, 0, 1, 1], [], []>} : vector<7x96xf32>, vector<96x84xf32>, vector<7x84xf32> -> vector<7x84xf32>
    %41 = arith.addf %31, %40 : vector<7x84xf32>
    %c0_53 = arith.constant 0 : index
    %c0_54 = arith.constant 0 : index
    %c1_55 = arith.constant 1 : index
    %c0_56 = arith.constant 0 : index
    %42 = vector.load %arg1[%c0_53, %c0_54, %c1_55, %c0_56] : memref<1x4x8x96xf32, #tpu.memory_space<vmem>>, vector<1x1x7x96xf32>
    %43 = vector.shape_cast %42 : vector<1x1x7x96xf32> to vector<7x96xf32>
    %c0_57 = arith.constant 0 : index
    %c4 = arith.constant 4 : index
    %c0_58 = arith.constant 0 : index
    %c0_59 = arith.constant 0 : index
    %44 = vector.load %arg2[%c0_57, %c4, %c0_58, %c0_59] : memref<2x5x96x84xf32, #tpu.memory_space<vmem>>, vector<1x1x96x84xf32>
    %45 = vector.shape_cast %44 : vector<1x1x96x84xf32> to vector<96x84xf32>
    %cst_60 = arith.constant dense<0.000000e+00> : vector<7x84xf32>
    %46 = tpu.matmul %43, %45, %cst_60 {dimension_numbers = #tpu.dot_dimension_numbers<[1], [0], [0], [1], [0, 0, 1, 1], [], []>} : vector<7x96xf32>, vector<96x84xf32>, vector<7x84xf32> -> vector<7x84xf32>
    %47 = arith.addf %37, %46 : vector<7x84xf32>
    %c1_61 = arith.constant 1 : index
    %c4_62 = arith.constant 4 : index
    %c0_63 = arith.constant 0 : index
    %c0_64 = arith.constant 0 : index
    %48 = vector.load %arg2[%c1_61, %c4_62, %c0_63, %c0_64] : memref<2x5x96x84xf32, #tpu.memory_space<vmem>>, vector<1x1x96x84xf32>
    %49 = vector.shape_cast %48 : vector<1x1x96x84xf32> to vector<96x84xf32>
    %cst_65 = arith.constant dense<0.000000e+00> : vector<7x84xf32>
    %50 = tpu.matmul %43, %49, %cst_65 {dimension_numbers = #tpu.dot_dimension_numbers<[1], [0], [0], [1], [0, 0, 1, 1], [], []>} : vector<7x96xf32>, vector<96x84xf32>, vector<7x84xf32> -> vector<7x84xf32>
    %51 = arith.addf %41, %50 : vector<7x84xf32>
    %52 = arith.maximumf %47, %51 : vector<7x84xf32>
    %c0_66 = arith.constant 0 : index
    %c0_67 = arith.constant 0 : index
    %53 = vector.load %arg3[%c0_66, %c0_67] : memref<1x84xf32, #tpu.memory_space<vmem>>, vector<1x84xf32>
    %54 = vector.broadcast %53 : vector<1x84xf32> to vector<7x84xf32>
    %55 = arith.addf %52, %54 : vector<7x84xf32>
    %cst_68 = arith.constant 0.000000e+00 : f32
    %56 = vector.broadcast %cst_68 : f32 to vector<7x84xf32>
    %57 = arith.maximumf %55, %56 : vector<7x84xf32>
    %cst_69 = arith.constant 0.000000e+00 : f32
    %58 = vector.broadcast %cst_69 : f32 to vector<7x84xf32>
    %cst_70 = arith.constant 0.000000e+00 : f32
    %59 = vector.broadcast %cst_70 : f32 to vector<7x84xf32>
    %c0_71 = arith.constant 0 : index
    %c1_72 = arith.constant 1 : index
    %c0_73 = arith.constant 0 : index
    %c0_74 = arith.constant 0 : index
    %60 = vector.load %arg1[%c0_71, %c1_72, %c0_73, %c0_74] : memref<1x4x8x96xf32, #tpu.memory_space<vmem>>, vector<1x1x7x96xf32>
    %61 = vector.shape_cast %60 : vector<1x1x7x96xf32> to vector<7x96xf32>
    %c0_75 = arith.constant 0 : index
    %c0_76 = arith.constant 0 : index
    %c0_77 = arith.constant 0 : index
    %c0_78 = arith.constant 0 : index
    %62 = vector.load %arg2[%c0_75, %c0_76, %c0_77, %c0_78] : memref<2x5x96x84xf32, #tpu.memory_space<vmem>>, vector<1x1x96x84xf32>
    %63 = vector.shape_cast %62 : vector<1x1x96x84xf32> to vector<96x84xf32>
    %cst_79 = arith.constant dense<0.000000e+00> : vector<7x84xf32>
    %64 = tpu.matmul %61, %63, %cst_79 {dimension_numbers = #tpu.dot_dimension_numbers<[1], [0], [0], [1], [0, 0, 1, 1], [], []>} : vector<7x96xf32>, vector<96x84xf32>, vector<7x84xf32> -> vector<7x84xf32>
    %65 = arith.addf %58, %64 : vector<7x84xf32>
    %c1_80 = arith.constant 1 : index
    %c0_81 = arith.constant 0 : index
    %c0_82 = arith.constant 0 : index
    %c0_83 = arith.constant 0 : index
    %66 = vector.load %arg2[%c1_80, %c0_81, %c0_82, %c0_83] : memref<2x5x96x84xf32, #tpu.memory_space<vmem>>, vector<1x1x96x84xf32>
    %67 = vector.shape_cast %66 : vector<1x1x96x84xf32> to vector<96x84xf32>
    %cst_84 = arith.constant dense<0.000000e+00> : vector<7x84xf32>
    %68 = tpu.matmul %61, %67, %cst_84 {dimension_numbers = #tpu.dot_dimension_numbers<[1], [0], [0], [1], [0, 0, 1, 1], [], []>} : vector<7x96xf32>, vector<96x84xf32>, vector<7x84xf32> -> vector<7x84xf32>
    %69 = arith.addf %59, %68 : vector<7x84xf32>
    %c0_85 = arith.constant 0 : index
    %c2_86 = arith.constant 2 : index
    %c0_87 = arith.constant 0 : index
    %c0_88 = arith.constant 0 : index
    %70 = vector.load %arg1[%c0_85, %c2_86, %c0_87, %c0_88] : memref<1x4x8x96xf32, #tpu.memory_space<vmem>>, vector<1x1x7x96xf32>
    %71 = vector.shape_cast %70 : vector<1x1x7x96xf32> to vector<7x96xf32>
    %c0_89 = arith.constant 0 : index
    %c1_90 = arith.constant 1 : index
    %c0_91 = arith.constant 0 : index
    %c0_92 = arith.constant 0 : index
    %72 = vector.load %arg2[%c0_89, %c1_90, %c0_91, %c0_92] : memref<2x5x96x84xf32, #tpu.memory_space<vmem>>, vector<1x1x96x84xf32>
    %73 = vector.shape_cast %72 : vector<1x1x96x84xf32> to vector<96x84xf32>
    %cst_93 = arith.constant dense<0.000000e+00> : vector<7x84xf32>
    %74 = tpu.matmul %71, %73, %cst_93 {dimension_numbers = #tpu.dot_dimension_numbers<[1], [0], [0], [1], [0, 0, 1, 1], [], []>} : vector<7x96xf32>, vector<96x84xf32>, vector<7x84xf32> -> vector<7x84xf32>
    %75 = arith.addf %65, %74 : vector<7x84xf32>
    %c1_94 = arith.constant 1 : index
    %c1_95 = arith.constant 1 : index
    %c0_96 = arith.constant 0 : index
    %c0_97 = arith.constant 0 : index
    %76 = vector.load %arg2[%c1_94, %c1_95, %c0_96, %c0_97] : memref<2x5x96x84xf32, #tpu.memory_space<vmem>>, vector<1x1x96x84xf32>
    %77 = vector.shape_cast %76 : vector<1x1x96x84xf32> to vector<96x84xf32>
    %cst_98 = arith.constant dense<0.000000e+00> : vector<7x84xf32>
    %78 = tpu.matmul %71, %77, %cst_98 {dimension_numbers = #tpu.dot_dimension_numbers<[1], [0], [0], [1], [0, 0, 1, 1], [], []>} : vector<7x96xf32>, vector<96x84xf32>, vector<7x84xf32> -> vector<7x84xf32>
    %79 = arith.addf %69, %78 : vector<7x84xf32>
    %c0_99 = arith.constant 0 : index
    %c3_100 = arith.constant 3 : index
    %c0_101 = arith.constant 0 : index
    %c0_102 = arith.constant 0 : index
    %80 = vector.load %arg1[%c0_99, %c3_100, %c0_101, %c0_102] : memref<1x4x8x96xf32, #tpu.memory_space<vmem>>, vector<1x1x7x96xf32>
    %81 = vector.shape_cast %80 : vector<1x1x7x96xf32> to vector<7x96xf32>
    %c0_103 = arith.constant 0 : index
    %c2_104 = arith.constant 2 : index
    %c0_105 = arith.constant 0 : index
    %c0_106 = arith.constant 0 : index
    %82 = vector.load %arg2[%c0_103, %c2_104, %c0_105, %c0_106] : memref<2x5x96x84xf32, #tpu.memory_space<vmem>>, vector<1x1x96x84xf32>
    %83 = vector.shape_cast %82 : vector<1x1x96x84xf32> to vector<96x84xf32>
    %cst_107 = arith.constant dense<0.000000e+00> : vector<7x84xf32>
    %84 = tpu.matmul %81, %83, %cst_107 {dimension_numbers = #tpu.dot_dimension_numbers<[1], [0], [0], [1], [0, 0, 1, 1], [], []>} : vector<7x96xf32>, vector<96x84xf32>, vector<7x84xf32> -> vector<7x84xf32>
    %85 = arith.addf %75, %84 : vector<7x84xf32>
    %c1_108 = arith.constant 1 : index
    %c2_109 = arith.constant 2 : index
    %c0_110 = arith.constant 0 : index
    %c0_111 = arith.constant 0 : index
    %86 = vector.load %arg2[%c1_108, %c2_109, %c0_110, %c0_111] : memref<2x5x96x84xf32, #tpu.memory_space<vmem>>, vector<1x1x96x84xf32>
    %87 = vector.shape_cast %86 : vector<1x1x96x84xf32> to vector<96x84xf32>
    %cst_112 = arith.constant dense<0.000000e+00> : vector<7x84xf32>
    %88 = tpu.matmul %81, %87, %cst_112 {dimension_numbers = #tpu.dot_dimension_numbers<[1], [0], [0], [1], [0, 0, 1, 1], [], []>} : vector<7x96xf32>, vector<96x84xf32>, vector<7x84xf32> -> vector<7x84xf32>
    %89 = arith.addf %79, %88 : vector<7x84xf32>
    %c0_113 = arith.constant 0 : index
    %c0_114 = arith.constant 0 : index
    %c1_115 = arith.constant 1 : index
    %c0_116 = arith.constant 0 : index
    %90 = vector.load %arg1[%c0_113, %c0_114, %c1_115, %c0_116] : memref<1x4x8x96xf32, #tpu.memory_space<vmem>>, vector<1x1x7x96xf32>
    %91 = vector.shape_cast %90 : vector<1x1x7x96xf32> to vector<7x96xf32>
    %c0_117 = arith.constant 0 : index
    %c3_118 = arith.constant 3 : index
    %c0_119 = arith.constant 0 : index
    %c0_120 = arith.constant 0 : index
    %92 = vector.load %arg2[%c0_117, %c3_118, %c0_119, %c0_120] : memref<2x5x96x84xf32, #tpu.memory_space<vmem>>, vector<1x1x96x84xf32>
    %93 = vector.shape_cast %92 : vector<1x1x96x84xf32> to vector<96x84xf32>
    %cst_121 = arith.constant dense<0.000000e+00> : vector<7x84xf32>
    %94 = tpu.matmul %91, %93, %cst_121 {dimension_numbers = #tpu.dot_dimension_numbers<[1], [0], [0], [1], [0, 0, 1, 1], [], []>} : vector<7x96xf32>, vector<96x84xf32>, vector<7x84xf32> -> vector<7x84xf32>
    %95 = arith.addf %85, %94 : vector<7x84xf32>
    %c1_122 = arith.constant 1 : index
    %c3_123 = arith.constant 3 : index
    %c0_124 = arith.constant 0 : index
    %c0_125 = arith.constant 0 : index
    %96 = vector.load %arg2[%c1_122, %c3_123, %c0_124, %c0_125] : memref<2x5x96x84xf32, #tpu.memory_space<vmem>>, vector<1x1x96x84xf32>
    %97 = vector.shape_cast %96 : vector<1x1x96x84xf32> to vector<96x84xf32>
    %cst_126 = arith.constant dense<0.000000e+00> : vector<7x84xf32>
    %98 = tpu.matmul %91, %97, %cst_126 {dimension_numbers = #tpu.dot_dimension_numbers<[1], [0], [0], [1], [0, 0, 1, 1], [], []>} : vector<7x96xf32>, vector<96x84xf32>, vector<7x84xf32> -> vector<7x84xf32>
    %99 = arith.addf %89, %98 : vector<7x84xf32>
    %c0_127 = arith.constant 0 : index
    %c1_128 = arith.constant 1 : index
    %c1_129 = arith.constant 1 : index
    %c0_130 = arith.constant 0 : index
    %100 = vector.load %arg1[%c0_127, %c1_128, %c1_129, %c0_130] : memref<1x4x8x96xf32, #tpu.memory_space<vmem>>, vector<1x1x7x96xf32>
    %101 = vector.shape_cast %100 : vector<1x1x7x96xf32> to vector<7x96xf32>
    %c0_131 = arith.constant 0 : index
    %c4_132 = arith.constant 4 : index
    %c0_133 = arith.constant 0 : index
    %c0_134 = arith.constant 0 : index
    %102 = vector.load %arg2[%c0_131, %c4_132, %c0_133, %c0_134] : memref<2x5x96x84xf32, #tpu.memory_space<vmem>>, vector<1x1x96x84xf32>
    %103 = vector.shape_cast %102 : vector<1x1x96x84xf32> to vector<96x84xf32>
    %cst_135 = arith.constant dense<0.000000e+00> : vector<7x84xf32>
    %104 = tpu.matmul %101, %103, %cst_135 {dimension_numbers = #tpu.dot_dimension_numbers<[1], [0], [0], [1], [0, 0, 1, 1], [], []>} : vector<7x96xf32>, vector<96x84xf32>, vector<7x84xf32> -> vector<7x84xf32>
    %105 = arith.addf %95, %104 : vector<7x84xf32>
    %c1_136 = arith.constant 1 : index
    %c4_137 = arith.constant 4 : index
    %c0_138 = arith.constant 0 : index
    %c0_139 = arith.constant 0 : index
    %106 = vector.load %arg2[%c1_136, %c4_137, %c0_138, %c0_139] : memref<2x5x96x84xf32, #tpu.memory_space<vmem>>, vector<1x1x96x84xf32>
    %107 = vector.shape_cast %106 : vector<1x1x96x84xf32> to vector<96x84xf32>
    %cst_140 = arith.constant dense<0.000000e+00> : vector<7x84xf32>
    %108 = tpu.matmul %101, %107, %cst_140 {dimension_numbers = #tpu.dot_dimension_numbers<[1], [0], [0], [1], [0, 0, 1, 1], [], []>} : vector<7x96xf32>, vector<96x84xf32>, vector<7x84xf32> -> vector<7x84xf32>
    %109 = arith.addf %99, %108 : vector<7x84xf32>
    %110 = arith.maximumf %105, %109 : vector<7x84xf32>
    %c0_141 = arith.constant 0 : index
    %c0_142 = arith.constant 0 : index
    %111 = vector.load %arg3[%c0_141, %c0_142] : memref<1x84xf32, #tpu.memory_space<vmem>>, vector<1x84xf32>
    %112 = vector.broadcast %111 : vector<1x84xf32> to vector<7x84xf32>
    %113 = arith.addf %110, %112 : vector<7x84xf32>
    %cst_143 = arith.constant 0.000000e+00 : f32
    %114 = vector.broadcast %cst_143 : f32 to vector<7x84xf32>
    %115 = arith.maximumf %113, %114 : vector<7x84xf32>
    %cst_144 = arith.constant 0.000000e+00 : f32
    %116 = vector.broadcast %cst_144 : f32 to vector<7x84xf32>
    %cst_145 = arith.constant 0.000000e+00 : f32
    %117 = vector.broadcast %cst_145 : f32 to vector<7x84xf32>
    %c0_146 = arith.constant 0 : index
    %c2_147 = arith.constant 2 : index
    %c0_148 = arith.constant 0 : index
    %c0_149 = arith.constant 0 : index
    %118 = vector.load %arg1[%c0_146, %c2_147, %c0_148, %c0_149] : memref<1x4x8x96xf32, #tpu.memory_space<vmem>>, vector<1x1x7x96xf32>
    %119 = vector.shape_cast %118 : vector<1x1x7x96xf32> to vector<7x96xf32>
    %c0_150 = arith.constant 0 : index
    %c0_151 = arith.constant 0 : index
    %c0_152 = arith.constant 0 : index
    %c0_153 = arith.constant 0 : index
    %120 = vector.load %arg2[%c0_150, %c0_151, %c0_152, %c0_153] : memref<2x5x96x84xf32, #tpu.memory_space<vmem>>, vector<1x1x96x84xf32>
    %121 = vector.shape_cast %120 : vector<1x1x96x84xf32> to vector<96x84xf32>
    %cst_154 = arith.constant dense<0.000000e+00> : vector<7x84xf32>
    %122 = tpu.matmul %119, %121, %cst_154 {dimension_numbers = #tpu.dot_dimension_numbers<[1], [0], [0], [1], [0, 0, 1, 1], [], []>} : vector<7x96xf32>, vector<96x84xf32>, vector<7x84xf32> -> vector<7x84xf32>
    %123 = arith.addf %116, %122 : vector<7x84xf32>
    %c1_155 = arith.constant 1 : index
    %c0_156 = arith.constant 0 : index
    %c0_157 = arith.constant 0 : index
    %c0_158 = arith.constant 0 : index
    %124 = vector.load %arg2[%c1_155, %c0_156, %c0_157, %c0_158] : memref<2x5x96x84xf32, #tpu.memory_space<vmem>>, vector<1x1x96x84xf32>
    %125 = vector.shape_cast %124 : vector<1x1x96x84xf32> to vector<96x84xf32>
    %cst_159 = arith.constant dense<0.000000e+00> : vector<7x84xf32>
    %126 = tpu.matmul %119, %125, %cst_159 {dimension_numbers = #tpu.dot_dimension_numbers<[1], [0], [0], [1], [0, 0, 1, 1], [], []>} : vector<7x96xf32>, vector<96x84xf32>, vector<7x84xf32> -> vector<7x84xf32>
    %127 = arith.addf %117, %126 : vector<7x84xf32>
    %c0_160 = arith.constant 0 : index
    %c3_161 = arith.constant 3 : index
    %c0_162 = arith.constant 0 : index
    %c0_163 = arith.constant 0 : index
    %128 = vector.load %arg1[%c0_160, %c3_161, %c0_162, %c0_163] : memref<1x4x8x96xf32, #tpu.memory_space<vmem>>, vector<1x1x7x96xf32>
    %129 = vector.shape_cast %128 : vector<1x1x7x96xf32> to vector<7x96xf32>
    %c0_164 = arith.constant 0 : index
    %c1_165 = arith.constant 1 : index
    %c0_166 = arith.constant 0 : index
    %c0_167 = arith.constant 0 : index
    %130 = vector.load %arg2[%c0_164, %c1_165, %c0_166, %c0_167] : memref<2x5x96x84xf32, #tpu.memory_space<vmem>>, vector<1x1x96x84xf32>
    %131 = vector.shape_cast %130 : vector<1x1x96x84xf32> to vector<96x84xf32>
    %cst_168 = arith.constant dense<0.000000e+00> : vector<7x84xf32>
    %132 = tpu.matmul %129, %131, %cst_168 {dimension_numbers = #tpu.dot_dimension_numbers<[1], [0], [0], [1], [0, 0, 1, 1], [], []>} : vector<7x96xf32>, vector<96x84xf32>, vector<7x84xf32> -> vector<7x84xf32>
    %133 = arith.addf %123, %132 : vector<7x84xf32>
    %c1_169 = arith.constant 1 : index
    %c1_170 = arith.constant 1 : index
    %c0_171 = arith.constant 0 : index
    %c0_172 = arith.constant 0 : index
    %134 = vector.load %arg2[%c1_169, %c1_170, %c0_171, %c0_172] : memref<2x5x96x84xf32, #tpu.memory_space<vmem>>, vector<1x1x96x84xf32>
    %135 = vector.shape_cast %134 : vector<1x1x96x84xf32> to vector<96x84xf32>
    %cst_173 = arith.constant dense<0.000000e+00> : vector<7x84xf32>
    %136 = tpu.matmul %129, %135, %cst_173 {dimension_numbers = #tpu.dot_dimension_numbers<[1], [0], [0], [1], [0, 0, 1, 1], [], []>} : vector<7x96xf32>, vector<96x84xf32>, vector<7x84xf32> -> vector<7x84xf32>
    %137 = arith.addf %127, %136 : vector<7x84xf32>
    %c0_174 = arith.constant 0 : index
    %c0_175 = arith.constant 0 : index
    %c1_176 = arith.constant 1 : index
    %c0_177 = arith.constant 0 : index
    %138 = vector.load %arg1[%c0_174, %c0_175, %c1_176, %c0_177] : memref<1x4x8x96xf32, #tpu.memory_space<vmem>>, vector<1x1x7x96xf32>
    %139 = vector.shape_cast %138 : vector<1x1x7x96xf32> to vector<7x96xf32>
    %c0_178 = arith.constant 0 : index
    %c2_179 = arith.constant 2 : index
    %c0_180 = arith.constant 0 : index
    %c0_181 = arith.constant 0 : index
    %140 = vector.load %arg2[%c0_178, %c2_179, %c0_180, %c0_181] : memref<2x5x96x84xf32, #tpu.memory_space<vmem>>, vector<1x1x96x84xf32>
    %141 = vector.shape_cast %140 : vector<1x1x96x84xf32> to vector<96x84xf32>
    %cst_182 = arith.constant dense<0.000000e+00> : vector<7x84xf32>
    %142 = tpu.matmul %139, %141, %cst_182 {dimension_numbers = #tpu.dot_dimension_numbers<[1], [0], [0], [1], [0, 0, 1, 1], [], []>} : vector<7x96xf32>, vector<96x84xf32>, vector<7x84xf32> -> vector<7x84xf32>
    %143 = arith.addf %133, %142 : vector<7x84xf32>
    %c1_183 = arith.constant 1 : index
    %c2_184 = arith.constant 2 : index
    %c0_185 = arith.constant 0 : index
    %c0_186 = arith.constant 0 : index
    %144 = vector.load %arg2[%c1_183, %c2_184, %c0_185, %c0_186] : memref<2x5x96x84xf32, #tpu.memory_space<vmem>>, vector<1x1x96x84xf32>
    %145 = vector.shape_cast %144 : vector<1x1x96x84xf32> to vector<96x84xf32>
    %cst_187 = arith.constant dense<0.000000e+00> : vector<7x84xf32>
    %146 = tpu.matmul %139, %145, %cst_187 {dimension_numbers = #tpu.dot_dimension_numbers<[1], [0], [0], [1], [0, 0, 1, 1], [], []>} : vector<7x96xf32>, vector<96x84xf32>, vector<7x84xf32> -> vector<7x84xf32>
    %147 = arith.addf %137, %146 : vector<7x84xf32>
    %c0_188 = arith.constant 0 : index
    %c1_189 = arith.constant 1 : index
    %c1_190 = arith.constant 1 : index
    %c0_191 = arith.constant 0 : index
    %148 = vector.load %arg1[%c0_188, %c1_189, %c1_190, %c0_191] : memref<1x4x8x96xf32, #tpu.memory_space<vmem>>, vector<1x1x7x96xf32>
    %149 = vector.shape_cast %148 : vector<1x1x7x96xf32> to vector<7x96xf32>
    %c0_192 = arith.constant 0 : index
    %c3_193 = arith.constant 3 : index
    %c0_194 = arith.constant 0 : index
    %c0_195 = arith.constant 0 : index
    %150 = vector.load %arg2[%c0_192, %c3_193, %c0_194, %c0_195] : memref<2x5x96x84xf32, #tpu.memory_space<vmem>>, vector<1x1x96x84xf32>
    %151 = vector.shape_cast %150 : vector<1x1x96x84xf32> to vector<96x84xf32>
    %cst_196 = arith.constant dense<0.000000e+00> : vector<7x84xf32>
    %152 = tpu.matmul %149, %151, %cst_196 {dimension_numbers = #tpu.dot_dimension_numbers<[1], [0], [0], [1], [0, 0, 1, 1], [], []>} : vector<7x96xf32>, vector<96x84xf32>, vector<7x84xf32> -> vector<7x84xf32>
    %153 = arith.addf %143, %152 : vector<7x84xf32>
    %c1_197 = arith.constant 1 : index
    %c3_198 = arith.constant 3 : index
    %c0_199 = arith.constant 0 : index
    %c0_200 = arith.constant 0 : index
    %154 = vector.load %arg2[%c1_197, %c3_198, %c0_199, %c0_200] : memref<2x5x96x84xf32, #tpu.memory_space<vmem>>, vector<1x1x96x84xf32>
    %155 = vector.shape_cast %154 : vector<1x1x96x84xf32> to vector<96x84xf32>
    %cst_201 = arith.constant dense<0.000000e+00> : vector<7x84xf32>
    %156 = tpu.matmul %149, %155, %cst_201 {dimension_numbers = #tpu.dot_dimension_numbers<[1], [0], [0], [1], [0, 0, 1, 1], [], []>} : vector<7x96xf32>, vector<96x84xf32>, vector<7x84xf32> -> vector<7x84xf32>
    %157 = arith.addf %147, %156 : vector<7x84xf32>
    %c0_202 = arith.constant 0 : index
    %c2_203 = arith.constant 2 : index
    %c1_204 = arith.constant 1 : index
    %c0_205 = arith.constant 0 : index
    %158 = vector.load %arg1[%c0_202, %c2_203, %c1_204, %c0_205] : memref<1x4x8x96xf32, #tpu.memory_space<vmem>>, vector<1x1x7x96xf32>
    %159 = vector.shape_cast %158 : vector<1x1x7x96xf32> to vector<7x96xf32>
    %c0_206 = arith.constant 0 : index
    %c4_207 = arith.constant 4 : index
    %c0_208 = arith.constant 0 : index
    %c0_209 = arith.constant 0 : index
    %160 = vector.load %arg2[%c0_206, %c4_207, %c0_208, %c0_209] : memref<2x5x96x84xf32, #tpu.memory_space<vmem>>, vector<1x1x96x84xf32>
    %161 = vector.shape_cast %160 : vector<1x1x96x84xf32> to vector<96x84xf32>
    %cst_210 = arith.constant dense<0.000000e+00> : vector<7x84xf32>
    %162 = tpu.matmul %159, %161, %cst_210 {dimension_numbers = #tpu.dot_dimension_numbers<[1], [0], [0], [1], [0, 0, 1, 1], [], []>} : vector<7x96xf32>, vector<96x84xf32>, vector<7x84xf32> -> vector<7x84xf32>
    %163 = arith.addf %153, %162 : vector<7x84xf32>
    %c1_211 = arith.constant 1 : index
    %c4_212 = arith.constant 4 : index
    %c0_213 = arith.constant 0 : index
    %c0_214 = arith.constant 0 : index
    %164 = vector.load %arg2[%c1_211, %c4_212, %c0_213, %c0_214] : memref<2x5x96x84xf32, #tpu.memory_space<vmem>>, vector<1x1x96x84xf32>
    %165 = vector.shape_cast %164 : vector<1x1x96x84xf32> to vector<96x84xf32>
    %cst_215 = arith.constant dense<0.000000e+00> : vector<7x84xf32>
    %166 = tpu.matmul %159, %165, %cst_215 {dimension_numbers = #tpu.dot_dimension_numbers<[1], [0], [0], [1], [0, 0, 1, 1], [], []>} : vector<7x96xf32>, vector<96x84xf32>, vector<7x84xf32> -> vector<7x84xf32>
    %167 = arith.addf %157, %166 : vector<7x84xf32>
    %168 = arith.maximumf %163, %167 : vector<7x84xf32>
    %c0_216 = arith.constant 0 : index
    %c0_217 = arith.constant 0 : index
    %169 = vector.load %arg3[%c0_216, %c0_217] : memref<1x84xf32, #tpu.memory_space<vmem>>, vector<1x84xf32>
    %170 = vector.broadcast %169 : vector<1x84xf32> to vector<7x84xf32>
    %171 = arith.addf %168, %170 : vector<7x84xf32>
    %cst_218 = arith.constant 0.000000e+00 : f32
    %172 = vector.broadcast %cst_218 : f32 to vector<7x84xf32>
    %173 = arith.maximumf %171, %172 : vector<7x84xf32>
    %cst_219 = arith.constant 0.000000e+00 : f32
    %174 = vector.broadcast %cst_219 : f32 to vector<7x84xf32>
    %cst_220 = arith.constant 0.000000e+00 : f32
    %175 = vector.broadcast %cst_220 : f32 to vector<7x84xf32>
    %c0_221 = arith.constant 0 : index
    %c3_222 = arith.constant 3 : index
    %c0_223 = arith.constant 0 : index
    %c0_224 = arith.constant 0 : index
    %176 = vector.load %arg1[%c0_221, %c3_222, %c0_223, %c0_224] : memref<1x4x8x96xf32, #tpu.memory_space<vmem>>, vector<1x1x7x96xf32>
    %177 = vector.shape_cast %176 : vector<1x1x7x96xf32> to vector<7x96xf32>
    %c0_225 = arith.constant 0 : index
    %c0_226 = arith.constant 0 : index
    %c0_227 = arith.constant 0 : index
    %c0_228 = arith.constant 0 : index
    %178 = vector.load %arg2[%c0_225, %c0_226, %c0_227, %c0_228] : memref<2x5x96x84xf32, #tpu.memory_space<vmem>>, vector<1x1x96x84xf32>
    %179 = vector.shape_cast %178 : vector<1x1x96x84xf32> to vector<96x84xf32>
    %cst_229 = arith.constant dense<0.000000e+00> : vector<7x84xf32>
    %180 = tpu.matmul %177, %179, %cst_229 {dimension_numbers = #tpu.dot_dimension_numbers<[1], [0], [0], [1], [0, 0, 1, 1], [], []>} : vector<7x96xf32>, vector<96x84xf32>, vector<7x84xf32> -> vector<7x84xf32>
    %181 = arith.addf %174, %180 : vector<7x84xf32>
    %c1_230 = arith.constant 1 : index
    %c0_231 = arith.constant 0 : index
    %c0_232 = arith.constant 0 : index
    %c0_233 = arith.constant 0 : index
    %182 = vector.load %arg2[%c1_230, %c0_231, %c0_232, %c0_233] : memref<2x5x96x84xf32, #tpu.memory_space<vmem>>, vector<1x1x96x84xf32>
    %183 = vector.shape_cast %182 : vector<1x1x96x84xf32> to vector<96x84xf32>
    %cst_234 = arith.constant dense<0.000000e+00> : vector<7x84xf32>
    %184 = tpu.matmul %177, %183, %cst_234 {dimension_numbers = #tpu.dot_dimension_numbers<[1], [0], [0], [1], [0, 0, 1, 1], [], []>} : vector<7x96xf32>, vector<96x84xf32>, vector<7x84xf32> -> vector<7x84xf32>
    %185 = arith.addf %175, %184 : vector<7x84xf32>
    %c0_235 = arith.constant 0 : index
    %c0_236 = arith.constant 0 : index
    %c1_237 = arith.constant 1 : index
    %c0_238 = arith.constant 0 : index
    %186 = vector.load %arg1[%c0_235, %c0_236, %c1_237, %c0_238] : memref<1x4x8x96xf32, #tpu.memory_space<vmem>>, vector<1x1x7x96xf32>
    %187 = vector.shape_cast %186 : vector<1x1x7x96xf32> to vector<7x96xf32>
    %c0_239 = arith.constant 0 : index
    %c1_240 = arith.constant 1 : index
    %c0_241 = arith.constant 0 : index
    %c0_242 = arith.constant 0 : index
    %188 = vector.load %arg2[%c0_239, %c1_240, %c0_241, %c0_242] : memref<2x5x96x84xf32, #tpu.memory_space<vmem>>, vector<1x1x96x84xf32>
    %189 = vector.shape_cast %188 : vector<1x1x96x84xf32> to vector<96x84xf32>
    %cst_243 = arith.constant dense<0.000000e+00> : vector<7x84xf32>
    %190 = tpu.matmul %187, %189, %cst_243 {dimension_numbers = #tpu.dot_dimension_numbers<[1], [0], [0], [1], [0, 0, 1, 1], [], []>} : vector<7x96xf32>, vector<96x84xf32>, vector<7x84xf32> -> vector<7x84xf32>
    %191 = arith.addf %181, %190 : vector<7x84xf32>
    %c1_244 = arith.constant 1 : index
    %c1_245 = arith.constant 1 : index
    %c0_246 = arith.constant 0 : index
    %c0_247 = arith.constant 0 : index
    %192 = vector.load %arg2[%c1_244, %c1_245, %c0_246, %c0_247] : memref<2x5x96x84xf32, #tpu.memory_space<vmem>>, vector<1x1x96x84xf32>
    %193 = vector.shape_cast %192 : vector<1x1x96x84xf32> to vector<96x84xf32>
    %cst_248 = arith.constant dense<0.000000e+00> : vector<7x84xf32>
    %194 = tpu.matmul %187, %193, %cst_248 {dimension_numbers = #tpu.dot_dimension_numbers<[1], [0], [0], [1], [0, 0, 1, 1], [], []>} : vector<7x96xf32>, vector<96x84xf32>, vector<7x84xf32> -> vector<7x84xf32>
    %195 = arith.addf %185, %194 : vector<7x84xf32>
    %c0_249 = arith.constant 0 : index
    %c1_250 = arith.constant 1 : index
    %c1_251 = arith.constant 1 : index
    %c0_252 = arith.constant 0 : index
    %196 = vector.load %arg1[%c0_249, %c1_250, %c1_251, %c0_252] : memref<1x4x8x96xf32, #tpu.memory_space<vmem>>, vector<1x1x7x96xf32>
    %197 = vector.shape_cast %196 : vector<1x1x7x96xf32> to vector<7x96xf32>
    %c0_253 = arith.constant 0 : index
    %c2_254 = arith.constant 2 : index
    %c0_255 = arith.constant 0 : index
    %c0_256 = arith.constant 0 : index
    %198 = vector.load %arg2[%c0_253, %c2_254, %c0_255, %c0_256] : memref<2x5x96x84xf32, #tpu.memory_space<vmem>>, vector<1x1x96x84xf32>
    %199 = vector.shape_cast %198 : vector<1x1x96x84xf32> to vector<96x84xf32>
    %cst_257 = arith.constant dense<0.000000e+00> : vector<7x84xf32>
    %200 = tpu.matmul %197, %199, %cst_257 {dimension_numbers = #tpu.dot_dimension_numbers<[1], [0], [0], [1], [0, 0, 1, 1], [], []>} : vector<7x96xf32>, vector<96x84xf32>, vector<7x84xf32> -> vector<7x84xf32>
    %201 = arith.addf %191, %200 : vector<7x84xf32>
    %c1_258 = arith.constant 1 : index
    %c2_259 = arith.constant 2 : index
    %c0_260 = arith.constant 0 : index
    %c0_261 = arith.constant 0 : index
    %202 = vector.load %arg2[%c1_258, %c2_259, %c0_260, %c0_261] : memref<2x5x96x84xf32, #tpu.memory_space<vmem>>, vector<1x1x96x84xf32>
    %203 = vector.shape_cast %202 : vector<1x1x96x84xf32> to vector<96x84xf32>
    %cst_262 = arith.constant dense<0.000000e+00> : vector<7x84xf32>
    %204 = tpu.matmul %197, %203, %cst_262 {dimension_numbers = #tpu.dot_dimension_numbers<[1], [0], [0], [1], [0, 0, 1, 1], [], []>} : vector<7x96xf32>, vector<96x84xf32>, vector<7x84xf32> -> vector<7x84xf32>
    %205 = arith.addf %195, %204 : vector<7x84xf32>
    %c0_263 = arith.constant 0 : index
    %c2_264 = arith.constant 2 : index
    %c1_265 = arith.constant 1 : index
    %c0_266 = arith.constant 0 : index
    %206 = vector.load %arg1[%c0_263, %c2_264, %c1_265, %c0_266] : memref<1x4x8x96xf32, #tpu.memory_space<vmem>>, vector<1x1x7x96xf32>
    %207 = vector.shape_cast %206 : vector<1x1x7x96xf32> to vector<7x96xf32>
    %c0_267 = arith.constant 0 : index
    %c3_268 = arith.constant 3 : index
    %c0_269 = arith.constant 0 : index
    %c0_270 = arith.constant 0 : index
    %208 = vector.load %arg2[%c0_267, %c3_268, %c0_269, %c0_270] : memref<2x5x96x84xf32, #tpu.memory_space<vmem>>, vector<1x1x96x84xf32>
    %209 = vector.shape_cast %208 : vector<1x1x96x84xf32> to vector<96x84xf32>
    %cst_271 = arith.constant dense<0.000000e+00> : vector<7x84xf32>
    %210 = tpu.matmul %207, %209, %cst_271 {dimension_numbers = #tpu.dot_dimension_numbers<[1], [0], [0], [1], [0, 0, 1, 1], [], []>} : vector<7x96xf32>, vector<96x84xf32>, vector<7x84xf32> -> vector<7x84xf32>
    %211 = arith.addf %201, %210 : vector<7x84xf32>
    %c1_272 = arith.constant 1 : index
    %c3_273 = arith.constant 3 : index
    %c0_274 = arith.constant 0 : index
    %c0_275 = arith.constant 0 : index
    %212 = vector.load %arg2[%c1_272, %c3_273, %c0_274, %c0_275] : memref<2x5x96x84xf32, #tpu.memory_space<vmem>>, vector<1x1x96x84xf32>
    %213 = vector.shape_cast %212 : vector<1x1x96x84xf32> to vector<96x84xf32>
    %cst_276 = arith.constant dense<0.000000e+00> : vector<7x84xf32>
    %214 = tpu.matmul %207, %213, %cst_276 {dimension_numbers = #tpu.dot_dimension_numbers<[1], [0], [0], [1], [0, 0, 1, 1], [], []>} : vector<7x96xf32>, vector<96x84xf32>, vector<7x84xf32> -> vector<7x84xf32>
    %215 = arith.addf %205, %214 : vector<7x84xf32>
    %c0_277 = arith.constant 0 : index
    %c3_278 = arith.constant 3 : index
    %c1_279 = arith.constant 1 : index
    %c0_280 = arith.constant 0 : index
    %216 = vector.load %arg1[%c0_277, %c3_278, %c1_279, %c0_280] : memref<1x4x8x96xf32, #tpu.memory_space<vmem>>, vector<1x1x7x96xf32>
    %217 = vector.shape_cast %216 : vector<1x1x7x96xf32> to vector<7x96xf32>
    %c0_281 = arith.constant 0 : index
    %c4_282 = arith.constant 4 : index
    %c0_283 = arith.constant 0 : index
    %c0_284 = arith.constant 0 : index
    %218 = vector.load %arg2[%c0_281, %c4_282, %c0_283, %c0_284] : memref<2x5x96x84xf32, #tpu.memory_space<vmem>>, vector<1x1x96x84xf32>
    %219 = vector.shape_cast %218 : vector<1x1x96x84xf32> to vector<96x84xf32>
    %cst_285 = arith.constant dense<0.000000e+00> : vector<7x84xf32>
    %220 = tpu.matmul %217, %219, %cst_285 {dimension_numbers = #tpu.dot_dimension_numbers<[1], [0], [0], [1], [0, 0, 1, 1], [], []>} : vector<7x96xf32>, vector<96x84xf32>, vector<7x84xf32> -> vector<7x84xf32>
    %221 = arith.addf %211, %220 : vector<7x84xf32>
    %c1_286 = arith.constant 1 : index
    %c4_287 = arith.constant 4 : index
    %c0_288 = arith.constant 0 : index
    %c0_289 = arith.constant 0 : index
    %222 = vector.load %arg2[%c1_286, %c4_287, %c0_288, %c0_289] : memref<2x5x96x84xf32, #tpu.memory_space<vmem>>, vector<1x1x96x84xf32>
    %223 = vector.shape_cast %222 : vector<1x1x96x84xf32> to vector<96x84xf32>
    %cst_290 = arith.constant dense<0.000000e+00> : vector<7x84xf32>
    %224 = tpu.matmul %217, %223, %cst_290 {dimension_numbers = #tpu.dot_dimension_numbers<[1], [0], [0], [1], [0, 0, 1, 1], [], []>} : vector<7x96xf32>, vector<96x84xf32>, vector<7x84xf32> -> vector<7x84xf32>
    %225 = arith.addf %215, %224 : vector<7x84xf32>
    %226 = arith.maximumf %221, %225 : vector<7x84xf32>
    %c0_291 = arith.constant 0 : index
    %c0_292 = arith.constant 0 : index
    %227 = vector.load %arg3[%c0_291, %c0_292] : memref<1x84xf32, #tpu.memory_space<vmem>>, vector<1x84xf32>
    %228 = vector.broadcast %227 : vector<1x84xf32> to vector<7x84xf32>
    %229 = arith.addf %226, %228 : vector<7x84xf32>
    %cst_293 = arith.constant 0.000000e+00 : f32
    %230 = vector.broadcast %cst_293 : f32 to vector<7x84xf32>
    %231 = arith.maximumf %229, %230 : vector<7x84xf32>
    %232 = arith.maximumf %57, %115 : vector<7x84xf32>
    %233 = arith.maximumf %173, %231 : vector<7x84xf32>
    %cst_294 = arith.constant 0.000000e+00 : f32
    %234 = vector.broadcast %cst_294 : f32 to vector<5x80xf32>
    %cst_295 = arith.constant 0.000000e+00 : f32
    %235 = vector.broadcast %cst_295 : f32 to vector<5x80xf32>
    %236 = vector.extract_strided_slice %232 {offsets = [0, 0], sizes = [5, 84], strides = [1, 1]} : vector<7x84xf32> to vector<5x84xf32>
    %c0_296 = arith.constant 0 : index
    %c0_297 = arith.constant 0 : index
    %c0_298 = arith.constant 0 : index
    %c0_299 = arith.constant 0 : index
    %237 = vector.load %arg4[%c0_296, %c0_297, %c0_298, %c0_299] : memref<2x5x84x80xf32, #tpu.memory_space<vmem>>, vector<1x1x84x80xf32>
    %238 = vector.shape_cast %237 : vector<1x1x84x80xf32> to vector<84x80xf32>
    %cst_300 = arith.constant dense<0.000000e+00> : vector<5x80xf32>
    %239 = tpu.matmul %236, %238, %cst_300 {dimension_numbers = #tpu.dot_dimension_numbers<[1], [0], [0], [1], [0, 0, 1, 1], [], []>} : vector<5x84xf32>, vector<84x80xf32>, vector<5x80xf32> -> vector<5x80xf32>
    %240 = arith.addf %234, %239 : vector<5x80xf32>
    %c1_301 = arith.constant 1 : index
    %c0_302 = arith.constant 0 : index
    %c0_303 = arith.constant 0 : index
    %c0_304 = arith.constant 0 : index
    %241 = vector.load %arg4[%c1_301, %c0_302, %c0_303, %c0_304] : memref<2x5x84x80xf32, #tpu.memory_space<vmem>>, vector<1x1x84x80xf32>
    %242 = vector.shape_cast %241 : vector<1x1x84x80xf32> to vector<84x80xf32>
    %cst_305 = arith.constant dense<0.000000e+00> : vector<5x80xf32>
    %243 = tpu.matmul %236, %242, %cst_305 {dimension_numbers = #tpu.dot_dimension_numbers<[1], [0], [0], [1], [0, 0, 1, 1], [], []>} : vector<5x84xf32>, vector<84x80xf32>, vector<5x80xf32> -> vector<5x80xf32>
    %244 = arith.addf %235, %243 : vector<5x80xf32>
    %245 = vector.extract_strided_slice %233 {offsets = [0, 0], sizes = [5, 84], strides = [1, 1]} : vector<7x84xf32> to vector<5x84xf32>
    %c0_306 = arith.constant 0 : index
    %c1_307 = arith.constant 1 : index
    %c0_308 = arith.constant 0 : index
    %c0_309 = arith.constant 0 : index
    %246 = vector.load %arg4[%c0_306, %c1_307, %c0_308, %c0_309] : memref<2x5x84x80xf32, #tpu.memory_space<vmem>>, vector<1x1x84x80xf32>
    %247 = vector.shape_cast %246 : vector<1x1x84x80xf32> to vector<84x80xf32>
    %cst_310 = arith.constant dense<0.000000e+00> : vector<5x80xf32>
    %248 = tpu.matmul %245, %247, %cst_310 {dimension_numbers = #tpu.dot_dimension_numbers<[1], [0], [0], [1], [0, 0, 1, 1], [], []>} : vector<5x84xf32>, vector<84x80xf32>, vector<5x80xf32> -> vector<5x80xf32>
    %249 = arith.addf %240, %248 : vector<5x80xf32>
    %c1_311 = arith.constant 1 : index
    %c1_312 = arith.constant 1 : index
    %c0_313 = arith.constant 0 : index
    %c0_314 = arith.constant 0 : index
    %250 = vector.load %arg4[%c1_311, %c1_312, %c0_313, %c0_314] : memref<2x5x84x80xf32, #tpu.memory_space<vmem>>, vector<1x1x84x80xf32>
    %251 = vector.shape_cast %250 : vector<1x1x84x80xf32> to vector<84x80xf32>
    %cst_315 = arith.constant dense<0.000000e+00> : vector<5x80xf32>
    %252 = tpu.matmul %245, %251, %cst_315 {dimension_numbers = #tpu.dot_dimension_numbers<[1], [0], [0], [1], [0, 0, 1, 1], [], []>} : vector<5x84xf32>, vector<84x80xf32>, vector<5x80xf32> -> vector<5x80xf32>
    %253 = arith.addf %244, %252 : vector<5x80xf32>
    %254 = vector.extract_strided_slice %232 {offsets = [1, 0], sizes = [5, 84], strides = [1, 1]} : vector<7x84xf32> to vector<5x84xf32>
    %c0_316 = arith.constant 0 : index
    %c2_317 = arith.constant 2 : index
    %c0_318 = arith.constant 0 : index
    %c0_319 = arith.constant 0 : index
    %255 = vector.load %arg4[%c0_316, %c2_317, %c0_318, %c0_319] : memref<2x5x84x80xf32, #tpu.memory_space<vmem>>, vector<1x1x84x80xf32>
    %256 = vector.shape_cast %255 : vector<1x1x84x80xf32> to vector<84x80xf32>
    %cst_320 = arith.constant dense<0.000000e+00> : vector<5x80xf32>
    %257 = tpu.matmul %254, %256, %cst_320 {dimension_numbers = #tpu.dot_dimension_numbers<[1], [0], [0], [1], [0, 0, 1, 1], [], []>} : vector<5x84xf32>, vector<84x80xf32>, vector<5x80xf32> -> vector<5x80xf32>
    %258 = arith.addf %249, %257 : vector<5x80xf32>
    %c1_321 = arith.constant 1 : index
    %c2_322 = arith.constant 2 : index
    %c0_323 = arith.constant 0 : index
    %c0_324 = arith.constant 0 : index
    %259 = vector.load %arg4[%c1_321, %c2_322, %c0_323, %c0_324] : memref<2x5x84x80xf32, #tpu.memory_space<vmem>>, vector<1x1x84x80xf32>
    %260 = vector.shape_cast %259 : vector<1x1x84x80xf32> to vector<84x80xf32>
    %cst_325 = arith.constant dense<0.000000e+00> : vector<5x80xf32>
    %261 = tpu.matmul %254, %260, %cst_325 {dimension_numbers = #tpu.dot_dimension_numbers<[1], [0], [0], [1], [0, 0, 1, 1], [], []>} : vector<5x84xf32>, vector<84x80xf32>, vector<5x80xf32> -> vector<5x80xf32>
    %262 = arith.addf %253, %261 : vector<5x80xf32>
    %263 = vector.extract_strided_slice %233 {offsets = [1, 0], sizes = [5, 84], strides = [1, 1]} : vector<7x84xf32> to vector<5x84xf32>
    %c0_326 = arith.constant 0 : index
    %c3_327 = arith.constant 3 : index
    %c0_328 = arith.constant 0 : index
    %c0_329 = arith.constant 0 : index
    %264 = vector.load %arg4[%c0_326, %c3_327, %c0_328, %c0_329] : memref<2x5x84x80xf32, #tpu.memory_space<vmem>>, vector<1x1x84x80xf32>
    %265 = vector.shape_cast %264 : vector<1x1x84x80xf32> to vector<84x80xf32>
    %cst_330 = arith.constant dense<0.000000e+00> : vector<5x80xf32>
    %266 = tpu.matmul %263, %265, %cst_330 {dimension_numbers = #tpu.dot_dimension_numbers<[1], [0], [0], [1], [0, 0, 1, 1], [], []>} : vector<5x84xf32>, vector<84x80xf32>, vector<5x80xf32> -> vector<5x80xf32>
    %267 = arith.addf %258, %266 : vector<5x80xf32>
    %c1_331 = arith.constant 1 : index
    %c3_332 = arith.constant 3 : index
    %c0_333 = arith.constant 0 : index
    %c0_334 = arith.constant 0 : index
    %268 = vector.load %arg4[%c1_331, %c3_332, %c0_333, %c0_334] : memref<2x5x84x80xf32, #tpu.memory_space<vmem>>, vector<1x1x84x80xf32>
    %269 = vector.shape_cast %268 : vector<1x1x84x80xf32> to vector<84x80xf32>
    %cst_335 = arith.constant dense<0.000000e+00> : vector<5x80xf32>
    %270 = tpu.matmul %263, %269, %cst_335 {dimension_numbers = #tpu.dot_dimension_numbers<[1], [0], [0], [1], [0, 0, 1, 1], [], []>} : vector<5x84xf32>, vector<84x80xf32>, vector<5x80xf32> -> vector<5x80xf32>
    %271 = arith.addf %262, %270 : vector<5x80xf32>
    %272 = vector.extract_strided_slice %232 {offsets = [2, 0], sizes = [5, 84], strides = [1, 1]} : vector<7x84xf32> to vector<5x84xf32>
    %c0_336 = arith.constant 0 : index
    %c4_337 = arith.constant 4 : index
    %c0_338 = arith.constant 0 : index
    %c0_339 = arith.constant 0 : index
    %273 = vector.load %arg4[%c0_336, %c4_337, %c0_338, %c0_339] : memref<2x5x84x80xf32, #tpu.memory_space<vmem>>, vector<1x1x84x80xf32>
    %274 = vector.shape_cast %273 : vector<1x1x84x80xf32> to vector<84x80xf32>
    %cst_340 = arith.constant dense<0.000000e+00> : vector<5x80xf32>
    %275 = tpu.matmul %272, %274, %cst_340 {dimension_numbers = #tpu.dot_dimension_numbers<[1], [0], [0], [1], [0, 0, 1, 1], [], []>} : vector<5x84xf32>, vector<84x80xf32>, vector<5x80xf32> -> vector<5x80xf32>
    %276 = arith.addf %267, %275 : vector<5x80xf32>
    %c1_341 = arith.constant 1 : index
    %c4_342 = arith.constant 4 : index
    %c0_343 = arith.constant 0 : index
    %c0_344 = arith.constant 0 : index
    %277 = vector.load %arg4[%c1_341, %c4_342, %c0_343, %c0_344] : memref<2x5x84x80xf32, #tpu.memory_space<vmem>>, vector<1x1x84x80xf32>
    %278 = vector.shape_cast %277 : vector<1x1x84x80xf32> to vector<84x80xf32>
    %cst_345 = arith.constant dense<0.000000e+00> : vector<5x80xf32>
    %279 = tpu.matmul %272, %278, %cst_345 {dimension_numbers = #tpu.dot_dimension_numbers<[1], [0], [0], [1], [0, 0, 1, 1], [], []>} : vector<5x84xf32>, vector<84x80xf32>, vector<5x80xf32> -> vector<5x80xf32>
    %280 = arith.addf %271, %279 : vector<5x80xf32>
    %281 = arith.maximumf %276, %280 : vector<5x80xf32>
    %c0_346 = arith.constant 0 : index
    %c0_347 = arith.constant 0 : index
    %282 = vector.load %arg5[%c0_346, %c0_347] : memref<1x80xf32, #tpu.memory_space<vmem>>, vector<1x80xf32>
    %283 = vector.broadcast %282 : vector<1x80xf32> to vector<5x80xf32>
    %284 = arith.addf %281, %283 : vector<5x80xf32>
    %cst_348 = arith.constant 0.000000e+00 : f32
    %285 = vector.broadcast %cst_348 : f32 to vector<5x80xf32>
    %286 = arith.maximumf %284, %285 : vector<5x80xf32>
    %cst_349 = arith.constant 0.000000e+00 : f32
    %287 = vector.broadcast %cst_349 : f32 to vector<5x80xf32>
    %cst_350 = arith.constant 0.000000e+00 : f32
    %288 = vector.broadcast %cst_350 : f32 to vector<5x80xf32>
    %289 = vector.extract_strided_slice %233 {offsets = [0, 0], sizes = [5, 84], strides = [1, 1]} : vector<7x84xf32> to vector<5x84xf32>
    %c0_351 = arith.constant 0 : index
    %c0_352 = arith.constant 0 : index
    %c0_353 = arith.constant 0 : index
    %c0_354 = arith.constant 0 : index
    %290 = vector.load %arg4[%c0_351, %c0_352, %c0_353, %c0_354] : memref<2x5x84x80xf32, #tpu.memory_space<vmem>>, vector<1x1x84x80xf32>
    %291 = vector.shape_cast %290 : vector<1x1x84x80xf32> to vector<84x80xf32>
    %cst_355 = arith.constant dense<0.000000e+00> : vector<5x80xf32>
    %292 = tpu.matmul %289, %291, %cst_355 {dimension_numbers = #tpu.dot_dimension_numbers<[1], [0], [0], [1], [0, 0, 1, 1], [], []>} : vector<5x84xf32>, vector<84x80xf32>, vector<5x80xf32> -> vector<5x80xf32>
    %293 = arith.addf %287, %292 : vector<5x80xf32>
    %c1_356 = arith.constant 1 : index
    %c0_357 = arith.constant 0 : index
    %c0_358 = arith.constant 0 : index
    %c0_359 = arith.constant 0 : index
    %294 = vector.load %arg4[%c1_356, %c0_357, %c0_358, %c0_359] : memref<2x5x84x80xf32, #tpu.memory_space<vmem>>, vector<1x1x84x80xf32>
    %295 = vector.shape_cast %294 : vector<1x1x84x80xf32> to vector<84x80xf32>
    %cst_360 = arith.constant dense<0.000000e+00> : vector<5x80xf32>
    %296 = tpu.matmul %289, %295, %cst_360 {dimension_numbers = #tpu.dot_dimension_numbers<[1], [0], [0], [1], [0, 0, 1, 1], [], []>} : vector<5x84xf32>, vector<84x80xf32>, vector<5x80xf32> -> vector<5x80xf32>
    %297 = arith.addf %288, %296 : vector<5x80xf32>
    %298 = vector.extract_strided_slice %232 {offsets = [1, 0], sizes = [5, 84], strides = [1, 1]} : vector<7x84xf32> to vector<5x84xf32>
    %c0_361 = arith.constant 0 : index
    %c1_362 = arith.constant 1 : index
    %c0_363 = arith.constant 0 : index
    %c0_364 = arith.constant 0 : index
    %299 = vector.load %arg4[%c0_361, %c1_362, %c0_363, %c0_364] : memref<2x5x84x80xf32, #tpu.memory_space<vmem>>, vector<1x1x84x80xf32>
    %300 = vector.shape_cast %299 : vector<1x1x84x80xf32> to vector<84x80xf32>
    %cst_365 = arith.constant dense<0.000000e+00> : vector<5x80xf32>
    %301 = tpu.matmul %298, %300, %cst_365 {dimension_numbers = #tpu.dot_dimension_numbers<[1], [0], [0], [1], [0, 0, 1, 1], [], []>} : vector<5x84xf32>, vector<84x80xf32>, vector<5x80xf32> -> vector<5x80xf32>
    %302 = arith.addf %293, %301 : vector<5x80xf32>
    %c1_366 = arith.constant 1 : index
    %c1_367 = arith.constant 1 : index
    %c0_368 = arith.constant 0 : index
    %c0_369 = arith.constant 0 : index
    %303 = vector.load %arg4[%c1_366, %c1_367, %c0_368, %c0_369] : memref<2x5x84x80xf32, #tpu.memory_space<vmem>>, vector<1x1x84x80xf32>
    %304 = vector.shape_cast %303 : vector<1x1x84x80xf32> to vector<84x80xf32>
    %cst_370 = arith.constant dense<0.000000e+00> : vector<5x80xf32>
    %305 = tpu.matmul %298, %304, %cst_370 {dimension_numbers = #tpu.dot_dimension_numbers<[1], [0], [0], [1], [0, 0, 1, 1], [], []>} : vector<5x84xf32>, vector<84x80xf32>, vector<5x80xf32> -> vector<5x80xf32>
    %306 = arith.addf %297, %305 : vector<5x80xf32>
    %307 = vector.extract_strided_slice %233 {offsets = [1, 0], sizes = [5, 84], strides = [1, 1]} : vector<7x84xf32> to vector<5x84xf32>
    %c0_371 = arith.constant 0 : index
    %c2_372 = arith.constant 2 : index
    %c0_373 = arith.constant 0 : index
    %c0_374 = arith.constant 0 : index
    %308 = vector.load %arg4[%c0_371, %c2_372, %c0_373, %c0_374] : memref<2x5x84x80xf32, #tpu.memory_space<vmem>>, vector<1x1x84x80xf32>
    %309 = vector.shape_cast %308 : vector<1x1x84x80xf32> to vector<84x80xf32>
    %cst_375 = arith.constant dense<0.000000e+00> : vector<5x80xf32>
    %310 = tpu.matmul %307, %309, %cst_375 {dimension_numbers = #tpu.dot_dimension_numbers<[1], [0], [0], [1], [0, 0, 1, 1], [], []>} : vector<5x84xf32>, vector<84x80xf32>, vector<5x80xf32> -> vector<5x80xf32>
    %311 = arith.addf %302, %310 : vector<5x80xf32>
    %c1_376 = arith.constant 1 : index
    %c2_377 = arith.constant 2 : index
    %c0_378 = arith.constant 0 : index
    %c0_379 = arith.constant 0 : index
    %312 = vector.load %arg4[%c1_376, %c2_377, %c0_378, %c0_379] : memref<2x5x84x80xf32, #tpu.memory_space<vmem>>, vector<1x1x84x80xf32>
    %313 = vector.shape_cast %312 : vector<1x1x84x80xf32> to vector<84x80xf32>
    %cst_380 = arith.constant dense<0.000000e+00> : vector<5x80xf32>
    %314 = tpu.matmul %307, %313, %cst_380 {dimension_numbers = #tpu.dot_dimension_numbers<[1], [0], [0], [1], [0, 0, 1, 1], [], []>} : vector<5x84xf32>, vector<84x80xf32>, vector<5x80xf32> -> vector<5x80xf32>
    %315 = arith.addf %306, %314 : vector<5x80xf32>
    %316 = vector.extract_strided_slice %232 {offsets = [2, 0], sizes = [5, 84], strides = [1, 1]} : vector<7x84xf32> to vector<5x84xf32>
    %c0_381 = arith.constant 0 : index
    %c3_382 = arith.constant 3 : index
    %c0_383 = arith.constant 0 : index
    %c0_384 = arith.constant 0 : index
    %317 = vector.load %arg4[%c0_381, %c3_382, %c0_383, %c0_384] : memref<2x5x84x80xf32, #tpu.memory_space<vmem>>, vector<1x1x84x80xf32>
    %318 = vector.shape_cast %317 : vector<1x1x84x80xf32> to vector<84x80xf32>
    %cst_385 = arith.constant dense<0.000000e+00> : vector<5x80xf32>
    %319 = tpu.matmul %316, %318, %cst_385 {dimension_numbers = #tpu.dot_dimension_numbers<[1], [0], [0], [1], [0, 0, 1, 1], [], []>} : vector<5x84xf32>, vector<84x80xf32>, vector<5x80xf32> -> vector<5x80xf32>
    %320 = arith.addf %311, %319 : vector<5x80xf32>
    %c1_386 = arith.constant 1 : index
    %c3_387 = arith.constant 3 : index
    %c0_388 = arith.constant 0 : index
    %c0_389 = arith.constant 0 : index
    %321 = vector.load %arg4[%c1_386, %c3_387, %c0_388, %c0_389] : memref<2x5x84x80xf32, #tpu.memory_space<vmem>>, vector<1x1x84x80xf32>
    %322 = vector.shape_cast %321 : vector<1x1x84x80xf32> to vector<84x80xf32>
    %cst_390 = arith.constant dense<0.000000e+00> : vector<5x80xf32>
    %323 = tpu.matmul %316, %322, %cst_390 {dimension_numbers = #tpu.dot_dimension_numbers<[1], [0], [0], [1], [0, 0, 1, 1], [], []>} : vector<5x84xf32>, vector<84x80xf32>, vector<5x80xf32> -> vector<5x80xf32>
    %324 = arith.addf %315, %323 : vector<5x80xf32>
    %325 = vector.extract_strided_slice %233 {offsets = [2, 0], sizes = [5, 84], strides = [1, 1]} : vector<7x84xf32> to vector<5x84xf32>
    %c0_391 = arith.constant 0 : index
    %c4_392 = arith.constant 4 : index
    %c0_393 = arith.constant 0 : index
    %c0_394 = arith.constant 0 : index
    %326 = vector.load %arg4[%c0_391, %c4_392, %c0_393, %c0_394] : memref<2x5x84x80xf32, #tpu.memory_space<vmem>>, vector<1x1x84x80xf32>
    %327 = vector.shape_cast %326 : vector<1x1x84x80xf32> to vector<84x80xf32>
    %cst_395 = arith.constant dense<0.000000e+00> : vector<5x80xf32>
    %328 = tpu.matmul %325, %327, %cst_395 {dimension_numbers = #tpu.dot_dimension_numbers<[1], [0], [0], [1], [0, 0, 1, 1], [], []>} : vector<5x84xf32>, vector<84x80xf32>, vector<5x80xf32> -> vector<5x80xf32>
    %329 = arith.addf %320, %328 : vector<5x80xf32>
    %c1_396 = arith.constant 1 : index
    %c4_397 = arith.constant 4 : index
    %c0_398 = arith.constant 0 : index
    %c0_399 = arith.constant 0 : index
    %330 = vector.load %arg4[%c1_396, %c4_397, %c0_398, %c0_399] : memref<2x5x84x80xf32, #tpu.memory_space<vmem>>, vector<1x1x84x80xf32>
    %331 = vector.shape_cast %330 : vector<1x1x84x80xf32> to vector<84x80xf32>
    %cst_400 = arith.constant dense<0.000000e+00> : vector<5x80xf32>
    %332 = tpu.matmul %325, %331, %cst_400 {dimension_numbers = #tpu.dot_dimension_numbers<[1], [0], [0], [1], [0, 0, 1, 1], [], []>} : vector<5x84xf32>, vector<84x80xf32>, vector<5x80xf32> -> vector<5x80xf32>
    %333 = arith.addf %324, %332 : vector<5x80xf32>
    %334 = arith.maximumf %329, %333 : vector<5x80xf32>
    %c0_401 = arith.constant 0 : index
    %c0_402 = arith.constant 0 : index
    %335 = vector.load %arg5[%c0_401, %c0_402] : memref<1x80xf32, #tpu.memory_space<vmem>>, vector<1x80xf32>
    %336 = vector.broadcast %335 : vector<1x80xf32> to vector<5x80xf32>
    %337 = arith.addf %334, %336 : vector<5x80xf32>
    %cst_403 = arith.constant 0.000000e+00 : f32
    %338 = vector.broadcast %cst_403 : f32 to vector<5x80xf32>
    %339 = arith.maximumf %337, %338 : vector<5x80xf32>
    %340 = arith.maximumf %286, %339 : vector<5x80xf32>
    %c0_404 = arith.constant 0 : index
    %c0_405 = arith.constant 0 : index
    %341 = vector.load %arg7[%c0_404, %c0_405] : memref<1x120xf32, #tpu.memory_space<vmem>>, vector<1x120xf32>
    %342 = vector.extract_strided_slice %340 {offsets = [0, 0], sizes = [1, 80], strides = [1, 1]} : vector<5x80xf32> to vector<1x80xf32>
    %c0_406 = arith.constant 0 : index
    %c0_407 = arith.constant 0 : index
    %c0_408 = arith.constant 0 : index
    %343 = vector.load %arg6[%c0_406, %c0_407, %c0_408] : memref<5x80x120xf32, #tpu.memory_space<vmem>>, vector<1x80x120xf32>
    %344 = vector.shape_cast %343 : vector<1x80x120xf32> to vector<80x120xf32>
    %cst_409 = arith.constant dense<0.000000e+00> : vector<1x120xf32>
    %345 = tpu.matmul %342, %344, %cst_409 {dimension_numbers = #tpu.dot_dimension_numbers<[1], [0], [0], [1], [0, 0, 1, 1], [], []>} : vector<1x80xf32>, vector<80x120xf32>, vector<1x120xf32> -> vector<1x120xf32>
    %346 = arith.addf %341, %345 : vector<1x120xf32>
    %347 = vector.extract_strided_slice %340 {offsets = [1, 0], sizes = [1, 80], strides = [1, 1]} : vector<5x80xf32> to vector<1x80xf32>
    %c1_410 = arith.constant 1 : index
    %c0_411 = arith.constant 0 : index
    %c0_412 = arith.constant 0 : index
    %348 = vector.load %arg6[%c1_410, %c0_411, %c0_412] : memref<5x80x120xf32, #tpu.memory_space<vmem>>, vector<1x80x120xf32>
    %349 = vector.shape_cast %348 : vector<1x80x120xf32> to vector<80x120xf32>
    %cst_413 = arith.constant dense<0.000000e+00> : vector<1x120xf32>
    %350 = tpu.matmul %347, %349, %cst_413 {dimension_numbers = #tpu.dot_dimension_numbers<[1], [0], [0], [1], [0, 0, 1, 1], [], []>} : vector<1x80xf32>, vector<80x120xf32>, vector<1x120xf32> -> vector<1x120xf32>
    %351 = arith.addf %346, %350 : vector<1x120xf32>
    %352 = vector.extract_strided_slice %340 {offsets = [2, 0], sizes = [1, 80], strides = [1, 1]} : vector<5x80xf32> to vector<1x80xf32>
    %c2_414 = arith.constant 2 : index
    %c0_415 = arith.constant 0 : index
    %c0_416 = arith.constant 0 : index
    %353 = vector.load %arg6[%c2_414, %c0_415, %c0_416] : memref<5x80x120xf32, #tpu.memory_space<vmem>>, vector<1x80x120xf32>
    %354 = vector.shape_cast %353 : vector<1x80x120xf32> to vector<80x120xf32>
    %cst_417 = arith.constant dense<0.000000e+00> : vector<1x120xf32>
    %355 = tpu.matmul %352, %354, %cst_417 {dimension_numbers = #tpu.dot_dimension_numbers<[1], [0], [0], [1], [0, 0, 1, 1], [], []>} : vector<1x80xf32>, vector<80x120xf32>, vector<1x120xf32> -> vector<1x120xf32>
    %356 = arith.addf %351, %355 : vector<1x120xf32>
    %357 = vector.extract_strided_slice %340 {offsets = [3, 0], sizes = [1, 80], strides = [1, 1]} : vector<5x80xf32> to vector<1x80xf32>
    %c3_418 = arith.constant 3 : index
    %c0_419 = arith.constant 0 : index
    %c0_420 = arith.constant 0 : index
    %358 = vector.load %arg6[%c3_418, %c0_419, %c0_420] : memref<5x80x120xf32, #tpu.memory_space<vmem>>, vector<1x80x120xf32>
    %359 = vector.shape_cast %358 : vector<1x80x120xf32> to vector<80x120xf32>
    %cst_421 = arith.constant dense<0.000000e+00> : vector<1x120xf32>
    %360 = tpu.matmul %357, %359, %cst_421 {dimension_numbers = #tpu.dot_dimension_numbers<[1], [0], [0], [1], [0, 0, 1, 1], [], []>} : vector<1x80xf32>, vector<80x120xf32>, vector<1x120xf32> -> vector<1x120xf32>
    %361 = arith.addf %356, %360 : vector<1x120xf32>
    %362 = vector.extract_strided_slice %340 {offsets = [4, 0], sizes = [1, 80], strides = [1, 1]} : vector<5x80xf32> to vector<1x80xf32>
    %c4_422 = arith.constant 4 : index
    %c0_423 = arith.constant 0 : index
    %c0_424 = arith.constant 0 : index
    %363 = vector.load %arg6[%c4_422, %c0_423, %c0_424] : memref<5x80x120xf32, #tpu.memory_space<vmem>>, vector<1x80x120xf32>
    %364 = vector.shape_cast %363 : vector<1x80x120xf32> to vector<80x120xf32>
    %cst_425 = arith.constant dense<0.000000e+00> : vector<1x120xf32>
    %365 = tpu.matmul %362, %364, %cst_425 {dimension_numbers = #tpu.dot_dimension_numbers<[1], [0], [0], [1], [0, 0, 1, 1], [], []>} : vector<1x80xf32>, vector<80x120xf32>, vector<1x120xf32> -> vector<1x120xf32>
    %366 = arith.addf %361, %365 : vector<1x120xf32>
    %cst_426 = arith.constant 0.000000e+00 : f32
    %367 = vector.broadcast %cst_426 : f32 to vector<1x120xf32>
    %368 = arith.maximumf %366, %367 : vector<1x120xf32>
    %c0_427 = arith.constant 0 : index
    %c0_428 = arith.constant 0 : index
    %369 = vector.load %arg8[%c0_427, %c0_428] : memref<120x84xf32, #tpu.memory_space<vmem>>, vector<120x84xf32>
    %cst_429 = arith.constant dense<0.000000e+00> : vector<1x84xf32>
    %370 = tpu.matmul %368, %369, %cst_429 {dimension_numbers = #tpu.dot_dimension_numbers<[1], [0], [0], [1], [0, 0, 1, 1], [], []>} : vector<1x120xf32>, vector<120x84xf32>, vector<1x84xf32> -> vector<1x84xf32>
    %c0_430 = arith.constant 0 : index
    %c0_431 = arith.constant 0 : index
    %371 = vector.load %arg9[%c0_430, %c0_431] : memref<1x84xf32, #tpu.memory_space<vmem>>, vector<1x84xf32>
    %372 = arith.addf %370, %371 : vector<1x84xf32>
    %cst_432 = arith.constant 0.000000e+00 : f32
    %373 = vector.broadcast %cst_432 : f32 to vector<1x84xf32>
    %374 = arith.maximumf %372, %373 : vector<1x84xf32>
    %c0_433 = arith.constant 0 : index
    %c0_434 = arith.constant 0 : index
    %375 = vector.load %arg10[%c0_433, %c0_434] : memref<84x128xf32, #tpu.memory_space<vmem>>, vector<84x128xf32>
    %cst_435 = arith.constant dense<0.000000e+00> : vector<1x128xf32>
    %376 = tpu.matmul %374, %375, %cst_435 {dimension_numbers = #tpu.dot_dimension_numbers<[1], [0], [0], [1], [0, 0, 1, 1], [], []>} : vector<1x84xf32>, vector<84x128xf32>, vector<1x128xf32> -> vector<1x128xf32>
    %c0_436 = arith.constant 0 : index
    %c0_437 = arith.constant 0 : index
    %377 = vector.load %arg11[%c0_436, %c0_437] : memref<1x128xf32, #tpu.memory_space<vmem>>, vector<1x128xf32>
    %378 = arith.addf %376, %377 : vector<1x128xf32>
    %c0_438 = arith.constant 0 : index
    %c0_439 = arith.constant 0 : index
    %c0_440 = arith.constant 0 : index
    %379 = vector.load %arg12[%c0_438, %c0_439, %c0_440] : memref<1x1x128xf32, #tpu.memory_space<vmem>>, vector<1x1x128xf32>
    %380 = vector.shape_cast %379 : vector<1x1x128xf32> to vector<1x128xf32>
    %381 = vector.shape_cast %378 : vector<1x128xf32> to vector<1x1x128xf32>
    tpu.vector_store %arg12[%c0_438, %c0_439, %c0_440], %381 {strides = array<i32>} : memref<1x1x128xf32, #tpu.memory_space<vmem>>, vector<1x1x128xf32>,
    return
  }
  func.func @transform_0(%arg0: i32) -> (i32, i32, i32, i32) {
    %c0_i32 = arith.constant 0 : i32
    %c0_i32_0 = arith.constant 0 : i32
    %c0_i32_1 = arith.constant 0 : i32
    %c0_i32_2 = arith.constant 0 : i32
    return %arg0, %c0_i32, %c0_i32_0, %c0_i32_1 : i32, i32, i32, i32
  }
  func.func @transform_1(%arg0: i32) -> (i32, i32, i32, i32) {
    %c0_i32 = arith.constant 0 : i32
    %c0_i32_0 = arith.constant 0 : i32
    %c0_i32_1 = arith.constant 0 : i32
    %c0_i32_2 = arith.constant 0 : i32
    %c0_i32_3 = arith.constant 0 : i32
    return %c0_i32, %c0_i32_0, %c0_i32_1, %c0_i32_2 : i32, i32, i32, i32
  }
  func.func @transform_2(%arg0: i32) -> (i32, i32) {
    %c0_i32 = arith.constant 0 : i32
    %c0_i32_0 = arith.constant 0 : i32
    %c0_i32_1 = arith.constant 0 : i32
    return %c0_i32, %c0_i32_0 : i32, i32
  }
  func.func @transform_3(%arg0: i32) -> (i32, i32, i32, i32) {
    %c0_i32 = arith.constant 0 : i32
    %c0_i32_0 = arith.constant 0 : i32
    %c0_i32_1 = arith.constant 0 : i32
    %c0_i32_2 = arith.constant 0 : i32
    %c0_i32_3 = arith.constant 0 : i32
    return %c0_i32, %c0_i32_0, %c0_i32_1, %c0_i32_2 : i32, i32, i32, i32
  }
  func.func @transform_4(%arg0: i32) -> (i32, i32) {
    %c0_i32 = arith.constant 0 : i32
    %c0_i32_0 = arith.constant 0 : i32
    %c0_i32_1 = arith.constant 0 : i32
    return %c0_i32, %c0_i32_0 : i32, i32
  }
  func.func @transform_5(%arg0: i32) -> (i32, i32, i32) {
    %c0_i32 = arith.constant 0 : i32
    %c0_i32_0 = arith.constant 0 : i32
    %c0_i32_1 = arith.constant 0 : i32
    %c0_i32_2 = arith.constant 0 : i32
    return %c0_i32, %c0_i32_0, %c0_i32_1 : i32, i32, i32
  }
  func.func @transform_6(%arg0: i32) -> (i32, i32) {
    %c0_i32 = arith.constant 0 : i32
    %c0_i32_0 = arith.constant 0 : i32
    %c0_i32_1 = arith.constant 0 : i32
    return %c0_i32, %c0_i32_0 : i32, i32
  }
  func.func @transform_7(%arg0: i32) -> (i32, i32) {
    %c0_i32 = arith.constant 0 : i32
    %c0_i32_0 = arith.constant 0 : i32
    %c0_i32_1 = arith.constant 0 : i32
    return %c0_i32, %c0_i32_0 : i32, i32
  }
  func.func @transform_8(%arg0: i32) -> (i32, i32) {
    %c0_i32 = arith.constant 0 : i32
    %c0_i32_0 = arith.constant 0 : i32
    %c0_i32_1 = arith.constant 0 : i32
    return %c0_i32, %c0_i32_0 : i32, i32
  }
  func.func @transform_9(%arg0: i32) -> (i32, i32) {
    %c0_i32 = arith.constant 0 : i32
    %c0_i32_0 = arith.constant 0 : i32
    %c0_i32_1 = arith.constant 0 : i32
    return %c0_i32, %c0_i32_0 : i32, i32
  }
  func.func @transform_10(%arg0: i32) -> (i32, i32) {
    %c0_i32 = arith.constant 0 : i32
    %c0_i32_0 = arith.constant 0 : i32
    %c0_i32_1 = arith.constant 0 : i32
    return %c0_i32, %c0_i32_0 : i32, i32
  }
  func.func @transform_11(%arg0: i32) -> (i32, i32, i32) {
    %c0_i32 = arith.constant 0 : i32
    %c0_i32_0 = arith.constant 0 : i32
    %c0_i32_1 = arith.constant 0 : i32
    return %arg0, %c0_i32, %c0_i32_0 : i32, i32, i32
  }
}

</mosaic_0001>

<llo_original>
// kernel: habs_cnn_forward.1
$region0: #{habs_cnn_forward.1}
  #allocation0 [shape = 'u32[]', space=smem, size = 0x4, offset = 0x4, fixed_abs, tag = 'smem constant byte address 0x4 - core index']
  #allocation1 [shape = 'u32[144,128]{1,0:T(1,128)}', space=vmem, size = 0x12000, scoped, tag = 'internal scratch']
  %s0 = inlined_call_operand.vmem [shape: f32[2,4,8,96], index: 0, kind: input, shape index: {}]
  %s1 = inlined_call_operand.vmem [shape: f32[2,5,96,84], index: 1, kind: input, shape index: {}]
  %s2 = inlined_call_operand.vmem [shape: f32[1,84], index: 2, kind: input, shape index: {}]
  %s3 = inlined_call_operand.vmem [shape: f32[2,5,84,80], index: 3, kind: input, shape index: {}]
  %s4 = inlined_call_operand.vmem [shape: f32[1,80], index: 4, kind: input, shape index: {}]
  %s5 = inlined_call_operand.vmem [shape: f32[5,80,120], index: 5, kind: input, shape index: {}]
  %s6 = inlined_call_operand.vmem [shape: f32[1,120], index: 6, kind: input, shape index: {}]
  %s7 = inlined_call_operand.vmem [shape: f32[120,84], index: 7, kind: input, shape index: {}]
  %s8 = inlined_call_operand.vmem [shape: f32[1,84], index: 8, kind: input, shape index: {}]
  %s9 = inlined_call_operand.vmem [shape: f32[84,128], index: 9, kind: input, shape index: {}]
  %s10 = inlined_call_operand.vmem [shape: f32[1,128], index: 10, kind: input, shape index: {}]
  %s11 = inlined_call_operand.hbm [shape: f32[2,1,128], index: 11, kind: output, shape index: {}]
  %s12 = sld [smem:[#allocation0]]
  $region77: #{habs_cnn_forward.1} parent=0
    _
  %s14 = ssub.s32 1, %s12
  %s15 = scalar_select 0, %s14, %s12
  $region1: #{habs_cnn_forward.1} parent=0
    #allocation2 [shape = 'u8[1024]{0}', space=vmem, size = 0x400, scoped, tag = 'output window, operand 0']
    #allocation3 [shape = 's32[2]{0}', space=sflag, size = 0x8, scoped, tag = 'scoped memory for habs_cnn_forward.1']
    %16 = vsyncpa [#allocation3], 0
    %s17 = scalar_lea.sflag [#allocation3], 1
    %18 = vsyncpa %s17, 0
    loop: start=0, step=1, limit=4
    $region2: #{habs_cnn_forward.1} parent=1 // loop_pre_header
      _
    $region3: #{habs_cnn_forward.1} parent=1 // loop_header
      %s20 = sphi 0, %s24
      %p21 = scmp.ge.s32.totalorder %s20, 4
      %s30 = sphi 0, %s32
      %s33 = sphi 0, %s30
      %s34 = sphi 0, %s33
      %s50 = sphi 0, %s34
      %s54 = sphi 0, %s54
      %s56 = sphi 0, %s54
      %s57 = sphi 0, %s56
      %s71 = sphi 0, %s57
      %s75 = sphi 0, %s75
      %s77 = sphi 0, %s75
      %s78 = sphi 0, %s77
      %s92 = sphi 0, %s78
      %s96 = sphi 0, %s96
      %s98 = sphi 0, %s96
      %s99 = sphi 0, %s98
      %s113 = sphi 0, %s99
      %s117 = sphi 0, %s117
      %s119 = sphi 0, %s117
      %s120 = sphi 0, %s119
      %s134 = sphi 0, %s120
      %s138 = sphi 0, %s138
      %s140 = sphi 0, %s138
      %s141 = sphi 0, %s140
      %s155 = sphi 0, %s141
      %s159 = sphi 0, %s159
      %s161 = sphi 0, %s159
      %s162 = sphi 0, %s161
      %s176 = sphi 0, %s162
      %s180 = sphi 0, %s180
      %s182 = sphi 0, %s180
      %s183 = sphi 0, %s182
      %s197 = sphi 0, %s183
      %s201 = sphi 0, %s201
      %s203 = sphi 0, %s201
      %s204 = sphi 0, %s203
      %s218 = sphi 0, %s204
      %s222 = sphi 0, %s222
      %s224 = sphi 0, %s222
      %s225 = sphi 0, %s224
      %s239 = sphi 0, %s225
      %s243 = sphi 0, %s243
      %s245 = sphi 0, %s243
      %s246 = sphi 0, %s245
      %s260 = sphi 0, %s246
      %s266 = sphi 0, %s268
      %s269 = sphi 0, %s266
      %s270 = sphi 0, %s269
      %s286 = sphi 0, %s270
    $region4: #{habs_cnn_forward.1} parent=1 // loop_header_branch
      %23 = sbr.rel (%p21) target = $region8
    $region5: #{habs_cnn_forward.1} parent=1 // loop_body
      %s25 = ssub.s32 %s20, 1
      %s26 = ssub.s32 %s20, 2
      %s27 = sadd.s32 %s20, 1
      %s28 = ssub.s32 %s20, %s27
      %p29 = scmp.eq.s32.totalorder %s28, 0
      %s31 = sadd.s32 %s30, 1
      %s32 = scalar_select %p29, %s30, %s31
      %p35 = pneg %p29
      %p36 = scmp.eq.s32.totalorder %s20, 1
      %p37 = por %p35, %p36
      %p38 = scmp.ne.s32.totalorder %s30, %s33
      %p39 = scmp.eq.s32.totalorder %s20, 0
      %p40 = por %p38, %p39
      %p41 = scmp.ne.s32.totalorder %s30, %s33
      %p42 = scmp.eq.s32.totalorder %s25, 1
      %p43 = por %p41, %p42
      %p44 = scmp.ne.s32.totalorder %s33, %s34
      %p45 = scmp.eq.s32.totalorder %s25, 0
      %p46 = por %p44, %p45
      %p47 = scmp.ne.s32.totalorder %s33, %s34
      %p48 = scmp.eq.s32.totalorder %s26, 1
      %p49 = por %p47, %p48
      %p51 = scmp.ne.s32.totalorder %s34, %s50
      %p52 = scmp.eq.s32.totalorder %s26, 0
      %p53 = por %p51, %p52
      %s55 = sadd.s32 %s54, 1
      %p58 = scmp.eq.s32.totalorder %s20, 1
      %p59 = scmp.ne.s32.totalorder %s54, %s56
      %p60 = scmp.eq.s32.totalorder %s20, 0
      %p61 = por %p59, %p60
      %p62 = scmp.ne.s32.totalorder %s54, %s56
      %p63 = scmp.eq.s32.totalorder %s25, 1
      %p64 = por %p62, %p63
      %p65 = scmp.ne.s32.totalorder %s56, %s57
      %p66 = scmp.eq.s32.totalorder %s25, 0
      %p67 = por %p65, %p66
      %p68 = scmp.ne.s32.totalorder %s56, %s57
      %p69 = scmp.eq.s32.totalorder %s26, 1
      %p70 = por %p68, %p69
      %p72 = scmp.ne.s32.totalorder %s57, %s71
      %p73 = scmp.eq.s32.totalorder %s26, 0
      %p74 = por %p72, %p73
      %s76 = sadd.s32 %s75, 1
      %p79 = scmp.eq.s32.totalorder %s20, 1
      %p80 = scmp.ne.s32.totalorder %s75, %s77
      %p81 = scmp.eq.s32.totalorder %s20, 0
      %p82 = por %p80, %p81
      %p83 = scmp.ne.s32.totalorder %s75, %s77
      %p84 = scmp.eq.s32.totalorder %s25, 1
      %p85 = por %p83, %p84
      %p86 = scmp.ne.s32.totalorder %s77, %s78
      %p87 = scmp.eq.s32.totalorder %s25, 0
      %p88 = por %p86, %p87
      %p89 = scmp.ne.s32.totalorder %s77, %s78
      %p90 = scmp.eq.s32.totalorder %s26, 1
      %p91 = por %p89, %p90
      %p93 = scmp.ne.s32.totalorder %s78, %s92
      %p94 = scmp.eq.s32.totalorder %s26, 0
      %p95 = por %p93, %p94
      %s97 = sadd.s32 %s96, 1
      %p100 = scmp.eq.s32.totalorder %s20, 1
      %p101 = scmp.ne.s32.totalorder %s96, %s98
      %p102 = scmp.eq.s32.totalorder %s20, 0
      %p103 = por %p101, %p102
      %p104 = scmp.ne.s32.totalorder %s96, %s98
      %p105 = scmp.eq.s32.totalorder %s25, 1
      %p106 = por %p104, %p105
      %p107 = scmp.ne.s32.totalorder %s98, %s99
      %p108 = scmp.eq.s32.totalorder %s25, 0
      %p109 = por %p107, %p108
      %p110 = scmp.ne.s32.totalorder %s98, %s99
      %p111 = scmp.eq.s32.totalorder %s26, 1
      %p112 = por %p110, %p111
      %p114 = scmp.ne.s32.totalorder %s99, %s113
      %p115 = scmp.eq.s32.totalorder %s26, 0
      %p116 = por %p114, %p115
      %s118 = sadd.s32 %s117, 1
      %p121 = scmp.eq.s32.totalorder %s20, 1
      %p122 = scmp.ne.s32.totalorder %s117, %s119
      %p123 = scmp.eq.s32.totalorder %s20, 0
      %p124 = por %p122, %p123
      %p125 = scmp.ne.s32.totalorder %s117, %s119
      %p126 = scmp.eq.s32.totalorder %s25, 1
      %p127 = por %p125, %p126
      %p128 = scmp.ne.s32.totalorder %s119, %s120
      %p129 = scmp.eq.s32.totalorder %s25, 0
      %p130 = por %p128, %p129
      %p131 = scmp.ne.s32.totalorder %s119, %s120
      %p132 = scmp.eq.s32.totalorder %s26, 1
      %p133 = por %p131, %p132
      %p135 = scmp.ne.s32.totalorder %s120, %s134
      %p136 = scmp.eq.s32.totalorder %s26, 0
      %p137 = por %p135, %p136
      %s139 = sadd.s32 %s138, 1
      %p142 = scmp.eq.s32.totalorder %s20, 1
      %p143 = scmp.ne.s32.totalorder %s138, %s140
      %p144 = scmp.eq.s32.totalorder %s20, 0
      %p145 = por %p143, %p144
      %p146 = scmp.ne.s32.totalorder %s138, %s140
      %p147 = scmp.eq.s32.totalorder %s25, 1
      %p148 = por %p146, %p147
      %p149 = scmp.ne.s32.totalorder %s140, %s141
      %p150 = scmp.eq.s32.totalorder %s25, 0
      %p151 = por %p149, %p150
      %p152 = scmp.ne.s32.totalorder %s140, %s141
      %p153 = scmp.eq.s32.totalorder %s26, 1
      %p154 = por %p152, %p153
      %p156 = scmp.ne.s32.totalorder %s141, %s155
      %p157 = scmp.eq.s32.totalorder %s26, 0
      %p158 = por %p156, %p157
      %s160 = sadd.s32 %s159, 1
      %p163 = scmp.eq.s32.totalorder %s20, 1
      %p164 = scmp.ne.s32.totalorder %s159, %s161
      %p165 = scmp.eq.s32.totalorder %s20, 0
      %p166 = por %p164, %p165
      %p167 = scmp.ne.s32.totalorder %s159, %s161
      %p168 = scmp.eq.s32.totalorder %s25, 1
      %p169 = por %p167, %p168
      %p170 = scmp.ne.s32.totalorder %s161, %s162
      %p171 = scmp.eq.s32.totalorder %s25, 0
      %p172 = por %p170, %p171
      %p173 = scmp.ne.s32.totalorder %s161, %s162
      %p174 = scmp.eq.s32.totalorder %s26, 1
      %p175 = por %p173, %p174
      %p177 = scmp.ne.s32.totalorder %s162, %s176
      %p178 = scmp.eq.s32.totalorder %s26, 0
      %p179 = por %p177, %p178
      %s181 = sadd.s32 %s180, 1
      %p184 = scmp.eq.s32.totalorder %s20, 1
      %p185 = scmp.ne.s32.totalorder %s180, %s182
      %p186 = scmp.eq.s32.totalorder %s20, 0
      %p187 = por %p185, %p186
      %p188 = scmp.ne.s32.totalorder %s180, %s182
      %p189 = scmp.eq.s32.totalorder %s25, 1
      %p190 = por %p188, %p189
      %p191 = scmp.ne.s32.totalorder %s182, %s183
      %p192 = scmp.eq.s32.totalorder %s25, 0
      %p193 = por %p191, %p192
      %p194 = scmp.ne.s32.totalorder %s182, %s183
      %p195 = scmp.eq.s32.totalorder %s26, 1
      %p196 = por %p194, %p195
      %p198 = scmp.ne.s32.totalorder %s183, %s197
      %p199 = scmp.eq.s32.totalorder %s26, 0
      %p200 = por %p198, %p199
      %s202 = sadd.s32 %s201, 1
      %p205 = scmp.eq.s32.totalorder %s20, 1
      %p206 = scmp.ne.s32.totalorder %s201, %s203
      %p207 = scmp.eq.s32.totalorder %s20, 0
      %p208 = por %p206, %p207
      %p209 = scmp.ne.s32.totalorder %s201, %s203
      %p210 = scmp.eq.s32.totalorder %s25, 1
      %p211 = por %p209, %p210
      %p212 = scmp.ne.s32.totalorder %s203, %s204
      %p213 = scmp.eq.s32.totalorder %s25, 0
      %p214 = por %p212, %p213
      %p215 = scmp.ne.s32.totalorder %s203, %s204
      %p216 = scmp.eq.s32.totalorder %s26, 1
      %p217 = por %p215, %p216
      %p219 = scmp.ne.s32.totalorder %s204, %s218
      %p220 = scmp.eq.s32.totalorder %s26, 0
      %p221 = por %p219, %p220
      %s223 = sadd.s32 %s222, 1
      %p226 = scmp.eq.s32.totalorder %s20, 1
      %p227 = scmp.ne.s32.totalorder %s222, %s224
      %p228 = scmp.eq.s32.totalorder %s20, 0
      %p229 = por %p227, %p228
      %p230 = scmp.ne.s32.totalorder %s222, %s224
      %p231 = scmp.eq.s32.totalorder %s25, 1
      %p232 = por %p230, %p231
      %p233 = scmp.ne.s32.totalorder %s224, %s225
      %p234 = scmp.eq.s32.totalorder %s25, 0
      %p235 = por %p233, %p234
      %p236 = scmp.ne.s32.totalorder %s224, %s225
      %p237 = scmp.eq.s32.totalorder %s26, 1
      %p238 = por %p236, %p237
      %p240 = scmp.ne.s32.totalorder %s225, %s239
      %p241 = scmp.eq.s32.totalorder %s26, 0
      %p242 = por %p240, %p241
      %s244 = sadd.s32 %s243, 1
      %p247 = scmp.eq.s32.totalorder %s20, 1
      %p248 = scmp.ne.s32.totalorder %s243, %s245
      %p249 = scmp.eq.s32.totalorder %s20, 0
      %p250 = por %p248, %p249
      %p251 = scmp.ne.s32.totalorder %s243, %s245
      %p252 = scmp.eq.s32.totalorder %s25, 1
      %p253 = por %p251, %p252
      %p254 = scmp.ne.s32.totalorder %s245, %s246
      %p255 = scmp.eq.s32.totalorder %s25, 0
      %p256 = por %p254, %p255
      %p257 = scmp.ne.s32.totalorder %s245, %s246
      %p258 = scmp.eq.s32.totalorder %s26, 1
      %p259 = por %p257, %p258
      %p261 = scmp.ne.s32.totalorder %s246, %s260
      %p262 = scmp.eq.s32.totalorder %s26, 0
      %p263 = por %p261, %p262
      %s264 = ssub.s32 %s20, %s27
      %p265 = scmp.eq.s32.totalorder %s264, 0
      %s267 = sadd.s32 %s266, 1
      %s268 = scalar_select %p265, %s266, %s267
      %p271 = pneg %p265
      %p272 = scmp.eq.s32.totalorder %s20, 1
      %p273 = por %p271, %p272
      %p274 = scmp.ne.s32.totalorder %s266, %s269
      %p275 = scmp.eq.s32.totalorder %s20, 0
      %p276 = por %p274, %p275
      %p277 = scmp.ne.s32.totalorder %s266, %s269
      %p278 = scmp.eq.s32.totalorder %s25, 1
      %p279 = por %p277, %p278
      %p280 = scmp.ne.s32.totalorder %s269, %s270
      %p281 = scmp.eq.s32.totalorder %s25, 0
      %p282 = por %p280, %p281
      %p283 = scmp.ne.s32.totalorder %s269, %s270
      %p284 = scmp.eq.s32.totalorder %s26, 1
      %p285 = por %p283, %p284
      %p287 = scmp.ne.s32.totalorder %s270, %s286
      %p288 = scmp.eq.s32.totalorder %s26, 0
      %p289 = por %p287, %p288
      %p290 = scmp.le.s32.totalorder 1, %s20
      %p291 = scmp.lt.s32.totalorder %s20, 3
      %p292 = pnand %p290, %p291
      %p293 = pneg %p292
      // Predicated region
      $region9: #{habs_cnn_forward.1} parent=5 // pred_check
        _
      $region10: #{habs_cnn_forward.1} parent=5 // pred_check_branch
        %295 = sbr.rel (%p292) target = $region12
      $region11: #{habs_cnn_forward.1} parent=5 // pred_region
        %s296 = ssub.s32 %s20, 1
        // Predicated region
        $region13: #{habs_cnn_forward.1} parent=11 // pred_check
          %p297 = pneg %p67
        $region14: #{habs_cnn_forward.1} parent=11 // pred_check_branch
          %299 = sbr.rel (%p297) target = $region16
        $region15: #{habs_cnn_forward.1} parent=11 // pred_region
          _
        $region16: #{habs_cnn_forward.1} parent=11 // pred_fallthru
          _
        // Predicated region
        $region17: #{habs_cnn_forward.1} parent=11 // pred_check
          %p300 = pneg %p88
        $region18: #{habs_cnn_forward.1} parent=11 // pred_check_branch
          %302 = sbr.rel (%p300) target = $region20
        $region19: #{habs_cnn_forward.1} parent=11 // pred_region
          _
        $region20: #{habs_cnn_forward.1} parent=11 // pred_fallthru
          _
        // Predicated region
        $region21: #{habs_cnn_forward.1} parent=11 // pred_check
          %p303 = pneg %p109
        $region22: #{habs_cnn_forward.1} parent=11 // pred_check_branch
          %305 = sbr.rel (%p303) target = $region24
        $region23: #{habs_cnn_forward.1} parent=11 // pred_region
          _
        $region24: #{habs_cnn_forward.1} parent=11 // pred_fallthru
          _
        // Predicated region
        $region25: #{habs_cnn_forward.1} parent=11 // pred_check
          %p306 = pneg %p130
        $region26: #{habs_cnn_forward.1} parent=11 // pred_check_branch
          %308 = sbr.rel (%p306) target = $region28
        $region27: #{habs_cnn_forward.1} parent=11 // pred_region
          _
        $region28: #{habs_cnn_forward.1} parent=11 // pred_fallthru
          _
        // Predicated region
        $region29: #{habs_cnn_forward.1} parent=11 // pred_check
          %p309 = pneg %p151
        $region30: #{habs_cnn_forward.1} parent=11 // pred_check_branch
          %311 = sbr.rel (%p309) target = $region32
        $region31: #{habs_cnn_forward.1} parent=11 // pred_region
          _
        $region32: #{habs_cnn_forward.1} parent=11 // pred_fallthru
          _
        // Predicated region
        $region33: #{habs_cnn_forward.1} parent=11 // pred_check
          %p312 = pneg %p172
        $region34: #{habs_cnn_forward.1} parent=11 // pred_check_branch
          %314 = sbr.rel (%p312) target = $region36
        $region35: #{habs_cnn_forward.1} parent=11 // pred_region
          _
        $region36: #{habs_cnn_forward.1} parent=11 // pred_fallthru
          _
        // Predicated region
        $region37: #{habs_cnn_forward.1} parent=11 // pred_check
          %p315 = pneg %p193
        $region38: #{habs_cnn_forward.1} parent=11 // pred_check_branch
          %317 = sbr.rel (%p315) target = $region40
        $region39: #{habs_cnn_forward.1} parent=11 // pred_region
          _
        $region40: #{habs_cnn_forward.1} parent=11 // pred_fallthru
          _
        // Predicated region
        $region41: #{habs_cnn_forward.1} parent=11 // pred_check
          %p318 = pneg %p214
        $region42: #{habs_cnn_forward.1} parent=11 // pred_check_branch
          %320 = sbr.rel (%p318) target = $region44
        $region43: #{habs_cnn_forward.1} parent=11 // pred_region
          _
        $region44: #{habs_cnn_forward.1} parent=11 // pred_fallthru
          _
        // Predicated region
        $region45: #{habs_cnn_forward.1} parent=11 // pred_check
          %p321 = pneg %p235
        $region46: #{habs_cnn_forward.1} parent=11 // pred_check_branch
          %323 = sbr.rel (%p321) target = $region48
        $region47: #{habs_cnn_forward.1} parent=11 // pred_region
          _
        $region48: #{habs_cnn_forward.1} parent=11 // pred_fallthru
          _
        // Predicated region
        $region49: #{habs_cnn_forward.1} parent=11 // pred_check
          %p324 = pneg %p256
        $region50: #{habs_cnn_forward.1} parent=11 // pred_check_branch
          %326 = sbr.rel (%p324) target = $region52
        $region51: #{habs_cnn_forward.1} parent=11 // pred_region
          _
        $region52: #{habs_cnn_forward.1} parent=11 // pred_fallthru
          _
      $region12: #{habs_cnn_forward.1} parent=5 // pred_fallthru
        _
      %p327 = scmp.lt.s32.totalorder %s20, 2
      // Predicated region
      $region53: #{habs_cnn_forward.1} parent=5 // pred_check
        %p328 = pneg %p327
      $region54: #{habs_cnn_forward.1} parent=5 // pred_check_branch
        %330 = sbr.rel (%p328) target = $region56
      $region55: #{habs_cnn_forward.1} parent=5 // pred_region
        // Predicated region
        $region57: #{habs_cnn_forward.1} parent=55 // pred_check
          %p331 = pneg %p40
        $region58: #{habs_cnn_forward.1} parent=55 // pred_check_branch
          %333 = sbr.rel (%p331) target = $region60
        $region59: #{habs_cnn_forward.1} parent=55 // pred_region
          %p334 = scmp.lt.s32.totalorder %s20, 1
          %s335 = scalar_select %p334, %s20, 1
          %s336 = smul.addr %s335, 4
          %s337 = smul.addr %s336, 8
          %s338 = scalar_lea.vmem %s0, %s337
        $region60: #{habs_cnn_forward.1} parent=55 // pred_fallthru
          _
      $region56: #{habs_cnn_forward.1} parent=5 // pred_fallthru
        _
      %p339 = scmp.le.s32.totalorder 1, %s20
      %p340 = scmp.lt.s32.totalorder %s20, 3
      %p341 = pnand %p339, %p340
      %p342 = pneg %p341
      // Predicated region
      $region61: #{habs_cnn_forward.1} parent=5 // pred_check
        _
      $region62: #{habs_cnn_forward.1} parent=5 // pred_check_branch
        %344 = sbr.rel (%p341) target = $region64
      $region63: #{habs_cnn_forward.1} parent=5 // pred_region
        %s345 = ssub.s32 %s20, 1
        %p346 = scmp.lt.s32.totalorder %s25, 1
        %s347 = scalar_select %p346, %s25, 1
        %s348 = smul.addr %s347, 4
        %s349 = smul.addr %s348, 8
        %s350 = scalar_lea.vmem %s0, %s349
        %p351 = pneg %p46
        %p352 = pneg %p43
        %p353 = pneg %p67
        %p354 = pneg %p64
        %p355 = pneg %p88
        %p356 = pneg %p85
        %p357 = pneg %p109
        %p358 = pneg %p106
        %p359 = pneg %p130
        %p360 = pneg %p127
        %p361 = pneg %p151
        %p362 = pneg %p148
        %p363 = pneg %p172
        %p364 = pneg %p169
        %p365 = pneg %p193
        %p366 = pneg %p190
        %p367 = pneg %p214
        %p368 = pneg %p211
        %p369 = pneg %p235
        %p370 = pneg %p232
        %p371 = pneg %p256
        %p372 = pneg %p253
        %p373 = pneg %p282
        %p374 = pneg %p279
        %s375 = sand.u32 %s269, 1
        %s376 = scalar_lea.sflag [#allocation3], %s375
        %s377 = sand.u32 %s269, 1
        %s378 = scalar_lea.vmem [#allocation2], %s377
        %p379 = scmp.lt.s32.totalorder %s25, 1
        %s380 = scalar_select %p379, %s25, 1
        %s381 = smul.addr %s380, 4
        %s382 = smul.addr %s381, 8
        %s383 = scalar_lea.vmem %s0, %s382
        %v384 = vld [vmem:[%s383] sm:$0x7f]
        %v385 = vld [vmem:[%s1] sm:$0xff]
        %v386 = vld [vmem:[%s1 + $0x8] sm:$0xff]
        %v387 = vld [vmem:[%s1 + $0x10] sm:$0xff]
        %v388 = vld [vmem:[%s1 + $0x18] sm:$0xff]
        %v389 = vld [vmem:[%s1 + $0x20] sm:$0xff]
        %v390 = vld [vmem:[%s1 + $0x28] sm:$0xff]
        %v391 = vld [vmem:[%s1 + $0x30] sm:$0xff]
        %v392 = vld [vmem:[%s1 + $0x38] sm:$0xff]
        %v393 = vld [vmem:[%s1 + $0x40] sm:$0xff]
        %v394 = vld [vmem:[%s1 + $0x48] sm:$0xff]
        %v395 = vld [vmem:[%s1 + $0x50] sm:$0xff]
        %v396 = vld [vmem:[%s1 + $0x58] sm:$0xff]
        %s397 = scalar_lea.vmem %s1, 480
        %v398 = vld [vmem:[%s397] sm:$0xff]
        %v399 = vld [vmem:[%s397 + $0x8] sm:$0xff]
        %v400 = vld [vmem:[%s397 + $0x10] sm:$0xff]
        %v401 = vld [vmem:[%s397 + $0x18] sm:$0xff]
        %v402 = vld [vmem:[%s397 + $0x20] sm:$0xff]
        %v403 = vld [vmem:[%s397 + $0x28] sm:$0xff]
        %v404 = vld [vmem:[%s397 + $0x30] sm:$0xff]
        %v405 = vld [vmem:[%s397 + $0x38] sm:$0xff]
        %v406 = vld [vmem:[%s397 + $0x40] sm:$0xff]
        %v407 = vld [vmem:[%s397 + $0x48] sm:$0xff]
        %v408 = vld [vmem:[%s397 + $0x50] sm:$0xff]
        %v409 = vld [vmem:[%s397 + $0x58] sm:$0xff]
        %s410 = scalar_lea.vmem %s383, 8
        %v411 = vld [vmem:[%s410] sm:$0x7f]
        %s412 = scalar_lea.vmem %s1, 96
        %v413 = vld [vmem:[%s412] sm:$0xff]
        %v414 = vld [vmem:[%s412 + $0x8] sm:$0xff]
        %v415 = vld [vmem:[%s412 + $0x10] sm:$0xff]
        %v416 = vld [vmem:[%s412 + $0x18] sm:$0xff]
        %v417 = vld [vmem:[%s412 + $0x20] sm:$0xff]
        %v418 = vld [vmem:[%s412 + $0x28] sm:$0xff]
        %v419 = vld [vmem:[%s412 + $0x30] sm:$0xff]
        %v420 = vld [vmem:[%s412 + $0x38] sm:$0xff]
        %v421 = vld [vmem:[%s412 + $0x40] sm:$0xff]
        %v422 = vld [vmem:[%s412 + $0x48] sm:$0xff]
        %v423 = vld [vmem:[%s412 + $0x50] sm:$0xff]
        %v424 = vld [vmem:[%s412 + $0x58] sm:$0xff]
        %vm425 = vcmask 785408
        %v427 = vsel %vm425, %v411, 0
        %429 = vmatprep.subr.mxu0 0.0
        %430 = vmatpush1.msra.mxu0 %v413
        %431 = vmatprep.subr.mxu0 0.0
        %432 = vmatpush1.msra.mxu0 %v414
        %433 = vmatprep.subr.mxu0 0.0
        %434 = vmatpush1.msra.mxu0 %v415
        %435 = vmatprep.subr.mxu0 0.0
        %436 = vmatpush1.msra.mxu0 %v416
        %437 = vmatprep.subr.mxu0 0.0
        %438 = vmatpush1.msra.mxu0 %v417
        %439 = vmatprep.subr.mxu0 0.0
        %440 = vmatpush1.msra.mxu0 %v418
        %441 = vmatprep.subr.mxu0 0.0
        %442 = vmatpush1.msra.mxu0 %v419
        %443 = vmatprep.subr.mxu0 0.0
        %444 = vmatpush1.msra.mxu0 %v420
        %445 = vmatprep.subr.mxu0 0.0
        %446 = vmatpush1.msra.mxu0 %v421
        %447 = vmatprep.subr.mxu0 0.0
        %448 = vmatpush1.msra.mxu0 %v422
        %449 = vmatprep.subr.mxu0 0.0
        %450 = vmatpush1.msra.mxu0 %v423
        %451 = vmatprep.subr.mxu0 0.0
        %452 = vmatpush1.msra.mxu0 %v424
        %453 = vmatprep.subr.mxu0 0.0
        %454 = vmatpush1.msra.mxu0 0.0
        %455 = vmatprep.subr.mxu0 0.0
        %456 = vmatpush1.msra.mxu0 0.0
        %457 = vmatprep.subr.mxu0 0.0
        %458 = vmatpush1.msra.mxu0 0.0
        %459 = vmatprep.subr.mxu0 0.0
        %460 = vmatpush1.msra.mxu0 0.0
        %461 = vmatprep.subr.mxu0 0.0
        %462 = vmatpush1.msra.mxu0 0.0
        %463 = vmatprep.subr.mxu0 0.0
        %464 = vmatpush1.msra.mxu0 0.0
        %465 = vmatprep.subr.mxu0 0.0
        %466 = vmatpush1.msra.mxu0 0.0
        %467 = vmatprep.subr.mxu0 0.0
        %468 = vmatpush1.msra.mxu0 0.0
        %469 = vmatprep.subr.mxu0 0.0
        %470 = vmatpush1.msra.mxu0 0.0
        %471 = vmatprep.subr.mxu0 0.0
        %472 = vmatpush1.msra.mxu0 0.0
        %473 = vmatprep.subr.mxu0 0.0
        %474 = vmatpush1.msra.mxu0 0.0
        %475 = vmatprep.subr.mxu0 0.0
        %476 = vmatpush1.msra.mxu0 0.0
        %477 = vmatprep.subr.mxu0 0.0
        %478 = vmatpush1.msra.mxu0 0.0
        %479 = vmatprep.subr.mxu0 0.0
        %480 = vmatpush1.msra.mxu0 0.0
        %481 = vmatprep.subr.mxu0 0.0
        %482 = vmatpush1.msra.mxu0 0.0
        %483 = vmatprep.subr.mxu0 0.0
        %484 = vmatpush1.msra.mxu0 0.0
        %485 = vmatprep.subr.mxu0 0.0
        %486 = vmatpush1.msra.mxu0 0.0
        %487 = vmatprep.subr.mxu0 0.0
        %488 = vmatpush1.msra.mxu0 0.0
        %489 = vmatprep.subr.mxu0 0.0
        %490 = vmatpush1.msra.mxu0 0.0
        %491 = vmatprep.subr.mxu0 0.0
        %492 = vmatpush1.msra.mxu0 0.0
        %493 = vmatprep.mubr.f32.mxu0 0.0
        %494 = vmatmul.mubr.f32.gmra.mrb[0].mxu0 %v427
        %v495 = vpop.f32.mrb[0].mxu0
        %v496 = vadd.f32 0.0, %v495
        %v497 = vpop.f32.mrb[0].mxu0
        %498 = vdwg.mxu0
        %v500 = vsel %vm425, %v384, 0
        %502 = vmatprep.subr.mxu0 0.0
        %503 = vmatpush1.msra.mxu0 %v385
        %504 = vmatprep.subr.mxu0 0.0
        %505 = vmatpush1.msra.mxu0 %v386
        %506 = vmatprep.subr.mxu0 0.0
        %507 = vmatpush1.msra.mxu0 %v387
        %508 = vmatprep.subr.mxu0 0.0
        %509 = vmatpush1.msra.mxu0 %v388
        %510 = vmatprep.subr.mxu0 0.0
        %511 = vmatpush1.msra.mxu0 %v389
        %512 = vmatprep.subr.mxu0 0.0
        %513 = vmatpush1.msra.mxu0 %v390
        %514 = vmatprep.subr.mxu0 0.0
        %515 = vmatpush1.msra.mxu0 %v391
        %516 = vmatprep.subr.mxu0 0.0
        %517 = vmatpush1.msra.mxu0 %v392
        %518 = vmatprep.subr.mxu0 0.0
        %519 = vmatpush1.msra.mxu0 %v393
        %520 = vmatprep.subr.mxu0 0.0
        %521 = vmatpush1.msra.mxu0 %v394
        %522 = vmatprep.subr.mxu0 0.0
        %523 = vmatpush1.msra.mxu0 %v395
        %524 = vmatprep.subr.mxu0 0.0
        %525 = vmatpush1.msra.mxu0 %v396
        %526 = vmatprep.subr.mxu0 0.0
        %527 = vmatpush1.msra.mxu0 0.0
        %528 = vmatprep.subr.mxu0 0.0
        %529 = vmatpush1.msra.mxu0 0.0
        %530 = vmatprep.subr.mxu0 0.0
        %531 = vmatpush1.msra.mxu0 0.0
        %532 = vmatprep.subr.mxu0 0.0
        %533 = vmatpush1.msra.mxu0 0.0
        %534 = vmatprep.subr.mxu0 0.0
        %535 = vmatpush1.msra.mxu0 0.0
        %536 = vmatprep.subr.mxu0 0.0
        %537 = vmatpush1.msra.mxu0 0.0
        %538 = vmatprep.subr.mxu0 0.0
        %539 = vmatpush1.msra.mxu0 0.0
        %540 = vmatprep.subr.mxu0 0.0
        %541 = vmatpush1.msra.mxu0 0.0
        %542 = vmatprep.subr.mxu0 0.0
        %543 = vmatpush1.msra.mxu0 0.0
        %544 = vmatprep.subr.mxu0 0.0
        %545 = vmatpush1.msra.mxu0 0.0
        %546 = vmatprep.subr.mxu0 0.0
        %547 = vmatpush1.msra.mxu0 0.0
        %548 = vmatprep.subr.mxu0 0.0
        %549 = vmatpush1.msra.mxu0 0.0
        %550 = vmatprep.subr.mxu0 0.0
        %551 = vmatpush1.msra.mxu0 0.0
        %552 = vmatprep.subr.mxu0 0.0
        %553 = vmatpush1.msra.mxu0 0.0
        %554 = vmatprep.subr.mxu0 0.0
        %555 = vmatpush1.msra.mxu0 0.0
        %556 = vmatprep.subr.mxu0 0.0
        %557 = vmatpush1.msra.mxu0 0.0
        %558 = vmatprep.subr.mxu0 0.0
        %559 = vmatpush1.msra.mxu0 0.0
        %560 = vmatprep.subr.mxu0 0.0
        %561 = vmatpush1.msra.mxu0 0.0
        %562 = vmatprep.subr.mxu0 0.0
        %563 = vmatpush1.msra.mxu0 0.0
        %564 = vmatprep.subr.mxu0 0.0
        %565 = vmatpush1.msra.mxu0 0.0
        %566 = vmatprep.mubr.f32.mxu0 0.0
        %567 = vmatmul.mubr.f32.gmra.mrb[0].mxu0 %v500
        %v568 = vpop.f32.mrb[0].mxu0
        %v569 = vadd.f32 %v496, %v568
        %v570 = vpop.f32.mrb[0].mxu0
        %571 = vdwg.mxu0
        %s572 = scalar_lea.vmem %s1, 576
        %v573 = vld [vmem:[%s572] sm:$0xff]
        %v574 = vld [vmem:[%s572 + $0x8] sm:$0xff]
        %v575 = vld [vmem:[%s572 + $0x10] sm:$0xff]
        %v576 = vld [vmem:[%s572 + $0x18] sm:$0xff]
        %v577 = vld [vmem:[%s572 + $0x20] sm:$0xff]
        %v578 = vld [vmem:[%s572 + $0x28] sm:$0xff]
        %v579 = vld [vmem:[%s572 + $0x30] sm:$0xff]
        %v580 = vld [vmem:[%s572 + $0x38] sm:$0xff]
        %v581 = vld [vmem:[%s572 + $0x40] sm:$0xff]
        %v582 = vld [vmem:[%s572 + $0x48] sm:$0xff]
        %v583 = vld [vmem:[%s572 + $0x50] sm:$0xff]
        %v584 = vld [vmem:[%s572 + $0x58] sm:$0xff]
        %585 = vmatprep.subr.mxu0 0.0
        %586 = vmatpush1.msra.mxu0 %v573
        %587 = vmatprep.subr.mxu0 0.0
        %588 = vmatpush1.msra.mxu0 %v574
        %589 = vmatprep.subr.mxu0 0.0
        %590 = vmatpush1.msra.mxu0 %v575
        %591 = vmatprep.subr.mxu0 0.0
        %592 = vmatpush1.msra.mxu0 %v576
        %593 = vmatprep.subr.mxu0 0.0
        %594 = vmatpush1.msra.mxu0 %v577
        %595 = vmatprep.subr.mxu0 0.0
        %596 = vmatpush1.msra.mxu0 %v578
        %597 = vmatprep.subr.mxu0 0.0
        %598 = vmatpush1.msra.mxu0 %v579
        %599 = vmatprep.subr.mxu0 0.0
        %600 = vmatpush1.msra.mxu0 %v580
        %601 = vmatprep.subr.mxu0 0.0
        %602 = vmatpush1.msra.mxu0 %v581
        %603 = vmatprep.subr.mxu0 0.0
        %604 = vmatpush1.msra.mxu0 %v582
        %605 = vmatprep.subr.mxu0 0.0
        %606 = vmatpush1.msra.mxu0 %v583
        %607 = vmatprep.subr.mxu0 0.0
        %608 = vmatpush1.msra.mxu0 %v584
        %609 = vmatprep.subr.mxu0 0.0
        %610 = vmatpush1.msra.mxu0 0.0
        %611 = vmatprep.subr.mxu0 0.0
        %612 = vmatpush1.msra.mxu0 0.0
        %613 = vmatprep.subr.mxu0 0.0
        %614 = vmatpush1.msra.mxu0 0.0
        %615 = vmatprep.subr.mxu0 0.0
        %616 = vmatpush1.msra.mxu0 0.0
        %617 = vmatprep.subr.mxu0 0.0
        %618 = vmatpush1.msra.mxu0 0.0
        %619 = vmatprep.subr.mxu0 0.0
        %620 = vmatpush1.msra.mxu0 0.0
        %621 = vmatprep.subr.mxu0 0.0
        %622 = vmatpush1.msra.mxu0 0.0
        %623 = vmatprep.subr.mxu0 0.0
        %624 = vmatpush1.msra.mxu0 0.0
        %625 = vmatprep.subr.mxu0 0.0
        %626 = vmatpush1.msra.mxu0 0.0
        %627 = vmatprep.subr.mxu0 0.0
        %628 = vmatpush1.msra.mxu0 0.0
        %629 = vmatprep.subr.mxu0 0.0
        %630 = vmatpush1.msra.mxu0 0.0
        %631 = vmatprep.subr.mxu0 0.0
        %632 = vmatpush1.msra.mxu0 0.0
        %633 = vmatprep.subr.mxu0 0.0
        %634 = vmatpush1.msra.mxu0 0.0
        %635 = vmatprep.subr.mxu0 0.0
        %636 = vmatpush1.msra.mxu0 0.0
        %637 = vmatprep.subr.mxu0 0.0
        %638 = vmatpush1.msra.mxu0 0.0
        %639 = vmatprep.subr.mxu0 0.0
        %640 = vmatpush1.msra.mxu0 0.0
        %641 = vmatprep.subr.mxu0 0.0
        %642 = vmatpush1.msra.mxu0 0.0
        %643 = vmatprep.subr.mxu0 0.0
        %644 = vmatpush1.msra.mxu0 0.0
        %645 = vmatprep.subr.mxu0 0.0
        %646 = vmatpush1.msra.mxu0 0.0
        %647 = vmatprep.subr.mxu0 0.0
        %648 = vmatpush1.msra.mxu0 0.0
        %649 = vmatprep.mubr.f32.mxu0 0.0
        %650 = vmatmul.mubr.f32.gmra.mrb[0].mxu0 %v427
        %v651 = vpop.f32.mrb[0].mxu0
        %v652 = vadd.f32 0.0, %v651
        %v653 = vpop.f32.mrb[0].mxu0
        %654 = vdwg.mxu0
        %655 = vmatprep.subr.mxu0 0.0
        %656 = vmatpush1.msra.mxu0 %v398
        %657 = vmatprep.subr.mxu0 0.0
        %658 = vmatpush1.msra.mxu0 %v399
        %659 = vmatprep.subr.mxu0 0.0
        %660 = vmatpush1.msra.mxu0 %v400
        %661 = vmatprep.subr.mxu0 0.0
        %662 = vmatpush1.msra.mxu0 %v401
        %663 = vmatprep.subr.mxu0 0.0
        %664 = vmatpush1.msra.mxu0 %v402
        %665 = vmatprep.subr.mxu0 0.0
        %666 = vmatpush1.msra.mxu0 %v403
        %667 = vmatprep.subr.mxu0 0.0
        %668 = vmatpush1.msra.mxu0 %v404
        %669 = vmatprep.subr.mxu0 0.0
        %670 = vmatpush1.msra.mxu0 %v405
        %671 = vmatprep.subr.mxu0 0.0
        %672 = vmatpush1.msra.mxu0 %v406
        %673 = vmatprep.subr.mxu0 0.0
        %674 = vmatpush1.msra.mxu0 %v407
        %675 = vmatprep.subr.mxu0 0.0
        %676 = vmatpush1.msra.mxu0 %v408
        %677 = vmatprep.subr.mxu0 0.0
        %678 = vmatpush1.msra.mxu0 %v409
        %679 = vmatprep.subr.mxu0 0.0
        %680 = vmatpush1.msra.mxu0 0.0
        %681 = vmatprep.subr.mxu0 0.0
        %682 = vmatpush1.msra.mxu0 0.0
        %683 = vmatprep.subr.mxu0 0.0
        %684 = vmatpush1.msra.mxu0 0.0
        %685 = vmatprep.subr.mxu0 0.0
        %686 = vmatpush1.msra.mxu0 0.0
        %687 = vmatprep.subr.mxu0 0.0
        %688 = vmatpush1.msra.mxu0 0.0
        %689 = vmatprep.subr.mxu0 0.0
        %690 = vmatpush1.msra.mxu0 0.0
        %691 = vmatprep.subr.mxu0 0.0
        %692 = vmatpush1.msra.mxu0 0.0
        %693 = vmatprep.subr.mxu0 0.0
        %694 = vmatpush1.msra.mxu0 0.0
        %695 = vmatprep.subr.mxu0 0.0
        %696 = vmatpush1.msra.mxu0 0.0
        %697 = vmatprep.subr.mxu0 0.0
        %698 = vmatpush1.msra.mxu0 0.0
        %699 = vmatprep.subr.mxu0 0.0
        %700 = vmatpush1.msra.mxu0 0.0
        %701 = vmatprep.subr.mxu0 0.0
        %702 = vmatpush1.msra.mxu0 0.0
        %703 = vmatprep.subr.mxu0 0.0
        %704 = vmatpush1.msra.mxu0 0.0
        %705 = vmatprep.subr.mxu0 0.0
        %706 = vmatpush1.msra.mxu0 0.0
        %707 = vmatprep.subr.mxu0 0.0
        %708 = vmatpush1.msra.mxu0 0.0
        %709 = vmatprep.subr.mxu0 0.0
        %710 = vmatpush1.msra.mxu0 0.0
        %711 = vmatprep.subr.mxu0 0.0
        %712 = vmatpush1.msra.mxu0 0.0
        %713 = vmatprep.subr.mxu0 0.0
        %714 = vmatpush1.msra.mxu0 0.0
        %715 = vmatprep.subr.mxu0 0.0
        %716 = vmatpush1.msra.mxu0 0.0
        %717 = vmatprep.subr.mxu0 0.0
        %718 = vmatpush1.msra.mxu0 0.0
        %719 = vmatprep.mubr.f32.mxu0 0.0
        %720 = vmatmul.mubr.f32.gmra.mrb[0].mxu0 %v500
        %v721 = vpop.f32.mrb[0].mxu0
        %v722 = vadd.f32 %v652, %v721
        %v723 = vpop.f32.mrb[0].mxu0
        %724 = vdwg.mxu0
        %s725 = scalar_lea.vmem %s383, 16
        %v726 = vld [vmem:[%s725] sm:$0x7f]
        %s727 = scalar_lea.vmem %s1, 192
        %v728 = vld [vmem:[%s727] sm:$0xff]
        %v729 = vld [vmem:[%s727 + $0x8] sm:$0xff]
        %v730 = vld [vmem:[%s727 + $0x10] sm:$0xff]
        %v731 = vld [vmem:[%s727 + $0x18] sm:$0xff]
        %v732 = vld [vmem:[%s727 + $0x20] sm:$0xff]
        %v733 = vld [vmem:[%s727 + $0x28] sm:$0xff]
        %v734 = vld [vmem:[%s727 + $0x30] sm:$0xff]
        %v735 = vld [vmem:[%s727 + $0x38] sm:$0xff]
        %v736 = vld [vmem:[%s727 + $0x40] sm:$0xff]
        %v737 = vld [vmem:[%s727 + $0x48] sm:$0xff]
        %v738 = vld [vmem:[%s727 + $0x50] sm:$0xff]
        %v739 = vld [vmem:[%s727 + $0x58] sm:$0xff]
        %v741 = vsel %vm425, %v726, 0
        %743 = vmatprep.subr.mxu0 0.0
        %744 = vmatpush1.msra.mxu0 %v728
        %745 = vmatprep.subr.mxu0 0.0
        %746 = vmatpush1.msra.mxu0 %v729
        %747 = vmatprep.subr.mxu0 0.0
        %748 = vmatpush1.msra.mxu0 %v730
        %749 = vmatprep.subr.mxu0 0.0
        %750 = vmatpush1.msra.mxu0 %v731
        %751 = vmatprep.subr.mxu0 0.0
        %752 = vmatpush1.msra.mxu0 %v732
        %753 = vmatprep.subr.mxu0 0.0
        %754 = vmatpush1.msra.mxu0 %v733
        %755 = vmatprep.subr.mxu0 0.0
        %756 = vmatpush1.msra.mxu0 %v734
        %757 = vmatprep.subr.mxu0 0.0
        %758 = vmatpush1.msra.mxu0 %v735
        %759 = vmatprep.subr.mxu0 0.0
        %760 = vmatpush1.msra.mxu0 %v736
        %761 = vmatprep.subr.mxu0 0.0
        %762 = vmatpush1.msra.mxu0 %v737
        %763 = vmatprep.subr.mxu0 0.0
        %764 = vmatpush1.msra.mxu0 %v738
        %765 = vmatprep.subr.mxu0 0.0
        %766 = vmatpush1.msra.mxu0 %v739
        %767 = vmatprep.subr.mxu0 0.0
        %768 = vmatpush1.msra.mxu0 0.0
        %769 = vmatprep.subr.mxu0 0.0
        %770 = vmatpush1.msra.mxu0 0.0
        %771 = vmatprep.subr.mxu0 0.0
        %772 = vmatpush1.msra.mxu0 0.0
        %773 = vmatprep.subr.mxu0 0.0
        %774 = vmatpush1.msra.mxu0 0.0
        %775 = vmatprep.subr.mxu0 0.0
        %776 = vmatpush1.msra.mxu0 0.0
        %777 = vmatprep.subr.mxu0 0.0
        %778 = vmatpush1.msra.mxu0 0.0
        %779 = vmatprep.subr.mxu0 0.0
        %780 = vmatpush1.msra.mxu0 0.0
        %781 = vmatprep.subr.mxu0 0.0
        %782 = vmatpush1.msra.mxu0 0.0
        %783 = vmatprep.subr.mxu0 0.0
        %784 = vmatpush1.msra.mxu0 0.0
        %785 = vmatprep.subr.mxu0 0.0
        %786 = vmatpush1.msra.mxu0 0.0
        %787 = vmatprep.subr.mxu0 0.0
        %788 = vmatpush1.msra.mxu0 0.0
        %789 = vmatprep.subr.mxu0 0.0
        %790 = vmatpush1.msra.mxu0 0.0
        %791 = vmatprep.subr.mxu0 0.0
        %792 = vmatpush1.msra.mxu0 0.0
        %793 = vmatprep.subr.mxu0 0.0
        %794 = vmatpush1.msra.mxu0 0.0
        %795 = vmatprep.subr.mxu0 0.0
        %796 = vmatpush1.msra.mxu0 0.0
        %797 = vmatprep.subr.mxu0 0.0
        %798 = vmatpush1.msra.mxu0 0.0
        %799 = vmatprep.subr.mxu0 0.0
        %800 = vmatpush1.msra.mxu0 0.0
        %801 = vmatprep.subr.mxu0 0.0
        %802 = vmatpush1.msra.mxu0 0.0
        %803 = vmatprep.subr.mxu0 0.0
        %804 = vmatpush1.msra.mxu0 0.0
        %805 = vmatprep.subr.mxu0 0.0
        %806 = vmatpush1.msra.mxu0 0.0
        %807 = vmatprep.mubr.f32.mxu0 0.0
        %808 = vmatmul.mubr.f32.gmra.mrb[0].mxu0 %v741
        %v809 = vpop.f32.mrb[0].mxu0
        %v810 = vadd.f32 0.0, %v809
        %v811 = vpop.f32.mrb[0].mxu0
        %812 = vdwg.mxu0
        %v813 = vadd.f32 %v569, %v810
        %s814 = scalar_lea.vmem %s1, 672
        %v815 = vld [vmem:[%s814] sm:$0xff]
        %v816 = vld [vmem:[%s814 + $0x8] sm:$0xff]
        %v817 = vld [vmem:[%s814 + $0x10] sm:$0xff]
        %v818 = vld [vmem:[%s814 + $0x18] sm:$0xff]
        %v819 = vld [vmem:[%s814 + $0x20] sm:$0xff]
        %v820 = vld [vmem:[%s814 + $0x28] sm:$0xff]
        %v821 = vld [vmem:[%s814 + $0x30] sm:$0xff]
        %v822 = vld [vmem:[%s814 + $0x38] sm:$0xff]
        %v823 = vld [vmem:[%s814 + $0x40] sm:$0xff]
        %v824 = vld [vmem:[%s814 + $0x48] sm:$0xff]
        %v825 = vld [vmem:[%s814 + $0x50] sm:$0xff]
        %v826 = vld [vmem:[%s814 + $0x58] sm:$0xff]
        %827 = vmatprep.subr.mxu0 0.0
        %828 = vmatpush1.msra.mxu0 %v815
        %829 = vmatprep.subr.mxu0 0.0
        %830 = vmatpush1.msra.mxu0 %v816
        %831 = vmatprep.subr.mxu0 0.0
        %832 = vmatpush1.msra.mxu0 %v817
        %833 = vmatprep.subr.mxu0 0.0
        %834 = vmatpush1.msra.mxu0 %v818
        %835 = vmatprep.subr.mxu0 0.0
        %836 = vmatpush1.msra.mxu0 %v819
        %837 = vmatprep.subr.mxu0 0.0
        %838 = vmatpush1.msra.mxu0 %v820
        %839 = vmatprep.subr.mxu0 0.0
        %840 = vmatpush1.msra.mxu0 %v821
        %841 = vmatprep.subr.mxu0 0.0
        %842 = vmatpush1.msra.mxu0 %v822
        %843 = vmatprep.subr.mxu0 0.0
        %844 = vmatpush1.msra.mxu0 %v823
        %845 = vmatprep.subr.mxu0 0.0
        %846 = vmatpush1.msra.mxu0 %v824
        %847 = vmatprep.subr.mxu0 0.0
        %848 = vmatpush1.msra.mxu0 %v825
        %849 = vmatprep.subr.mxu0 0.0
        %850 = vmatpush1.msra.mxu0 %v826
        %851 = vmatprep.subr.mxu0 0.0
        %852 = vmatpush1.msra.mxu0 0.0
        %853 = vmatprep.subr.mxu0 0.0
        %854 = vmatpush1.msra.mxu0 0.0
        %855 = vmatprep.subr.mxu0 0.0
        %856 = vmatpush1.msra.mxu0 0.0
        %857 = vmatprep.subr.mxu0 0.0
        %858 = vmatpush1.msra.mxu0 0.0
        %859 = vmatprep.subr.mxu0 0.0
        %860 = vmatpush1.msra.mxu0 0.0
        %861 = vmatprep.subr.mxu0 0.0
        %862 = vmatpush1.msra.mxu0 0.0
        %863 = vmatprep.subr.mxu0 0.0
        %864 = vmatpush1.msra.mxu0 0.0
        %865 = vmatprep.subr.mxu0 0.0
        %866 = vmatpush1.msra.mxu0 0.0
        %867 = vmatprep.subr.mxu0 0.0
        %868 = vmatpush1.msra.mxu0 0.0
        %869 = vmatprep.subr.mxu0 0.0
        %870 = vmatpush1.msra.mxu0 0.0
        %871 = vmatprep.subr.mxu0 0.0
        %872 = vmatpush1.msra.mxu0 0.0
        %873 = vmatprep.subr.mxu0 0.0
        %874 = vmatpush1.msra.mxu0 0.0
        %875 = vmatprep.subr.mxu0 0.0
        %876 = vmatpush1.msra.mxu0 0.0
        %877 = vmatprep.subr.mxu0 0.0
        %878 = vmatpush1.msra.mxu0 0.0
        %879 = vmatprep.subr.mxu0 0.0
        %880 = vmatpush1.msra.mxu0 0.0
        %881 = vmatprep.subr.mxu0 0.0
        %882 = vmatpush1.msra.mxu0 0.0
        %883 = vmatprep.subr.mxu0 0.0
        %884 = vmatpush1.msra.mxu0 0.0
        %885 = vmatprep.subr.mxu0 0.0
        %886 = vmatpush1.msra.mxu0 0.0
        %887 = vmatprep.subr.mxu0 0.0
        %888 = vmatpush1.msra.mxu0 0.0
        %889 = vmatprep.subr.mxu0 0.0
        %890 = vmatpush1.msra.mxu0 0.0
        %891 = vmatprep.mubr.f32.mxu0 0.0
        %892 = vmatmul.mubr.f32.gmra.mrb[0].mxu0 %v741
        %v893 = vpop.f32.mrb[0].mxu0
        %v894 = vadd.f32 0.0, %v893
        %v895 = vpop.f32.mrb[0].mxu0
        %896 = vdwg.mxu0
        %v897 = vadd.f32 %v722, %v894
        %s898 = scalar_lea.vmem %s383, 24
        %v899 = vld [vmem:[%s898] sm:$0x7f]
        %s900 = scalar_lea.vmem %s1, 288
        %v901 = vld [vmem:[%s900] sm:$0xff]
        %v902 = vld [vmem:[%s900 + $0x8] sm:$0xff]
        %v903 = vld [vmem:[%s900 + $0x10] sm:$0xff]
        %v904 = vld [vmem:[%s900 + $0x18] sm:$0xff]
        %v905 = vld [vmem:[%s900 + $0x20] sm:$0xff]
        %v906 = vld [vmem:[%s900 + $0x28] sm:$0xff]
        %v907 = vld [vmem:[%s900 + $0x30] sm:$0xff]
        %v908 = vld [vmem:[%s900 + $0x38] sm:$0xff]
        %v909 = vld [vmem:[%s900 + $0x40] sm:$0xff]
        %v910 = vld [vmem:[%s900 + $0x48] sm:$0xff]
        %v911 = vld [vmem:[%s900 + $0x50] sm:$0xff]
        %v912 = vld [vmem:[%s900 + $0x58] sm:$0xff]
        %v914 = vsel %vm425, %v899, 0
        %916 = vmatprep.subr.mxu0 0.0
        %917 = vmatpush1.msra.mxu0 %v901
        %918 = vmatprep.subr.mxu0 0.0
        %919 = vmatpush1.msra.mxu0 %v902
        %920 = vmatprep.subr.mxu0 0.0
        %921 = vmatpush1.msra.mxu0 %v903
        %922 = vmatprep.subr.mxu0 0.0
        %923 = vmatpush1.msra.mxu0 %v904
        %924 = vmatprep.subr.mxu0 0.0
        %925 = vmatpush1.msra.mxu0 %v905
        %926 = vmatprep.subr.mxu0 0.0
        %927 = vmatpush1.msra.mxu0 %v906
        %928 = vmatprep.subr.mxu0 0.0
        %929 = vmatpush1.msra.mxu0 %v907
        %930 = vmatprep.subr.mxu0 0.0
        %931 = vmatpush1.msra.mxu0 %v908
        %932 = vmatprep.subr.mxu0 0.0
        %933 = vmatpush1.msra.mxu0 %v909
        %934 = vmatprep.subr.mxu0 0.0
        %935 = vmatpush1.msra.mxu0 %v910
        %936 = vmatprep.subr.mxu0 0.0
        %937 = vmatpush1.msra.mxu0 %v911
        %938 = vmatprep.subr.mxu0 0.0
        %939 = vmatpush1.msra.mxu0 %v912
        %940 = vmatprep.subr.mxu0 0.0
        %941 = vmatpush1.msra.mxu0 0.0
        %942 = vmatprep.subr.mxu0 0.0
        %943 = vmatpush1.msra.mxu0 0.0
        %944 = vmatprep.subr.mxu0 0.0
        %945 = vmatpush1.msra.mxu0 0.0
        %946 = vmatprep.subr.mxu0 0.0
        %947 = vmatpush1.msra.mxu0 0.0
        %948 = vmatprep.subr.mxu0 0.0
        %949 = vmatpush1.msra.mxu0 0.0
        %950 = vmatprep.subr.mxu0 0.0
        %951 = vmatpush1.msra.mxu0 0.0
        %952 = vmatprep.subr.mxu0 0.0
        %953 = vmatpush1.msra.mxu0 0.0
        %954 = vmatprep.subr.mxu0 0.0
        %955 = vmatpush1.msra.mxu0 0.0
        %956 = vmatprep.subr.mxu0 0.0
        %957 = vmatpush1.msra.mxu0 0.0
        %958 = vmatprep.subr.mxu0 0.0
        %959 = vmatpush1.msra.mxu0 0.0
        %960 = vmatprep.subr.mxu0 0.0
        %961 = vmatpush1.msra.mxu0 0.0
        %962 = vmatprep.subr.mxu0 0.0
        %963 = vmatpush1.msra.mxu0 0.0
        %964 = vmatprep.subr.mxu0 0.0
        %965 = vmatpush1.msra.mxu0 0.0
        %966 = vmatprep.subr.mxu0 0.0
        %967 = vmatpush1.msra.mxu0 0.0
        %968 = vmatprep.subr.mxu0 0.0
        %969 = vmatpush1.msra.mxu0 0.0
        %970 = vmatprep.subr.mxu0 0.0
        %971 = vmatpush1.msra.mxu0 0.0
        %972 = vmatprep.subr.mxu0 0.0
        %973 = vmatpush1.msra.mxu0 0.0
        %974 = vmatprep.subr.mxu0 0.0
        %975 = vmatpush1.msra.mxu0 0.0
        %976 = vmatprep.subr.mxu0 0.0
        %977 = vmatpush1.msra.mxu0 0.0
        %978 = vmatprep.subr.mxu0 0.0
        %979 = vmatpush1.msra.mxu0 0.0
        %980 = vmatprep.mubr.f32.mxu0 0.0
        %981 = vmatmul.mubr.f32.gmra.mrb[0].mxu0 %v914
        %v982 = vpop.f32.mrb[0].mxu0
        %v983 = vadd.f32 0.0, %v982
        %v984 = vpop.f32.mrb[0].mxu0
        %985 = vdwg.mxu0
        %v986 = vadd.f32 %v813, %v983
        %s987 = scalar_lea.vmem %s1, 768
        %v988 = vld [vmem:[%s987] sm:$0xff]
        %v989 = vld [vmem:[%s987 + $0x8] sm:$0xff]
        %v990 = vld [vmem:[%s987 + $0x10] sm:$0xff]
        %v991 = vld [vmem:[%s987 + $0x18] sm:$0xff]
        %v992 = vld [vmem:[%s987 + $0x20] sm:$0xff]
        %v993 = vld [vmem:[%s987 + $0x28] sm:$0xff]
        %v994 = vld [vmem:[%s987 + $0x30] sm:$0xff]
        %v995 = vld [vmem:[%s987 + $0x38] sm:$0xff]
        %v996 = vld [vmem:[%s987 + $0x40] sm:$0xff]
        %v997 = vld [vmem:[%s987 + $0x48] sm:$0xff]
        %v998 = vld [vmem:[%s987 + $0x50] sm:$0xff]
        %v999 = vld [vmem:[%s987 + $0x58] sm:$0xff]
        %1000 = vmatprep.subr.mxu0 0.0
        %1001 = vmatpush1.msra.mxu0 %v988
        %1002 = vmatprep.subr.mxu0 0.0
        %1003 = vmatpush1.msra.mxu0 %v989
        %1004 = vmatprep.subr.mxu0 0.0
        %1005 = vmatpush1.msra.mxu0 %v990
        %1006 = vmatprep.subr.mxu0 0.0
        %1007 = vmatpush1.msra.mxu0 %v991
        %1008 = vmatprep.subr.mxu0 0.0
        %1009 = vmatpush1.msra.mxu0 %v992
        %1010 = vmatprep.subr.mxu0 0.0
        %1011 = vmatpush1.msra.mxu0 %v993
        %1012 = vmatprep.subr.mxu0 0.0
        %1013 = vmatpush1.msra.mxu0 %v994
        %1014 = vmatprep.subr.mxu0 0.0
        %1015 = vmatpush1.msra.mxu0 %v995
        %1016 = vmatprep.subr.mxu0 0.0
        %1017 = vmatpush1.msra.mxu0 %v996
        %1018 = vmatprep.subr.mxu0 0.0
        %1019 = vmatpush1.msra.mxu0 %v997
        %1020 = vmatprep.subr.mxu0 0.0
        %1021 = vmatpush1.msra.mxu0 %v998
        %1022 = vmatprep.subr.mxu0 0.0
        %1023 = vmatpush1.msra.mxu0 %v999
        %1024 = vmatprep.subr.mxu0 0.0
        %1025 = vmatpush1.msra.mxu0 0.0
        %1026 = vmatprep.subr.mxu0 0.0
        %1027 = vmatpush1.msra.mxu0 0.0
        %1028 = vmatprep.subr.mxu0 0.0
        %1029 = vmatpush1.msra.mxu0 0.0
        %1030 = vmatprep.subr.mxu0 0.0
        %1031 = vmatpush1.msra.mxu0 0.0
        %1032 = vmatprep.subr.mxu0 0.0
        %1033 = vmatpush1.msra.mxu0 0.0
        %1034 = vmatprep.subr.mxu0 0.0
        %1035 = vmatpush1.msra.mxu0 0.0
        %1036 = vmatprep.subr.mxu0 0.0
        %1037 = vmatpush1.msra.mxu0 0.0
        %1038 = vmatprep.subr.mxu0 0.0
        %1039 = vmatpush1.msra.mxu0 0.0
        %1040 = vmatprep.subr.mxu0 0.0
        %1041 = vmatpush1.msra.mxu0 0.0
        %1042 = vmatprep.subr.mxu0 0.0
        %1043 = vmatpush1.msra.mxu0 0.0
        %1044 = vmatprep.subr.mxu0 0.0
        %1045 = vmatpush1.msra.mxu0 0.0
        %1046 = vmatprep.subr.mxu0 0.0
        %1047 = vmatpush1.msra.mxu0 0.0
        %1048 = vmatprep.subr.mxu0 0.0
        %1049 = vmatpush1.msra.mxu0 0.0
        %1050 = vmatprep.subr.mxu0 0.0
        %1051 = vmatpush1.msra.mxu0 0.0
        %1052 = vmatprep.subr.mxu0 0.0
        %1053 = vmatpush1.msra.mxu0 0.0
        %1054 = vmatprep.subr.mxu0 0.0
        %1055 = vmatpush1.msra.mxu0 0.0
        %1056 = vmatprep.subr.mxu0 0.0
        %1057 = vmatpush1.msra.mxu0 0.0
        %1058 = vmatprep.subr.mxu0 0.0
        %1059 = vmatpush1.msra.mxu0 0.0
        %1060 = vmatprep.subr.mxu0 0.0
        %1061 = vmatpush1.msra.mxu0 0.0
        %1062 = vmatprep.subr.mxu0 0.0
        %1063 = vmatpush1.msra.mxu0 0.0
        %1064 = vmatprep.mubr.f32.mxu0 0.0
        %1065 = vmatmul.mubr.f32.gmra.mrb[0].mxu0 %v914
        %v1066 = vpop.f32.mrb[0].mxu0
        %v1067 = vadd.f32 0.0, %v1066
        %v1068 = vpop.f32.mrb[0].mxu0
        %1069 = vdwg.mxu0
        %v1070 = vadd.f32 %v897, %v1067
        %v1071 = vld [vmem:[%s383 + $0x1] sm:$0x7f]
        %s1072 = scalar_lea.vmem %s1, 384
        %v1073 = vld [vmem:[%s1072] sm:$0xff]
        %v1074 = vld [vmem:[%s1072 + $0x8] sm:$0xff]
        %v1075 = vld [vmem:[%s1072 + $0x10] sm:$0xff]
        %v1076 = vld [vmem:[%s1072 + $0x18] sm:$0xff]
        %v1077 = vld [vmem:[%s1072 + $0x20] sm:$0xff]
        %v1078 = vld [vmem:[%s1072 + $0x28] sm:$0xff]
        %v1079 = vld [vmem:[%s1072 + $0x30] sm:$0xff]
        %v1080 = vld [vmem:[%s1072 + $0x38] sm:$0xff]
        %v1081 = vld [vmem:[%s1072 + $0x40] sm:$0xff]
        %v1082 = vld [vmem:[%s1072 + $0x48] sm:$0xff]
        %v1083 = vld [vmem:[%s1072 + $0x50] sm:$0xff]
        %v1084 = vld [vmem:[%s1072 + $0x58] sm:$0xff]
        %v1086 = vsel %vm425, %v1071, 0
        %1088 = vmatprep.subr.mxu0 0.0
        %1089 = vmatpush1.msra.mxu0 %v1073
        %1090 = vmatprep.subr.mxu0 0.0
        %1091 = vmatpush1.msra.mxu0 %v1074
        %1092 = vmatprep.subr.mxu0 0.0
        %1093 = vmatpush1.msra.mxu0 %v1075
        %1094 = vmatprep.subr.mxu0 0.0
        %1095 = vmatpush1.msra.mxu0 %v1076
        %1096 = vmatprep.subr.mxu0 0.0
        %1097 = vmatpush1.msra.mxu0 %v1077
        %1098 = vmatprep.subr.mxu0 0.0
        %1099 = vmatpush1.msra.mxu0 %v1078
        %1100 = vmatprep.subr.mxu0 0.0
        %1101 = vmatpush1.msra.mxu0 %v1079
        %1102 = vmatprep.subr.mxu0 0.0
        %1103 = vmatpush1.msra.mxu0 %v1080
        %1104 = vmatprep.subr.mxu0 0.0
        %1105 = vmatpush1.msra.mxu0 %v1081
        %1106 = vmatprep.subr.mxu0 0.0
        %1107 = vmatpush1.msra.mxu0 %v1082
        %1108 = vmatprep.subr.mxu0 0.0
        %1109 = vmatpush1.msra.mxu0 %v1083
        %1110 = vmatprep.subr.mxu0 0.0
        %1111 = vmatpush1.msra.mxu0 %v1084
        %1112 = vmatprep.subr.mxu0 0.0
        %1113 = vmatpush1.msra.mxu0 0.0
        %1114 = vmatprep.subr.mxu0 0.0
        %1115 = vmatpush1.msra.mxu0 0.0
        %1116 = vmatprep.subr.mxu0 0.0
        %1117 = vmatpush1.msra.mxu0 0.0
        %1118 = vmatprep.subr.mxu0 0.0
        %1119 = vmatpush1.msra.mxu0 0.0
        %1120 = vmatprep.subr.mxu0 0.0
        %1121 = vmatpush1.msra.mxu0 0.0
        %1122 = vmatprep.subr.mxu0 0.0
        %1123 = vmatpush1.msra.mxu0 0.0
        %1124 = vmatprep.subr.mxu0 0.0
        %1125 = vmatpush1.msra.mxu0 0.0
        %1126 = vmatprep.subr.mxu0 0.0
        %1127 = vmatpush1.msra.mxu0 0.0
        %1128 = vmatprep.subr.mxu0 0.0
        %1129 = vmatpush1.msra.mxu0 0.0
        %1130 = vmatprep.subr.mxu0 0.0
        %1131 = vmatpush1.msra.mxu0 0.0
        %1132 = vmatprep.subr.mxu0 0.0
        %1133 = vmatpush1.msra.mxu0 0.0
        %1134 = vmatprep.subr.mxu0 0.0
        %1135 = vmatpush1.msra.mxu0 0.0
        %1136 = vmatprep.subr.mxu0 0.0
        %1137 = vmatpush1.msra.mxu0 0.0
        %1138 = vmatprep.subr.mxu0 0.0
        %1139 = vmatpush1.msra.mxu0 0.0
        %1140 = vmatprep.subr.mxu0 0.0
        %1141 = vmatpush1.msra.mxu0 0.0
        %1142 = vmatprep.subr.mxu0 0.0
        %1143 = vmatpush1.msra.mxu0 0.0
        %1144 = vmatprep.subr.mxu0 0.0
        %1145 = vmatpush1.msra.mxu0 0.0
        %1146 = vmatprep.subr.mxu0 0.0
        %1147 = vmatpush1.msra.mxu0 0.0
        %1148 = vmatprep.subr.mxu0 0.0
        %1149 = vmatpush1.msra.mxu0 0.0
        %1150 = vmatprep.subr.mxu0 0.0
        %1151 = vmatpush1.msra.mxu0 0.0
        %1152 = vmatprep.mubr.f32.mxu0 0.0
        %1153 = vmatmul.mubr.f32.gmra.mrb[0].mxu0 %v1086
        %v1154 = vpop.f32.mrb[0].mxu0
        %v1155 = vadd.f32 0.0, %v1154
        %v1156 = vpop.f32.mrb[0].mxu0
        %1157 = vdwg.mxu0
        %v1158 = vadd.f32 %v986, %v1155
        %s1159 = scalar_lea.vmem %s1, 864
        %v1160 = vld [vmem:[%s1159] sm:$0xff]
        %v1161 = vld [vmem:[%s1159 + $0x8] sm:$0xff]
        %v1162 = vld [vmem:[%s1159 + $0x10] sm:$0xff]
        %v1163 = vld [vmem:[%s1159 + $0x18] sm:$0xff]
        %v1164 = vld [vmem:[%s1159 + $0x20] sm:$0xff]
        %v1165 = vld [vmem:[%s1159 + $0x28] sm:$0xff]
        %v1166 = vld [vmem:[%s1159 + $0x30] sm:$0xff]
        %v1167 = vld [vmem:[%s1159 + $0x38] sm:$0xff]
        %v1168 = vld [vmem:[%s1159 + $0x40] sm:$0xff]
        %v1169 = vld [vmem:[%s1159 + $0x48] sm:$0xff]
        %v1170 = vld [vmem:[%s1159 + $0x50] sm:$0xff]
        %v1171 = vld [vmem:[%s1159 + $0x58] sm:$0xff]
        %1172 = vmatprep.subr.mxu0 0.0
        %1173 = vmatpush1.msra.mxu0 %v1160
        %1174 = vmatprep.subr.mxu0 0.0
        %1175 = vmatpush1.msra.mxu0 %v1161
        %1176 = vmatprep.subr.mxu0 0.0
        %1177 = vmatpush1.msra.mxu0 %v1162
        %1178 = vmatprep.subr.mxu0 0.0
        %1179 = vmatpush1.msra.mxu0 %v1163
        %1180 = vmatprep.subr.mxu0 0.0
        %1181 = vmatpush1.msra.mxu0 %v1164
        %1182 = vmatprep.subr.mxu0 0.0
        %1183 = vmatpush1.msra.mxu0 %v1165
        %1184 = vmatprep.subr.mxu0 0.0
        %1185 = vmatpush1.msra.mxu0 %v1166
        %1186 = vmatprep.subr.mxu0 0.0
        %1187 = vmatpush1.msra.mxu0 %v1167
        %1188 = vmatprep.subr.mxu0 0.0
        %1189 = vmatpush1.msra.mxu0 %v1168
        %1190 = vmatprep.subr.mxu0 0.0
        %1191 = vmatpush1.msra.mxu0 %v1169
        %1192 = vmatprep.subr.mxu0 0.0
        %1193 = vmatpush1.msra.mxu0 %v1170
        %1194 = vmatprep.subr.mxu0 0.0
        %1195 = vmatpush1.msra.mxu0 %v1171
        %1196 = vmatprep.subr.mxu0 0.0
        %1197 = vmatpush1.msra.mxu0 0.0
        %1198 = vmatprep.subr.mxu0 0.0
        %1199 = vmatpush1.msra.mxu0 0.0
        %1200 = vmatprep.subr.mxu0 0.0
        %1201 = vmatpush1.msra.mxu0 0.0
        %1202 = vmatprep.subr.mxu0 0.0
        %1203 = vmatpush1.msra.mxu0 0.0
        %1204 = vmatprep.subr.mxu0 0.0
        %1205 = vmatpush1.msra.mxu0 0.0
        %1206 = vmatprep.subr.mxu0 0.0
        %1207 = vmatpush1.msra.mxu0 0.0
        %1208 = vmatprep.subr.mxu0 0.0
        %1209 = vmatpush1.msra.mxu0 0.0
        %1210 = vmatprep.subr.mxu0 0.0
        %1211 = vmatpush1.msra.mxu0 0.0
        %1212 = vmatprep.subr.mxu0 0.0
        %1213 = vmatpush1.msra.mxu0 0.0
        %1214 = vmatprep.subr.mxu0 0.0
        %1215 = vmatpush1.msra.mxu0 0.0
        %1216 = vmatprep.subr.mxu0 0.0
        %1217 = vmatpush1.msra.mxu0 0.0
        %1218 = vmatprep.subr.mxu0 0.0
        %1219 = vmatpush1.msra.mxu0 0.0
        %1220 = vmatprep.subr.mxu0 0.0
        %1221 = vmatpush1.msra.mxu0 0.0
        %1222 = vmatprep.subr.mxu0 0.0
        %1223 = vmatpush1.msra.mxu0 0.0
        %1224 = vmatprep.subr.mxu0 0.0
        %1225 = vmatpush1.msra.mxu0 0.0
        %1226 = vmatprep.subr.mxu0 0.0
        %1227 = vmatpush1.msra.mxu0 0.0
        %1228 = vmatprep.subr.mxu0 0.0
        %1229 = vmatpush1.msra.mxu0 0.0
        %1230 = vmatprep.subr.mxu0 0.0
        %1231 = vmatpush1.msra.mxu0 0.0
        %1232 = vmatprep.subr.mxu0 0.0
        %1233 = vmatpush1.msra.mxu0 0.0
        %1234 = vmatprep.subr.mxu0 0.0
        %1235 = vmatpush1.msra.mxu0 0.0
        %1236 = vmatprep.mubr.f32.mxu0 0.0
        %1237 = vmatmul.mubr.f32.gmra.mrb[0].mxu0 %v1086
        %v1238 = vpop.f32.mrb[0].mxu0
        %v1239 = vadd.f32 0.0, %v1238
        %v1240 = vpop.f32.mrb[0].mxu0
        %1241 = vdwg.mxu0
        %v1242 = vadd.f32 %v1070, %v1239
        %v1243 = vmax.f32 %v1158, %v1242
        %v1244 = vld [vmem:[%s2] sm:$0x1]
        %v1246 = vlaneseq
        %v1247 = vshrl.u32 %v1246, 7
        %v1248 = vsub.s32 0, %v1247
        %v1249 = vrot.slane %v1244, %v1248
        %v1251 = vadd.f32 %v1243, %v1249
        %v1252 = vmax.f32 %v1251, 0.0
        %1253 = vmatprep.subr.mxu0 0.0
        %1254 = vmatpush1.msra.mxu0 %v413
        %1255 = vmatprep.subr.mxu0 0.0
        %1256 = vmatpush1.msra.mxu0 %v414
        %1257 = vmatprep.subr.mxu0 0.0
        %1258 = vmatpush1.msra.mxu0 %v415
        %1259 = vmatprep.subr.mxu0 0.0
        %1260 = vmatpush1.msra.mxu0 %v416
        %1261 = vmatprep.subr.mxu0 0.0
        %1262 = vmatpush1.msra.mxu0 %v417
        %1263 = vmatprep.subr.mxu0 0.0
        %1264 = vmatpush1.msra.mxu0 %v418
        %1265 = vmatprep.subr.mxu0 0.0
        %1266 = vmatpush1.msra.mxu0 %v419
        %1267 = vmatprep.subr.mxu0 0.0
        %1268 = vmatpush1.msra.mxu0 %v420
        %1269 = vmatprep.subr.mxu0 0.0
        %1270 = vmatpush1.msra.mxu0 %v421
        %1271 = vmatprep.subr.mxu0 0.0
        %1272 = vmatpush1.msra.mxu0 %v422
        %1273 = vmatprep.subr.mxu0 0.0
        %1274 = vmatpush1.msra.mxu0 %v423
        %1275 = vmatprep.subr.mxu0 0.0
        %1276 = vmatpush1.msra.mxu0 %v424
        %1277 = vmatprep.subr.mxu0 0.0
        %1278 = vmatpush1.msra.mxu0 0.0
        %1279 = vmatprep.subr.mxu0 0.0
        %1280 = vmatpush1.msra.mxu0 0.0
        %1281 = vmatprep.subr.mxu0 0.0
        %1282 = vmatpush1.msra.mxu0 0.0
        %1283 = vmatprep.subr.mxu0 0.0
        %1284 = vmatpush1.msra.mxu0 0.0
        %1285 = vmatprep.subr.mxu0 0.0
        %1286 = vmatpush1.msra.mxu0 0.0
        %1287 = vmatprep.subr.mxu0 0.0
        %1288 = vmatpush1.msra.mxu0 0.0
        %1289 = vmatprep.subr.mxu0 0.0
        %1290 = vmatpush1.msra.mxu0 0.0
        %1291 = vmatprep.subr.mxu0 0.0
        %1292 = vmatpush1.msra.mxu0 0.0
        %1293 = vmatprep.subr.mxu0 0.0
        %1294 = vmatpush1.msra.mxu0 0.0
        %1295 = vmatprep.subr.mxu0 0.0
        %1296 = vmatpush1.msra.mxu0 0.0
        %1297 = vmatprep.subr.mxu0 0.0
        %1298 = vmatpush1.msra.mxu0 0.0
        %1299 = vmatprep.subr.mxu0 0.0
        %1300 = vmatpush1.msra.mxu0 0.0
        %1301 = vmatprep.subr.mxu0 0.0
        %1302 = vmatpush1.msra.mxu0 0.0
        %1303 = vmatprep.subr.mxu0 0.0
        %1304 = vmatpush1.msra.mxu0 0.0
        %1305 = vmatprep.subr.mxu0 0.0
        %1306 = vmatpush1.msra.mxu0 0.0
        %1307 = vmatprep.subr.mxu0 0.0
        %1308 = vmatpush1.msra.mxu0 0.0
        %1309 = vmatprep.subr.mxu0 0.0
        %1310 = vmatpush1.msra.mxu0 0.0
        %1311 = vmatprep.subr.mxu0 0.0
        %1312 = vmatpush1.msra.mxu0 0.0
        %1313 = vmatprep.subr.mxu0 0.0
        %1314 = vmatpush1.msra.mxu0 0.0
        %1315 = vmatprep.subr.mxu0 0.0
        %1316 = vmatpush1.msra.mxu0 0.0
        %1317 = vmatprep.mubr.f32.mxu0 0.0
        %1318 = vmatmul.mubr.f32.gmra.mrb[0].mxu0 %v741
        %v1319 = vpop.f32.mrb[0].mxu0
        %v1320 = vadd.f32 0.0, %v1319
        %v1321 = vpop.f32.mrb[0].mxu0
        %1322 = vdwg.mxu0
        %1323 = vmatprep.subr.mxu0 0.0
        %1324 = vmatpush1.msra.mxu0 %v385
        %1325 = vmatprep.subr.mxu0 0.0
        %1326 = vmatpush1.msra.mxu0 %v386
        %1327 = vmatprep.subr.mxu0 0.0
        %1328 = vmatpush1.msra.mxu0 %v387
        %1329 = vmatprep.subr.mxu0 0.0
        %1330 = vmatpush1.msra.mxu0 %v388
        %1331 = vmatprep.subr.mxu0 0.0
        %1332 = vmatpush1.msra.mxu0 %v389
        %1333 = vmatprep.subr.mxu0 0.0
        %1334 = vmatpush1.msra.mxu0 %v390
        %1335 = vmatprep.subr.mxu0 0.0
        %1336 = vmatpush1.msra.mxu0 %v391
        %1337 = vmatprep.subr.mxu0 0.0
        %1338 = vmatpush1.msra.mxu0 %v392
        %1339 = vmatprep.subr.mxu0 0.0
        %1340 = vmatpush1.msra.mxu0 %v393
        %1341 = vmatprep.subr.mxu0 0.0
        %1342 = vmatpush1.msra.mxu0 %v394
        %1343 = vmatprep.subr.mxu0 0.0
        %1344 = vmatpush1.msra.mxu0 %v395
        %1345 = vmatprep.subr.mxu0 0.0
        %1346 = vmatpush1.msra.mxu0 %v396
        %1347 = vmatprep.subr.mxu0 0.0
        %1348 = vmatpush1.msra.mxu0 0.0
        %1349 = vmatprep.subr.mxu0 0.0
        %1350 = vmatpush1.msra.mxu0 0.0
        %1351 = vmatprep.subr.mxu0 0.0
        %1352 = vmatpush1.msra.mxu0 0.0
        %1353 = vmatprep.subr.mxu0 0.0
        %1354 = vmatpush1.msra.mxu0 0.0
        %1355 = vmatprep.subr.mxu0 0.0
        %1356 = vmatpush1.msra.mxu0 0.0
        %1357 = vmatprep.subr.mxu0 0.0
        %1358 = vmatpush1.msra.mxu0 0.0
        %1359 = vmatprep.subr.mxu0 0.0
        %1360 = vmatpush1.msra.mxu0 0.0
        %1361 = vmatprep.subr.mxu0 0.0
        %1362 = vmatpush1.msra.mxu0 0.0
        %1363 = vmatprep.subr.mxu0 0.0
        %1364 = vmatpush1.msra.mxu0 0.0
        %1365 = vmatprep.subr.mxu0 0.0
        %1366 = vmatpush1.msra.mxu0 0.0
        %1367 = vmatprep.subr.mxu0 0.0
        %1368 = vmatpush1.msra.mxu0 0.0
        %1369 = vmatprep.subr.mxu0 0.0
        %1370 = vmatpush1.msra.mxu0 0.0
        %1371 = vmatprep.subr.mxu0 0.0
        %1372 = vmatpush1.msra.mxu0 0.0
        %1373 = vmatprep.subr.mxu0 0.0
        %1374 = vmatpush1.msra.mxu0 0.0
        %1375 = vmatprep.subr.mxu0 0.0
        %1376 = vmatpush1.msra.mxu0 0.0
        %1377 = vmatprep.subr.mxu0 0.0
        %1378 = vmatpush1.msra.mxu0 0.0
        %1379 = vmatprep.subr.mxu0 0.0
        %1380 = vmatpush1.msra.mxu0 0.0
        %1381 = vmatprep.subr.mxu0 0.0
        %1382 = vmatpush1.msra.mxu0 0.0
        %1383 = vmatprep.subr.mxu0 0.0
        %1384 = vmatpush1.msra.mxu0 0.0
        %1385 = vmatprep.subr.mxu0 0.0
        %1386 = vmatpush1.msra.mxu0 0.0
        %1387 = vmatprep.mubr.f32.mxu0 0.0
        %1388 = vmatmul.mubr.f32.gmra.mrb[0].mxu0 %v427
        %v1389 = vpop.f32.mrb[0].mxu0
        %v1390 = vadd.f32 %v1320, %v1389
        %v1391 = vpop.f32.mrb[0].mxu0
        %1392 = vdwg.mxu0
        %1393 = vmatprep.subr.mxu0 0.0
        %1394 = vmatpush1.msra.mxu0 %v573
        %1395 = vmatprep.subr.mxu0 0.0
        %1396 = vmatpush1.msra.mxu0 %v574
        %1397 = vmatprep.subr.mxu0 0.0
        %1398 = vmatpush1.msra.mxu0 %v575
        %1399 = vmatprep.subr.mxu0 0.0
        %1400 = vmatpush1.msra.mxu0 %v576
        %1401 = vmatprep.subr.mxu0 0.0
        %1402 = vmatpush1.msra.mxu0 %v577
        %1403 = vmatprep.subr.mxu0 0.0
        %1404 = vmatpush1.msra.mxu0 %v578
        %1405 = vmatprep.subr.mxu0 0.0
        %1406 = vmatpush1.msra.mxu0 %v579
        %1407 = vmatprep.subr.mxu0 0.0
        %1408 = vmatpush1.msra.mxu0 %v580
        %1409 = vmatprep.subr.mxu0 0.0
        %1410 = vmatpush1.msra.mxu0 %v581
        %1411 = vmatprep.subr.mxu0 0.0
        %1412 = vmatpush1.msra.mxu0 %v582
        %1413 = vmatprep.subr.mxu0 0.0
        %1414 = vmatpush1.msra.mxu0 %v583
        %1415 = vmatprep.subr.mxu0 0.0
        %1416 = vmatpush1.msra.mxu0 %v584
        %1417 = vmatprep.subr.mxu0 0.0
        %1418 = vmatpush1.msra.mxu0 0.0
        %1419 = vmatprep.subr.mxu0 0.0
        %1420 = vmatpush1.msra.mxu0 0.0
        %1421 = vmatprep.subr.mxu0 0.0
        %1422 = vmatpush1.msra.mxu0 0.0
        %1423 = vmatprep.subr.mxu0 0.0
        %1424 = vmatpush1.msra.mxu0 0.0
        %1425 = vmatprep.subr.mxu0 0.0
        %1426 = vmatpush1.msra.mxu0 0.0
        %1427 = vmatprep.subr.mxu0 0.0
        %1428 = vmatpush1.msra.mxu0 0.0
        %1429 = vmatprep.subr.mxu0 0.0
        %1430 = vmatpush1.msra.mxu0 0.0
        %1431 = vmatprep.subr.mxu0 0.0
        %1432 = vmatpush1.msra.mxu0 0.0
        %1433 = vmatprep.subr.mxu0 0.0
        %1434 = vmatpush1.msra.mxu0 0.0
        %1435 = vmatprep.subr.mxu0 0.0
        %1436 = vmatpush1.msra.mxu0 0.0
        %1437 = vmatprep.subr.mxu0 0.0
        %1438 = vmatpush1.msra.mxu0 0.0
        %1439 = vmatprep.subr.mxu0 0.0
        %1440 = vmatpush1.msra.mxu0 0.0
        %1441 = vmatprep.subr.mxu0 0.0
        %1442 = vmatpush1.msra.mxu0 0.0
        %1443 = vmatprep.subr.mxu0 0.0
        %1444 = vmatpush1.msra.mxu0 0.0
        %1445 = vmatprep.subr.mxu0 0.0
        %1446 = vmatpush1.msra.mxu0 0.0
        %1447 = vmatprep.subr.mxu0 0.0
        %1448 = vmatpush1.msra.mxu0 0.0
        %1449 = vmatprep.subr.mxu0 0.0
        %1450 = vmatpush1.msra.mxu0 0.0
        %1451 = vmatprep.subr.mxu0 0.0
        %1452 = vmatpush1.msra.mxu0 0.0
        %1453 = vmatprep.subr.mxu0 0.0
        %1454 = vmatpush1.msra.mxu0 0.0
        %1455 = vmatprep.subr.mxu0 0.0
        %1456 = vmatpush1.msra.mxu0 0.0
        %1457 = vmatprep.mubr.f32.mxu0 0.0
        %1458 = vmatmul.mubr.f32.gmra.mrb[0].mxu0 %v741
        %v1459 = vpop.f32.mrb[0].mxu0
        %v1460 = vadd.f32 0.0, %v1459
        %v1461 = vpop.f32.mrb[0].mxu0
        %1462 = vdwg.mxu0
        %1463 = vmatprep.subr.mxu0 0.0
        %1464 = vmatpush1.msra.mxu0 %v398
        %1465 = vmatprep.subr.mxu0 0.0
        %1466 = vmatpush1.msra.mxu0 %v399
        %1467 = vmatprep.subr.mxu0 0.0
        %1468 = vmatpush1.msra.mxu0 %v400
        %1469 = vmatprep.subr.mxu0 0.0
        %1470 = vmatpush1.msra.mxu0 %v401
        %1471 = vmatprep.subr.mxu0 0.0
        %1472 = vmatpush1.msra.mxu0 %v402
        %1473 = vmatprep.subr.mxu0 0.0
        %1474 = vmatpush1.msra.mxu0 %v403
        %1475 = vmatprep.subr.mxu0 0.0
        %1476 = vmatpush1.msra.mxu0 %v404
        %1477 = vmatprep.subr.mxu0 0.0
        %1478 = vmatpush1.msra.mxu0 %v405
        %1479 = vmatprep.subr.mxu0 0.0
        %1480 = vmatpush1.msra.mxu0 %v406
        %1481 = vmatprep.subr.mxu0 0.0
        %1482 = vmatpush1.msra.mxu0 %v407
        %1483 = vmatprep.subr.mxu0 0.0
        %1484 = vmatpush1.msra.mxu0 %v408
        %1485 = vmatprep.subr.mxu0 0.0
        %1486 = vmatpush1.msra.mxu0 %v409
        %1487 = vmatprep.subr.mxu0 0.0
        %1488 = vmatpush1.msra.mxu0 0.0
        %1489 = vmatprep.subr.mxu0 0.0
        %1490 = vmatpush1.msra.mxu0 0.0
        %1491 = vmatprep.subr.mxu0 0.0
        %1492 = vmatpush1.msra.mxu0 0.0
        %1493 = vmatprep.subr.mxu0 0.0
        %1494 = vmatpush1.msra.mxu0 0.0
        %1495 = vmatprep.subr.mxu0 0.0
        %1496 = vmatpush1.msra.mxu0 0.0
        %1497 = vmatprep.subr.mxu0 0.0
        %1498 = vmatpush1.msra.mxu0 0.0
        %1499 = vmatprep.subr.mxu0 0.0
        %1500 = vmatpush1.msra.mxu0 0.0
        %1501 = vmatprep.subr.mxu0 0.0
        %1502 = vmatpush1.msra.mxu0 0.0
        %1503 = vmatprep.subr.mxu0 0.0
        %1504 = vmatpush1.msra.mxu0 0.0
        %1505 = vmatprep.subr.mxu0 0.0
        %1506 = vmatpush1.msra.mxu0 0.0
        %1507 = vmatprep.subr.mxu0 0.0
        %1508 = vmatpush1.msra.mxu0 0.0
        %1509 = vmatprep.subr.mxu0 0.0
        %1510 = vmatpush1.msra.mxu0 0.0
        %1511 = vmatprep.subr.mxu0 0.0
        %1512 = vmatpush1.msra.mxu0 0.0
        %1513 = vmatprep.subr.mxu0 0.0
        %1514 = vmatpush1.msra.mxu0 0.0
        %1515 = vmatprep.subr.mxu0 0.0
        %1516 = vmatpush1.msra.mxu0 0.0
        %1517 = vmatprep.subr.mxu0 0.0
        %1518 = vmatpush1.msra.mxu0 0.0
        %1519 = vmatprep.subr.mxu0 0.0
        %1520 = vmatpush1.msra.mxu0 0.0
        %1521 = vmatprep.subr.mxu0 0.0
        %1522 = vmatpush1.msra.mxu0 0.0
        %1523 = vmatprep.subr.mxu0 0.0
        %1524 = vmatpush1.msra.mxu0 0.0
        %1525 = vmatprep.subr.mxu0 0.0
        %1526 = vmatpush1.msra.mxu0 0.0
        %1527 = vmatprep.mubr.f32.mxu0 0.0
        %1528 = vmatmul.mubr.f32.gmra.mrb[0].mxu0 %v427
        %v1529 = vpop.f32.mrb[0].mxu0
        %v1530 = vadd.f32 %v1460, %v1529
        %v1531 = vpop.f32.mrb[0].mxu0
        %1532 = vdwg.mxu0
        %1533 = vmatprep.subr.mxu0 0.0
        %1534 = vmatpush1.msra.mxu0 %v728
        %1535 = vmatprep.subr.mxu0 0.0
        %1536 = vmatpush1.msra.mxu0 %v729
        %1537 = vmatprep.subr.mxu0 0.0
        %1538 = vmatpush1.msra.mxu0 %v730
        %1539 = vmatprep.subr.mxu0 0.0
        %1540 = vmatpush1.msra.mxu0 %v731
        %1541 = vmatprep.subr.mxu0 0.0
        %1542 = vmatpush1.msra.mxu0 %v732
        %1543 = vmatprep.subr.mxu0 0.0
        %1544 = vmatpush1.msra.mxu0 %v733
        %1545 = vmatprep.subr.mxu0 0.0
        %1546 = vmatpush1.msra.mxu0 %v734
        %1547 = vmatprep.subr.mxu0 0.0
        %1548 = vmatpush1.msra.mxu0 %v735
        %1549 = vmatprep.subr.mxu0 0.0
        %1550 = vmatpush1.msra.mxu0 %v736
        %1551 = vmatprep.subr.mxu0 0.0
        %1552 = vmatpush1.msra.mxu0 %v737
        %1553 = vmatprep.subr.mxu0 0.0
        %1554 = vmatpush1.msra.mxu0 %v738
        %1555 = vmatprep.subr.mxu0 0.0
        %1556 = vmatpush1.msra.mxu0 %v739
        %1557 = vmatprep.subr.mxu0 0.0
        %1558 = vmatpush1.msra.mxu0 0.0
        %1559 = vmatprep.subr.mxu0 0.0
        %1560 = vmatpush1.msra.mxu0 0.0
        %1561 = vmatprep.subr.mxu0 0.0
        %1562 = vmatpush1.msra.mxu0 0.0
        %1563 = vmatprep.subr.mxu0 0.0
        %1564 = vmatpush1.msra.mxu0 0.0
        %1565 = vmatprep.subr.mxu0 0.0
        %1566 = vmatpush1.msra.mxu0 0.0
        %1567 = vmatprep.subr.mxu0 0.0
        %1568 = vmatpush1.msra.mxu0 0.0
        %1569 = vmatprep.subr.mxu0 0.0
        %1570 = vmatpush1.msra.mxu0 0.0
        %1571 = vmatprep.subr.mxu0 0.0
        %1572 = vmatpush1.msra.mxu0 0.0
        %1573 = vmatprep.subr.mxu0 0.0
        %1574 = vmatpush1.msra.mxu0 0.0
        %1575 = vmatprep.subr.mxu0 0.0
        %1576 = vmatpush1.msra.mxu0 0.0
        %1577 = vmatprep.subr.mxu0 0.0
        %1578 = vmatpush1.msra.mxu0 0.0
        %1579 = vmatprep.subr.mxu0 0.0
        %1580 = vmatpush1.msra.mxu0 0.0
        %1581 = vmatprep.subr.mxu0 0.0
        %1582 = vmatpush1.msra.mxu0 0.0
        %1583 = vmatprep.subr.mxu0 0.0
        %1584 = vmatpush1.msra.mxu0 0.0
        %1585 = vmatprep.subr.mxu0 0.0
        %1586 = vmatpush1.msra.mxu0 0.0
        %1587 = vmatprep.subr.mxu0 0.0
        %1588 = vmatpush1.msra.mxu0 0.0
        %1589 = vmatprep.subr.mxu0 0.0
        %1590 = vmatpush1.msra.mxu0 0.0
        %1591 = vmatprep.subr.mxu0 0.0
        %1592 = vmatpush1.msra.mxu0 0.0
        %1593 = vmatprep.subr.mxu0 0.0
        %1594 = vmatpush1.msra.mxu0 0.0
        %1595 = vmatprep.subr.mxu0 0.0
        %1596 = vmatpush1.msra.mxu0 0.0
        %1597 = vmatprep.mubr.f32.mxu0 0.0
        %1598 = vmatmul.mubr.f32.gmra.mrb[0].mxu0 %v914
        %v1599 = vpop.f32.mrb[0].mxu0
        %v1600 = vadd.f32 0.0, %v1599
        %v1601 = vpop.f32.mrb[0].mxu0
        %1602 = vdwg.mxu0
        %v1603 = vadd.f32 %v1390, %v1600
        %1604 = vmatprep.subr.mxu0 0.0
        %1605 = vmatpush1.msra.mxu0 %v815
        %1606 = vmatprep.subr.mxu0 0.0
        %1607 = vmatpush1.msra.mxu0 %v816
        %1608 = vmatprep.subr.mxu0 0.0
        %1609 = vmatpush1.msra.mxu0 %v817
        %1610 = vmatprep.subr.mxu0 0.0
        %1611 = vmatpush1.msra.mxu0 %v818
        %1612 = vmatprep.subr.mxu0 0.0
        %1613 = vmatpush1.msra.mxu0 %v819
        %1614 = vmatprep.subr.mxu0 0.0
        %1615 = vmatpush1.msra.mxu0 %v820
        %1616 = vmatprep.subr.mxu0 0.0
        %1617 = vmatpush1.msra.mxu0 %v821
        %1618 = vmatprep.subr.mxu0 0.0
        %1619 = vmatpush1.msra.mxu0 %v822
        %1620 = vmatprep.subr.mxu0 0.0
        %1621 = vmatpush1.msra.mxu0 %v823
        %1622 = vmatprep.subr.mxu0 0.0
        %1623 = vmatpush1.msra.mxu0 %v824
        %1624 = vmatprep.subr.mxu0 0.0
        %1625 = vmatpush1.msra.mxu0 %v825
        %1626 = vmatprep.subr.mxu0 0.0
        %1627 = vmatpush1.msra.mxu0 %v826
        %1628 = vmatprep.subr.mxu0 0.0
        %1629 = vmatpush1.msra.mxu0 0.0
        %1630 = vmatprep.subr.mxu0 0.0
        %1631 = vmatpush1.msra.mxu0 0.0
        %1632 = vmatprep.subr.mxu0 0.0
        %1633 = vmatpush1.msra.mxu0 0.0
        %1634 = vmatprep.subr.mxu0 0.0
        %1635 = vmatpush1.msra.mxu0 0.0
        %1636 = vmatprep.subr.mxu0 0.0
        %1637 = vmatpush1.msra.mxu0 0.0
        %1638 = vmatprep.subr.mxu0 0.0
        %1639 = vmatpush1.msra.mxu0 0.0
        %1640 = vmatprep.subr.mxu0 0.0
        %1641 = vmatpush1.msra.mxu0 0.0
        %1642 = vmatprep.subr.mxu0 0.0
        %1643 = vmatpush1.msra.mxu0 0.0
        %1644 = vmatprep.subr.mxu0 0.0
        %1645 = vmatpush1.msra.mxu0 0.0
        %1646 = vmatprep.subr.mxu0 0.0
        %1647 = vmatpush1.msra.mxu0 0.0
        %1648 = vmatprep.subr.mxu0 0.0
        %1649 = vmatpush1.msra.mxu0 0.0
        %1650 = vmatprep.subr.mxu0 0.0
        %1651 = vmatpush1.msra.mxu0 0.0
        %1652 = vmatprep.subr.mxu0 0.0
        %1653 = vmatpush1.msra.mxu0 0.0
        %1654 = vmatprep.subr.mxu0 0.0
        %1655 = vmatpush1.msra.mxu0 0.0
        %1656 = vmatprep.subr.mxu0 0.0
        %1657 = vmatpush1.msra.mxu0 0.0
        %1658 = vmatprep.subr.mxu0 0.0
        %1659 = vmatpush1.msra.mxu0 0.0
        %1660 = vmatprep.subr.mxu0 0.0
        %1661 = vmatpush1.msra.mxu0 0.0
        %1662 = vmatprep.subr.mxu0 0.0
        %1663 = vmatpush1.msra.mxu0 0.0
        %1664 = vmatprep.subr.mxu0 0.0
        %1665 = vmatpush1.msra.mxu0 0.0
        %1666 = vmatprep.subr.mxu0 0.0
        %1667 = vmatpush1.msra.mxu0 0.0
        %1668 = vmatprep.mubr.f32.mxu0 0.0
        %1669 = vmatmul.mubr.f32.gmra.mrb[0].mxu0 %v914
        %v1670 = vpop.f32.mrb[0].mxu0
        %v1671 = vadd.f32 0.0, %v1670
        %v1672 = vpop.f32.mrb[0].mxu0
        %1673 = vdwg.mxu0
        %v1674 = vadd.f32 %v1530, %v1671
        %1675 = vmatprep.subr.mxu0 0.0
        %1676 = vmatpush1.msra.mxu0 %v901
        %1677 = vmatprep.subr.mxu0 0.0
        %1678 = vmatpush1.msra.mxu0 %v902
        %1679 = vmatprep.subr.mxu0 0.0
        %1680 = vmatpush1.msra.mxu0 %v903
        %1681 = vmatprep.subr.mxu0 0.0
        %1682 = vmatpush1.msra.mxu0 %v904
        %1683 = vmatprep.subr.mxu0 0.0
        %1684 = vmatpush1.msra.mxu0 %v905
        %1685 = vmatprep.subr.mxu0 0.0
        %1686 = vmatpush1.msra.mxu0 %v906
        %1687 = vmatprep.subr.mxu0 0.0
        %1688 = vmatpush1.msra.mxu0 %v907
        %1689 = vmatprep.subr.mxu0 0.0
        %1690 = vmatpush1.msra.mxu0 %v908
        %1691 = vmatprep.subr.mxu0 0.0
        %1692 = vmatpush1.msra.mxu0 %v909
        %1693 = vmatprep.subr.mxu0 0.0
        %1694 = vmatpush1.msra.mxu0 %v910
        %1695 = vmatprep.subr.mxu0 0.0
        %1696 = vmatpush1.msra.mxu0 %v911
        %1697 = vmatprep.subr.mxu0 0.0
        %1698 = vmatpush1.msra.mxu0 %v912
        %1699 = vmatprep.subr.mxu0 0.0
        %1700 = vmatpush1.msra.mxu0 0.0
        %1701 = vmatprep.subr.mxu0 0.0
        %1702 = vmatpush1.msra.mxu0 0.0
        %1703 = vmatprep.subr.mxu0 0.0
        %1704 = vmatpush1.msra.mxu0 0.0
        %1705 = vmatprep.subr.mxu0 0.0
        %1706 = vmatpush1.msra.mxu0 0.0
        %1707 = vmatprep.subr.mxu0 0.0
        %1708 = vmatpush1.msra.mxu0 0.0
        %1709 = vmatprep.subr.mxu0 0.0
        %1710 = vmatpush1.msra.mxu0 0.0
        %1711 = vmatprep.subr.mxu0 0.0
        %1712 = vmatpush1.msra.mxu0 0.0
        %1713 = vmatprep.subr.mxu0 0.0
        %1714 = vmatpush1.msra.mxu0 0.0
        %1715 = vmatprep.subr.mxu0 0.0
        %1716 = vmatpush1.msra.mxu0 0.0
        %1717 = vmatprep.subr.mxu0 0.0
        %1718 = vmatpush1.msra.mxu0 0.0
        %1719 = vmatprep.subr.mxu0 0.0
        %1720 = vmatpush1.msra.mxu0 0.0
        %1721 = vmatprep.subr.mxu0 0.0
        %1722 = vmatpush1.msra.mxu0 0.0
        %1723 = vmatprep.subr.mxu0 0.0
        %1724 = vmatpush1.msra.mxu0 0.0
        %1725 = vmatprep.subr.mxu0 0.0
        %1726 = vmatpush1.msra.mxu0 0.0
        %1727 = vmatprep.subr.mxu0 0.0
        %1728 = vmatpush1.msra.mxu0 0.0
        %1729 = vmatprep.subr.mxu0 0.0
        %1730 = vmatpush1.msra.mxu0 0.0
        %1731 = vmatprep.subr.mxu0 0.0
        %1732 = vmatpush1.msra.mxu0 0.0
        %1733 = vmatprep.subr.mxu0 0.0
        %1734 = vmatpush1.msra.mxu0 0.0
        %1735 = vmatprep.subr.mxu0 0.0
        %1736 = vmatpush1.msra.mxu0 0.0
        %1737 = vmatprep.subr.mxu0 0.0
        %1738 = vmatpush1.msra.mxu0 0.0
        %1739 = vmatprep.mubr.f32.mxu0 0.0
        %1740 = vmatmul.mubr.f32.gmra.mrb[0].mxu0 %v1086
        %v1741 = vpop.f32.mrb[0].mxu0
        %v1742 = vadd.f32 0.0, %v1741
        %v1743 = vpop.f32.mrb[0].mxu0
        %1744 = vdwg.mxu0
        %v1745 = vadd.f32 %v1603, %v1742
        %1746 = vmatprep.subr.mxu0 0.0
        %1747 = vmatpush1.msra.mxu0 %v988
        %1748 = vmatprep.subr.mxu0 0.0
        %1749 = vmatpush1.msra.mxu0 %v989
        %1750 = vmatprep.subr.mxu0 0.0
        %1751 = vmatpush1.msra.mxu0 %v990
        %1752 = vmatprep.subr.mxu0 0.0
        %1753 = vmatpush1.msra.mxu0 %v991
        %1754 = vmatprep.subr.mxu0 0.0
        %1755 = vmatpush1.msra.mxu0 %v992
        %1756 = vmatprep.subr.mxu0 0.0
        %1757 = vmatpush1.msra.mxu0 %v993
        %1758 = vmatprep.subr.mxu0 0.0
        %1759 = vmatpush1.msra.mxu0 %v994
        %1760 = vmatprep.subr.mxu0 0.0
        %1761 = vmatpush1.msra.mxu0 %v995
        %1762 = vmatprep.subr.mxu0 0.0
        %1763 = vmatpush1.msra.mxu0 %v996
        %1764 = vmatprep.subr.mxu0 0.0
        %1765 = vmatpush1.msra.mxu0 %v997
        %1766 = vmatprep.subr.mxu0 0.0
        %1767 = vmatpush1.msra.mxu0 %v998
        %1768 = vmatprep.subr.mxu0 0.0
        %1769 = vmatpush1.msra.mxu0 %v999
        %1770 = vmatprep.subr.mxu0 0.0
        %1771 = vmatpush1.msra.mxu0 0.0
        %1772 = vmatprep.subr.mxu0 0.0
        %1773 = vmatpush1.msra.mxu0 0.0
        %1774 = vmatprep.subr.mxu0 0.0
        %1775 = vmatpush1.msra.mxu0 0.0
        %1776 = vmatprep.subr.mxu0 0.0
        %1777 = vmatpush1.msra.mxu0 0.0
        %1778 = vmatprep.subr.mxu0 0.0
        %1779 = vmatpush1.msra.mxu0 0.0
        %1780 = vmatprep.subr.mxu0 0.0
        %1781 = vmatpush1.msra.mxu0 0.0
        %1782 = vmatprep.subr.mxu0 0.0
        %1783 = vmatpush1.msra.mxu0 0.0
        %1784 = vmatprep.subr.mxu0 0.0
        %1785 = vmatpush1.msra.mxu0 0.0
        %1786 = vmatprep.subr.mxu0 0.0
        %1787 = vmatpush1.msra.mxu0 0.0
        %1788 = vmatprep.subr.mxu0 0.0
        %1789 = vmatpush1.msra.mxu0 0.0
        %1790 = vmatprep.subr.mxu0 0.0
        %1791 = vmatpush1.msra.mxu0 0.0
        %1792 = vmatprep.subr.mxu0 0.0
        %1793 = vmatpush1.msra.mxu0 0.0
        %1794 = vmatprep.subr.mxu0 0.0
        %1795 = vmatpush1.msra.mxu0 0.0
        %1796 = vmatprep.subr.mxu0 0.0
        %1797 = vmatpush1.msra.mxu0 0.0
        %1798 = vmatprep.subr.mxu0 0.0
        %1799 = vmatpush1.msra.mxu0 0.0
        %1800 = vmatprep.subr.mxu0 0.0
        %1801 = vmatpush1.msra.mxu0 0.0
        %1802 = vmatprep.subr.mxu0 0.0
        %1803 = vmatpush1.msra.mxu0 0.0
        %1804 = vmatprep.subr.mxu0 0.0
        %1805 = vmatpush1.msra.mxu0 0.0
        %1806 = vmatprep.subr.mxu0 0.0
        %1807 = vmatpush1.msra.mxu0 0.0
        %1808 = vmatprep.subr.mxu0 0.0
        %1809 = vmatpush1.msra.mxu0 0.0
        %1810 = vmatprep.mubr.f32.mxu0 0.0
        %1811 = vmatmul.mubr.f32.gmra.mrb[0].mxu0 %v1086
        %v1812 = vpop.f32.mrb[0].mxu0
        %v1813 = vadd.f32 0.0, %v1812
        %v1814 = vpop.f32.mrb[0].mxu0
        %1815 = vdwg.mxu0
        %v1816 = vadd.f32 %v1674, %v1813
        %v1817 = vld [vmem:[%s410 + $0x1] sm:$0x7f]
        %v1819 = vsel %vm425, %v1817, 0
        %1821 = vmatprep.subr.mxu0 0.0
        %1822 = vmatpush1.msra.mxu0 %v1073
        %1823 = vmatprep.subr.mxu0 0.0
        %1824 = vmatpush1.msra.mxu0 %v1074
        %1825 = vmatprep.subr.mxu0 0.0
        %1826 = vmatpush1.msra.mxu0 %v1075
        %1827 = vmatprep.subr.mxu0 0.0
        %1828 = vmatpush1.msra.mxu0 %v1076
        %1829 = vmatprep.subr.mxu0 0.0
        %1830 = vmatpush1.msra.mxu0 %v1077
        %1831 = vmatprep.subr.mxu0 0.0
        %1832 = vmatpush1.msra.mxu0 %v1078
        %1833 = vmatprep.subr.mxu0 0.0
        %1834 = vmatpush1.msra.mxu0 %v1079
        %1835 = vmatprep.subr.mxu0 0.0
        %1836 = vmatpush1.msra.mxu0 %v1080
        %1837 = vmatprep.subr.mxu0 0.0
        %1838 = vmatpush1.msra.mxu0 %v1081
        %1839 = vmatprep.subr.mxu0 0.0
        %1840 = vmatpush1.msra.mxu0 %v1082
        %1841 = vmatprep.subr.mxu0 0.0
        %1842 = vmatpush1.msra.mxu0 %v1083
        %1843 = vmatprep.subr.mxu0 0.0
        %1844 = vmatpush1.msra.mxu0 %v1084
        %1845 = vmatprep.subr.mxu0 0.0
        %1846 = vmatpush1.msra.mxu0 0.0
        %1847 = vmatprep.subr.mxu0 0.0
        %1848 = vmatpush1.msra.mxu0 0.0
        %1849 = vmatprep.subr.mxu0 0.0
        %1850 = vmatpush1.msra.mxu0 0.0
        %1851 = vmatprep.subr.mxu0 0.0
        %1852 = vmatpush1.msra.mxu0 0.0
        %1853 = vmatprep.subr.mxu0 0.0
        %1854 = vmatpush1.msra.mxu0 0.0
        %1855 = vmatprep.subr.mxu0 0.0
        %1856 = vmatpush1.msra.mxu0 0.0
        %1857 = vmatprep.subr.mxu0 0.0
        %1858 = vmatpush1.msra.mxu0 0.0
        %1859 = vmatprep.subr.mxu0 0.0
        %1860 = vmatpush1.msra.mxu0 0.0
        %1861 = vmatprep.subr.mxu0 0.0
        %1862 = vmatpush1.msra.mxu0 0.0
        %1863 = vmatprep.subr.mxu0 0.0
        %1864 = vmatpush1.msra.mxu0 0.0
        %1865 = vmatprep.subr.mxu0 0.0
        %1866 = vmatpush1.msra.mxu0 0.0
        %1867 = vmatprep.subr.mxu0 0.0
        %1868 = vmatpush1.msra.mxu0 0.0
        %1869 = vmatprep.subr.mxu0 0.0
        %1870 = vmatpush1.msra.mxu0 0.0
        %1871 = vmatprep.subr.mxu0 0.0
        %1872 = vmatpush1.msra.mxu0 0.0
        %1873 = vmatprep.subr.mxu0 0.0
        %1874 = vmatpush1.msra.mxu0 0.0
        %1875 = vmatprep.subr.mxu0 0.0
        %1876 = vmatpush1.msra.mxu0 0.0
        %1877 = vmatprep.subr.mxu0 0.0
        %1878 = vmatpush1.msra.mxu0 0.0
        %1879 = vmatprep.subr.mxu0 0.0
        %1880 = vmatpush1.msra.mxu0 0.0
        %1881 = vmatprep.subr.mxu0 0.0
        %1882 = vmatpush1.msra.mxu0 0.0
        %1883 = vmatprep.subr.mxu0 0.0
        %1884 = vmatpush1.msra.mxu0 0.0
        %1885 = vmatprep.mubr.f32.mxu0 0.0
        %1886 = vmatmul.mubr.f32.gmra.mrb[0].mxu0 %v1819
        %v1887 = vpop.f32.mrb[0].mxu0
        %v1888 = vadd.f32 0.0, %v1887
        %v1889 = vpop.f32.mrb[0].mxu0
        %1890 = vdwg.mxu0
        %v1891 = vadd.f32 %v1745, %v1888
        %1892 = vmatprep.subr.mxu0 0.0
        %1893 = vmatpush1.msra.mxu0 %v1160
        %1894 = vmatprep.subr.mxu0 0.0
        %1895 = vmatpush1.msra.mxu0 %v1161
        %1896 = vmatprep.subr.mxu0 0.0
        %1897 = vmatpush1.msra.mxu0 %v1162
        %1898 = vmatprep.subr.mxu0 0.0
        %1899 = vmatpush1.msra.mxu0 %v1163
        %1900 = vmatprep.subr.mxu0 0.0
        %1901 = vmatpush1.msra.mxu0 %v1164
        %1902 = vmatprep.subr.mxu0 0.0
        %1903 = vmatpush1.msra.mxu0 %v1165
        %1904 = vmatprep.subr.mxu0 0.0
        %1905 = vmatpush1.msra.mxu0 %v1166
        %1906 = vmatprep.subr.mxu0 0.0
        %1907 = vmatpush1.msra.mxu0 %v1167
        %1908 = vmatprep.subr.mxu0 0.0
        %1909 = vmatpush1.msra.mxu0 %v1168
        %1910 = vmatprep.subr.mxu0 0.0
        %1911 = vmatpush1.msra.mxu0 %v1169
        %1912 = vmatprep.subr.mxu0 0.0
        %1913 = vmatpush1.msra.mxu0 %v1170
        %1914 = vmatprep.subr.mxu0 0.0
        %1915 = vmatpush1.msra.mxu0 %v1171
        %1916 = vmatprep.subr.mxu0 0.0
        %1917 = vmatpush1.msra.mxu0 0.0
        %1918 = vmatprep.subr.mxu0 0.0
        %1919 = vmatpush1.msra.mxu0 0.0
        %1920 = vmatprep.subr.mxu0 0.0
        %1921 = vmatpush1.msra.mxu0 0.0
        %1922 = vmatprep.subr.mxu0 0.0
        %1923 = vmatpush1.msra.mxu0 0.0
        %1924 = vmatprep.subr.mxu0 0.0
        %1925 = vmatpush1.msra.mxu0 0.0
        %1926 = vmatprep.subr.mxu0 0.0
        %1927 = vmatpush1.msra.mxu0 0.0
        %1928 = vmatprep.subr.mxu0 0.0
        %1929 = vmatpush1.msra.mxu0 0.0
        %1930 = vmatprep.subr.mxu0 0.0
        %1931 = vmatpush1.msra.mxu0 0.0
        %1932 = vmatprep.subr.mxu0 0.0
        %1933 = vmatpush1.msra.mxu0 0.0
        %1934 = vmatprep.subr.mxu0 0.0
        %1935 = vmatpush1.msra.mxu0 0.0
        %1936 = vmatprep.subr.mxu0 0.0
        %1937 = vmatpush1.msra.mxu0 0.0
        %1938 = vmatprep.subr.mxu0 0.0
        %1939 = vmatpush1.msra.mxu0 0.0
        %1940 = vmatprep.subr.mxu0 0.0
        %1941 = vmatpush1.msra.mxu0 0.0
        %1942 = vmatprep.subr.mxu0 0.0
        %1943 = vmatpush1.msra.mxu0 0.0
        %1944 = vmatprep.subr.mxu0 0.0
        %1945 = vmatpush1.msra.mxu0 0.0
        %1946 = vmatprep.subr.mxu0 0.0
        %1947 = vmatpush1.msra.mxu0 0.0
        %1948 = vmatprep.subr.mxu0 0.0
        %1949 = vmatpush1.msra.mxu0 0.0
        %1950 = vmatprep.subr.mxu0 0.0
        %1951 = vmatpush1.msra.mxu0 0.0
        %1952 = vmatprep.subr.mxu0 0.0
        %1953 = vmatpush1.msra.mxu0 0.0
        %1954 = vmatprep.subr.mxu0 0.0
        %1955 = vmatpush1.msra.mxu0 0.0
        %1956 = vmatprep.mubr.f32.mxu0 0.0
        %1957 = vmatmul.mubr.f32.gmra.mrb[0].mxu0 %v1819
        %v1958 = vpop.f32.mrb[0].mxu0
        %v1959 = vadd.f32 0.0, %v1958
        %v1960 = vpop.f32.mrb[0].mxu0
        %1961 = vdwg.mxu0
        %v1962 = vadd.f32 %v1816, %v1959
        %v1963 = vmax.f32 %v1891, %v1962
        %v1964 = vadd.f32 %v1963, %v1249
        %v1965 = vmax.f32 %v1964, 0.0
        %1966 = vmatprep.subr.mxu0 0.0
        %1967 = vmatpush1.msra.mxu0 %v413
        %1968 = vmatprep.subr.mxu0 0.0
        %1969 = vmatpush1.msra.mxu0 %v414
        %1970 = vmatprep.subr.mxu0 0.0
        %1971 = vmatpush1.msra.mxu0 %v415
        %1972 = vmatprep.subr.mxu0 0.0
        %1973 = vmatpush1.msra.mxu0 %v416
        %1974 = vmatprep.subr.mxu0 0.0
        %1975 = vmatpush1.msra.mxu0 %v417
        %1976 = vmatprep.subr.mxu0 0.0
        %1977 = vmatpush1.msra.mxu0 %v418
        %1978 = vmatprep.subr.mxu0 0.0
        %1979 = vmatpush1.msra.mxu0 %v419
        %1980 = vmatprep.subr.mxu0 0.0
        %1981 = vmatpush1.msra.mxu0 %v420
        %1982 = vmatprep.subr.mxu0 0.0
        %1983 = vmatpush1.msra.mxu0 %v421
        %1984 = vmatprep.subr.mxu0 0.0
        %1985 = vmatpush1.msra.mxu0 %v422
        %1986 = vmatprep.subr.mxu0 0.0
        %1987 = vmatpush1.msra.mxu0 %v423
        %1988 = vmatprep.subr.mxu0 0.0
        %1989 = vmatpush1.msra.mxu0 %v424
        %1990 = vmatprep.subr.mxu0 0.0
        %1991 = vmatpush1.msra.mxu0 0.0
        %1992 = vmatprep.subr.mxu0 0.0
        %1993 = vmatpush1.msra.mxu0 0.0
        %1994 = vmatprep.subr.mxu0 0.0
        %1995 = vmatpush1.msra.mxu0 0.0
        %1996 = vmatprep.subr.mxu0 0.0
        %1997 = vmatpush1.msra.mxu0 0.0
        %1998 = vmatprep.subr.mxu0 0.0
        %1999 = vmatpush1.msra.mxu0 0.0
        %2000 = vmatprep.subr.mxu0 0.0
        %2001 = vmatpush1.msra.mxu0 0.0
        %2002 = vmatprep.subr.mxu0 0.0
        %2003 = vmatpush1.msra.mxu0 0.0
        %2004 = vmatprep.subr.mxu0 0.0
        %2005 = vmatpush1.msra.mxu0 0.0
        %2006 = vmatprep.subr.mxu0 0.0
        %2007 = vmatpush1.msra.mxu0 0.0
        %2008 = vmatprep.subr.mxu0 0.0
        %2009 = vmatpush1.msra.mxu0 0.0
        %2010 = vmatprep.subr.mxu0 0.0
        %2011 = vmatpush1.msra.mxu0 0.0
        %2012 = vmatprep.subr.mxu0 0.0
        %2013 = vmatpush1.msra.mxu0 0.0
        %2014 = vmatprep.subr.mxu0 0.0
        %2015 = vmatpush1.msra.mxu0 0.0
        %2016 = vmatprep.subr.mxu0 0.0
        %2017 = vmatpush1.msra.mxu0 0.0
        %2018 = vmatprep.subr.mxu0 0.0
        %2019 = vmatpush1.msra.mxu0 0.0
        %2020 = vmatprep.subr.mxu0 0.0
        %2021 = vmatpush1.msra.mxu0 0.0
        %2022 = vmatprep.subr.mxu0 0.0
        %2023 = vmatpush1.msra.mxu0 0.0
        %2024 = vmatprep.subr.mxu0 0.0
        %2025 = vmatpush1.msra.mxu0 0.0
        %2026 = vmatprep.subr.mxu0 0.0
        %2027 = vmatpush1.msra.mxu0 0.0
        %2028 = vmatprep.subr.mxu0 0.0
        %2029 = vmatpush1.msra.mxu0 0.0
        %2030 = vmatprep.mubr.f32.mxu0 0.0
        %2031 = vmatmul.mubr.f32.gmra.mrb[0].mxu0 %v914
        %v2032 = vpop.f32.mrb[0].mxu0
        %v2033 = vadd.f32 0.0, %v2032
        %v2034 = vpop.f32.mrb[0].mxu0
        %2035 = vdwg.mxu0
        %2036 = vmatprep.subr.mxu0 0.0
        %2037 = vmatpush1.msra.mxu0 %v385
        %2038 = vmatprep.subr.mxu0 0.0
        %2039 = vmatpush1.msra.mxu0 %v386
        %2040 = vmatprep.subr.mxu0 0.0
        %2041 = vmatpush1.msra.mxu0 %v387
        %2042 = vmatprep.subr.mxu0 0.0
        %2043 = vmatpush1.msra.mxu0 %v388
        %2044 = vmatprep.subr.mxu0 0.0
        %2045 = vmatpush1.msra.mxu0 %v389
        %2046 = vmatprep.subr.mxu0 0.0
        %2047 = vmatpush1.msra.mxu0 %v390
        %2048 = vmatprep.subr.mxu0 0.0
        %2049 = vmatpush1.msra.mxu0 %v391
        %2050 = vmatprep.subr.mxu0 0.0
        %2051 = vmatpush1.msra.mxu0 %v392
        %2052 = vmatprep.subr.mxu0 0.0
        %2053 = vmatpush1.msra.mxu0 %v393
        %2054 = vmatprep.subr.mxu0 0.0
        %2055 = vmatpush1.msra.mxu0 %v394
        %2056 = vmatprep.subr.mxu0 0.0
        %2057 = vmatpush1.msra.mxu0 %v395
        %2058 = vmatprep.subr.mxu0 0.0
        %2059 = vmatpush1.msra.mxu0 %v396
        %2060 = vmatprep.subr.mxu0 0.0
        %2061 = vmatpush1.msra.mxu0 0.0
        %2062 = vmatprep.subr.mxu0 0.0
        %2063 = vmatpush1.msra.mxu0 0.0
        %2064 = vmatprep.subr.mxu0 0.0
        %2065 = vmatpush1.msra.mxu0 0.0
        %2066 = vmatprep.subr.mxu0 0.0
        %2067 = vmatpush1.msra.mxu0 0.0
        %2068 = vmatprep.subr.mxu0 0.0
        %2069 = vmatpush1.msra.mxu0 0.0
        %2070 = vmatprep.subr.mxu0 0.0
        %2071 = vmatpush1.msra.mxu0 0.0
        %2072 = vmatprep.subr.mxu0 0.0
        %2073 = vmatpush1.msra.mxu0 0.0
        %2074 = vmatprep.subr.mxu0 0.0
        %2075 = vmatpush1.msra.mxu0 0.0
        %2076 = vmatprep.subr.mxu0 0.0
        %2077 = vmatpush1.msra.mxu0 0.0
        %2078 = vmatprep.subr.mxu0 0.0
        %2079 = vmatpush1.msra.mxu0 0.0
        %2080 = vmatprep.subr.mxu0 0.0
        %2081 = vmatpush1.msra.mxu0 0.0
        %2082 = vmatprep.subr.mxu0 0.0
        %2083 = vmatpush1.msra.mxu0 0.0
        %2084 = vmatprep.subr.mxu0 0.0
        %2085 = vmatpush1.msra.mxu0 0.0
        %2086 = vmatprep.subr.mxu0 0.0
        %2087 = vmatpush1.msra.mxu0 0.0
        %2088 = vmatprep.subr.mxu0 0.0
        %2089 = vmatpush1.msra.mxu0 0.0
        %2090 = vmatprep.subr.mxu0 0.0
        %2091 = vmatpush1.msra.mxu0 0.0
        %2092 = vmatprep.subr.mxu0 0.0
        %2093 = vmatpush1.msra.mxu0 0.0
        %2094 = vmatprep.subr.mxu0 0.0
        %2095 = vmatpush1.msra.mxu0 0.0
        %2096 = vmatprep.subr.mxu0 0.0
        %2097 = vmatpush1.msra.mxu0 0.0
        %2098 = vmatprep.subr.mxu0 0.0
        %2099 = vmatpush1.msra.mxu0 0.0
        %2100 = vmatprep.mubr.f32.mxu0 0.0
        %2101 = vmatmul.mubr.f32.gmra.mrb[0].mxu0 %v741
        %v2102 = vpop.f32.mrb[0].mxu0
        %v2103 = vadd.f32 %v2033, %v2102
        %v2104 = vpop.f32.mrb[0].mxu0
        %2105 = vdwg.mxu0
        %2106 = vmatprep.subr.mxu0 0.0
        %2107 = vmatpush1.msra.mxu0 %v573
        %2108 = vmatprep.subr.mxu0 0.0
        %2109 = vmatpush1.msra.mxu0 %v574
        %2110 = vmatprep.subr.mxu0 0.0
        %2111 = vmatpush1.msra.mxu0 %v575
        %2112 = vmatprep.subr.mxu0 0.0
        %2113 = vmatpush1.msra.mxu0 %v576
        %2114 = vmatprep.subr.mxu0 0.0
        %2115 = vmatpush1.msra.mxu0 %v577
        %2116 = vmatprep.subr.mxu0 0.0
        %2117 = vmatpush1.msra.mxu0 %v578
        %2118 = vmatprep.subr.mxu0 0.0
        %2119 = vmatpush1.msra.mxu0 %v579
        %2120 = vmatprep.subr.mxu0 0.0
        %2121 = vmatpush1.msra.mxu0 %v580
        %2122 = vmatprep.subr.mxu0 0.0
        %2123 = vmatpush1.msra.mxu0 %v581
        %2124 = vmatprep.subr.mxu0 0.0
        %2125 = vmatpush1.msra.mxu0 %v582
        %2126 = vmatprep.subr.mxu0 0.0
        %2127 = vmatpush1.msra.mxu0 %v583
        %2128 = vmatprep.subr.mxu0 0.0
        %2129 = vmatpush1.msra.mxu0 %v584
        %2130 = vmatprep.subr.mxu0 0.0
        %2131 = vmatpush1.msra.mxu0 0.0
        %2132 = vmatprep.subr.mxu0 0.0
        %2133 = vmatpush1.msra.mxu0 0.0
        %2134 = vmatprep.subr.mxu0 0.0
        %2135 = vmatpush1.msra.mxu0 0.0
        %2136 = vmatprep.subr.mxu0 0.0
        %2137 = vmatpush1.msra.mxu0 0.0
        %2138 = vmatprep.subr.mxu0 0.0
        %2139 = vmatpush1.msra.mxu0 0.0
        %2140 = vmatprep.subr.mxu0 0.0
        %2141 = vmatpush1.msra.mxu0 0.0
        %2142 = vmatprep.subr.mxu0 0.0
        %2143 = vmatpush1.msra.mxu0 0.0
        %2144 = vmatprep.subr.mxu0 0.0
        %2145 = vmatpush1.msra.mxu0 0.0
        %2146 = vmatprep.subr.mxu0 0.0
        %2147 = vmatpush1.msra.mxu0 0.0
        %2148 = vmatprep.subr.mxu0 0.0
        %2149 = vmatpush1.msra.mxu0 0.0
        %2150 = vmatprep.subr.mxu0 0.0
        %2151 = vmatpush1.msra.mxu0 0.0
        %2152 = vmatprep.subr.mxu0 0.0
        %2153 = vmatpush1.msra.mxu0 0.0
        %2154 = vmatprep.subr.mxu0 0.0
        %2155 = vmatpush1.msra.mxu0 0.0
        %2156 = vmatprep.subr.mxu0 0.0
        %2157 = vmatpush1.msra.mxu0 0.0
        %2158 = vmatprep.subr.mxu0 0.0
        %2159 = vmatpush1.msra.mxu0 0.0
        %2160 = vmatprep.subr.mxu0 0.0
        %2161 = vmatpush1.msra.mxu0 0.0
        %2162 = vmatprep.subr.mxu0 0.0
        %2163 = vmatpush1.msra.mxu0 0.0
        %2164 = vmatprep.subr.mxu0 0.0
        %2165 = vmatpush1.msra.mxu0 0.0
        %2166 = vmatprep.subr.mxu0 0.0
        %2167 = vmatpush1.msra.mxu0 0.0
        %2168 = vmatprep.subr.mxu0 0.0
        %2169 = vmatpush1.msra.mxu0 0.0
        %2170 = vmatprep.mubr.f32.mxu0 0.0
        %2171 = vmatmul.mubr.f32.gmra.mrb[0].mxu0 %v914
        %v2172 = vpop.f32.mrb[0].mxu0
        %v2173 = vadd.f32 0.0, %v2172
        %v2174 = vpop.f32.mrb[0].mxu0
        %2175 = vdwg.mxu0
        %2176 = vmatprep.subr.mxu0 0.0
        %2177 = vmatpush1.msra.mxu0 %v398
        %2178 = vmatprep.subr.mxu0 0.0
        %2179 = vmatpush1.msra.mxu0 %v399
        %2180 = vmatprep.subr.mxu0 0.0
        %2181 = vmatpush1.msra.mxu0 %v400
        %2182 = vmatprep.subr.mxu0 0.0
        %2183 = vmatpush1.msra.mxu0 %v401
        %2184 = vmatprep.subr.mxu0 0.0
        %2185 = vmatpush1.msra.mxu0 %v402
        %2186 = vmatprep.subr.mxu0 0.0
        %2187 = vmatpush1.msra.mxu0 %v403
        %2188 = vmatprep.subr.mxu0 0.0
        %2189 = vmatpush1.msra.mxu0 %v404
        %2190 = vmatprep.subr.mxu0 0.0
        %2191 = vmatpush1.msra.mxu0 %v405
        %2192 = vmatprep.subr.mxu0 0.0
        %2193 = vmatpush1.msra.mxu0 %v406
        %2194 = vmatprep.subr.mxu0 0.0
        %2195 = vmatpush1.msra.mxu0 %v407
        %2196 = vmatprep.subr.mxu0 0.0
        %2197 = vmatpush1.msra.mxu0 %v408
        %2198 = vmatprep.subr.mxu0 0.0
        %2199 = vmatpush1.msra.mxu0 %v409
        %2200 = vmatprep.subr.mxu0 0.0
        %2201 = vmatpush1.msra.mxu0 0.0
        %2202 = vmatprep.subr.mxu0 0.0
        %2203 = vmatpush1.msra.mxu0 0.0
        %2204 = vmatprep.subr.mxu0 0.0
        %2205 = vmatpush1.msra.mxu0 0.0
        %2206 = vmatprep.subr.mxu0 0.0
        %2207 = vmatpush1.msra.mxu0 0.0
        %2208 = vmatprep.subr.mxu0 0.0
        %2209 = vmatpush1.msra.mxu0 0.0
        %2210 = vmatprep.subr.mxu0 0.0
        %2211 = vmatpush1.msra.mxu0 0.0
        %2212 = vmatprep.subr.mxu0 0.0
        %2213 = vmatpush1.msra.mxu0 0.0
        %2214 = vmatprep.subr.mxu0 0.0
        %2215 = vmatpush1.msra.mxu0 0.0
        %2216 = vmatprep.subr.mxu0 0.0
        %2217 = vmatpush1.msra.mxu0 0.0
        %2218 = vmatprep.subr.mxu0 0.0
        %2219 = vmatpush1.msra.mxu0 0.0
        %2220 = vmatprep.subr.mxu0 0.0
        %2221 = vmatpush1.msra.mxu0 0.0
        %2222 = vmatprep.subr.mxu0 0.0
        %2223 = vmatpush1.msra.mxu0 0.0
        %2224 = vmatprep.subr.mxu0 0.0
        %2225 = vmatpush1.msra.mxu0 0.0
        %2226 = vmatprep.subr.mxu0 0.0
        %2227 = vmatpush1.msra.mxu0 0.0
        %2228 = vmatprep.subr.mxu0 0.0
        %2229 = vmatpush1.msra.mxu0 0.0
        %2230 = vmatprep.subr.mxu0 0.0
        %2231 = vmatpush1.msra.mxu0 0.0
        %2232 = vmatprep.subr.mxu0 0.0
        %2233 = vmatpush1.msra.mxu0 0.0
        %2234 = vmatprep.subr.mxu0 0.0
        %2235 = vmatpush1.msra.mxu0 0.0
        %2236 = vmatprep.subr.mxu0 0.0
        %2237 = vmatpush1.msra.mxu0 0.0
        %2238 = vmatprep.subr.mxu0 0.0
        %2239 = vmatpush1.msra.mxu0 0.0
        %2240 = vmatprep.mubr.f32.mxu0 0.0
        %2241 = vmatmul.mubr.f32.gmra.mrb[0].mxu0 %v741
        %v2242 = vpop.f32.mrb[0].mxu0
        %v2243 = vadd.f32 %v2173, %v2242
        %v2244 = vpop.f32.mrb[0].mxu0
        %2245 = vdwg.mxu0
        %2246 = vmatprep.subr.mxu0 0.0
        %2247 = vmatpush1.msra.mxu0 %v728
        %2248 = vmatprep.subr.mxu0 0.0
        %2249 = vmatpush1.msra.mxu0 %v729
        %2250 = vmatprep.subr.mxu0 0.0
        %2251 = vmatpush1.msra.mxu0 %v730
        %2252 = vmatprep.subr.mxu0 0.0
        %2253 = vmatpush1.msra.mxu0 %v731
        %2254 = vmatprep.subr.mxu0 0.0
        %2255 = vmatpush1.msra.mxu0 %v732
        %2256 = vmatprep.subr.mxu0 0.0
        %2257 = vmatpush1.msra.mxu0 %v733
        %2258 = vmatprep.subr.mxu0 0.0
        %2259 = vmatpush1.msra.mxu0 %v734
        %2260 = vmatprep.subr.mxu0 0.0
        %2261 = vmatpush1.msra.mxu0 %v735
        %2262 = vmatprep.subr.mxu0 0.0
        %2263 = vmatpush1.msra.mxu0 %v736
        %2264 = vmatprep.subr.mxu0 0.0
        %2265 = vmatpush1.msra.mxu0 %v737
        %2266 = vmatprep.subr.mxu0 0.0
        %2267 = vmatpush1.msra.mxu0 %v738
        %2268 = vmatprep.subr.mxu0 0.0
        %2269 = vmatpush1.msra.mxu0 %v739
        %2270 = vmatprep.subr.mxu0 0.0
        %2271 = vmatpush1.msra.mxu0 0.0
        %2272 = vmatprep.subr.mxu0 0.0
        %2273 = vmatpush1.msra.mxu0 0.0
        %2274 = vmatprep.subr.mxu0 0.0
        %2275 = vmatpush1.msra.mxu0 0.0
        %2276 = vmatprep.subr.mxu0 0.0
        %2277 = vmatpush1.msra.mxu0 0.0
        %2278 = vmatprep.subr.mxu0 0.0
        %2279 = vmatpush1.msra.mxu0 0.0
        %2280 = vmatprep.subr.mxu0 0.0
        %2281 = vmatpush1.msra.mxu0 0.0
        %2282 = vmatprep.subr.mxu0 0.0
        %2283 = vmatpush1.msra.mxu0 0.0
        %2284 = vmatprep.subr.mxu0 0.0
        %2285 = vmatpush1.msra.mxu0 0.0
        %2286 = vmatprep.subr.mxu0 0.0
        %2287 = vmatpush1.msra.mxu0 0.0
        %2288 = vmatprep.subr.mxu0 0.0
        %2289 = vmatpush1.msra.mxu0 0.0
        %2290 = vmatprep.subr.mxu0 0.0
        %2291 = vmatpush1.msra.mxu0 0.0
        %2292 = vmatprep.subr.mxu0 0.0
        %2293 = vmatpush1.msra.mxu0 0.0
        %2294 = vmatprep.subr.mxu0 0.0
        %2295 = vmatpush1.msra.mxu0 0.0
        %2296 = vmatprep.subr.mxu0 0.0
        %2297 = vmatpush1.msra.mxu0 0.0
        %2298 = vmatprep.subr.mxu0 0.0
        %2299 = vmatpush1.msra.mxu0 0.0
        %2300 = vmatprep.subr.mxu0 0.0
        %2301 = vmatpush1.msra.mxu0 0.0
        %2302 = vmatprep.subr.mxu0 0.0
        %2303 = vmatpush1.msra.mxu0 0.0
        %2304 = vmatprep.subr.mxu0 0.0
        %2305 = vmatpush1.msra.mxu0 0.0
        %2306 = vmatprep.subr.mxu0 0.0
        %2307 = vmatpush1.msra.mxu0 0.0
        %2308 = vmatprep.subr.mxu0 0.0
        %2309 = vmatpush1.msra.mxu0 0.0
        %2310 = vmatprep.mubr.f32.mxu0 0.0
        %2311 = vmatmul.mubr.f32.gmra.mrb[0].mxu0 %v1086
        %v2312 = vpop.f32.mrb[0].mxu0
        %v2313 = vadd.f32 0.0, %v2312
        %v2314 = vpop.f32.mrb[0].mxu0
        %2315 = vdwg.mxu0
        %v2316 = vadd.f32 %v2103, %v2313
        %2317 = vmatprep.subr.mxu0 0.0
        %2318 = vmatpush1.msra.mxu0 %v815
        %2319 = vmatprep.subr.mxu0 0.0
        %2320 = vmatpush1.msra.mxu0 %v816
        %2321 = vmatprep.subr.mxu0 0.0
        %2322 = vmatpush1.msra.mxu0 %v817
        %2323 = vmatprep.subr.mxu0 0.0
        %2324 = vmatpush1.msra.mxu0 %v818
        %2325 = vmatprep.subr.mxu0 0.0
        %2326 = vmatpush1.msra.mxu0 %v819
        %2327 = vmatprep.subr.mxu0 0.0
        %2328 = vmatpush1.msra.mxu0 %v820
        %2329 = vmatprep.subr.mxu0 0.0
        %2330 = vmatpush1.msra.mxu0 %v821
        %2331 = vmatprep.subr.mxu0 0.0
        %2332 = vmatpush1.msra.mxu0 %v822
        %2333 = vmatprep.subr.mxu0 0.0
        %2334 = vmatpush1.msra.mxu0 %v823
        %2335 = vmatprep.subr.mxu0 0.0
        %2336 = vmatpush1.msra.mxu0 %v824
        %2337 = vmatprep.subr.mxu0 0.0
        %2338 = vmatpush1.msra.mxu0 %v825
        %2339 = vmatprep.subr.mxu0 0.0
        %2340 = vmatpush1.msra.mxu0 %v826
        %2341 = vmatprep.subr.mxu0 0.0
        %2342 = vmatpush1.msra.mxu0 0.0
        %2343 = vmatprep.subr.mxu0 0.0
        %2344 = vmatpush1.msra.mxu0 0.0
        %2345 = vmatprep.subr.mxu0 0.0
        %2346 = vmatpush1.msra.mxu0 0.0
        %2347 = vmatprep.subr.mxu0 0.0
        %2348 = vmatpush1.msra.mxu0 0.0
        %2349 = vmatprep.subr.mxu0 0.0
        %2350 = vmatpush1.msra.mxu0 0.0
        %2351 = vmatprep.subr.mxu0 0.0
        %2352 = vmatpush1.msra.mxu0 0.0
        %2353 = vmatprep.subr.mxu0 0.0
        %2354 = vmatpush1.msra.mxu0 0.0
        %2355 = vmatprep.subr.mxu0 0.0
        %2356 = vmatpush1.msra.mxu0 0.0
        %2357 = vmatprep.subr.mxu0 0.0
        %2358 = vmatpush1.msra.mxu0 0.0
        %2359 = vmatprep.subr.mxu0 0.0
        %2360 = vmatpush1.msra.mxu0 0.0
        %2361 = vmatprep.subr.mxu0 0.0
        %2362 = vmatpush1.msra.mxu0 0.0
        %2363 = vmatprep.subr.mxu0 0.0
        %2364 = vmatpush1.msra.mxu0 0.0
        %2365 = vmatprep.subr.mxu0 0.0
        %2366 = vmatpush1.msra.mxu0 0.0
        %2367 = vmatprep.subr.mxu0 0.0
        %2368 = vmatpush1.msra.mxu0 0.0
        %2369 = vmatprep.subr.mxu0 0.0
        %2370 = vmatpush1.msra.mxu0 0.0
        %2371 = vmatprep.subr.mxu0 0.0
        %2372 = vmatpush1.msra.mxu0 0.0
        %2373 = vmatprep.subr.mxu0 0.0
        %2374 = vmatpush1.msra.mxu0 0.0
        %2375 = vmatprep.subr.mxu0 0.0
        %2376 = vmatpush1.msra.mxu0 0.0
        %2377 = vmatprep.subr.mxu0 0.0
        %2378 = vmatpush1.msra.mxu0 0.0
        %2379 = vmatprep.subr.mxu0 0.0
        %2380 = vmatpush1.msra.mxu0 0.0
        %2381 = vmatprep.mubr.f32.mxu0 0.0
        %2382 = vmatmul.mubr.f32.gmra.mrb[0].mxu0 %v1086
        %v2383 = vpop.f32.mrb[0].mxu0
        %v2384 = vadd.f32 0.0, %v2383
        %v2385 = vpop.f32.mrb[0].mxu0
        %2386 = vdwg.mxu0
        %v2387 = vadd.f32 %v2243, %v2384
        %2388 = vmatprep.subr.mxu0 0.0
        %2389 = vmatpush1.msra.mxu0 %v901
        %2390 = vmatprep.subr.mxu0 0.0
        %2391 = vmatpush1.msra.mxu0 %v902
        %2392 = vmatprep.subr.mxu0 0.0
        %2393 = vmatpush1.msra.mxu0 %v903
        %2394 = vmatprep.subr.mxu0 0.0
        %2395 = vmatpush1.msra.mxu0 %v904
        %2396 = vmatprep.subr.mxu0 0.0
        %2397 = vmatpush1.msra.mxu0 %v905
        %2398 = vmatprep.subr.mxu0 0.0
        %2399 = vmatpush1.msra.mxu0 %v906
        %2400 = vmatprep.subr.mxu0 0.0
        %2401 = vmatpush1.msra.mxu0 %v907
        %2402 = vmatprep.subr.mxu0 0.0
        %2403 = vmatpush1.msra.mxu0 %v908
        %2404 = vmatprep.subr.mxu0 0.0
        %2405 = vmatpush1.msra.mxu0 %v909
        %2406 = vmatprep.subr.mxu0 0.0
        %2407 = vmatpush1.msra.mxu0 %v910
        %2408 = vmatprep.subr.mxu0 0.0
        %2409 = vmatpush1.msra.mxu0 %v911
        %2410 = vmatprep.subr.mxu0 0.0
        %2411 = vmatpush1.msra.mxu0 %v912
        %2412 = vmatprep.subr.mxu0 0.0
        %2413 = vmatpush1.msra.mxu0 0.0
        %2414 = vmatprep.subr.mxu0 0.0
        %2415 = vmatpush1.msra.mxu0 0.0
        %2416 = vmatprep.subr.mxu0 0.0
        %2417 = vmatpush1.msra.mxu0 0.0
        %2418 = vmatprep.subr.mxu0 0.0
        %2419 = vmatpush1.msra.mxu0 0.0
        %2420 = vmatprep.subr.mxu0 0.0
        %2421 = vmatpush1.msra.mxu0 0.0
        %2422 = vmatprep.subr.mxu0 0.0
        %2423 = vmatpush1.msra.mxu0 0.0
        %2424 = vmatprep.subr.mxu0 0.0
        %2425 = vmatpush1.msra.mxu0 0.0
        %2426 = vmatprep.subr.mxu0 0.0
        %2427 = vmatpush1.msra.mxu0 0.0
        %2428 = vmatprep.subr.mxu0 0.0
        %2429 = vmatpush1.msra.mxu0 0.0
        %2430 = vmatprep.subr.mxu0 0.0
        %2431 = vmatpush1.msra.mxu0 0.0
        %2432 = vmatprep.subr.mxu0 0.0
        %2433 = vmatpush1.msra.mxu0 0.0
        %2434 = vmatprep.subr.mxu0 0.0
        %2435 = vmatpush1.msra.mxu0 0.0
        %2436 = vmatprep.subr.mxu0 0.0
        %2437 = vmatpush1.msra.mxu0 0.0
        %2438 = vmatprep.subr.mxu0 0.0
        %2439 = vmatpush1.msra.mxu0 0.0
        %2440 = vmatprep.subr.mxu0 0.0
        %2441 = vmatpush1.msra.mxu0 0.0
        %2442 = vmatprep.subr.mxu0 0.0
        %2443 = vmatpush1.msra.mxu0 0.0
        %2444 = vmatprep.subr.mxu0 0.0
        %2445 = vmatpush1.msra.mxu0 0.0
        %2446 = vmatprep.subr.mxu0 0.0
        %2447 = vmatpush1.msra.mxu0 0.0
        %2448 = vmatprep.subr.mxu0 0.0
        %2449 = vmatpush1.msra.mxu0 0.0
        %2450 = vmatprep.subr.mxu0 0.0
        %2451 = vmatpush1.msra.mxu0 0.0
        %2452 = vmatprep.mubr.f32.mxu0 0.0
        %2453 = vmatmul.mubr.f32.gmra.mrb[0].mxu0 %v1819
        %v2454 = vpop.f32.mrb[0].mxu0
        %v2455 = vadd.f32 0.0, %v2454
        %v2456 = vpop.f32.mrb[0].mxu0
        %2457 = vdwg.mxu0
        %v2458 = vadd.f32 %v2316, %v2455
        %2459 = vmatprep.subr.mxu0 0.0
        %2460 = vmatpush1.msra.mxu0 %v988
        %2461 = vmatprep.subr.mxu0 0.0
        %2462 = vmatpush1.msra.mxu0 %v989
        %2463 = vmatprep.subr.mxu0 0.0
        %2464 = vmatpush1.msra.mxu0 %v990
        %2465 = vmatprep.subr.mxu0 0.0
        %2466 = vmatpush1.msra.mxu0 %v991
        %2467 = vmatprep.subr.mxu0 0.0
        %2468 = vmatpush1.msra.mxu0 %v992
        %2469 = vmatprep.subr.mxu0 0.0
        %2470 = vmatpush1.msra.mxu0 %v993
        %2471 = vmatprep.subr.mxu0 0.0
        %2472 = vmatpush1.msra.mxu0 %v994
        %2473 = vmatprep.subr.mxu0 0.0
        %2474 = vmatpush1.msra.mxu0 %v995
        %2475 = vmatprep.subr.mxu0 0.0
        %2476 = vmatpush1.msra.mxu0 %v996
        %2477 = vmatprep.subr.mxu0 0.0
        %2478 = vmatpush1.msra.mxu0 %v997
        %2479 = vmatprep.subr.mxu0 0.0
        %2480 = vmatpush1.msra.mxu0 %v998
        %2481 = vmatprep.subr.mxu0 0.0
        %2482 = vmatpush1.msra.mxu0 %v999
        %2483 = vmatprep.subr.mxu0 0.0
        %2484 = vmatpush1.msra.mxu0 0.0
        %2485 = vmatprep.subr.mxu0 0.0
        %2486 = vmatpush1.msra.mxu0 0.0
        %2487 = vmatprep.subr.mxu0 0.0
        %2488 = vmatpush1.msra.mxu0 0.0
        %2489 = vmatprep.subr.mxu0 0.0
        %2490 = vmatpush1.msra.mxu0 0.0
        %2491 = vmatprep.subr.mxu0 0.0
        %2492 = vmatpush1.msra.mxu0 0.0
        %2493 = vmatprep.subr.mxu0 0.0
        %2494 = vmatpush1.msra.mxu0 0.0
        %2495 = vmatprep.subr.mxu0 0.0
        %2496 = vmatpush1.msra.mxu0 0.0
        %2497 = vmatprep.subr.mxu0 0.0
        %2498 = vmatpush1.msra.mxu0 0.0
        %2499 = vmatprep.subr.mxu0 0.0
        %2500 = vmatpush1.msra.mxu0 0.0
        %2501 = vmatprep.subr.mxu0 0.0
        %2502 = vmatpush1.msra.mxu0 0.0
        %2503 = vmatprep.subr.mxu0 0.0
        %2504 = vmatpush1.msra.mxu0 0.0
        %2505 = vmatprep.subr.mxu0 0.0
        %2506 = vmatpush1.msra.mxu0 0.0
        %2507 = vmatprep.subr.mxu0 0.0
        %2508 = vmatpush1.msra.mxu0 0.0
        %2509 = vmatprep.subr.mxu0 0.0
        %2510 = vmatpush1.msra.mxu0 0.0
        %2511 = vmatprep.subr.mxu0 0.0
        %2512 = vmatpush1.msra.mxu0 0.0
        %2513 = vmatprep.subr.mxu0 0.0
        %2514 = vmatpush1.msra.mxu0 0.0
        %2515 = vmatprep.subr.mxu0 0.0
        %2516 = vmatpush1.msra.mxu0 0.0
        %2517 = vmatprep.subr.mxu0 0.0
        %2518 = vmatpush1.msra.mxu0 0.0
        %2519 = vmatprep.subr.mxu0 0.0
        %2520 = vmatpush1.msra.mxu0 0.0
        %2521 = vmatprep.subr.mxu0 0.0
        %2522 = vmatpush1.msra.mxu0 0.0
        %2523 = vmatprep.mubr.f32.mxu0 0.0
        %2524 = vmatmul.mubr.f32.gmra.mrb[0].mxu0 %v1819
        %v2525 = vpop.f32.mrb[0].mxu0
        %v2526 = vadd.f32 0.0, %v2525
        %v2527 = vpop.f32.mrb[0].mxu0
        %2528 = vdwg.mxu0
        %v2529 = vadd.f32 %v2387, %v2526
        %v2530 = vld [vmem:[%s725 + $0x1] sm:$0x7f]
        %v2532 = vsel %vm425, %v2530, 0
        %2534 = vmatprep.subr.mxu0 0.0
        %2535 = vmatpush1.msra.mxu0 %v1073
        %2536 = vmatprep.subr.mxu0 0.0
        %2537 = vmatpush1.msra.mxu0 %v1074
        %2538 = vmatprep.subr.mxu0 0.0
        %2539 = vmatpush1.msra.mxu0 %v1075
        %2540 = vmatprep.subr.mxu0 0.0
        %2541 = vmatpush1.msra.mxu0 %v1076
        %2542 = vmatprep.subr.mxu0 0.0
        %2543 = vmatpush1.msra.mxu0 %v1077
        %2544 = vmatprep.subr.mxu0 0.0
        %2545 = vmatpush1.msra.mxu0 %v1078
        %2546 = vmatprep.subr.mxu0 0.0
        %2547 = vmatpush1.msra.mxu0 %v1079
        %2548 = vmatprep.subr.mxu0 0.0
        %2549 = vmatpush1.msra.mxu0 %v1080
        %2550 = vmatprep.subr.mxu0 0.0
        %2551 = vmatpush1.msra.mxu0 %v1081
        %2552 = vmatprep.subr.mxu0 0.0
        %2553 = vmatpush1.msra.mxu0 %v1082
        %2554 = vmatprep.subr.mxu0 0.0
        %2555 = vmatpush1.msra.mxu0 %v1083
        %2556 = vmatprep.subr.mxu0 0.0
        %2557 = vmatpush1.msra.mxu0 %v1084
        %2558 = vmatprep.subr.mxu0 0.0
        %2559 = vmatpush1.msra.mxu0 0.0
        %2560 = vmatprep.subr.mxu0 0.0
        %2561 = vmatpush1.msra.mxu0 0.0
        %2562 = vmatprep.subr.mxu0 0.0
        %2563 = vmatpush1.msra.mxu0 0.0
        %2564 = vmatprep.subr.mxu0 0.0
        %2565 = vmatpush1.msra.mxu0 0.0
        %2566 = vmatprep.subr.mxu0 0.0
        %2567 = vmatpush1.msra.mxu0 0.0
        %2568 = vmatprep.subr.mxu0 0.0
        %2569 = vmatpush1.msra.mxu0 0.0
        %2570 = vmatprep.subr.mxu0 0.0
        %2571 = vmatpush1.msra.mxu0 0.0
        %2572 = vmatprep.subr.mxu0 0.0
        %2573 = vmatpush1.msra.mxu0 0.0
        %2574 = vmatprep.subr.mxu0 0.0
        %2575 = vmatpush1.msra.mxu0 0.0
        %2576 = vmatprep.subr.mxu0 0.0
        %2577 = vmatpush1.msra.mxu0 0.0
        %2578 = vmatprep.subr.mxu0 0.0
        %2579 = vmatpush1.msra.mxu0 0.0
        %2580 = vmatprep.subr.mxu0 0.0
        %2581 = vmatpush1.msra.mxu0 0.0
        %2582 = vmatprep.subr.mxu0 0.0
        %2583 = vmatpush1.msra.mxu0 0.0
        %2584 = vmatprep.subr.mxu0 0.0
        %2585 = vmatpush1.msra.mxu0 0.0
        %2586 = vmatprep.subr.mxu0 0.0
        %2587 = vmatpush1.msra.mxu0 0.0
        %2588 = vmatprep.subr.mxu0 0.0
        %2589 = vmatpush1.msra.mxu0 0.0
        %2590 = vmatprep.subr.mxu0 0.0
        %2591 = vmatpush1.msra.mxu0 0.0
        %2592 = vmatprep.subr.mxu0 0.0
        %2593 = vmatpush1.msra.mxu0 0.0
        %2594 = vmatprep.subr.mxu0 0.0
        %2595 = vmatpush1.msra.mxu0 0.0
        %2596 = vmatprep.subr.mxu0 0.0
        %2597 = vmatpush1.msra.mxu0 0.0
        %2598 = vmatprep.mubr.f32.mxu0 0.0
        %2599 = vmatmul.mubr.f32.gmra.mrb[0].mxu0 %v2532
        %v2600 = vpop.f32.mrb[0].mxu0
        %v2601 = vadd.f32 0.0, %v2600
        %v2602 = vpop.f32.mrb[0].mxu0
        %2603 = vdwg.mxu0
        %v2604 = vadd.f32 %v2458, %v2601
        %2605 = vmatprep.subr.mxu0 0.0
        %2606 = vmatpush1.msra.mxu0 %v1160
        %2607 = vmatprep.subr.mxu0 0.0
        %2608 = vmatpush1.msra.mxu0 %v1161
        %2609 = vmatprep.subr.mxu0 0.0
        %2610 = vmatpush1.msra.mxu0 %v1162
        %2611 = vmatprep.subr.mxu0 0.0
        %2612 = vmatpush1.msra.mxu0 %v1163
        %2613 = vmatprep.subr.mxu0 0.0
        %2614 = vmatpush1.msra.mxu0 %v1164
        %2615 = vmatprep.subr.mxu0 0.0
        %2616 = vmatpush1.msra.mxu0 %v1165
        %2617 = vmatprep.subr.mxu0 0.0
        %2618 = vmatpush1.msra.mxu0 %v1166
        %2619 = vmatprep.subr.mxu0 0.0
        %2620 = vmatpush1.msra.mxu0 %v1167
        %2621 = vmatprep.subr.mxu0 0.0
        %2622 = vmatpush1.msra.mxu0 %v1168
        %2623 = vmatprep.subr.mxu0 0.0
        %2624 = vmatpush1.msra.mxu0 %v1169
        %2625 = vmatprep.subr.mxu0 0.0
        %2626 = vmatpush1.msra.mxu0 %v1170
        %2627 = vmatprep.subr.mxu0 0.0
        %2628 = vmatpush1.msra.mxu0 %v1171
        %2629 = vmatprep.subr.mxu0 0.0
        %2630 = vmatpush1.msra.mxu0 0.0
        %2631 = vmatprep.subr.mxu0 0.0
        %2632 = vmatpush1.msra.mxu0 0.0
        %2633 = vmatprep.subr.mxu0 0.0
        %2634 = vmatpush1.msra.mxu0 0.0
        %2635 = vmatprep.subr.mxu0 0.0
        %2636 = vmatpush1.msra.mxu0 0.0
        %2637 = vmatprep.subr.mxu0 0.0
        %2638 = vmatpush1.msra.mxu0 0.0
        %2639 = vmatprep.subr.mxu0 0.0
        %2640 = vmatpush1.msra.mxu0 0.0
        %2641 = vmatprep.subr.mxu0 0.0
        %2642 = vmatpush1.msra.mxu0 0.0
        %2643 = vmatprep.subr.mxu0 0.0
        %2644 = vmatpush1.msra.mxu0 0.0
        %2645 = vmatprep.subr.mxu0 0.0
        %2646 = vmatpush1.msra.mxu0 0.0
        %2647 = vmatprep.subr.mxu0 0.0
        %2648 = vmatpush1.msra.mxu0 0.0
        %2649 = vmatprep.subr.mxu0 0.0
        %2650 = vmatpush1.msra.mxu0 0.0
        %2651 = vmatprep.subr.mxu0 0.0
        %2652 = vmatpush1.msra.mxu0 0.0
        %2653 = vmatprep.subr.mxu0 0.0
        %2654 = vmatpush1.msra.mxu0 0.0
        %2655 = vmatprep.subr.mxu0 0.0
        %2656 = vmatpush1.msra.mxu0 0.0
        %2657 = vmatprep.subr.mxu0 0.0
        %2658 = vmatpush1.msra.mxu0 0.0
        %2659 = vmatprep.subr.mxu0 0.0
        %2660 = vmatpush1.msra.mxu0 0.0
        %2661 = vmatprep.subr.mxu0 0.0
        %2662 = vmatpush1.msra.mxu0 0.0
        %2663 = vmatprep.subr.mxu0 0.0
        %2664 = vmatpush1.msra.mxu0 0.0
        %2665 = vmatprep.subr.mxu0 0.0
        %2666 = vmatpush1.msra.mxu0 0.0
        %2667 = vmatprep.subr.mxu0 0.0
        %2668 = vmatpush1.msra.mxu0 0.0
        %2669 = vmatprep.mubr.f32.mxu0 0.0
        %2670 = vmatmul.mubr.f32.gmra.mrb[0].mxu0 %v2532
        %v2671 = vpop.f32.mrb[0].mxu0
        %v2672 = vadd.f32 0.0, %v2671
        %v2673 = vpop.f32.mrb[0].mxu0
        %2674 = vdwg.mxu0
        %v2675 = vadd.f32 %v2529, %v2672
        %v2676 = vmax.f32 %v2604, %v2675
        %v2677 = vadd.f32 %v2676, %v1249
        %v2678 = vmax.f32 %v2677, 0.0
        %2679 = vmatprep.subr.mxu0 0.0
        %2680 = vmatpush1.msra.mxu0 %v413
        %2681 = vmatprep.subr.mxu0 0.0
        %2682 = vmatpush1.msra.mxu0 %v414
        %2683 = vmatprep.subr.mxu0 0.0
        %2684 = vmatpush1.msra.mxu0 %v415
        %2685 = vmatprep.subr.mxu0 0.0
        %2686 = vmatpush1.msra.mxu0 %v416
        %2687 = vmatprep.subr.mxu0 0.0
        %2688 = vmatpush1.msra.mxu0 %v417
        %2689 = vmatprep.subr.mxu0 0.0
        %2690 = vmatpush1.msra.mxu0 %v418
        %2691 = vmatprep.subr.mxu0 0.0
        %2692 = vmatpush1.msra.mxu0 %v419
        %2693 = vmatprep.subr.mxu0 0.0
        %2694 = vmatpush1.msra.mxu0 %v420
        %2695 = vmatprep.subr.mxu0 0.0
        %2696 = vmatpush1.msra.mxu0 %v421
        %2697 = vmatprep.subr.mxu0 0.0
        %2698 = vmatpush1.msra.mxu0 %v422
        %2699 = vmatprep.subr.mxu0 0.0
        %2700 = vmatpush1.msra.mxu0 %v423
        %2701 = vmatprep.subr.mxu0 0.0
        %2702 = vmatpush1.msra.mxu0 %v424
        %2703 = vmatprep.subr.mxu0 0.0
        %2704 = vmatpush1.msra.mxu0 0.0
        %2705 = vmatprep.subr.mxu0 0.0
        %2706 = vmatpush1.msra.mxu0 0.0
        %2707 = vmatprep.subr.mxu0 0.0
        %2708 = vmatpush1.msra.mxu0 0.0
        %2709 = vmatprep.subr.mxu0 0.0
        %2710 = vmatpush1.msra.mxu0 0.0
        %2711 = vmatprep.subr.mxu0 0.0
        %2712 = vmatpush1.msra.mxu0 0.0
        %2713 = vmatprep.subr.mxu0 0.0
        %2714 = vmatpush1.msra.mxu0 0.0
        %2715 = vmatprep.subr.mxu0 0.0
        %2716 = vmatpush1.msra.mxu0 0.0
        %2717 = vmatprep.subr.mxu0 0.0
        %2718 = vmatpush1.msra.mxu0 0.0
        %2719 = vmatprep.subr.mxu0 0.0
        %2720 = vmatpush1.msra.mxu0 0.0
        %2721 = vmatprep.subr.mxu0 0.0
        %2722 = vmatpush1.msra.mxu0 0.0
        %2723 = vmatprep.subr.mxu0 0.0
        %2724 = vmatpush1.msra.mxu0 0.0
        %2725 = vmatprep.subr.mxu0 0.0
        %2726 = vmatpush1.msra.mxu0 0.0
        %2727 = vmatprep.subr.mxu0 0.0
        %2728 = vmatpush1.msra.mxu0 0.0
        %2729 = vmatprep.subr.mxu0 0.0
        %2730 = vmatpush1.msra.mxu0 0.0
        %2731 = vmatprep.subr.mxu0 0.0
        %2732 = vmatpush1.msra.mxu0 0.0
        %2733 = vmatprep.subr.mxu0 0.0
        %2734 = vmatpush1.msra.mxu0 0.0
        %2735 = vmatprep.subr.mxu0 0.0
        %2736 = vmatpush1.msra.mxu0 0.0
        %2737 = vmatprep.subr.mxu0 0.0
        %2738 = vmatpush1.msra.mxu0 0.0
        %2739 = vmatprep.subr.mxu0 0.0
        %2740 = vmatpush1.msra.mxu0 0.0
        %2741 = vmatprep.subr.mxu0 0.0
        %2742 = vmatpush1.msra.mxu0 0.0
        %2743 = vmatprep.mubr.f32.mxu0 0.0
        %2744 = vmatmul.mubr.f32.gmra.mrb[0].mxu0 %v1086
        %v2745 = vpop.f32.mrb[0].mxu0
        %v2746 = vadd.f32 0.0, %v2745
        %v2747 = vpop.f32.mrb[0].mxu0
        %2748 = vdwg.mxu0
        %2749 = vmatprep.subr.mxu0 0.0
        %2750 = vmatpush1.msra.mxu0 %v385
        %2751 = vmatprep.subr.mxu0 0.0
        %2752 = vmatpush1.msra.mxu0 %v386
        %2753 = vmatprep.subr.mxu0 0.0
        %2754 = vmatpush1.msra.mxu0 %v387
        %2755 = vmatprep.subr.mxu0 0.0
        %2756 = vmatpush1.msra.mxu0 %v388
        %2757 = vmatprep.subr.mxu0 0.0
        %2758 = vmatpush1.msra.mxu0 %v389
        %2759 = vmatprep.subr.mxu0 0.0
        %2760 = vmatpush1.msra.mxu0 %v390
        %2761 = vmatprep.subr.mxu0 0.0
        %2762 = vmatpush1.msra.mxu0 %v391
        %2763 = vmatprep.subr.mxu0 0.0
        %2764 = vmatpush1.msra.mxu0 %v392
        %2765 = vmatprep.subr.mxu0 0.0
        %2766 = vmatpush1.msra.mxu0 %v393
        %2767 = vmatprep.subr.mxu0 0.0
        %2768 = vmatpush1.msra.mxu0 %v394
        %2769 = vmatprep.subr.mxu0 0.0
        %2770 = vmatpush1.msra.mxu0 %v395
        %2771 = vmatprep.subr.mxu0 0.0
        %2772 = vmatpush1.msra.mxu0 %v396
        %2773 = vmatprep.subr.mxu0 0.0
        %2774 = vmatpush1.msra.mxu0 0.0
        %2775 = vmatprep.subr.mxu0 0.0
        %2776 = vmatpush1.msra.mxu0 0.0
        %2777 = vmatprep.subr.mxu0 0.0
        %2778 = vmatpush1.msra.mxu0 0.0
        %2779 = vmatprep.subr.mxu0 0.0
        %2780 = vmatpush1.msra.mxu0 0.0
        %2781 = vmatprep.subr.mxu0 0.0
        %2782 = vmatpush1.msra.mxu0 0.0
        %2783 = vmatprep.subr.mxu0 0.0
        %2784 = vmatpush1.msra.mxu0 0.0
        %2785 = vmatprep.subr.mxu0 0.0
        %2786 = vmatpush1.msra.mxu0 0.0
        %2787 = vmatprep.subr.mxu0 0.0
        %2788 = vmatpush1.msra.mxu0 0.0
        %2789 = vmatprep.subr.mxu0 0.0
        %2790 = vmatpush1.msra.mxu0 0.0
        %2791 = vmatprep.subr.mxu0 0.0
        %2792 = vmatpush1.msra.mxu0 0.0
        %2793 = vmatprep.subr.mxu0 0.0
        %2794 = vmatpush1.msra.mxu0 0.0
        %2795 = vmatprep.subr.mxu0 0.0
        %2796 = vmatpush1.msra.mxu0 0.0
        %2797 = vmatprep.subr.mxu0 0.0
        %2798 = vmatpush1.msra.mxu0 0.0
        %2799 = vmatprep.subr.mxu0 0.0
        %2800 = vmatpush1.msra.mxu0 0.0
        %2801 = vmatprep.subr.mxu0 0.0
        %2802 = vmatpush1.msra.mxu0 0.0
        %2803 = vmatprep.subr.mxu0 0.0
        %2804 = vmatpush1.msra.mxu0 0.0
        %2805 = vmatprep.subr.mxu0 0.0
        %2806 = vmatpush1.msra.mxu0 0.0
        %2807 = vmatprep.subr.mxu0 0.0
        %2808 = vmatpush1.msra.mxu0 0.0
        %2809 = vmatprep.subr.mxu0 0.0
        %2810 = vmatpush1.msra.mxu0 0.0
        %2811 = vmatprep.subr.mxu0 0.0
        %2812 = vmatpush1.msra.mxu0 0.0
        %2813 = vmatprep.mubr.f32.mxu0 0.0
        %2814 = vmatmul.mubr.f32.gmra.mrb[0].mxu0 %v914
        %v2815 = vpop.f32.mrb[0].mxu0
        %v2816 = vadd.f32 %v2746, %v2815
        %v2817 = vpop.f32.mrb[0].mxu0
        %2818 = vdwg.mxu0
        %2819 = vmatprep.subr.mxu0 0.0
        %2820 = vmatpush1.msra.mxu0 %v573
        %2821 = vmatprep.subr.mxu0 0.0
        %2822 = vmatpush1.msra.mxu0 %v574
        %2823 = vmatprep.subr.mxu0 0.0
        %2824 = vmatpush1.msra.mxu0 %v575
        %2825 = vmatprep.subr.mxu0 0.0
        %2826 = vmatpush1.msra.mxu0 %v576
        %2827 = vmatprep.subr.mxu0 0.0
        %2828 = vmatpush1.msra.mxu0 %v577
        %2829 = vmatprep.subr.mxu0 0.0
        %2830 = vmatpush1.msra.mxu0 %v578
        %2831 = vmatprep.subr.mxu0 0.0
        %2832 = vmatpush1.msra.mxu0 %v579
        %2833 = vmatprep.subr.mxu0 0.0
        %2834 = vmatpush1.msra.mxu0 %v580
        %2835 = vmatprep.subr.mxu0 0.0
        %2836 = vmatpush1.msra.mxu0 %v581
        %2837 = vmatprep.subr.mxu0 0.0
        %2838 = vmatpush1.msra.mxu0 %v582
        %2839 = vmatprep.subr.mxu0 0.0
        %2840 = vmatpush1.msra.mxu0 %v583
        %2841 = vmatprep.subr.mxu0 0.0
        %2842 = vmatpush1.msra.mxu0 %v584
        %2843 = vmatprep.subr.mxu0 0.0
        %2844 = vmatpush1.msra.mxu0 0.0
        %2845 = vmatprep.subr.mxu0 0.0
        %2846 = vmatpush1.msra.mxu0 0.0
        %2847 = vmatprep.subr.mxu0 0.0
        %2848 = vmatpush1.msra.mxu0 0.0
        %2849 = vmatprep.subr.mxu0 0.0
        %2850 = vmatpush1.msra.mxu0 0.0
        %2851 = vmatprep.subr.mxu0 0.0
        %2852 = vmatpush1.msra.mxu0 0.0
        %2853 = vmatprep.subr.mxu0 0.0
        %2854 = vmatpush1.msra.mxu0 0.0
        %2855 = vmatprep.subr.mxu0 0.0
        %2856 = vmatpush1.msra.mxu0 0.0
        %2857 = vmatprep.subr.mxu0 0.0
        %2858 = vmatpush1.msra.mxu0 0.0
        %2859 = vmatprep.subr.mxu0 0.0
        %2860 = vmatpush1.msra.mxu0 0.0
        %2861 = vmatprep.subr.mxu0 0.0
        %2862 = vmatpush1.msra.mxu0 0.0
        %2863 = vmatprep.subr.mxu0 0.0
        %2864 = vmatpush1.msra.mxu0 0.0
        %2865 = vmatprep.subr.mxu0 0.0
        %2866 = vmatpush1.msra.mxu0 0.0
        %2867 = vmatprep.subr.mxu0 0.0
        %2868 = vmatpush1.msra.mxu0 0.0
        %2869 = vmatprep.subr.mxu0 0.0
        %2870 = vmatpush1.msra.mxu0 0.0
        %2871 = vmatprep.subr.mxu0 0.0
        %2872 = vmatpush1.msra.mxu0 0.0
        %2873 = vmatprep.subr.mxu0 0.0
        %2874 = vmatpush1.msra.mxu0 0.0
        %2875 = vmatprep.subr.mxu0 0.0
        %2876 = vmatpush1.msra.mxu0 0.0
        %2877 = vmatprep.subr.mxu0 0.0
        %2878 = vmatpush1.msra.mxu0 0.0
        %2879 = vmatprep.subr.mxu0 0.0
        %2880 = vmatpush1.msra.mxu0 0.0
        %2881 = vmatprep.subr.mxu0 0.0
        %2882 = vmatpush1.msra.mxu0 0.0
        %2883 = vmatprep.mubr.f32.mxu0 0.0
        %2884 = vmatmul.mubr.f32.gmra.mrb[0].mxu0 %v1086
        %v2885 = vpop.f32.mrb[0].mxu0
        %v2886 = vadd.f32 0.0, %v2885
        %v2887 = vpop.f32.mrb[0].mxu0
        %2888 = vdwg.mxu0
        %2889 = vmatprep.subr.mxu0 0.0
        %2890 = vmatpush1.msra.mxu0 %v398
        %2891 = vmatprep.subr.mxu0 0.0
        %2892 = vmatpush1.msra.mxu0 %v399
        %2893 = vmatprep.subr.mxu0 0.0
        %2894 = vmatpush1.msra.mxu0 %v400
        %2895 = vmatprep.subr.mxu0 0.0
        %2896 = vmatpush1.msra.mxu0 %v401
        %2897 = vmatprep.subr.mxu0 0.0
        %2898 = vmatpush1.msra.mxu0 %v402
        %2899 = vmatprep.subr.mxu0 0.0
        %2900 = vmatpush1.msra.mxu0 %v403
        %2901 = vmatprep.subr.mxu0 0.0
        %2902 = vmatpush1.msra.mxu0 %v404
        %2903 = vmatprep.subr.mxu0 0.0
        %2904 = vmatpush1.msra.mxu0 %v405
        %2905 = vmatprep.subr.mxu0 0.0
        %2906 = vmatpush1.msra.mxu0 %v406
        %2907 = vmatprep.subr.mxu0 0.0
        %2908 = vmatpush1.msra.mxu0 %v407
        %2909 = vmatprep.subr.mxu0 0.0
        %2910 = vmatpush1.msra.mxu0 %v408
        %2911 = vmatprep.subr.mxu0 0.0
        %2912 = vmatpush1.msra.mxu0 %v409
        %2913 = vmatprep.subr.mxu0 0.0
        %2914 = vmatpush1.msra.mxu0 0.0
        %2915 = vmatprep.subr.mxu0 0.0
        %2916 = vmatpush1.msra.mxu0 0.0
        %2917 = vmatprep.subr.mxu0 0.0
        %2918 = vmatpush1.msra.mxu0 0.0
        %2919 = vmatprep.subr.mxu0 0.0
        %2920 = vmatpush1.msra.mxu0 0.0
        %2921 = vmatprep.subr.mxu0 0.0
        %2922 = vmatpush1.msra.mxu0 0.0
        %2923 = vmatprep.subr.mxu0 0.0
        %2924 = vmatpush1.msra.mxu0 0.0
        %2925 = vmatprep.subr.mxu0 0.0
        %2926 = vmatpush1.msra.mxu0 0.0
        %2927 = vmatprep.subr.mxu0 0.0
        %2928 = vmatpush1.msra.mxu0 0.0
        %2929 = vmatprep.subr.mxu0 0.0
        %2930 = vmatpush1.msra.mxu0 0.0
        %2931 = vmatprep.subr.mxu0 0.0
        %2932 = vmatpush1.msra.mxu0 0.0
        %2933 = vmatprep.subr.mxu0 0.0
        %2934 = vmatpush1.msra.mxu0 0.0
        %2935 = vmatprep.subr.mxu0 0.0
        %2936 = vmatpush1.msra.mxu0 0.0
        %2937 = vmatprep.subr.mxu0 0.0
        %2938 = vmatpush1.msra.mxu0 0.0
        %2939 = vmatprep.subr.mxu0 0.0
        %2940 = vmatpush1.msra.mxu0 0.0
        %2941 = vmatprep.subr.mxu0 0.0
        %2942 = vmatpush1.msra.mxu0 0.0
        %2943 = vmatprep.subr.mxu0 0.0
        %2944 = vmatpush1.msra.mxu0 0.0
        %2945 = vmatprep.subr.mxu0 0.0
        %2946 = vmatpush1.msra.mxu0 0.0
        %2947 = vmatprep.subr.mxu0 0.0
        %2948 = vmatpush1.msra.mxu0 0.0
        %2949 = vmatprep.subr.mxu0 0.0
        %2950 = vmatpush1.msra.mxu0 0.0
        %2951 = vmatprep.subr.mxu0 0.0
        %2952 = vmatpush1.msra.mxu0 0.0
        %2953 = vmatprep.mubr.f32.mxu0 0.0
        %2954 = vmatmul.mubr.f32.gmra.mrb[0].mxu0 %v914
        %v2955 = vpop.f32.mrb[0].mxu0
        %v2956 = vadd.f32 %v2886, %v2955
        %v2957 = vpop.f32.mrb[0].mxu0
        %2958 = vdwg.mxu0
        %2959 = vmatprep.subr.mxu0 0.0
        %2960 = vmatpush1.msra.mxu0 %v728
        %2961 = vmatprep.subr.mxu0 0.0
        %2962 = vmatpush1.msra.mxu0 %v729
        %2963 = vmatprep.subr.mxu0 0.0
        %2964 = vmatpush1.msra.mxu0 %v730
        %2965 = vmatprep.subr.mxu0 0.0
        %2966 = vmatpush1.msra.mxu0 %v731
        %2967 = vmatprep.subr.mxu0 0.0
        %2968 = vmatpush1.msra.mxu0 %v732
        %2969 = vmatprep.subr.mxu0 0.0
        %2970 = vmatpush1.msra.mxu0 %v733
        %2971 = vmatprep.subr.mxu0 0.0
        %2972 = vmatpush1.msra.mxu0 %v734
        %2973 = vmatprep.subr.mxu0 0.0
        %2974 = vmatpush1.msra.mxu0 %v735
        %2975 = vmatprep.subr.mxu0 0.0
        %2976 = vmatpush1.msra.mxu0 %v736
        %2977 = vmatprep.subr.mxu0 0.0
        %2978 = vmatpush1.msra.mxu0 %v737
        %2979 = vmatprep.subr.mxu0 0.0
        %2980 = vmatpush1.msra.mxu0 %v738
        %2981 = vmatprep.subr.mxu0 0.0
        %2982 = vmatpush1.msra.mxu0 %v739
        %2983 = vmatprep.subr.mxu0 0.0
        %2984 = vmatpush1.msra.mxu0 0.0
        %2985 = vmatprep.subr.mxu0 0.0
        %2986 = vmatpush1.msra.mxu0 0.0
        %2987 = vmatprep.subr.mxu0 0.0
        %2988 = vmatpush1.msra.mxu0 0.0
        %2989 = vmatprep.subr.mxu0 0.0
        %2990 = vmatpush1.msra.mxu0 0.0
        %2991 = vmatprep.subr.mxu0 0.0
        %2992 = vmatpush1.msra.mxu0 0.0
        %2993 = vmatprep.subr.mxu0 0.0
        %2994 = vmatpush1.msra.mxu0 0.0
        %2995 = vmatprep.subr.mxu0 0.0
        %2996 = vmatpush1.msra.mxu0 0.0
        %2997 = vmatprep.subr.mxu0 0.0
        %2998 = vmatpush1.msra.mxu0 0.0
        %2999 = vmatprep.subr.mxu0 0.0
        %3000 = vmatpush1.msra.mxu0 0.0
        %3001 = vmatprep.subr.mxu0 0.0
        %3002 = vmatpush1.msra.mxu0 0.0
        %3003 = vmatprep.subr.mxu0 0.0
        %3004 = vmatpush1.msra.mxu0 0.0
        %3005 = vmatprep.subr.mxu0 0.0
        %3006 = vmatpush1.msra.mxu0 0.0
        %3007 = vmatprep.subr.mxu0 0.0
        %3008 = vmatpush1.msra.mxu0 0.0
        %3009 = vmatprep.subr.mxu0 0.0
        %3010 = vmatpush1.msra.mxu0 0.0
        %3011 = vmatprep.subr.mxu0 0.0
        %3012 = vmatpush1.msra.mxu0 0.0
        %3013 = vmatprep.subr.mxu0 0.0
        %3014 = vmatpush1.msra.mxu0 0.0
        %3015 = vmatprep.subr.mxu0 0.0
        %3016 = vmatpush1.msra.mxu0 0.0
        %3017 = vmatprep.subr.mxu0 0.0
        %3018 = vmatpush1.msra.mxu0 0.0
        %3019 = vmatprep.subr.mxu0 0.0
        %3020 = vmatpush1.msra.mxu0 0.0
        %3021 = vmatprep.subr.mxu0 0.0
        %3022 = vmatpush1.msra.mxu0 0.0
        %3023 = vmatprep.mubr.f32.mxu0 0.0
        %3024 = vmatmul.mubr.f32.gmra.mrb[0].mxu0 %v1819
        %v3025 = vpop.f32.mrb[0].mxu0
        %v3026 = vadd.f32 0.0, %v3025
        %v3027 = vpop.f32.mrb[0].mxu0
        %3028 = vdwg.mxu0
        %v3029 = vadd.f32 %v2816, %v3026
        %3030 = vmatprep.subr.mxu0 0.0
        %3031 = vmatpush1.msra.mxu0 %v815
        %3032 = vmatprep.subr.mxu0 0.0
        %3033 = vmatpush1.msra.mxu0 %v816
        %3034 = vmatprep.subr.mxu0 0.0
        %3035 = vmatpush1.msra.mxu0 %v817
        %3036 = vmatprep.subr.mxu0 0.0
        %3037 = vmatpush1.msra.mxu0 %v818
        %3038 = vmatprep.subr.mxu0 0.0
        %3039 = vmatpush1.msra.mxu0 %v819
        %3040 = vmatprep.subr.mxu0 0.0
        %3041 = vmatpush1.msra.mxu0 %v820
        %3042 = vmatprep.subr.mxu0 0.0
        %3043 = vmatpush1.msra.mxu0 %v821
        %3044 = vmatprep.subr.mxu0 0.0
        %3045 = vmatpush1.msra.mxu0 %v822
        %3046 = vmatprep.subr.mxu0 0.0
        %3047 = vmatpush1.msra.mxu0 %v823
        %3048 = vmatprep.subr.mxu0 0.0
        %3049 = vmatpush1.msra.mxu0 %v824
        %3050 = vmatprep.subr.mxu0 0.0
        %3051 = vmatpush1.msra.mxu0 %v825
        %3052 = vmatprep.subr.mxu0 0.0
        %3053 = vmatpush1.msra.mxu0 %v826
        %3054 = vmatprep.subr.mxu0 0.0
        %3055 = vmatpush1.msra.mxu0 0.0
        %3056 = vmatprep.subr.mxu0 0.0
        %3057 = vmatpush1.msra.mxu0 0.0
        %3058 = vmatprep.subr.mxu0 0.0
        %3059 = vmatpush1.msra.mxu0 0.0
        %3060 = vmatprep.subr.mxu0 0.0
        %3061 = vmatpush1.msra.mxu0 0.0
        %3062 = vmatprep.subr.mxu0 0.0
        %3063 = vmatpush1.msra.mxu0 0.0
        %3064 = vmatprep.subr.mxu0 0.0
        %3065 = vmatpush1.msra.mxu0 0.0
        %3066 = vmatprep.subr.mxu0 0.0
        %3067 = vmatpush1.msra.mxu0 0.0
        %3068 = vmatprep.subr.mxu0 0.0
        %3069 = vmatpush1.msra.mxu0 0.0
        %3070 = vmatprep.subr.mxu0 0.0
        %3071 = vmatpush1.msra.mxu0 0.0
        %3072 = vmatprep.subr.mxu0 0.0
        %3073 = vmatpush1.msra.mxu0 0.0
        %3074 = vmatprep.subr.mxu0 0.0
        %3075 = vmatpush1.msra.mxu0 0.0
        %3076 = vmatprep.subr.mxu0 0.0
        %3077 = vmatpush1.msra.mxu0 0.0
        %3078 = vmatprep.subr.mxu0 0.0
        %3079 = vmatpush1.msra.mxu0 0.0
        %3080 = vmatprep.subr.mxu0 0.0
        %3081 = vmatpush1.msra.mxu0 0.0
        %3082 = vmatprep.subr.mxu0 0.0
        %3083 = vmatpush1.msra.mxu0 0.0
        %3084 = vmatprep.subr.mxu0 0.0
        %3085 = vmatpush1.msra.mxu0 0.0
        %3086 = vmatprep.subr.mxu0 0.0
        %3087 = vmatpush1.msra.mxu0 0.0
        %3088 = vmatprep.subr.mxu0 0.0
        %3089 = vmatpush1.msra.mxu0 0.0
        %3090 = vmatprep.subr.mxu0 0.0
        %3091 = vmatpush1.msra.mxu0 0.0
        %3092 = vmatprep.subr.mxu0 0.0
        %3093 = vmatpush1.msra.mxu0 0.0
        %3094 = vmatprep.mubr.f32.mxu0 0.0
        %3095 = vmatmul.mubr.f32.gmra.mrb[0].mxu0 %v1819
        %v3096 = vpop.f32.mrb[0].mxu0
        %v3097 = vadd.f32 0.0, %v3096
        %v3098 = vpop.f32.mrb[0].mxu0
        %3099 = vdwg.mxu0
        %v3100 = vadd.f32 %v2956, %v3097
        %3101 = vmatprep.subr.mxu0 0.0
        %3102 = vmatpush1.msra.mxu0 %v901
        %3103 = vmatprep.subr.mxu0 0.0
        %3104 = vmatpush1.msra.mxu0 %v902
        %3105 = vmatprep.subr.mxu0 0.0
        %3106 = vmatpush1.msra.mxu0 %v903
        %3107 = vmatprep.subr.mxu0 0.0
        %3108 = vmatpush1.msra.mxu0 %v904
        %3109 = vmatprep.subr.mxu0 0.0
        %3110 = vmatpush1.msra.mxu0 %v905
        %3111 = vmatprep.subr.mxu0 0.0
        %3112 = vmatpush1.msra.mxu0 %v906
        %3113 = vmatprep.subr.mxu0 0.0
        %3114 = vmatpush1.msra.mxu0 %v907
        %3115 = vmatprep.subr.mxu0 0.0
        %3116 = vmatpush1.msra.mxu0 %v908
        %3117 = vmatprep.subr.mxu0 0.0
        %3118 = vmatpush1.msra.mxu0 %v909
        %3119 = vmatprep.subr.mxu0 0.0
        %3120 = vmatpush1.msra.mxu0 %v910
        %3121 = vmatprep.subr.mxu0 0.0
        %3122 = vmatpush1.msra.mxu0 %v911
        %3123 = vmatprep.subr.mxu0 0.0
        %3124 = vmatpush1.msra.mxu0 %v912
        %3125 = vmatprep.subr.mxu0 0.0
        %3126 = vmatpush1.msra.mxu0 0.0
        %3127 = vmatprep.subr.mxu0 0.0
        %3128 = vmatpush1.msra.mxu0 0.0
        %3129 = vmatprep.subr.mxu0 0.0
        %3130 = vmatpush1.msra.mxu0 0.0
        %3131 = vmatprep.subr.mxu0 0.0
        %3132 = vmatpush1.msra.mxu0 0.0
        %3133 = vmatprep.subr.mxu0 0.0
        %3134 = vmatpush1.msra.mxu0 0.0
        %3135 = vmatprep.subr.mxu0 0.0
        %3136 = vmatpush1.msra.mxu0 0.0
        %3137 = vmatprep.subr.mxu0 0.0
        %3138 = vmatpush1.msra.mxu0 0.0
        %3139 = vmatprep.subr.mxu0 0.0
        %3140 = vmatpush1.msra.mxu0 0.0
        %3141 = vmatprep.subr.mxu0 0.0
        %3142 = vmatpush1.msra.mxu0 0.0
        %3143 = vmatprep.subr.mxu0 0.0
        %3144 = vmatpush1.msra.mxu0 0.0
        %3145 = vmatprep.subr.mxu0 0.0
        %3146 = vmatpush1.msra.mxu0 0.0
        %3147 = vmatprep.subr.mxu0 0.0
        %3148 = vmatpush1.msra.mxu0 0.0
        %3149 = vmatprep.subr.mxu0 0.0
        %3150 = vmatpush1.msra.mxu0 0.0
        %3151 = vmatprep.subr.mxu0 0.0
        %3152 = vmatpush1.msra.mxu0 0.0
        %3153 = vmatprep.subr.mxu0 0.0
        %3154 = vmatpush1.msra.mxu0 0.0
        %3155 = vmatprep.subr.mxu0 0.0
        %3156 = vmatpush1.msra.mxu0 0.0
        %3157 = vmatprep.subr.mxu0 0.0
        %3158 = vmatpush1.msra.mxu0 0.0
        %3159 = vmatprep.subr.mxu0 0.0
        %3160 = vmatpush1.msra.mxu0 0.0
        %3161 = vmatprep.subr.mxu0 0.0
        %3162 = vmatpush1.msra.mxu0 0.0
        %3163 = vmatprep.subr.mxu0 0.0
        %3164 = vmatpush1.msra.mxu0 0.0
        %3165 = vmatprep.mubr.f32.mxu0 0.0
        %3166 = vmatmul.mubr.f32.gmra.mrb[0].mxu0 %v2532
        %v3167 = vpop.f32.mrb[0].mxu0
        %v3168 = vadd.f32 0.0, %v3167
        %v3169 = vpop.f32.mrb[0].mxu0
        %3170 = vdwg.mxu0
        %v3171 = vadd.f32 %v3029, %v3168
        %3172 = vmatprep.subr.mxu0 0.0
        %3173 = vmatpush1.msra.mxu0 %v988
        %3174 = vmatprep.subr.mxu0 0.0
        %3175 = vmatpush1.msra.mxu0 %v989
        %3176 = vmatprep.subr.mxu0 0.0
        %3177 = vmatpush1.msra.mxu0 %v990
        %3178 = vmatprep.subr.mxu0 0.0
        %3179 = vmatpush1.msra.mxu0 %v991
        %3180 = vmatprep.subr.mxu0 0.0
        %3181 = vmatpush1.msra.mxu0 %v992
        %3182 = vmatprep.subr.mxu0 0.0
        %3183 = vmatpush1.msra.mxu0 %v993
        %3184 = vmatprep.subr.mxu0 0.0
        %3185 = vmatpush1.msra.mxu0 %v994
        %3186 = vmatprep.subr.mxu0 0.0
        %3187 = vmatpush1.msra.mxu0 %v995
        %3188 = vmatprep.subr.mxu0 0.0
        %3189 = vmatpush1.msra.mxu0 %v996
        %3190 = vmatprep.subr.mxu0 0.0
        %3191 = vmatpush1.msra.mxu0 %v997
        %3192 = vmatprep.subr.mxu0 0.0
        %3193 = vmatpush1.msra.mxu0 %v998
        %3194 = vmatprep.subr.mxu0 0.0
        %3195 = vmatpush1.msra.mxu0 %v999
        %3196 = vmatprep.subr.mxu0 0.0
        %3197 = vmatpush1.msra.mxu0 0.0
        %3198 = vmatprep.subr.mxu0 0.0
        %3199 = vmatpush1.msra.mxu0 0.0
        %3200 = vmatprep.subr.mxu0 0.0
        %3201 = vmatpush1.msra.mxu0 0.0
        %3202 = vmatprep.subr.mxu0 0.0
        %3203 = vmatpush1.msra.mxu0 0.0
        %3204 = vmatprep.subr.mxu0 0.0
        %3205 = vmatpush1.msra.mxu0 0.0
        %3206 = vmatprep.subr.mxu0 0.0
        %3207 = vmatpush1.msra.mxu0 0.0
        %3208 = vmatprep.subr.mxu0 0.0
        %3209 = vmatpush1.msra.mxu0 0.0
        %3210 = vmatprep.subr.mxu0 0.0
        %3211 = vmatpush1.msra.mxu0 0.0
        %3212 = vmatprep.subr.mxu0 0.0
        %3213 = vmatpush1.msra.mxu0 0.0
        %3214 = vmatprep.subr.mxu0 0.0
        %3215 = vmatpush1.msra.mxu0 0.0
        %3216 = vmatprep.subr.mxu0 0.0
        %3217 = vmatpush1.msra.mxu0 0.0
        %3218 = vmatprep.subr.mxu0 0.0
        %3219 = vmatpush1.msra.mxu0 0.0
        %3220 = vmatprep.subr.mxu0 0.0
        %3221 = vmatpush1.msra.mxu0 0.0
        %3222 = vmatprep.subr.mxu0 0.0
        %3223 = vmatpush1.msra.mxu0 0.0
        %3224 = vmatprep.subr.mxu0 0.0
        %3225 = vmatpush1.msra.mxu0 0.0
        %3226 = vmatprep.subr.mxu0 0.0
        %3227 = vmatpush1.msra.mxu0 0.0
        %3228 = vmatprep.subr.mxu0 0.0
        %3229 = vmatpush1.msra.mxu0 0.0
        %3230 = vmatprep.subr.mxu0 0.0
        %3231 = vmatpush1.msra.mxu0 0.0
        %3232 = vmatprep.subr.mxu0 0.0
        %3233 = vmatpush1.msra.mxu0 0.0
        %3234 = vmatprep.subr.mxu0 0.0
        %3235 = vmatpush1.msra.mxu0 0.0
        %3236 = vmatprep.mubr.f32.mxu0 0.0
        %3237 = vmatmul.mubr.f32.gmra.mrb[0].mxu0 %v2532
        %v3238 = vpop.f32.mrb[0].mxu0
        %v3239 = vadd.f32 0.0, %v3238
        %v3240 = vpop.f32.mrb[0].mxu0
        %3241 = vdwg.mxu0
        %v3242 = vadd.f32 %v3100, %v3239
        %v3243 = vld [vmem:[%s898 + $0x1] sm:$0x7f]
        %v3245 = vsel %vm425, %v3243, 0
        %3247 = vmatprep.subr.mxu0 0.0
        %3248 = vmatpush1.msra.mxu0 %v1073
        %3249 = vmatprep.subr.mxu0 0.0
        %3250 = vmatpush1.msra.mxu0 %v1074
        %3251 = vmatprep.subr.mxu0 0.0
        %3252 = vmatpush1.msra.mxu0 %v1075
        %3253 = vmatprep.subr.mxu0 0.0
        %3254 = vmatpush1.msra.mxu0 %v1076
        %3255 = vmatprep.subr.mxu0 0.0
        %3256 = vmatpush1.msra.mxu0 %v1077
        %3257 = vmatprep.subr.mxu0 0.0
        %3258 = vmatpush1.msra.mxu0 %v1078
        %3259 = vmatprep.subr.mxu0 0.0
        %3260 = vmatpush1.msra.mxu0 %v1079
        %3261 = vmatprep.subr.mxu0 0.0
        %3262 = vmatpush1.msra.mxu0 %v1080
        %3263 = vmatprep.subr.mxu0 0.0
        %3264 = vmatpush1.msra.mxu0 %v1081
        %3265 = vmatprep.subr.mxu0 0.0
        %3266 = vmatpush1.msra.mxu0 %v1082
        %3267 = vmatprep.subr.mxu0 0.0
        %3268 = vmatpush1.msra.mxu0 %v1083
        %3269 = vmatprep.subr.mxu0 0.0
        %3270 = vmatpush1.msra.mxu0 %v1084
        %3271 = vmatprep.subr.mxu0 0.0
        %3272 = vmatpush1.msra.mxu0 0.0
        %3273 = vmatprep.subr.mxu0 0.0
        %3274 = vmatpush1.msra.mxu0 0.0
        %3275 = vmatprep.subr.mxu0 0.0
        %3276 = vmatpush1.msra.mxu0 0.0
        %3277 = vmatprep.subr.mxu0 0.0
        %3278 = vmatpush1.msra.mxu0 0.0
        %3279 = vmatprep.subr.mxu0 0.0
        %3280 = vmatpush1.msra.mxu0 0.0
        %3281 = vmatprep.subr.mxu0 0.0
        %3282 = vmatpush1.msra.mxu0 0.0
        %3283 = vmatprep.subr.mxu0 0.0
        %3284 = vmatpush1.msra.mxu0 0.0
        %3285 = vmatprep.subr.mxu0 0.0
        %3286 = vmatpush1.msra.mxu0 0.0
        %3287 = vmatprep.subr.mxu0 0.0
        %3288 = vmatpush1.msra.mxu0 0.0
        %3289 = vmatprep.subr.mxu0 0.0
        %3290 = vmatpush1.msra.mxu0 0.0
        %3291 = vmatprep.subr.mxu0 0.0
        %3292 = vmatpush1.msra.mxu0 0.0
        %3293 = vmatprep.subr.mxu0 0.0
        %3294 = vmatpush1.msra.mxu0 0.0
        %3295 = vmatprep.subr.mxu0 0.0
        %3296 = vmatpush1.msra.mxu0 0.0
        %3297 = vmatprep.subr.mxu0 0.0
        %3298 = vmatpush1.msra.mxu0 0.0
        %3299 = vmatprep.subr.mxu0 0.0
        %3300 = vmatpush1.msra.mxu0 0.0
        %3301 = vmatprep.subr.mxu0 0.0
        %3302 = vmatpush1.msra.mxu0 0.0
        %3303 = vmatprep.subr.mxu0 0.0
        %3304 = vmatpush1.msra.mxu0 0.0
        %3305 = vmatprep.subr.mxu0 0.0
        %3306 = vmatpush1.msra.mxu0 0.0
        %3307 = vmatprep.subr.mxu0 0.0
        %3308 = vmatpush1.msra.mxu0 0.0
        %3309 = vmatprep.subr.mxu0 0.0
        %3310 = vmatpush1.msra.mxu0 0.0
        %3311 = vmatprep.mubr.f32.mxu0 0.0
        %3312 = vmatmul.mubr.f32.gmra.mrb[0].mxu0 %v3245
        %v3313 = vpop.f32.mrb[0].mxu0
        %v3314 = vadd.f32 0.0, %v3313
        %v3315 = vpop.f32.mrb[0].mxu0
        %3316 = vdwg.mxu0
        %v3317 = vadd.f32 %v3171, %v3314
        %3318 = vmatprep.subr.mxu0 0.0
        %3319 = vmatpush1.msra.mxu0 %v1160
        %3320 = vmatprep.subr.mxu0 0.0
        %3321 = vmatpush1.msra.mxu0 %v1161
        %3322 = vmatprep.subr.mxu0 0.0
        %3323 = vmatpush1.msra.mxu0 %v1162
        %3324 = vmatprep.subr.mxu0 0.0
        %3325 = vmatpush1.msra.mxu0 %v1163
        %3326 = vmatprep.subr.mxu0 0.0
        %3327 = vmatpush1.msra.mxu0 %v1164
        %3328 = vmatprep.subr.mxu0 0.0
        %3329 = vmatpush1.msra.mxu0 %v1165
        %3330 = vmatprep.subr.mxu0 0.0
        %3331 = vmatpush1.msra.mxu0 %v1166
        %3332 = vmatprep.subr.mxu0 0.0
        %3333 = vmatpush1.msra.mxu0 %v1167
        %3334 = vmatprep.subr.mxu0 0.0
        %3335 = vmatpush1.msra.mxu0 %v1168
        %3336 = vmatprep.subr.mxu0 0.0
        %3337 = vmatpush1.msra.mxu0 %v1169
        %3338 = vmatprep.subr.mxu0 0.0
        %3339 = vmatpush1.msra.mxu0 %v1170
        %3340 = vmatprep.subr.mxu0 0.0
        %3341 = vmatpush1.msra.mxu0 %v1171
        %3342 = vmatprep.subr.mxu0 0.0
        %3343 = vmatpush1.msra.mxu0 0.0
        %3344 = vmatprep.subr.mxu0 0.0
        %3345 = vmatpush1.msra.mxu0 0.0
        %3346 = vmatprep.subr.mxu0 0.0
        %3347 = vmatpush1.msra.mxu0 0.0
        %3348 = vmatprep.subr.mxu0 0.0
        %3349 = vmatpush1.msra.mxu0 0.0
        %3350 = vmatprep.subr.mxu0 0.0
        %3351 = vmatpush1.msra.mxu0 0.0
        %3352 = vmatprep.subr.mxu0 0.0
        %3353 = vmatpush1.msra.mxu0 0.0
        %3354 = vmatprep.subr.mxu0 0.0
        %3355 = vmatpush1.msra.mxu0 0.0
        %3356 = vmatprep.subr.mxu0 0.0
        %3357 = vmatpush1.msra.mxu0 0.0
        %3358 = vmatprep.subr.mxu0 0.0
        %3359 = vmatpush1.msra.mxu0 0.0
        %3360 = vmatprep.subr.mxu0 0.0
        %3361 = vmatpush1.msra.mxu0 0.0
        %3362 = vmatprep.subr.mxu0 0.0
        %3363 = vmatpush1.msra.mxu0 0.0
        %3364 = vmatprep.subr.mxu0 0.0
        %3365 = vmatpush1.msra.mxu0 0.0
        %3366 = vmatprep.subr.mxu0 0.0
        %3367 = vmatpush1.msra.mxu0 0.0
        %3368 = vmatprep.subr.mxu0 0.0
        %3369 = vmatpush1.msra.mxu0 0.0
        %3370 = vmatprep.subr.mxu0 0.0
        %3371 = vmatpush1.msra.mxu0 0.0
        %3372 = vmatprep.subr.mxu0 0.0
        %3373 = vmatpush1.msra.mxu0 0.0
        %3374 = vmatprep.subr.mxu0 0.0
        %3375 = vmatpush1.msra.mxu0 0.0
        %3376 = vmatprep.subr.mxu0 0.0
        %3377 = vmatpush1.msra.mxu0 0.0
        %3378 = vmatprep.subr.mxu0 0.0
        %3379 = vmatpush1.msra.mxu0 0.0
        %3380 = vmatprep.subr.mxu0 0.0
        %3381 = vmatpush1.msra.mxu0 0.0
        %3382 = vmatprep.mubr.f32.mxu0 0.0
        %3383 = vmatmul.mubr.f32.gmra.mrb[0].mxu0 %v3245
        %v3384 = vpop.f32.mrb[0].mxu0
        %v3385 = vadd.f32 0.0, %v3384
        %v3386 = vpop.f32.mrb[0].mxu0
        %3387 = vdwg.mxu0
        %v3388 = vadd.f32 %v3242, %v3385
        %v3389 = vmax.f32 %v3317, %v3388
        %v3390 = vadd.f32 %v3389, %v1249
        %v3391 = vmax.f32 %v3390, 0.0
        %v3392 = vmax.f32 %v1252, %v1965
        %v3393 = vmax.f32 %v2678, %v3391
        %v3394 = vld [vmem:[%s3] sm:$0xff]
        %v3395 = vld [vmem:[%s3 + $0x8] sm:$0xff]
        %v3396 = vld [vmem:[%s3 + $0x10] sm:$0xff]
        %v3397 = vld [vmem:[%s3 + $0x18] sm:$0xff]
        %v3398 = vld [vmem:[%s3 + $0x20] sm:$0xff]
        %v3399 = vld [vmem:[%s3 + $0x28] sm:$0xff]
        %v3400 = vld [vmem:[%s3 + $0x30] sm:$0xff]
        %v3401 = vld [vmem:[%s3 + $0x38] sm:$0xff]
        %v3402 = vld [vmem:[%s3 + $0x40] sm:$0xff]
        %v3403 = vld [vmem:[%s3 + $0x48] sm:$0xff]
        %v3404 = vld [vmem:[%s3 + $0x50] sm:$0xf]
        %s3405 = scalar_lea.vmem %s3, 440
        %v3406 = vld [vmem:[%s3405] sm:$0xff]
        %v3407 = vld [vmem:[%s3405 + $0x8] sm:$0xff]
        %v3408 = vld [vmem:[%s3405 + $0x10] sm:$0xff]
        %v3409 = vld [vmem:[%s3405 + $0x18] sm:$0xff]
        %v3410 = vld [vmem:[%s3405 + $0x20] sm:$0xff]
        %v3411 = vld [vmem:[%s3405 + $0x28] sm:$0xff]
        %v3412 = vld [vmem:[%s3405 + $0x30] sm:$0xff]
        %v3413 = vld [vmem:[%s3405 + $0x38] sm:$0xff]
        %v3414 = vld [vmem:[%s3405 + $0x40] sm:$0xff]
        %v3415 = vld [vmem:[%s3405 + $0x48] sm:$0xff]
        %v3416 = vld [vmem:[%s3405 + $0x50] sm:$0xf]
        %s3417 = scalar_lea.vmem %s3, 88
        %v3418 = vld [vmem:[%s3417] sm:$0xff]
        %v3419 = vld [vmem:[%s3417 + $0x8] sm:$0xff]
        %v3420 = vld [vmem:[%s3417 + $0x10] sm:$0xff]
        %v3421 = vld [vmem:[%s3417 + $0x18] sm:$0xff]
        %v3422 = vld [vmem:[%s3417 + $0x20] sm:$0xff]
        %v3423 = vld [vmem:[%s3417 + $0x28] sm:$0xff]
        %v3424 = vld [vmem:[%s3417 + $0x30] sm:$0xff]
        %v3425 = vld [vmem:[%s3417 + $0x38] sm:$0xff]
        %v3426 = vld [vmem:[%s3417 + $0x40] sm:$0xff]
        %v3427 = vld [vmem:[%s3417 + $0x48] sm:$0xff]
        %v3428 = vld [vmem:[%s3417 + $0x50] sm:$0xf]
        %vm3429 = vcmask 687104
        %v3431 = vsel %vm3429, %v3393, 0
        %vm3433 = vcmask 1043456
        %v3435 = vsel %vm3433, %v3428, 0
        %3437 = vmatprep.subr.mxu0 0.0
        %3438 = vmatpush1.msra.mxu0 %v3418
        %3439 = vmatprep.subr.mxu0 0.0
        %3440 = vmatpush1.msra.mxu0 %v3419
        %3441 = vmatprep.subr.mxu0 0.0
        %3442 = vmatpush1.msra.mxu0 %v3420
        %3443 = vmatprep.subr.mxu0 0.0
        %3444 = vmatpush1.msra.mxu0 %v3421
        %3445 = vmatprep.subr.mxu0 0.0
        %3446 = vmatpush1.msra.mxu0 %v3422
        %3447 = vmatprep.subr.mxu0 0.0
        %3448 = vmatpush1.msra.mxu0 %v3423
        %3449 = vmatprep.subr.mxu0 0.0
        %3450 = vmatpush1.msra.mxu0 %v3424
        %3451 = vmatprep.subr.mxu0 0.0
        %3452 = vmatpush1.msra.mxu0 %v3425
        %3453 = vmatprep.subr.mxu0 0.0
        %3454 = vmatpush1.msra.mxu0 %v3426
        %3455 = vmatprep.subr.mxu0 0.0
        %3456 = vmatpush1.msra.mxu0 %v3427
        %3457 = vmatprep.subr.mxu0 0.0
        %3458 = vmatpush1.msra.mxu0 %v3435
        %3459 = vmatprep.subr.mxu0 0.0
        %3460 = vmatpush1.msra.mxu0 0.0
        %3461 = vmatprep.subr.mxu0 0.0
        %3462 = vmatpush1.msra.mxu0 0.0
        %3463 = vmatprep.subr.mxu0 0.0
        %3464 = vmatpush1.msra.mxu0 0.0
        %3465 = vmatprep.subr.mxu0 0.0
        %3466 = vmatpush1.msra.mxu0 0.0
        %3467 = vmatprep.subr.mxu0 0.0
        %3468 = vmatpush1.msra.mxu0 0.0
        %3469 = vmatprep.subr.mxu0 0.0
        %3470 = vmatpush1.msra.mxu0 0.0
        %3471 = vmatprep.subr.mxu0 0.0
        %3472 = vmatpush1.msra.mxu0 0.0
        %3473 = vmatprep.subr.mxu0 0.0
        %3474 = vmatpush1.msra.mxu0 0.0
        %3475 = vmatprep.subr.mxu0 0.0
        %3476 = vmatpush1.msra.mxu0 0.0
        %3477 = vmatprep.subr.mxu0 0.0
        %3478 = vmatpush1.msra.mxu0 0.0
        %3479 = vmatprep.subr.mxu0 0.0
        %3480 = vmatpush1.msra.mxu0 0.0
        %3481 = vmatprep.subr.mxu0 0.0
        %3482 = vmatpush1.msra.mxu0 0.0
        %3483 = vmatprep.subr.mxu0 0.0
        %3484 = vmatpush1.msra.mxu0 0.0
        %3485 = vmatprep.subr.mxu0 0.0
        %3486 = vmatpush1.msra.mxu0 0.0
        %3487 = vmatprep.subr.mxu0 0.0
        %3488 = vmatpush1.msra.mxu0 0.0
        %3489 = vmatprep.subr.mxu0 0.0
        %3490 = vmatpush1.msra.mxu0 0.0
        %3491 = vmatprep.subr.mxu0 0.0
        %3492 = vmatpush1.msra.mxu0 0.0
        %3493 = vmatprep.subr.mxu0 0.0
        %3494 = vmatpush1.msra.mxu0 0.0
        %3495 = vmatprep.subr.mxu0 0.0
        %3496 = vmatpush1.msra.mxu0 0.0
        %3497 = vmatprep.subr.mxu0 0.0
        %3498 = vmatpush1.msra.mxu0 0.0
        %3499 = vmatprep.subr.mxu0 0.0
        %3500 = vmatpush1.msra.mxu0 0.0
        %3501 = vmatprep.mubr.f32.mxu0 0.0
        %3502 = vmatmul.mubr.f32.gmra.mrb[0].mxu0 %v3431
        %v3503 = vpop.f32.mrb[0].mxu0
        %v3504 = vadd.f32 0.0, %v3503
        %v3505 = vpop.f32.mrb[0].mxu0
        %3506 = vdwg.mxu0
        %v3508 = vsel %vm3429, %v3392, 0
        %v3511 = vsel %vm3433, %v3404, 0
        %3513 = vmatprep.subr.mxu0 0.0
        %3514 = vmatpush1.msra.mxu0 %v3394
        %3515 = vmatprep.subr.mxu0 0.0
        %3516 = vmatpush1.msra.mxu0 %v3395
        %3517 = vmatprep.subr.mxu0 0.0
        %3518 = vmatpush1.msra.mxu0 %v3396
        %3519 = vmatprep.subr.mxu0 0.0
        %3520 = vmatpush1.msra.mxu0 %v3397
        %3521 = vmatprep.subr.mxu0 0.0
        %3522 = vmatpush1.msra.mxu0 %v3398
        %3523 = vmatprep.subr.mxu0 0.0
        %3524 = vmatpush1.msra.mxu0 %v3399
        %3525 = vmatprep.subr.mxu0 0.0
        %3526 = vmatpush1.msra.mxu0 %v3400
        %3527 = vmatprep.subr.mxu0 0.0
        %3528 = vmatpush1.msra.mxu0 %v3401
        %3529 = vmatprep.subr.mxu0 0.0
        %3530 = vmatpush1.msra.mxu0 %v3402
        %3531 = vmatprep.subr.mxu0 0.0
        %3532 = vmatpush1.msra.mxu0 %v3403
        %3533 = vmatprep.subr.mxu0 0.0
        %3534 = vmatpush1.msra.mxu0 %v3511
        %3535 = vmatprep.subr.mxu0 0.0
        %3536 = vmatpush1.msra.mxu0 0.0
        %3537 = vmatprep.subr.mxu0 0.0
        %3538 = vmatpush1.msra.mxu0 0.0
        %3539 = vmatprep.subr.mxu0 0.0
        %3540 = vmatpush1.msra.mxu0 0.0
        %3541 = vmatprep.subr.mxu0 0.0
        %3542 = vmatpush1.msra.mxu0 0.0
        %3543 = vmatprep.subr.mxu0 0.0
        %3544 = vmatpush1.msra.mxu0 0.0
        %3545 = vmatprep.subr.mxu0 0.0
        %3546 = vmatpush1.msra.mxu0 0.0
        %3547 = vmatprep.subr.mxu0 0.0
        %3548 = vmatpush1.msra.mxu0 0.0
        %3549 = vmatprep.subr.mxu0 0.0
        %3550 = vmatpush1.msra.mxu0 0.0
        %3551 = vmatprep.subr.mxu0 0.0
        %3552 = vmatpush1.msra.mxu0 0.0
        %3553 = vmatprep.subr.mxu0 0.0
        %3554 = vmatpush1.msra.mxu0 0.0
        %3555 = vmatprep.subr.mxu0 0.0
        %3556 = vmatpush1.msra.mxu0 0.0
        %3557 = vmatprep.subr.mxu0 0.0
        %3558 = vmatpush1.msra.mxu0 0.0
        %3559 = vmatprep.subr.mxu0 0.0
        %3560 = vmatpush1.msra.mxu0 0.0
        %3561 = vmatprep.subr.mxu0 0.0
        %3562 = vmatpush1.msra.mxu0 0.0
        %3563 = vmatprep.subr.mxu0 0.0
        %3564 = vmatpush1.msra.mxu0 0.0
        %3565 = vmatprep.subr.mxu0 0.0
        %3566 = vmatpush1.msra.mxu0 0.0
        %3567 = vmatprep.subr.mxu0 0.0
        %3568 = vmatpush1.msra.mxu0 0.0
        %3569 = vmatprep.subr.mxu0 0.0
        %3570 = vmatpush1.msra.mxu0 0.0
        %3571 = vmatprep.subr.mxu0 0.0
        %3572 = vmatpush1.msra.mxu0 0.0
        %3573 = vmatprep.subr.mxu0 0.0
        %3574 = vmatpush1.msra.mxu0 0.0
        %3575 = vmatprep.subr.mxu0 0.0
        %3576 = vmatpush1.msra.mxu0 0.0
        %3577 = vmatprep.mubr.f32.mxu0 0.0
        %3578 = vmatmul.mubr.f32.gmra.mrb[0].mxu0 %v3508
        %v3579 = vpop.f32.mrb[0].mxu0
        %v3580 = vadd.f32 %v3504, %v3579
        %v3581 = vpop.f32.mrb[0].mxu0
        %3582 = vdwg.mxu0
        %s3583 = scalar_lea.vmem %s3, 528
        %v3584 = vld [vmem:[%s3583] sm:$0xff]
        %v3585 = vld [vmem:[%s3583 + $0x8] sm:$0xff]
        %v3586 = vld [vmem:[%s3583 + $0x10] sm:$0xff]
        %v3587 = vld [vmem:[%s3583 + $0x18] sm:$0xff]
        %v3588 = vld [vmem:[%s3583 + $0x20] sm:$0xff]
        %v3589 = vld [vmem:[%s3583 + $0x28] sm:$0xff]
        %v3590 = vld [vmem:[%s3583 + $0x30] sm:$0xff]
        %v3591 = vld [vmem:[%s3583 + $0x38] sm:$0xff]
        %v3592 = vld [vmem:[%s3583 + $0x40] sm:$0xff]
        %v3593 = vld [vmem:[%s3583 + $0x48] sm:$0xff]
        %v3594 = vld [vmem:[%s3583 + $0x50] sm:$0xf]
        %v3596 = vsel %vm3433, %v3594, 0
        %3598 = vmatprep.subr.mxu0 0.0
        %3599 = vmatpush1.msra.mxu0 %v3584
        %3600 = vmatprep.subr.mxu0 0.0
        %3601 = vmatpush1.msra.mxu0 %v3585
        %3602 = vmatprep.subr.mxu0 0.0
        %3603 = vmatpush1.msra.mxu0 %v3586
        %3604 = vmatprep.subr.mxu0 0.0
        %3605 = vmatpush1.msra.mxu0 %v3587
        %3606 = vmatprep.subr.mxu0 0.0
        %3607 = vmatpush1.msra.mxu0 %v3588
        %3608 = vmatprep.subr.mxu0 0.0
        %3609 = vmatpush1.msra.mxu0 %v3589
        %3610 = vmatprep.subr.mxu0 0.0
        %3611 = vmatpush1.msra.mxu0 %v3590
        %3612 = vmatprep.subr.mxu0 0.0
        %3613 = vmatpush1.msra.mxu0 %v3591
        %3614 = vmatprep.subr.mxu0 0.0
        %3615 = vmatpush1.msra.mxu0 %v3592
        %3616 = vmatprep.subr.mxu0 0.0
        %3617 = vmatpush1.msra.mxu0 %v3593
        %3618 = vmatprep.subr.mxu0 0.0
        %3619 = vmatpush1.msra.mxu0 %v3596
        %3620 = vmatprep.subr.mxu0 0.0
        %3621 = vmatpush1.msra.mxu0 0.0
        %3622 = vmatprep.subr.mxu0 0.0
        %3623 = vmatpush1.msra.mxu0 0.0
        %3624 = vmatprep.subr.mxu0 0.0
        %3625 = vmatpush1.msra.mxu0 0.0
        %3626 = vmatprep.subr.mxu0 0.0
        %3627 = vmatpush1.msra.mxu0 0.0
        %3628 = vmatprep.subr.mxu0 0.0
        %3629 = vmatpush1.msra.mxu0 0.0
        %3630 = vmatprep.subr.mxu0 0.0
        %3631 = vmatpush1.msra.mxu0 0.0
        %3632 = vmatprep.subr.mxu0 0.0
        %3633 = vmatpush1.msra.mxu0 0.0
        %3634 = vmatprep.subr.mxu0 0.0
        %3635 = vmatpush1.msra.mxu0 0.0
        %3636 = vmatprep.subr.mxu0 0.0
        %3637 = vmatpush1.msra.mxu0 0.0
        %3638 = vmatprep.subr.mxu0 0.0
        %3639 = vmatpush1.msra.mxu0 0.0
        %3640 = vmatprep.subr.mxu0 0.0
        %3641 = vmatpush1.msra.mxu0 0.0
        %3642 = vmatprep.subr.mxu0 0.0
        %3643 = vmatpush1.msra.mxu0 0.0
        %3644 = vmatprep.subr.mxu0 0.0
        %3645 = vmatpush1.msra.mxu0 0.0
        %3646 = vmatprep.subr.mxu0 0.0
        %3647 = vmatpush1.msra.mxu0 0.0
        %3648 = vmatprep.subr.mxu0 0.0
        %3649 = vmatpush1.msra.mxu0 0.0
        %3650 = vmatprep.subr.mxu0 0.0
        %3651 = vmatpush1.msra.mxu0 0.0
        %3652 = vmatprep.subr.mxu0 0.0
        %3653 = vmatpush1.msra.mxu0 0.0
        %3654 = vmatprep.subr.mxu0 0.0
        %3655 = vmatpush1.msra.mxu0 0.0
        %3656 = vmatprep.subr.mxu0 0.0
        %3657 = vmatpush1.msra.mxu0 0.0
        %3658 = vmatprep.subr.mxu0 0.0
        %3659 = vmatpush1.msra.mxu0 0.0
        %3660 = vmatprep.subr.mxu0 0.0
        %3661 = vmatpush1.msra.mxu0 0.0
        %3662 = vmatprep.mubr.f32.mxu0 0.0
        %3663 = vmatmul.mubr.f32.gmra.mrb[0].mxu0 %v3431
        %v3664 = vpop.f32.mrb[0].mxu0
        %v3665 = vadd.f32 0.0, %v3664
        %v3666 = vpop.f32.mrb[0].mxu0
        %3667 = vdwg.mxu0
        %v3669 = vsel %vm3433, %v3416, 0
        %3671 = vmatprep.subr.mxu0 0.0
        %3672 = vmatpush1.msra.mxu0 %v3406
        %3673 = vmatprep.subr.mxu0 0.0
        %3674 = vmatpush1.msra.mxu0 %v3407
        %3675 = vmatprep.subr.mxu0 0.0
        %3676 = vmatpush1.msra.mxu0 %v3408
        %3677 = vmatprep.subr.mxu0 0.0
        %3678 = vmatpush1.msra.mxu0 %v3409
        %3679 = vmatprep.subr.mxu0 0.0
        %3680 = vmatpush1.msra.mxu0 %v3410
        %3681 = vmatprep.subr.mxu0 0.0
        %3682 = vmatpush1.msra.mxu0 %v3411
        %3683 = vmatprep.subr.mxu0 0.0
        %3684 = vmatpush1.msra.mxu0 %v3412
        %3685 = vmatprep.subr.mxu0 0.0
        %3686 = vmatpush1.msra.mxu0 %v3413
        %3687 = vmatprep.subr.mxu0 0.0
        %3688 = vmatpush1.msra.mxu0 %v3414
        %3689 = vmatprep.subr.mxu0 0.0
        %3690 = vmatpush1.msra.mxu0 %v3415
        %3691 = vmatprep.subr.mxu0 0.0
        %3692 = vmatpush1.msra.mxu0 %v3669
        %3693 = vmatprep.subr.mxu0 0.0
        %3694 = vmatpush1.msra.mxu0 0.0
        %3695 = vmatprep.subr.mxu0 0.0
        %3696 = vmatpush1.msra.mxu0 0.0
        %3697 = vmatprep.subr.mxu0 0.0
        %3698 = vmatpush1.msra.mxu0 0.0
        %3699 = vmatprep.subr.mxu0 0.0
        %3700 = vmatpush1.msra.mxu0 0.0
        %3701 = vmatprep.subr.mxu0 0.0
        %3702 = vmatpush1.msra.mxu0 0.0
        %3703 = vmatprep.subr.mxu0 0.0
        %3704 = vmatpush1.msra.mxu0 0.0
        %3705 = vmatprep.subr.mxu0 0.0
        %3706 = vmatpush1.msra.mxu0 0.0
        %3707 = vmatprep.subr.mxu0 0.0
        %3708 = vmatpush1.msra.mxu0 0.0
        %3709 = vmatprep.subr.mxu0 0.0
        %3710 = vmatpush1.msra.mxu0 0.0
        %3711 = vmatprep.subr.mxu0 0.0
        %3712 = vmatpush1.msra.mxu0 0.0
        %3713 = vmatprep.subr.mxu0 0.0
        %3714 = vmatpush1.msra.mxu0 0.0
        %3715 = vmatprep.subr.mxu0 0.0
        %3716 = vmatpush1.msra.mxu0 0.0
        %3717 = vmatprep.subr.mxu0 0.0
        %3718 = vmatpush1.msra.mxu0 0.0
        %3719 = vmatprep.subr.mxu0 0.0
        %3720 = vmatpush1.msra.mxu0 0.0
        %3721 = vmatprep.subr.mxu0 0.0
        %3722 = vmatpush1.msra.mxu0 0.0
        %3723 = vmatprep.subr.mxu0 0.0
        %3724 = vmatpush1.msra.mxu0 0.0
        %3725 = vmatprep.subr.mxu0 0.0
        %3726 = vmatpush1.msra.mxu0 0.0
        %3727 = vmatprep.subr.mxu0 0.0
        %3728 = vmatpush1.msra.mxu0 0.0
        %3729 = vmatprep.subr.mxu0 0.0
        %3730 = vmatpush1.msra.mxu0 0.0
        %3731 = vmatprep.subr.mxu0 0.0
        %3732 = vmatpush1.msra.mxu0 0.0
        %3733 = vmatprep.subr.mxu0 0.0
        %3734 = vmatpush1.msra.mxu0 0.0
        %3735 = vmatprep.mubr.f32.mxu0 0.0
        %3736 = vmatmul.mubr.f32.gmra.mrb[0].mxu0 %v3508
        %v3737 = vpop.f32.mrb[0].mxu0
        %v3738 = vadd.f32 %v3665, %v3737
        %v3739 = vpop.f32.mrb[0].mxu0
        %3740 = vdwg.mxu0
        %s3741 = scalar_lea.vmem %s3, 176
        %v3742 = vld [vmem:[%s3741] sm:$0xff]
        %v3743 = vld [vmem:[%s3741 + $0x8] sm:$0xff]
        %v3744 = vld [vmem:[%s3741 + $0x10] sm:$0xff]
        %v3745 = vld [vmem:[%s3741 + $0x18] sm:$0xff]
        %v3746 = vld [vmem:[%s3741 + $0x20] sm:$0xff]
        %v3747 = vld [vmem:[%s3741 + $0x28] sm:$0xff]
        %v3748 = vld [vmem:[%s3741 + $0x30] sm:$0xff]
        %v3749 = vld [vmem:[%s3741 + $0x38] sm:$0xff]
        %v3750 = vld [vmem:[%s3741 + $0x40] sm:$0xff]
        %v3751 = vld [vmem:[%s3741 + $0x48] sm:$0xff]
        %v3752 = vld [vmem:[%s3741 + $0x50] sm:$0xf]
        %v3753 = vrot.slane %v3392, 1
        %v3754 = vsel %vm3429, %v3753, 0
        %v3757 = vsel %vm3433, %v3752, 0
        %3759 = vmatprep.subr.mxu0 0.0
        %3760 = vmatpush1.msra.mxu0 %v3742
        %3761 = vmatprep.subr.mxu0 0.0
        %3762 = vmatpush1.msra.mxu0 %v3743
        %3763 = vmatprep.subr.mxu0 0.0
        %3764 = vmatpush1.msra.mxu0 %v3744
        %3765 = vmatprep.subr.mxu0 0.0
        %3766 = vmatpush1.msra.mxu0 %v3745
        %3767 = vmatprep.subr.mxu0 0.0
        %3768 = vmatpush1.msra.mxu0 %v3746
        %3769 = vmatprep.subr.mxu0 0.0
        %3770 = vmatpush1.msra.mxu0 %v3747
        %3771 = vmatprep.subr.mxu0 0.0
        %3772 = vmatpush1.msra.mxu0 %v3748
        %3773 = vmatprep.subr.mxu0 0.0
        %3774 = vmatpush1.msra.mxu0 %v3749
        %3775 = vmatprep.subr.mxu0 0.0
        %3776 = vmatpush1.msra.mxu0 %v3750
        %3777 = vmatprep.subr.mxu0 0.0
        %3778 = vmatpush1.msra.mxu0 %v3751
        %3779 = vmatprep.subr.mxu0 0.0
        %3780 = vmatpush1.msra.mxu0 %v3757
        %3781 = vmatprep.subr.mxu0 0.0
        %3782 = vmatpush1.msra.mxu0 0.0
        %3783 = vmatprep.subr.mxu0 0.0
        %3784 = vmatpush1.msra.mxu0 0.0
        %3785 = vmatprep.subr.mxu0 0.0
        %3786 = vmatpush1.msra.mxu0 0.0
        %3787 = vmatprep.subr.mxu0 0.0
        %3788 = vmatpush1.msra.mxu0 0.0
        %3789 = vmatprep.subr.mxu0 0.0
        %3790 = vmatpush1.msra.mxu0 0.0
        %3791 = vmatprep.subr.mxu0 0.0
        %3792 = vmatpush1.msra.mxu0 0.0
        %3793 = vmatprep.subr.mxu0 0.0
        %3794 = vmatpush1.msra.mxu0 0.0
        %3795 = vmatprep.subr.mxu0 0.0
        %3796 = vmatpush1.msra.mxu0 0.0
        %3797 = vmatprep.subr.mxu0 0.0
        %3798 = vmatpush1.msra.mxu0 0.0
        %3799 = vmatprep.subr.mxu0 0.0
        %3800 = vmatpush1.msra.mxu0 0.0
        %3801 = vmatprep.subr.mxu0 0.0
        %3802 = vmatpush1.msra.mxu0 0.0
        %3803 = vmatprep.subr.mxu0 0.0
        %3804 = vmatpush1.msra.mxu0 0.0
        %3805 = vmatprep.subr.mxu0 0.0
        %3806 = vmatpush1.msra.mxu0 0.0
        %3807 = vmatprep.subr.mxu0 0.0
        %3808 = vmatpush1.msra.mxu0 0.0
        %3809 = vmatprep.subr.mxu0 0.0
        %3810 = vmatpush1.msra.mxu0 0.0
        %3811 = vmatprep.subr.mxu0 0.0
        %3812 = vmatpush1.msra.mxu0 0.0
        %3813 = vmatprep.subr.mxu0 0.0
        %3814 = vmatpush1.msra.mxu0 0.0
        %3815 = vmatprep.subr.mxu0 0.0
        %3816 = vmatpush1.msra.mxu0 0.0
        %3817 = vmatprep.subr.mxu0 0.0
        %3818 = vmatpush1.msra.mxu0 0.0
        %3819 = vmatprep.subr.mxu0 0.0
        %3820 = vmatpush1.msra.mxu0 0.0
        %3821 = vmatprep.subr.mxu0 0.0
        %3822 = vmatpush1.msra.mxu0 0.0
        %3823 = vmatprep.mubr.f32.mxu0 0.0
        %3824 = vmatmul.mubr.f32.gmra.mrb[0].mxu0 %v3754
        %v3825 = vpop.f32.mrb[0].mxu0
        %v3826 = vadd.f32 0.0, %v3825
        %v3827 = vpop.f32.mrb[0].mxu0
        %3828 = vdwg.mxu0
        %v3829 = vadd.f32 %v3580, %v3826
        %s3830 = scalar_lea.vmem %s3, 616
        %v3831 = vld [vmem:[%s3830] sm:$0xff]
        %v3832 = vld [vmem:[%s3830 + $0x8] sm:$0xff]
        %v3833 = vld [vmem:[%s3830 + $0x10] sm:$0xff]
        %v3834 = vld [vmem:[%s3830 + $0x18] sm:$0xff]
        %v3835 = vld [vmem:[%s3830 + $0x20] sm:$0xff]
        %v3836 = vld [vmem:[%s3830 + $0x28] sm:$0xff]
        %v3837 = vld [vmem:[%s3830 + $0x30] sm:$0xff]
        %v3838 = vld [vmem:[%s3830 + $0x38] sm:$0xff]
        %v3839 = vld [vmem:[%s3830 + $0x40] sm:$0xff]
        %v3840 = vld [vmem:[%s3830 + $0x48] sm:$0xff]
        %v3841 = vld [vmem:[%s3830 + $0x50] sm:$0xf]
        %v3843 = vsel %vm3433, %v3841, 0
        %3845 = vmatprep.subr.mxu0 0.0
        %3846 = vmatpush1.msra.mxu0 %v3831
        %3847 = vmatprep.subr.mxu0 0.0
        %3848 = vmatpush1.msra.mxu0 %v3832
        %3849 = vmatprep.subr.mxu0 0.0
        %3850 = vmatpush1.msra.mxu0 %v3833
        %3851 = vmatprep.subr.mxu0 0.0
        %3852 = vmatpush1.msra.mxu0 %v3834
        %3853 = vmatprep.subr.mxu0 0.0
        %3854 = vmatpush1.msra.mxu0 %v3835
        %3855 = vmatprep.subr.mxu0 0.0
        %3856 = vmatpush1.msra.mxu0 %v3836
        %3857 = vmatprep.subr.mxu0 0.0
        %3858 = vmatpush1.msra.mxu0 %v3837
        %3859 = vmatprep.subr.mxu0 0.0
        %3860 = vmatpush1.msra.mxu0 %v3838
        %3861 = vmatprep.subr.mxu0 0.0
        %3862 = vmatpush1.msra.mxu0 %v3839
        %3863 = vmatprep.subr.mxu0 0.0
        %3864 = vmatpush1.msra.mxu0 %v3840
        %3865 = vmatprep.subr.mxu0 0.0
        %3866 = vmatpush1.msra.mxu0 %v3843
        %3867 = vmatprep.subr.mxu0 0.0
        %3868 = vmatpush1.msra.mxu0 0.0
        %3869 = vmatprep.subr.mxu0 0.0
        %3870 = vmatpush1.msra.mxu0 0.0
        %3871 = vmatprep.subr.mxu0 0.0
        %3872 = vmatpush1.msra.mxu0 0.0
        %3873 = vmatprep.subr.mxu0 0.0
        %3874 = vmatpush1.msra.mxu0 0.0
        %3875 = vmatprep.subr.mxu0 0.0
        %3876 = vmatpush1.msra.mxu0 0.0
        %3877 = vmatprep.subr.mxu0 0.0
        %3878 = vmatpush1.msra.mxu0 0.0
        %3879 = vmatprep.subr.mxu0 0.0
        %3880 = vmatpush1.msra.mxu0 0.0
        %3881 = vmatprep.subr.mxu0 0.0
        %3882 = vmatpush1.msra.mxu0 0.0
        %3883 = vmatprep.subr.mxu0 0.0
        %3884 = vmatpush1.msra.mxu0 0.0
        %3885 = vmatprep.subr.mxu0 0.0
        %3886 = vmatpush1.msra.mxu0 0.0
        %3887 = vmatprep.subr.mxu0 0.0
        %3888 = vmatpush1.msra.mxu0 0.0
        %3889 = vmatprep.subr.mxu0 0.0
        %3890 = vmatpush1.msra.mxu0 0.0
        %3891 = vmatprep.subr.mxu0 0.0
        %3892 = vmatpush1.msra.mxu0 0.0
        %3893 = vmatprep.subr.mxu0 0.0
        %3894 = vmatpush1.msra.mxu0 0.0
        %3895 = vmatprep.subr.mxu0 0.0
        %3896 = vmatpush1.msra.mxu0 0.0
        %3897 = vmatprep.subr.mxu0 0.0
        %3898 = vmatpush1.msra.mxu0 0.0
        %3899 = vmatprep.subr.mxu0 0.0
        %3900 = vmatpush1.msra.mxu0 0.0
        %3901 = vmatprep.subr.mxu0 0.0
        %3902 = vmatpush1.msra.mxu0 0.0
        %3903 = vmatprep.subr.mxu0 0.0
        %3904 = vmatpush1.msra.mxu0 0.0
        %3905 = vmatprep.subr.mxu0 0.0
        %3906 = vmatpush1.msra.mxu0 0.0
        %3907 = vmatprep.subr.mxu0 0.0
        %3908 = vmatpush1.msra.mxu0 0.0
        %3909 = vmatprep.mubr.f32.mxu0 0.0
        %3910 = vmatmul.mubr.f32.gmra.mrb[0].mxu0 %v3754
        %v3911 = vpop.f32.mrb[0].mxu0
        %v3912 = vadd.f32 0.0, %v3911
        %v3913 = vpop.f32.mrb[0].mxu0
        %3914 = vdwg.mxu0
        %v3915 = vadd.f32 %v3738, %v3912
        %s3916 = scalar_lea.vmem %s3, 264
        %v3917 = vld [vmem:[%s3916] sm:$0xff]
        %v3918 = vld [vmem:[%s3916 + $0x8] sm:$0xff]
        %v3919 = vld [vmem:[%s3916 + $0x10] sm:$0xff]
        %v3920 = vld [vmem:[%s3916 + $0x18] sm:$0xff]
        %v3921 = vld [vmem:[%s3916 + $0x20] sm:$0xff]
        %v3922 = vld [vmem:[%s3916 + $0x28] sm:$0xff]
        %v3923 = vld [vmem:[%s3916 + $0x30] sm:$0xff]
        %v3924 = vld [vmem:[%s3916 + $0x38] sm:$0xff]
        %v3925 = vld [vmem:[%s3916 + $0x40] sm:$0xff]
        %v3926 = vld [vmem:[%s3916 + $0x48] sm:$0xff]
        %v3927 = vld [vmem:[%s3916 + $0x50] sm:$0xf]
        %v3928 = vrot.slane %v3393, 1
        %v3929 = vsel %vm3429, %v3928, 0
        %v3932 = vsel %vm3433, %v3927, 0
        %3934 = vmatprep.subr.mxu0 0.0
        %3935 = vmatpush1.msra.mxu0 %v3917
        %3936 = vmatprep.subr.mxu0 0.0
        %3937 = vmatpush1.msra.mxu0 %v3918
        %3938 = vmatprep.subr.mxu0 0.0
        %3939 = vmatpush1.msra.mxu0 %v3919
        %3940 = vmatprep.subr.mxu0 0.0
        %3941 = vmatpush1.msra.mxu0 %v3920
        %3942 = vmatprep.subr.mxu0 0.0
        %3943 = vmatpush1.msra.mxu0 %v3921
        %3944 = vmatprep.subr.mxu0 0.0
        %3945 = vmatpush1.msra.mxu0 %v3922
        %3946 = vmatprep.subr.mxu0 0.0
        %3947 = vmatpush1.msra.mxu0 %v3923
        %3948 = vmatprep.subr.mxu0 0.0
        %3949 = vmatpush1.msra.mxu0 %v3924
        %3950 = vmatprep.subr.mxu0 0.0
        %3951 = vmatpush1.msra.mxu0 %v3925
        %3952 = vmatprep.subr.mxu0 0.0
        %3953 = vmatpush1.msra.mxu0 %v3926
        %3954 = vmatprep.subr.mxu0 0.0
        %3955 = vmatpush1.msra.mxu0 %v3932
        %3956 = vmatprep.subr.mxu0 0.0
        %3957 = vmatpush1.msra.mxu0 0.0
        %3958 = vmatprep.subr.mxu0 0.0
        %3959 = vmatpush1.msra.mxu0 0.0
        %3960 = vmatprep.subr.mxu0 0.0
        %3961 = vmatpush1.msra.mxu0 0.0
        %3962 = vmatprep.subr.mxu0 0.0
        %3963 = vmatpush1.msra.mxu0 0.0
        %3964 = vmatprep.subr.mxu0 0.0
        %3965 = vmatpush1.msra.mxu0 0.0
        %3966 = vmatprep.subr.mxu0 0.0
        %3967 = vmatpush1.msra.mxu0 0.0
        %3968 = vmatprep.subr.mxu0 0.0
        %3969 = vmatpush1.msra.mxu0 0.0
        %3970 = vmatprep.subr.mxu0 0.0
        %3971 = vmatpush1.msra.mxu0 0.0
        %3972 = vmatprep.subr.mxu0 0.0
        %3973 = vmatpush1.msra.mxu0 0.0
        %3974 = vmatprep.subr.mxu0 0.0
        %3975 = vmatpush1.msra.mxu0 0.0
        %3976 = vmatprep.subr.mxu0 0.0
        %3977 = vmatpush1.msra.mxu0 0.0
        %3978 = vmatprep.subr.mxu0 0.0
        %3979 = vmatpush1.msra.mxu0 0.0
        %3980 = vmatprep.subr.mxu0 0.0
        %3981 = vmatpush1.msra.mxu0 0.0
        %3982 = vmatprep.subr.mxu0 0.0
        %3983 = vmatpush1.msra.mxu0 0.0
        %3984 = vmatprep.subr.mxu0 0.0
        %3985 = vmatpush1.msra.mxu0 0.0
        %3986 = vmatprep.subr.mxu0 0.0
        %3987 = vmatpush1.msra.mxu0 0.0
        %3988 = vmatprep.subr.mxu0 0.0
        %3989 = vmatpush1.msra.mxu0 0.0
        %3990 = vmatprep.subr.mxu0 0.0
        %3991 = vmatpush1.msra.mxu0 0.0
        %3992 = vmatprep.subr.mxu0 0.0
        %3993 = vmatpush1.msra.mxu0 0.0
        %3994 = vmatprep.subr.mxu0 0.0
        %3995 = vmatpush1.msra.mxu0 0.0
        %3996 = vmatprep.subr.mxu0 0.0
        %3997 = vmatpush1.msra.mxu0 0.0
        %3998 = vmatprep.mubr.f32.mxu0 0.0
        %3999 = vmatmul.mubr.f32.gmra.mrb[0].mxu0 %v3929
        %v4000 = vpop.f32.mrb[0].mxu0
        %v4001 = vadd.f32 0.0, %v4000
        %v4002 = vpop.f32.mrb[0].mxu0
        %4003 = vdwg.mxu0
        %v4004 = vadd.f32 %v3829, %v4001
        %s4005 = scalar_lea.vmem %s3, 704
        %v4006 = vld [vmem:[%s4005] sm:$0xff]
        %v4007 = vld [vmem:[%s4005 + $0x8] sm:$0xff]
        %v4008 = vld [vmem:[%s4005 + $0x10] sm:$0xff]
        %v4009 = vld [vmem:[%s4005 + $0x18] sm:$0xff]
        %v4010 = vld [vmem:[%s4005 + $0x20] sm:$0xff]
        %v4011 = vld [vmem:[%s4005 + $0x28] sm:$0xff]
        %v4012 = vld [vmem:[%s4005 + $0x30] sm:$0xff]
        %v4013 = vld [vmem:[%s4005 + $0x38] sm:$0xff]
        %v4014 = vld [vmem:[%s4005 + $0x40] sm:$0xff]
        %v4015 = vld [vmem:[%s4005 + $0x48] sm:$0xff]
        %v4016 = vld [vmem:[%s4005 + $0x50] sm:$0xf]
        %v4018 = vsel %vm3433, %v4016, 0
        %4020 = vmatprep.subr.mxu0 0.0
        %4021 = vmatpush1.msra.mxu0 %v4006
        %4022 = vmatprep.subr.mxu0 0.0
        %4023 = vmatpush1.msra.mxu0 %v4007
        %4024 = vmatprep.subr.mxu0 0.0
        %4025 = vmatpush1.msra.mxu0 %v4008
        %4026 = vmatprep.subr.mxu0 0.0
        %4027 = vmatpush1.msra.mxu0 %v4009
        %4028 = vmatprep.subr.mxu0 0.0
        %4029 = vmatpush1.msra.mxu0 %v4010
        %4030 = vmatprep.subr.mxu0 0.0
        %4031 = vmatpush1.msra.mxu0 %v4011
        %4032 = vmatprep.subr.mxu0 0.0
        %4033 = vmatpush1.msra.mxu0 %v4012
        %4034 = vmatprep.subr.mxu0 0.0
        %4035 = vmatpush1.msra.mxu0 %v4013
        %4036 = vmatprep.subr.mxu0 0.0
        %4037 = vmatpush1.msra.mxu0 %v4014
        %4038 = vmatprep.subr.mxu0 0.0
        %4039 = vmatpush1.msra.mxu0 %v4015
        %4040 = vmatprep.subr.mxu0 0.0
        %4041 = vmatpush1.msra.mxu0 %v4018
        %4042 = vmatprep.subr.mxu0 0.0
        %4043 = vmatpush1.msra.mxu0 0.0
        %4044 = vmatprep.subr.mxu0 0.0
        %4045 = vmatpush1.msra.mxu0 0.0
        %4046 = vmatprep.subr.mxu0 0.0
        %4047 = vmatpush1.msra.mxu0 0.0
        %4048 = vmatprep.subr.mxu0 0.0
        %4049 = vmatpush1.msra.mxu0 0.0
        %4050 = vmatprep.subr.mxu0 0.0
        %4051 = vmatpush1.msra.mxu0 0.0
        %4052 = vmatprep.subr.mxu0 0.0
        %4053 = vmatpush1.msra.mxu0 0.0
        %4054 = vmatprep.subr.mxu0 0.0
        %4055 = vmatpush1.msra.mxu0 0.0
        %4056 = vmatprep.subr.mxu0 0.0
        %4057 = vmatpush1.msra.mxu0 0.0
        %4058 = vmatprep.subr.mxu0 0.0
        %4059 = vmatpush1.msra.mxu0 0.0
        %4060 = vmatprep.subr.mxu0 0.0
        %4061 = vmatpush1.msra.mxu0 0.0
        %4062 = vmatprep.subr.mxu0 0.0
        %4063 = vmatpush1.msra.mxu0 0.0
        %4064 = vmatprep.subr.mxu0 0.0
        %4065 = vmatpush1.msra.mxu0 0.0
        %4066 = vmatprep.subr.mxu0 0.0
        %4067 = vmatpush1.msra.mxu0 0.0
        %4068 = vmatprep.subr.mxu0 0.0
        %4069 = vmatpush1.msra.mxu0 0.0
        %4070 = vmatprep.subr.mxu0 0.0
        %4071 = vmatpush1.msra.mxu0 0.0
        %4072 = vmatprep.subr.mxu0 0.0
        %4073 = vmatpush1.msra.mxu0 0.0
        %4074 = vmatprep.subr.mxu0 0.0
        %4075 = vmatpush1.msra.mxu0 0.0
        %4076 = vmatprep.subr.mxu0 0.0
        %4077 = vmatpush1.msra.mxu0 0.0
        %4078 = vmatprep.subr.mxu0 0.0
        %4079 = vmatpush1.msra.mxu0 0.0
        %4080 = vmatprep.subr.mxu0 0.0
        %4081 = vmatpush1.msra.mxu0 0.0
        %4082 = vmatprep.subr.mxu0 0.0
        %4083 = vmatpush1.msra.mxu0 0.0
        %4084 = vmatprep.mubr.f32.mxu0 0.0
        %4085 = vmatmul.mubr.f32.gmra.mrb[0].mxu0 %v3929
        %v4086 = vpop.f32.mrb[0].mxu0
        %v4087 = vadd.f32 0.0, %v4086
        %v4088 = vpop.f32.mrb[0].mxu0
        %4089 = vdwg.mxu0
        %v4090 = vadd.f32 %v3915, %v4087
        %s4091 = scalar_lea.vmem %s3, 352
        %v4092 = vld [vmem:[%s4091] sm:$0xff]
        %v4093 = vld [vmem:[%s4091 + $0x8] sm:$0xff]
        %v4094 = vld [vmem:[%s4091 + $0x10] sm:$0xff]
        %v4095 = vld [vmem:[%s4091 + $0x18] sm:$0xff]
        %v4096 = vld [vmem:[%s4091 + $0x20] sm:$0xff]
        %v4097 = vld [vmem:[%s4091 + $0x28] sm:$0xff]
        %v4098 = vld [vmem:[%s4091 + $0x30] sm:$0xff]
        %v4099 = vld [vmem:[%s4091 + $0x38] sm:$0xff]
        %v4100 = vld [vmem:[%s4091 + $0x40] sm:$0xff]
        %v4101 = vld [vmem:[%s4091 + $0x48] sm:$0xff]
        %v4102 = vld [vmem:[%s4091 + $0x50] sm:$0xf]
        %v4103 = vrot.slane %v3392, 2
        %v4104 = vsel %vm3429, %v4103, 0
        %v4107 = vsel %vm3433, %v4102, 0
        %4109 = vmatprep.subr.mxu0 0.0
        %4110 = vmatpush1.msra.mxu0 %v4092
        %4111 = vmatprep.subr.mxu0 0.0
        %4112 = vmatpush1.msra.mxu0 %v4093
        %4113 = vmatprep.subr.mxu0 0.0
        %4114 = vmatpush1.msra.mxu0 %v4094
        %4115 = vmatprep.subr.mxu0 0.0
        %4116 = vmatpush1.msra.mxu0 %v4095
        %4117 = vmatprep.subr.mxu0 0.0
        %4118 = vmatpush1.msra.mxu0 %v4096
        %4119 = vmatprep.subr.mxu0 0.0
        %4120 = vmatpush1.msra.mxu0 %v4097
        %4121 = vmatprep.subr.mxu0 0.0
        %4122 = vmatpush1.msra.mxu0 %v4098
        %4123 = vmatprep.subr.mxu0 0.0
        %4124 = vmatpush1.msra.mxu0 %v4099
        %4125 = vmatprep.subr.mxu0 0.0
        %4126 = vmatpush1.msra.mxu0 %v4100
        %4127 = vmatprep.subr.mxu0 0.0
        %4128 = vmatpush1.msra.mxu0 %v4101
        %4129 = vmatprep.subr.mxu0 0.0
        %4130 = vmatpush1.msra.mxu0 %v4107
        %4131 = vmatprep.subr.mxu0 0.0
        %4132 = vmatpush1.msra.mxu0 0.0
        %4133 = vmatprep.subr.mxu0 0.0
        %4134 = vmatpush1.msra.mxu0 0.0
        %4135 = vmatprep.subr.mxu0 0.0
        %4136 = vmatpush1.msra.mxu0 0.0
        %4137 = vmatprep.subr.mxu0 0.0
        %4138 = vmatpush1.msra.mxu0 0.0
        %4139 = vmatprep.subr.mxu0 0.0
        %4140 = vmatpush1.msra.mxu0 0.0
        %4141 = vmatprep.subr.mxu0 0.0
        %4142 = vmatpush1.msra.mxu0 0.0
        %4143 = vmatprep.subr.mxu0 0.0
        %4144 = vmatpush1.msra.mxu0 0.0
        %4145 = vmatprep.subr.mxu0 0.0
        %4146 = vmatpush1.msra.mxu0 0.0
        %4147 = vmatprep.subr.mxu0 0.0
        %4148 = vmatpush1.msra.mxu0 0.0
        %4149 = vmatprep.subr.mxu0 0.0
        %4150 = vmatpush1.msra.mxu0 0.0
        %4151 = vmatprep.subr.mxu0 0.0
        %4152 = vmatpush1.msra.mxu0 0.0
        %4153 = vmatprep.subr.mxu0 0.0
        %4154 = vmatpush1.msra.mxu0 0.0
        %4155 = vmatprep.subr.mxu0 0.0
        %4156 = vmatpush1.msra.mxu0 0.0
        %4157 = vmatprep.subr.mxu0 0.0
        %4158 = vmatpush1.msra.mxu0 0.0
        %4159 = vmatprep.subr.mxu0 0.0
        %4160 = vmatpush1.msra.mxu0 0.0
        %4161 = vmatprep.subr.mxu0 0.0
        %4162 = vmatpush1.msra.mxu0 0.0
        %4163 = vmatprep.subr.mxu0 0.0
        %4164 = vmatpush1.msra.mxu0 0.0
        %4165 = vmatprep.subr.mxu0 0.0
        %4166 = vmatpush1.msra.mxu0 0.0
        %4167 = vmatprep.subr.mxu0 0.0
        %4168 = vmatpush1.msra.mxu0 0.0
        %4169 = vmatprep.subr.mxu0 0.0
        %4170 = vmatpush1.msra.mxu0 0.0
        %4171 = vmatprep.subr.mxu0 0.0
        %4172 = vmatpush1.msra.mxu0 0.0
        %4173 = vmatprep.mubr.f32.mxu0 0.0
        %4174 = vmatmul.mubr.f32.gmra.mrb[0].mxu0 %v4104
        %v4175 = vpop.f32.mrb[0].mxu0
        %v4176 = vadd.f32 0.0, %v4175
        %v4177 = vpop.f32.mrb[0].mxu0
        %4178 = vdwg.mxu0
        %v4179 = vadd.f32 %v4004, %v4176
        %s4180 = scalar_lea.vmem %s3, 792
        %v4181 = vld [vmem:[%s4180] sm:$0xff]
        %v4182 = vld [vmem:[%s4180 + $0x8] sm:$0xff]
        %v4183 = vld [vmem:[%s4180 + $0x10] sm:$0xff]
        %v4184 = vld [vmem:[%s4180 + $0x18] sm:$0xff]
        %v4185 = vld [vmem:[%s4180 + $0x20] sm:$0xff]
        %v4186 = vld [vmem:[%s4180 + $0x28] sm:$0xff]
        %v4187 = vld [vmem:[%s4180 + $0x30] sm:$0xff]
        %v4188 = vld [vmem:[%s4180 + $0x38] sm:$0xff]
        %v4189 = vld [vmem:[%s4180 + $0x40] sm:$0xff]
        %v4190 = vld [vmem:[%s4180 + $0x48] sm:$0xff]
        %v4191 = vld [vmem:[%s4180 + $0x50] sm:$0xf]
        %v4193 = vsel %vm3433, %v4191, 0
        %4195 = vmatprep.subr.mxu0 0.0
        %4196 = vmatpush1.msra.mxu0 %v4181
        %4197 = vmatprep.subr.mxu0 0.0
        %4198 = vmatpush1.msra.mxu0 %v4182
        %4199 = vmatprep.subr.mxu0 0.0
        %4200 = vmatpush1.msra.mxu0 %v4183
        %4201 = vmatprep.subr.mxu0 0.0
        %4202 = vmatpush1.msra.mxu0 %v4184
        %4203 = vmatprep.subr.mxu0 0.0
        %4204 = vmatpush1.msra.mxu0 %v4185
        %4205 = vmatprep.subr.mxu0 0.0
        %4206 = vmatpush1.msra.mxu0 %v4186
        %4207 = vmatprep.subr.mxu0 0.0
        %4208 = vmatpush1.msra.mxu0 %v4187
        %4209 = vmatprep.subr.mxu0 0.0
        %4210 = vmatpush1.msra.mxu0 %v4188
        %4211 = vmatprep.subr.mxu0 0.0
        %4212 = vmatpush1.msra.mxu0 %v4189
        %4213 = vmatprep.subr.mxu0 0.0
        %4214 = vmatpush1.msra.mxu0 %v4190
        %4215 = vmatprep.subr.mxu0 0.0
        %4216 = vmatpush1.msra.mxu0 %v4193
        %4217 = vmatprep.subr.mxu0 0.0
        %4218 = vmatpush1.msra.mxu0 0.0
        %4219 = vmatprep.subr.mxu0 0.0
        %4220 = vmatpush1.msra.mxu0 0.0
        %4221 = vmatprep.subr.mxu0 0.0
        %4222 = vmatpush1.msra.mxu0 0.0
        %4223 = vmatprep.subr.mxu0 0.0
        %4224 = vmatpush1.msra.mxu0 0.0
        %4225 = vmatprep.subr.mxu0 0.0
        %4226 = vmatpush1.msra.mxu0 0.0
        %4227 = vmatprep.subr.mxu0 0.0
        %4228 = vmatpush1.msra.mxu0 0.0
        %4229 = vmatprep.subr.mxu0 0.0
        %4230 = vmatpush1.msra.mxu0 0.0
        %4231 = vmatprep.subr.mxu0 0.0
        %4232 = vmatpush1.msra.mxu0 0.0
        %4233 = vmatprep.subr.mxu0 0.0
        %4234 = vmatpush1.msra.mxu0 0.0
        %4235 = vmatprep.subr.mxu0 0.0
        %4236 = vmatpush1.msra.mxu0 0.0
        %4237 = vmatprep.subr.mxu0 0.0
        %4238 = vmatpush1.msra.mxu0 0.0
        %4239 = vmatprep.subr.mxu0 0.0
        %4240 = vmatpush1.msra.mxu0 0.0
        %4241 = vmatprep.subr.mxu0 0.0
        %4242 = vmatpush1.msra.mxu0 0.0
        %4243 = vmatprep.subr.mxu0 0.0
        %4244 = vmatpush1.msra.mxu0 0.0
        %4245 = vmatprep.subr.mxu0 0.0
        %4246 = vmatpush1.msra.mxu0 0.0
        %4247 = vmatprep.subr.mxu0 0.0
        %4248 = vmatpush1.msra.mxu0 0.0
        %4249 = vmatprep.subr.mxu0 0.0
        %4250 = vmatpush1.msra.mxu0 0.0
        %4251 = vmatprep.subr.mxu0 0.0
        %4252 = vmatpush1.msra.mxu0 0.0
        %4253 = vmatprep.subr.mxu0 0.0
        %4254 = vmatpush1.msra.mxu0 0.0
        %4255 = vmatprep.subr.mxu0 0.0
        %4256 = vmatpush1.msra.mxu0 0.0
        %4257 = vmatprep.subr.mxu0 0.0
        %4258 = vmatpush1.msra.mxu0 0.0
        %4259 = vmatprep.mubr.f32.mxu0 0.0
        %4260 = vmatmul.mubr.f32.gmra.mrb[0].mxu0 %v4104
        %v4261 = vpop.f32.mrb[0].mxu0
        %v4262 = vadd.f32 0.0, %v4261
        %v4263 = vpop.f32.mrb[0].mxu0
        %4264 = vdwg.mxu0
        %v4265 = vadd.f32 %v4090, %v4262
        %v4266 = vmax.f32 %v4179, %v4265
        %v4267 = vld [vmem:[%s4] sm:$0x1]
        %v4269 = vlaneseq
        %v4270 = vshrl.u32 %v4269, 7
        %v4271 = vsub.s32 0, %v4270
        %v4272 = vrot.slane %v4267, %v4271
        %v4274 = vadd.f32 %v4266, %v4272
        %v4275 = vmax.f32 %v4274, 0.0
        %4276 = vmatprep.subr.mxu0 0.0
        %4277 = vmatpush1.msra.mxu0 %v3418
        %4278 = vmatprep.subr.mxu0 0.0
        %4279 = vmatpush1.msra.mxu0 %v3419
        %4280 = vmatprep.subr.mxu0 0.0
        %4281 = vmatpush1.msra.mxu0 %v3420
        %4282 = vmatprep.subr.mxu0 0.0
        %4283 = vmatpush1.msra.mxu0 %v3421
        %4284 = vmatprep.subr.mxu0 0.0
        %4285 = vmatpush1.msra.mxu0 %v3422
        %4286 = vmatprep.subr.mxu0 0.0
        %4287 = vmatpush1.msra.mxu0 %v3423
        %4288 = vmatprep.subr.mxu0 0.0
        %4289 = vmatpush1.msra.mxu0 %v3424
        %4290 = vmatprep.subr.mxu0 0.0
        %4291 = vmatpush1.msra.mxu0 %v3425
        %4292 = vmatprep.subr.mxu0 0.0
        %4293 = vmatpush1.msra.mxu0 %v3426
        %4294 = vmatprep.subr.mxu0 0.0
        %4295 = vmatpush1.msra.mxu0 %v3427
        %4296 = vmatprep.subr.mxu0 0.0
        %4297 = vmatpush1.msra.mxu0 %v3435
        %4298 = vmatprep.subr.mxu0 0.0
        %4299 = vmatpush1.msra.mxu0 0.0
        %4300 = vmatprep.subr.mxu0 0.0
        %4301 = vmatpush1.msra.mxu0 0.0
        %4302 = vmatprep.subr.mxu0 0.0
        %4303 = vmatpush1.msra.mxu0 0.0
        %4304 = vmatprep.subr.mxu0 0.0
        %4305 = vmatpush1.msra.mxu0 0.0
        %4306 = vmatprep.subr.mxu0 0.0
        %4307 = vmatpush1.msra.mxu0 0.0
        %4308 = vmatprep.subr.mxu0 0.0
        %4309 = vmatpush1.msra.mxu0 0.0
        %4310 = vmatprep.subr.mxu0 0.0
        %4311 = vmatpush1.msra.mxu0 0.0
        %4312 = vmatprep.subr.mxu0 0.0
        %4313 = vmatpush1.msra.mxu0 0.0
        %4314 = vmatprep.subr.mxu0 0.0
        %4315 = vmatpush1.msra.mxu0 0.0
        %4316 = vmatprep.subr.mxu0 0.0
        %4317 = vmatpush1.msra.mxu0 0.0
        %4318 = vmatprep.subr.mxu0 0.0
        %4319 = vmatpush1.msra.mxu0 0.0
        %4320 = vmatprep.subr.mxu0 0.0
        %4321 = vmatpush1.msra.mxu0 0.0
        %4322 = vmatprep.subr.mxu0 0.0
        %4323 = vmatpush1.msra.mxu0 0.0
        %4324 = vmatprep.subr.mxu0 0.0
        %4325 = vmatpush1.msra.mxu0 0.0
        %4326 = vmatprep.subr.mxu0 0.0
        %4327 = vmatpush1.msra.mxu0 0.0
        %4328 = vmatprep.subr.mxu0 0.0
        %4329 = vmatpush1.msra.mxu0 0.0
        %4330 = vmatprep.subr.mxu0 0.0
        %4331 = vmatpush1.msra.mxu0 0.0
        %4332 = vmatprep.subr.mxu0 0.0
        %4333 = vmatpush1.msra.mxu0 0.0
        %4334 = vmatprep.subr.mxu0 0.0
        %4335 = vmatpush1.msra.mxu0 0.0
        %4336 = vmatprep.subr.mxu0 0.0
        %4337 = vmatpush1.msra.mxu0 0.0
        %4338 = vmatprep.subr.mxu0 0.0
        %4339 = vmatpush1.msra.mxu0 0.0
        %4340 = vmatprep.mubr.f32.mxu0 0.0
        %4341 = vmatmul.mubr.f32.gmra.mrb[0].mxu0 %v3754
        %v4342 = vpop.f32.mrb[0].mxu0
        %v4343 = vadd.f32 0.0, %v4342
        %v4344 = vpop.f32.mrb[0].mxu0
        %4345 = vdwg.mxu0
        %4346 = vmatprep.subr.mxu0 0.0
        %4347 = vmatpush1.msra.mxu0 %v3394
        %4348 = vmatprep.subr.mxu0 0.0
        %4349 = vmatpush1.msra.mxu0 %v3395
        %4350 = vmatprep.subr.mxu0 0.0
        %4351 = vmatpush1.msra.mxu0 %v3396
        %4352 = vmatprep.subr.mxu0 0.0
        %4353 = vmatpush1.msra.mxu0 %v3397
        %4354 = vmatprep.subr.mxu0 0.0
        %4355 = vmatpush1.msra.mxu0 %v3398
        %4356 = vmatprep.subr.mxu0 0.0
        %4357 = vmatpush1.msra.mxu0 %v3399
        %4358 = vmatprep.subr.mxu0 0.0
        %4359 = vmatpush1.msra.mxu0 %v3400
        %4360 = vmatprep.subr.mxu0 0.0
        %4361 = vmatpush1.msra.mxu0 %v3401
        %4362 = vmatprep.subr.mxu0 0.0
        %4363 = vmatpush1.msra.mxu0 %v3402
        %4364 = vmatprep.subr.mxu0 0.0
        %4365 = vmatpush1.msra.mxu0 %v3403
        %4366 = vmatprep.subr.mxu0 0.0
        %4367 = vmatpush1.msra.mxu0 %v3511
        %4368 = vmatprep.subr.mxu0 0.0
        %4369 = vmatpush1.msra.mxu0 0.0
        %4370 = vmatprep.subr.mxu0 0.0
        %4371 = vmatpush1.msra.mxu0 0.0
        %4372 = vmatprep.subr.mxu0 0.0
        %4373 = vmatpush1.msra.mxu0 0.0
        %4374 = vmatprep.subr.mxu0 0.0
        %4375 = vmatpush1.msra.mxu0 0.0
        %4376 = vmatprep.subr.mxu0 0.0
        %4377 = vmatpush1.msra.mxu0 0.0
        %4378 = vmatprep.subr.mxu0 0.0
        %4379 = vmatpush1.msra.mxu0 0.0
        %4380 = vmatprep.subr.mxu0 0.0
        %4381 = vmatpush1.msra.mxu0 0.0
        %4382 = vmatprep.subr.mxu0 0.0
        %4383 = vmatpush1.msra.mxu0 0.0
        %4384 = vmatprep.subr.mxu0 0.0
        %4385 = vmatpush1.msra.mxu0 0.0
        %4386 = vmatprep.subr.mxu0 0.0
        %4387 = vmatpush1.msra.mxu0 0.0
        %4388 = vmatprep.subr.mxu0 0.0
        %4389 = vmatpush1.msra.mxu0 0.0
        %4390 = vmatprep.subr.mxu0 0.0
        %4391 = vmatpush1.msra.mxu0 0.0
        %4392 = vmatprep.subr.mxu0 0.0
        %4393 = vmatpush1.msra.mxu0 0.0
        %4394 = vmatprep.subr.mxu0 0.0
        %4395 = vmatpush1.msra.mxu0 0.0
        %4396 = vmatprep.subr.mxu0 0.0
        %4397 = vmatpush1.msra.mxu0 0.0
        %4398 = vmatprep.subr.mxu0 0.0
        %4399 = vmatpush1.msra.mxu0 0.0
        %4400 = vmatprep.subr.mxu0 0.0
        %4401 = vmatpush1.msra.mxu0 0.0
        %4402 = vmatprep.subr.mxu0 0.0
        %4403 = vmatpush1.msra.mxu0 0.0
        %4404 = vmatprep.subr.mxu0 0.0
        %4405 = vmatpush1.msra.mxu0 0.0
        %4406 = vmatprep.subr.mxu0 0.0
        %4407 = vmatpush1.msra.mxu0 0.0
        %4408 = vmatprep.subr.mxu0 0.0
        %4409 = vmatpush1.msra.mxu0 0.0
        %4410 = vmatprep.mubr.f32.mxu0 0.0
        %4411 = vmatmul.mubr.f32.gmra.mrb[0].mxu0 %v3431
        %v4412 = vpop.f32.mrb[0].mxu0
        %v4413 = vadd.f32 %v4343, %v4412
        %v4414 = vpop.f32.mrb[0].mxu0
        %4415 = vdwg.mxu0
        %4416 = vmatprep.subr.mxu0 0.0
        %4417 = vmatpush1.msra.mxu0 %v3584
        %4418 = vmatprep.subr.mxu0 0.0
        %4419 = vmatpush1.msra.mxu0 %v3585
        %4420 = vmatprep.subr.mxu0 0.0
        %4421 = vmatpush1.msra.mxu0 %v3586
        %4422 = vmatprep.subr.mxu0 0.0
        %4423 = vmatpush1.msra.mxu0 %v3587
        %4424 = vmatprep.subr.mxu0 0.0
        %4425 = vmatpush1.msra.mxu0 %v3588
        %4426 = vmatprep.subr.mxu0 0.0
        %4427 = vmatpush1.msra.mxu0 %v3589
        %4428 = vmatprep.subr.mxu0 0.0
        %4429 = vmatpush1.msra.mxu0 %v3590
        %4430 = vmatprep.subr.mxu0 0.0
        %4431 = vmatpush1.msra.mxu0 %v3591
        %4432 = vmatprep.subr.mxu0 0.0
        %4433 = vmatpush1.msra.mxu0 %v3592
        %4434 = vmatprep.subr.mxu0 0.0
        %4435 = vmatpush1.msra.mxu0 %v3593
        %4436 = vmatprep.subr.mxu0 0.0
        %4437 = vmatpush1.msra.mxu0 %v3596
        %4438 = vmatprep.subr.mxu0 0.0
        %4439 = vmatpush1.msra.mxu0 0.0
        %4440 = vmatprep.subr.mxu0 0.0
        %4441 = vmatpush1.msra.mxu0 0.0
        %4442 = vmatprep.subr.mxu0 0.0
        %4443 = vmatpush1.msra.mxu0 0.0
        %4444 = vmatprep.subr.mxu0 0.0
        %4445 = vmatpush1.msra.mxu0 0.0
        %4446 = vmatprep.subr.mxu0 0.0
        %4447 = vmatpush1.msra.mxu0 0.0
        %4448 = vmatprep.subr.mxu0 0.0
        %4449 = vmatpush1.msra.mxu0 0.0
        %4450 = vmatprep.subr.mxu0 0.0
        %4451 = vmatpush1.msra.mxu0 0.0
        %4452 = vmatprep.subr.mxu0 0.0
        %4453 = vmatpush1.msra.mxu0 0.0
        %4454 = vmatprep.subr.mxu0 0.0
        %4455 = vmatpush1.msra.mxu0 0.0
        %4456 = vmatprep.subr.mxu0 0.0
        %4457 = vmatpush1.msra.mxu0 0.0
        %4458 = vmatprep.subr.mxu0 0.0
        %4459 = vmatpush1.msra.mxu0 0.0
        %4460 = vmatprep.subr.mxu0 0.0
        %4461 = vmatpush1.msra.mxu0 0.0
        %4462 = vmatprep.subr.mxu0 0.0
        %4463 = vmatpush1.msra.mxu0 0.0
        %4464 = vmatprep.subr.mxu0 0.0
        %4465 = vmatpush1.msra.mxu0 0.0
        %4466 = vmatprep.subr.mxu0 0.0
        %4467 = vmatpush1.msra.mxu0 0.0
        %4468 = vmatprep.subr.mxu0 0.0
        %4469 = vmatpush1.msra.mxu0 0.0
        %4470 = vmatprep.subr.mxu0 0.0
        %4471 = vmatpush1.msra.mxu0 0.0
        %4472 = vmatprep.subr.mxu0 0.0
        %4473 = vmatpush1.msra.mxu0 0.0
        %4474 = vmatprep.subr.mxu0 0.0
        %4475 = vmatpush1.msra.mxu0 0.0
        %4476 = vmatprep.subr.mxu0 0.0
        %4477 = vmatpush1.msra.mxu0 0.0
        %4478 = vmatprep.subr.mxu0 0.0
        %4479 = vmatpush1.msra.mxu0 0.0
        %4480 = vmatprep.mubr.f32.mxu0 0.0
        %4481 = vmatmul.mubr.f32.gmra.mrb[0].mxu0 %v3754
        %v4482 = vpop.f32.mrb[0].mxu0
        %v4483 = vadd.f32 0.0, %v4482
        %v4484 = vpop.f32.mrb[0].mxu0
        %4485 = vdwg.mxu0
        %4486 = vmatprep.subr.mxu0 0.0
        %4487 = vmatpush1.msra.mxu0 %v3406
        %4488 = vmatprep.subr.mxu0 0.0
        %4489 = vmatpush1.msra.mxu0 %v3407
        %4490 = vmatprep.subr.mxu0 0.0
        %4491 = vmatpush1.msra.mxu0 %v3408
        %4492 = vmatprep.subr.mxu0 0.0
        %4493 = vmatpush1.msra.mxu0 %v3409
        %4494 = vmatprep.subr.mxu0 0.0
        %4495 = vmatpush1.msra.mxu0 %v3410
        %4496 = vmatprep.subr.mxu0 0.0
        %4497 = vmatpush1.msra.mxu0 %v3411
        %4498 = vmatprep.subr.mxu0 0.0
        %4499 = vmatpush1.msra.mxu0 %v3412
        %4500 = vmatprep.subr.mxu0 0.0
        %4501 = vmatpush1.msra.mxu0 %v3413
        %4502 = vmatprep.subr.mxu0 0.0
        %4503 = vmatpush1.msra.mxu0 %v3414
        %4504 = vmatprep.subr.mxu0 0.0
        %4505 = vmatpush1.msra.mxu0 %v3415
        %4506 = vmatprep.subr.mxu0 0.0
        %4507 = vmatpush1.msra.mxu0 %v3669
        %4508 = vmatprep.subr.mxu0 0.0
        %4509 = vmatpush1.msra.mxu0 0.0
        %4510 = vmatprep.subr.mxu0 0.0
        %4511 = vmatpush1.msra.mxu0 0.0
        %4512 = vmatprep.subr.mxu0 0.0
        %4513 = vmatpush1.msra.mxu0 0.0
        %4514 = vmatprep.subr.mxu0 0.0
        %4515 = vmatpush1.msra.mxu0 0.0
        %4516 = vmatprep.subr.mxu0 0.0
        %4517 = vmatpush1.msra.mxu0 0.0
        %4518 = vmatprep.subr.mxu0 0.0
        %4519 = vmatpush1.msra.mxu0 0.0
        %4520 = vmatprep.subr.mxu0 0.0
        %4521 = vmatpush1.msra.mxu0 0.0
        %4522 = vmatprep.subr.mxu0 0.0
        %4523 = vmatpush1.msra.mxu0 0.0
        %4524 = vmatprep.subr.mxu0 0.0
        %4525 = vmatpush1.msra.mxu0 0.0
        %4526 = vmatprep.subr.mxu0 0.0
        %4527 = vmatpush1.msra.mxu0 0.0
        %4528 = vmatprep.subr.mxu0 0.0
        %4529 = vmatpush1.msra.mxu0 0.0
        %4530 = vmatprep.subr.mxu0 0.0
        %4531 = vmatpush1.msra.mxu0 0.0
        %4532 = vmatprep.subr.mxu0 0.0
        %4533 = vmatpush1.msra.mxu0 0.0
        %4534 = vmatprep.subr.mxu0 0.0
        %4535 = vmatpush1.msra.mxu0 0.0
        %4536 = vmatprep.subr.mxu0 0.0
        %4537 = vmatpush1.msra.mxu0 0.0
        %4538 = vmatprep.subr.mxu0 0.0
        %4539 = vmatpush1.msra.mxu0 0.0
        %4540 = vmatprep.subr.mxu0 0.0
        %4541 = vmatpush1.msra.mxu0 0.0
        %4542 = vmatprep.subr.mxu0 0.0
        %4543 = vmatpush1.msra.mxu0 0.0
        %4544 = vmatprep.subr.mxu0 0.0
        %4545 = vmatpush1.msra.mxu0 0.0
        %4546 = vmatprep.subr.mxu0 0.0
        %4547 = vmatpush1.msra.mxu0 0.0
        %4548 = vmatprep.subr.mxu0 0.0
        %4549 = vmatpush1.msra.mxu0 0.0
        %4550 = vmatprep.mubr.f32.mxu0 0.0
        %4551 = vmatmul.mubr.f32.gmra.mrb[0].mxu0 %v3431
        %v4552 = vpop.f32.mrb[0].mxu0
        %v4553 = vadd.f32 %v4483, %v4552
        %v4554 = vpop.f32.mrb[0].mxu0
        %4555 = vdwg.mxu0
        %4556 = vmatprep.subr.mxu0 0.0
        %4557 = vmatpush1.msra.mxu0 %v3742
        %4558 = vmatprep.subr.mxu0 0.0
        %4559 = vmatpush1.msra.mxu0 %v3743
        %4560 = vmatprep.subr.mxu0 0.0
        %4561 = vmatpush1.msra.mxu0 %v3744
        %4562 = vmatprep.subr.mxu0 0.0
        %4563 = vmatpush1.msra.mxu0 %v3745
        %4564 = vmatprep.subr.mxu0 0.0
        %4565 = vmatpush1.msra.mxu0 %v3746
        %4566 = vmatprep.subr.mxu0 0.0
        %4567 = vmatpush1.msra.mxu0 %v3747
        %4568 = vmatprep.subr.mxu0 0.0
        %4569 = vmatpush1.msra.mxu0 %v3748
        %4570 = vmatprep.subr.mxu0 0.0
        %4571 = vmatpush1.msra.mxu0 %v3749
        %4572 = vmatprep.subr.mxu0 0.0
        %4573 = vmatpush1.msra.mxu0 %v3750
        %4574 = vmatprep.subr.mxu0 0.0
        %4575 = vmatpush1.msra.mxu0 %v3751
        %4576 = vmatprep.subr.mxu0 0.0
        %4577 = vmatpush1.msra.mxu0 %v3757
        %4578 = vmatprep.subr.mxu0 0.0
        %4579 = vmatpush1.msra.mxu0 0.0
        %4580 = vmatprep.subr.mxu0 0.0
        %4581 = vmatpush1.msra.mxu0 0.0
        %4582 = vmatprep.subr.mxu0 0.0
        %4583 = vmatpush1.msra.mxu0 0.0
        %4584 = vmatprep.subr.mxu0 0.0
        %4585 = vmatpush1.msra.mxu0 0.0
        %4586 = vmatprep.subr.mxu0 0.0
        %4587 = vmatpush1.msra.mxu0 0.0
        %4588 = vmatprep.subr.mxu0 0.0
        %4589 = vmatpush1.msra.mxu0 0.0
        %4590 = vmatprep.subr.mxu0 0.0
        %4591 = vmatpush1.msra.mxu0 0.0
        %4592 = vmatprep.subr.mxu0 0.0
        %4593 = vmatpush1.msra.mxu0 0.0
        %4594 = vmatprep.subr.mxu0 0.0
        %4595 = vmatpush1.msra.mxu0 0.0
        %4596 = vmatprep.subr.mxu0 0.0
        %4597 = vmatpush1.msra.mxu0 0.0
        %4598 = vmatprep.subr.mxu0 0.0
        %4599 = vmatpush1.msra.mxu0 0.0
        %4600 = vmatprep.subr.mxu0 0.0
        %4601 = vmatpush1.msra.mxu0 0.0
        %4602 = vmatprep.subr.mxu0 0.0
        %4603 = vmatpush1.msra.mxu0 0.0
        %4604 = vmatprep.subr.mxu0 0.0
        %4605 = vmatpush1.msra.mxu0 0.0
        %4606 = vmatprep.subr.mxu0 0.0
        %4607 = vmatpush1.msra.mxu0 0.0
        %4608 = vmatprep.subr.mxu0 0.0
        %4609 = vmatpush1.msra.mxu0 0.0
        %4610 = vmatprep.subr.mxu0 0.0
        %4611 = vmatpush1.msra.mxu0 0.0
        %4612 = vmatprep.subr.mxu0 0.0
        %4613 = vmatpush1.msra.mxu0 0.0
        %4614 = vmatprep.subr.mxu0 0.0
        %4615 = vmatpush1.msra.mxu0 0.0
        %4616 = vmatprep.subr.mxu0 0.0
        %4617 = vmatpush1.msra.mxu0 0.0
        %4618 = vmatprep.subr.mxu0 0.0
        %4619 = vmatpush1.msra.mxu0 0.0
        %4620 = vmatprep.mubr.f32.mxu0 0.0
        %4621 = vmatmul.mubr.f32.gmra.mrb[0].mxu0 %v3929
        %v4622 = vpop.f32.mrb[0].mxu0
        %v4623 = vadd.f32 0.0, %v4622
        %v4624 = vpop.f32.mrb[0].mxu0
        %4625 = vdwg.mxu0
        %v4626 = vadd.f32 %v4413, %v4623
        %4627 = vmatprep.subr.mxu0 0.0
        %4628 = vmatpush1.msra.mxu0 %v3831
        %4629 = vmatprep.subr.mxu0 0.0
        %4630 = vmatpush1.msra.mxu0 %v3832
        %4631 = vmatprep.subr.mxu0 0.0
        %4632 = vmatpush1.msra.mxu0 %v3833
        %4633 = vmatprep.subr.mxu0 0.0
        %4634 = vmatpush1.msra.mxu0 %v3834
        %4635 = vmatprep.subr.mxu0 0.0
        %4636 = vmatpush1.msra.mxu0 %v3835
        %4637 = vmatprep.subr.mxu0 0.0
        %4638 = vmatpush1.msra.mxu0 %v3836
        %4639 = vmatprep.subr.mxu0 0.0
        %4640 = vmatpush1.msra.mxu0 %v3837
        %4641 = vmatprep.subr.mxu0 0.0
        %4642 = vmatpush1.msra.mxu0 %v3838
        %4643 = vmatprep.subr.mxu0 0.0
        %4644 = vmatpush1.msra.mxu0 %v3839
        %4645 = vmatprep.subr.mxu0 0.0
        %4646 = vmatpush1.msra.mxu0 %v3840
        %4647 = vmatprep.subr.mxu0 0.0
        %4648 = vmatpush1.msra.mxu0 %v3843
        %4649 = vmatprep.subr.mxu0 0.0
        %4650 = vmatpush1.msra.mxu0 0.0
        %4651 = vmatprep.subr.mxu0 0.0
        %4652 = vmatpush1.msra.mxu0 0.0
        %4653 = vmatprep.subr.mxu0 0.0
        %4654 = vmatpush1.msra.mxu0 0.0
        %4655 = vmatprep.subr.mxu0 0.0
        %4656 = vmatpush1.msra.mxu0 0.0
        %4657 = vmatprep.subr.mxu0 0.0
        %4658 = vmatpush1.msra.mxu0 0.0
        %4659 = vmatprep.subr.mxu0 0.0
        %4660 = vmatpush1.msra.mxu0 0.0
        %4661 = vmatprep.subr.mxu0 0.0
        %4662 = vmatpush1.msra.mxu0 0.0
        %4663 = vmatprep.subr.mxu0 0.0
        %4664 = vmatpush1.msra.mxu0 0.0
        %4665 = vmatprep.subr.mxu0 0.0
        %4666 = vmatpush1.msra.mxu0 0.0
        %4667 = vmatprep.subr.mxu0 0.0
        %4668 = vmatpush1.msra.mxu0 0.0
        %4669 = vmatprep.subr.mxu0 0.0
        %4670 = vmatpush1.msra.mxu0 0.0
        %4671 = vmatprep.subr.mxu0 0.0
        %4672 = vmatpush1.msra.mxu0 0.0
        %4673 = vmatprep.subr.mxu0 0.0
        %4674 = vmatpush1.msra.mxu0 0.0
        %4675 = vmatprep.subr.mxu0 0.0
        %4676 = vmatpush1.msra.mxu0 0.0
        %4677 = vmatprep.subr.mxu0 0.0
        %4678 = vmatpush1.msra.mxu0 0.0
        %4679 = vmatprep.subr.mxu0 0.0
        %4680 = vmatpush1.msra.mxu0 0.0
        %4681 = vmatprep.subr.mxu0 0.0
        %4682 = vmatpush1.msra.mxu0 0.0
        %4683 = vmatprep.subr.mxu0 0.0
        %4684 = vmatpush1.msra.mxu0 0.0
        %4685 = vmatprep.subr.mxu0 0.0
        %4686 = vmatpush1.msra.mxu0 0.0
        %4687 = vmatprep.subr.mxu0 0.0
        %4688 = vmatpush1.msra.mxu0 0.0
        %4689 = vmatprep.subr.mxu0 0.0
        %4690 = vmatpush1.msra.mxu0 0.0
        %4691 = vmatprep.mubr.f32.mxu0 0.0
        %4692 = vmatmul.mubr.f32.gmra.mrb[0].mxu0 %v3929
        %v4693 = vpop.f32.mrb[0].mxu0
        %v4694 = vadd.f32 0.0, %v4693
        %v4695 = vpop.f32.mrb[0].mxu0
        %4696 = vdwg.mxu0
        %v4697 = vadd.f32 %v4553, %v4694
        %4698 = vmatprep.subr.mxu0 0.0
        %4699 = vmatpush1.msra.mxu0 %v3917
        %4700 = vmatprep.subr.mxu0 0.0
        %4701 = vmatpush1.msra.mxu0 %v3918
        %4702 = vmatprep.subr.mxu0 0.0
        %4703 = vmatpush1.msra.mxu0 %v3919
        %4704 = vmatprep.subr.mxu0 0.0
        %4705 = vmatpush1.msra.mxu0 %v3920
        %4706 = vmatprep.subr.mxu0 0.0
        %4707 = vmatpush1.msra.mxu0 %v3921
        %4708 = vmatprep.subr.mxu0 0.0
        %4709 = vmatpush1.msra.mxu0 %v3922
        %4710 = vmatprep.subr.mxu0 0.0
        %4711 = vmatpush1.msra.mxu0 %v3923
        %4712 = vmatprep.subr.mxu0 0.0
        %4713 = vmatpush1.msra.mxu0 %v3924
        %4714 = vmatprep.subr.mxu0 0.0
        %4715 = vmatpush1.msra.mxu0 %v3925
        %4716 = vmatprep.subr.mxu0 0.0
        %4717 = vmatpush1.msra.mxu0 %v3926
        %4718 = vmatprep.subr.mxu0 0.0
        %4719 = vmatpush1.msra.mxu0 %v3932
        %4720 = vmatprep.subr.mxu0 0.0
        %4721 = vmatpush1.msra.mxu0 0.0
        %4722 = vmatprep.subr.mxu0 0.0
        %4723 = vmatpush1.msra.mxu0 0.0
        %4724 = vmatprep.subr.mxu0 0.0
        %4725 = vmatpush1.msra.mxu0 0.0
        %4726 = vmatprep.subr.mxu0 0.0
        %4727 = vmatpush1.msra.mxu0 0.0
        %4728 = vmatprep.subr.mxu0 0.0
        %4729 = vmatpush1.msra.mxu0 0.0
        %4730 = vmatprep.subr.mxu0 0.0
        %4731 = vmatpush1.msra.mxu0 0.0
        %4732 = vmatprep.subr.mxu0 0.0
        %4733 = vmatpush1.msra.mxu0 0.0
        %4734 = vmatprep.subr.mxu0 0.0
        %4735 = vmatpush1.msra.mxu0 0.0
        %4736 = vmatprep.subr.mxu0 0.0
        %4737 = vmatpush1.msra.mxu0 0.0
        %4738 = vmatprep.subr.mxu0 0.0
        %4739 = vmatpush1.msra.mxu0 0.0
        %4740 = vmatprep.subr.mxu0 0.0
        %4741 = vmatpush1.msra.mxu0 0.0
        %4742 = vmatprep.subr.mxu0 0.0
        %4743 = vmatpush1.msra.mxu0 0.0
        %4744 = vmatprep.subr.mxu0 0.0
        %4745 = vmatpush1.msra.mxu0 0.0
        %4746 = vmatprep.subr.mxu0 0.0
        %4747 = vmatpush1.msra.mxu0 0.0
        %4748 = vmatprep.subr.mxu0 0.0
        %4749 = vmatpush1.msra.mxu0 0.0
        %4750 = vmatprep.subr.mxu0 0.0
        %4751 = vmatpush1.msra.mxu0 0.0
        %4752 = vmatprep.subr.mxu0 0.0
        %4753 = vmatpush1.msra.mxu0 0.0
        %4754 = vmatprep.subr.mxu0 0.0
        %4755 = vmatpush1.msra.mxu0 0.0
        %4756 = vmatprep.subr.mxu0 0.0
        %4757 = vmatpush1.msra.mxu0 0.0
        %4758 = vmatprep.subr.mxu0 0.0
        %4759 = vmatpush1.msra.mxu0 0.0
        %4760 = vmatprep.subr.mxu0 0.0
        %4761 = vmatpush1.msra.mxu0 0.0
        %4762 = vmatprep.mubr.f32.mxu0 0.0
        %4763 = vmatmul.mubr.f32.gmra.mrb[0].mxu0 %v4104
        %v4764 = vpop.f32.mrb[0].mxu0
        %v4765 = vadd.f32 0.0, %v4764
        %v4766 = vpop.f32.mrb[0].mxu0
        %4767 = vdwg.mxu0
        %v4768 = vadd.f32 %v4626, %v4765
        %4769 = vmatprep.subr.mxu0 0.0
        %4770 = vmatpush1.msra.mxu0 %v4006
        %4771 = vmatprep.subr.mxu0 0.0
        %4772 = vmatpush1.msra.mxu0 %v4007
        %4773 = vmatprep.subr.mxu0 0.0
        %4774 = vmatpush1.msra.mxu0 %v4008
        %4775 = vmatprep.subr.mxu0 0.0
        %4776 = vmatpush1.msra.mxu0 %v4009
        %4777 = vmatprep.subr.mxu0 0.0
        %4778 = vmatpush1.msra.mxu0 %v4010
        %4779 = vmatprep.subr.mxu0 0.0
        %4780 = vmatpush1.msra.mxu0 %v4011
        %4781 = vmatprep.subr.mxu0 0.0
        %4782 = vmatpush1.msra.mxu0 %v4012
        %4783 = vmatprep.subr.mxu0 0.0
        %4784 = vmatpush1.msra.mxu0 %v4013
        %4785 = vmatprep.subr.mxu0 0.0
        %4786 = vmatpush1.msra.mxu0 %v4014
        %4787 = vmatprep.subr.mxu0 0.0
        %4788 = vmatpush1.msra.mxu0 %v4015
        %4789 = vmatprep.subr.mxu0 0.0
        %4790 = vmatpush1.msra.mxu0 %v4018
        %4791 = vmatprep.subr.mxu0 0.0
        %4792 = vmatpush1.msra.mxu0 0.0
        %4793 = vmatprep.subr.mxu0 0.0
        %4794 = vmatpush1.msra.mxu0 0.0
        %4795 = vmatprep.subr.mxu0 0.0
        %4796 = vmatpush1.msra.mxu0 0.0
        %4797 = vmatprep.subr.mxu0 0.0
        %4798 = vmatpush1.msra.mxu0 0.0
        %4799 = vmatprep.subr.mxu0 0.0
        %4800 = vmatpush1.msra.mxu0 0.0
        %4801 = vmatprep.subr.mxu0 0.0
        %4802 = vmatpush1.msra.mxu0 0.0
        %4803 = vmatprep.subr.mxu0 0.0
        %4804 = vmatpush1.msra.mxu0 0.0
        %4805 = vmatprep.subr.mxu0 0.0
        %4806 = vmatpush1.msra.mxu0 0.0
        %4807 = vmatprep.subr.mxu0 0.0
        %4808 = vmatpush1.msra.mxu0 0.0
        %4809 = vmatprep.subr.mxu0 0.0
        %4810 = vmatpush1.msra.mxu0 0.0
        %4811 = vmatprep.subr.mxu0 0.0
        %4812 = vmatpush1.msra.mxu0 0.0
        %4813 = vmatprep.subr.mxu0 0.0
        %4814 = vmatpush1.msra.mxu0 0.0
        %4815 = vmatprep.subr.mxu0 0.0
        %4816 = vmatpush1.msra.mxu0 0.0
        %4817 = vmatprep.subr.mxu0 0.0
        %4818 = vmatpush1.msra.mxu0 0.0
        %4819 = vmatprep.subr.mxu0 0.0
        %4820 = vmatpush1.msra.mxu0 0.0
        %4821 = vmatprep.subr.mxu0 0.0
        %4822 = vmatpush1.msra.mxu0 0.0
        %4823 = vmatprep.subr.mxu0 0.0
        %4824 = vmatpush1.msra.mxu0 0.0
        %4825 = vmatprep.subr.mxu0 0.0
        %4826 = vmatpush1.msra.mxu0 0.0
        %4827 = vmatprep.subr.mxu0 0.0
        %4828 = vmatpush1.msra.mxu0 0.0
        %4829 = vmatprep.subr.mxu0 0.0
        %4830 = vmatpush1.msra.mxu0 0.0
        %4831 = vmatprep.subr.mxu0 0.0
        %4832 = vmatpush1.msra.mxu0 0.0
        %4833 = vmatprep.mubr.f32.mxu0 0.0
        %4834 = vmatmul.mubr.f32.gmra.mrb[0].mxu0 %v4104
        %v4835 = vpop.f32.mrb[0].mxu0
        %v4836 = vadd.f32 0.0, %v4835
        %v4837 = vpop.f32.mrb[0].mxu0
        %4838 = vdwg.mxu0
        %v4839 = vadd.f32 %v4697, %v4836
        %v4840 = vrot.slane %v3393, 2
        %v4841 = vsel %vm3429, %v4840, 0
        %4843 = vmatprep.subr.mxu0 0.0
        %4844 = vmatpush1.msra.mxu0 %v4092
        %4845 = vmatprep.subr.mxu0 0.0
        %4846 = vmatpush1.msra.mxu0 %v4093
        %4847 = vmatprep.subr.mxu0 0.0
        %4848 = vmatpush1.msra.mxu0 %v4094
        %4849 = vmatprep.subr.mxu0 0.0
        %4850 = vmatpush1.msra.mxu0 %v4095
        %4851 = vmatprep.subr.mxu0 0.0
        %4852 = vmatpush1.msra.mxu0 %v4096
        %4853 = vmatprep.subr.mxu0 0.0
        %4854 = vmatpush1.msra.mxu0 %v4097
        %4855 = vmatprep.subr.mxu0 0.0
        %4856 = vmatpush1.msra.mxu0 %v4098
        %4857 = vmatprep.subr.mxu0 0.0
        %4858 = vmatpush1.msra.mxu0 %v4099
        %4859 = vmatprep.subr.mxu0 0.0
        %4860 = vmatpush1.msra.mxu0 %v4100
        %4861 = vmatprep.subr.mxu0 0.0
        %4862 = vmatpush1.msra.mxu0 %v4101
        %4863 = vmatprep.subr.mxu0 0.0
        %4864 = vmatpush1.msra.mxu0 %v4107
        %4865 = vmatprep.subr.mxu0 0.0
        %4866 = vmatpush1.msra.mxu0 0.0
        %4867 = vmatprep.subr.mxu0 0.0
        %4868 = vmatpush1.msra.mxu0 0.0
        %4869 = vmatprep.subr.mxu0 0.0
        %4870 = vmatpush1.msra.mxu0 0.0
        %4871 = vmatprep.subr.mxu0 0.0
        %4872 = vmatpush1.msra.mxu0 0.0
        %4873 = vmatprep.subr.mxu0 0.0
        %4874 = vmatpush1.msra.mxu0 0.0
        %4875 = vmatprep.subr.mxu0 0.0
        %4876 = vmatpush1.msra.mxu0 0.0
        %4877 = vmatprep.subr.mxu0 0.0
        %4878 = vmatpush1.msra.mxu0 0.0
        %4879 = vmatprep.subr.mxu0 0.0
        %4880 = vmatpush1.msra.mxu0 0.0
        %4881 = vmatprep.subr.mxu0 0.0
        %4882 = vmatpush1.msra.mxu0 0.0
        %4883 = vmatprep.subr.mxu0 0.0
        %4884 = vmatpush1.msra.mxu0 0.0
        %4885 = vmatprep.subr.mxu0 0.0
        %4886 = vmatpush1.msra.mxu0 0.0
        %4887 = vmatprep.subr.mxu0 0.0
        %4888 = vmatpush1.msra.mxu0 0.0
        %4889 = vmatprep.subr.mxu0 0.0
        %4890 = vmatpush1.msra.mxu0 0.0
        %4891 = vmatprep.subr.mxu0 0.0
        %4892 = vmatpush1.msra.mxu0 0.0
        %4893 = vmatprep.subr.mxu0 0.0
        %4894 = vmatpush1.msra.mxu0 0.0
        %4895 = vmatprep.subr.mxu0 0.0
        %4896 = vmatpush1.msra.mxu0 0.0
        %4897 = vmatprep.subr.mxu0 0.0
        %4898 = vmatpush1.msra.mxu0 0.0
        %4899 = vmatprep.subr.mxu0 0.0
        %4900 = vmatpush1.msra.mxu0 0.0
        %4901 = vmatprep.subr.mxu0 0.0
        %4902 = vmatpush1.msra.mxu0 0.0
        %4903 = vmatprep.subr.mxu0 0.0
        %4904 = vmatpush1.msra.mxu0 0.0
        %4905 = vmatprep.subr.mxu0 0.0
        %4906 = vmatpush1.msra.mxu0 0.0
        %4907 = vmatprep.mubr.f32.mxu0 0.0
        %4908 = vmatmul.mubr.f32.gmra.mrb[0].mxu0 %v4841
        %v4909 = vpop.f32.mrb[0].mxu0
        %v4910 = vadd.f32 0.0, %v4909
        %v4911 = vpop.f32.mrb[0].mxu0
        %4912 = vdwg.mxu0
        %v4913 = vadd.f32 %v4768, %v4910
        %4914 = vmatprep.subr.mxu0 0.0
        %4915 = vmatpush1.msra.mxu0 %v4181
        %4916 = vmatprep.subr.mxu0 0.0
        %4917 = vmatpush1.msra.mxu0 %v4182
        %4918 = vmatprep.subr.mxu0 0.0
        %4919 = vmatpush1.msra.mxu0 %v4183
        %4920 = vmatprep.subr.mxu0 0.0
        %4921 = vmatpush1.msra.mxu0 %v4184
        %4922 = vmatprep.subr.mxu0 0.0
        %4923 = vmatpush1.msra.mxu0 %v4185
        %4924 = vmatprep.subr.mxu0 0.0
        %4925 = vmatpush1.msra.mxu0 %v4186
        %4926 = vmatprep.subr.mxu0 0.0
        %4927 = vmatpush1.msra.mxu0 %v4187
        %4928 = vmatprep.subr.mxu0 0.0
        %4929 = vmatpush1.msra.mxu0 %v4188
        %4930 = vmatprep.subr.mxu0 0.0
        %4931 = vmatpush1.msra.mxu0 %v4189
        %4932 = vmatprep.subr.mxu0 0.0
        %4933 = vmatpush1.msra.mxu0 %v4190
        %4934 = vmatprep.subr.mxu0 0.0
        %4935 = vmatpush1.msra.mxu0 %v4193
        %4936 = vmatprep.subr.mxu0 0.0
        %4937 = vmatpush1.msra.mxu0 0.0
        %4938 = vmatprep.subr.mxu0 0.0
        %4939 = vmatpush1.msra.mxu0 0.0
        %4940 = vmatprep.subr.mxu0 0.0
        %4941 = vmatpush1.msra.mxu0 0.0
        %4942 = vmatprep.subr.mxu0 0.0
        %4943 = vmatpush1.msra.mxu0 0.0
        %4944 = vmatprep.subr.mxu0 0.0
        %4945 = vmatpush1.msra.mxu0 0.0
        %4946 = vmatprep.subr.mxu0 0.0
        %4947 = vmatpush1.msra.mxu0 0.0
        %4948 = vmatprep.subr.mxu0 0.0
        %4949 = vmatpush1.msra.mxu0 0.0
        %4950 = vmatprep.subr.mxu0 0.0
        %4951 = vmatpush1.msra.mxu0 0.0
        %4952 = vmatprep.subr.mxu0 0.0
        %4953 = vmatpush1.msra.mxu0 0.0
        %4954 = vmatprep.subr.mxu0 0.0
        %4955 = vmatpush1.msra.mxu0 0.0
        %4956 = vmatprep.subr.mxu0 0.0
        %4957 = vmatpush1.msra.mxu0 0.0
        %4958 = vmatprep.subr.mxu0 0.0
        %4959 = vmatpush1.msra.mxu0 0.0
        %4960 = vmatprep.subr.mxu0 0.0
        %4961 = vmatpush1.msra.mxu0 0.0
        %4962 = vmatprep.subr.mxu0 0.0
        %4963 = vmatpush1.msra.mxu0 0.0
        %4964 = vmatprep.subr.mxu0 0.0
        %4965 = vmatpush1.msra.mxu0 0.0
        %4966 = vmatprep.subr.mxu0 0.0
        %4967 = vmatpush1.msra.mxu0 0.0
        %4968 = vmatprep.subr.mxu0 0.0
        %4969 = vmatpush1.msra.mxu0 0.0
        %4970 = vmatprep.subr.mxu0 0.0
        %4971 = vmatpush1.msra.mxu0 0.0
        %4972 = vmatprep.subr.mxu0 0.0
        %4973 = vmatpush1.msra.mxu0 0.0
        %4974 = vmatprep.subr.mxu0 0.0
        %4975 = vmatpush1.msra.mxu0 0.0
        %4976 = vmatprep.subr.mxu0 0.0
        %4977 = vmatpush1.msra.mxu0 0.0
        %4978 = vmatprep.mubr.f32.mxu0 0.0
        %4979 = vmatmul.mubr.f32.gmra.mrb[0].mxu0 %v4841
        %v4980 = vpop.f32.mrb[0].mxu0
        %v4981 = vadd.f32 0.0, %v4980
        %v4982 = vpop.f32.mrb[0].mxu0
        %4983 = vdwg.mxu0
        %v4984 = vadd.f32 %v4839, %v4981
        %v4985 = vmax.f32 %v4913, %v4984
        %v4986 = vadd.f32 %v4985, %v4272
        %v4987 = vmax.f32 %v4986, 0.0
        %v4988 = vmax.f32 %v4275, %v4987
        %v4989 = vld [vmem:[%s6] sm:$0x1]
        %v4990 = vld [vmem:[%s5] sm:$0xff]
        %v4991 = vld [vmem:[%s5 + $0x8] sm:$0xff]
        %v4992 = vld [vmem:[%s5 + $0x10] sm:$0xff]
        %v4993 = vld [vmem:[%s5 + $0x18] sm:$0xff]
        %v4994 = vld [vmem:[%s5 + $0x20] sm:$0xff]
        %v4995 = vld [vmem:[%s5 + $0x28] sm:$0xff]
        %v4996 = vld [vmem:[%s5 + $0x30] sm:$0xff]
        %v4997 = vld [vmem:[%s5 + $0x38] sm:$0xff]
        %v4998 = vld [vmem:[%s5 + $0x40] sm:$0xff]
        %v4999 = vld [vmem:[%s5 + $0x48] sm:$0xff]
        %vm5000 = vcmask 654336
        %v5002 = vsel %vm5000, %v4988, 0
        %5004 = vmatprep.subr.mxu0 0.0
        %5005 = vmatpush1.msra.mxu0 %v4990
        %5006 = vmatprep.subr.mxu0 0.0
        %5007 = vmatpush1.msra.mxu0 %v4991
        %5008 = vmatprep.subr.mxu0 0.0
        %5009 = vmatpush1.msra.mxu0 %v4992
        %5010 = vmatprep.subr.mxu0 0.0
        %5011 = vmatpush1.msra.mxu0 %v4993
        %5012 = vmatprep.subr.mxu0 0.0
        %5013 = vmatpush1.msra.mxu0 %v4994
        %5014 = vmatprep.subr.mxu0 0.0
        %5015 = vmatpush1.msra.mxu0 %v4995
        %5016 = vmatprep.subr.mxu0 0.0
        %5017 = vmatpush1.msra.mxu0 %v4996
        %5018 = vmatprep.subr.mxu0 0.0
        %5019 = vmatpush1.msra.mxu0 %v4997
        %5020 = vmatprep.subr.mxu0 0.0
        %5021 = vmatpush1.msra.mxu0 %v4998
        %5022 = vmatprep.subr.mxu0 0.0
        %5023 = vmatpush1.msra.mxu0 %v4999
        %5024 = vmatprep.subr.mxu0 0.0
        %5025 = vmatpush1.msra.mxu0 0.0
        %5026 = vmatprep.subr.mxu0 0.0
        %5027 = vmatpush1.msra.mxu0 0.0
        %5028 = vmatprep.subr.mxu0 0.0
        %5029 = vmatpush1.msra.mxu0 0.0
        %5030 = vmatprep.subr.mxu0 0.0
        %5031 = vmatpush1.msra.mxu0 0.0
        %5032 = vmatprep.subr.mxu0 0.0
        %5033 = vmatpush1.msra.mxu0 0.0
        %5034 = vmatprep.subr.mxu0 0.0
        %5035 = vmatpush1.msra.mxu0 0.0
        %5036 = vmatprep.subr.mxu0 0.0
        %5037 = vmatpush1.msra.mxu0 0.0
        %5038 = vmatprep.subr.mxu0 0.0
        %5039 = vmatpush1.msra.mxu0 0.0
        %5040 = vmatprep.subr.mxu0 0.0
        %5041 = vmatpush1.msra.mxu0 0.0
        %5042 = vmatprep.subr.mxu0 0.0
        %5043 = vmatpush1.msra.mxu0 0.0
        %5044 = vmatprep.subr.mxu0 0.0
        %5045 = vmatpush1.msra.mxu0 0.0
        %5046 = vmatprep.subr.mxu0 0.0
        %5047 = vmatpush1.msra.mxu0 0.0
        %5048 = vmatprep.subr.mxu0 0.0
        %5049 = vmatpush1.msra.mxu0 0.0
        %5050 = vmatprep.subr.mxu0 0.0
        %5051 = vmatpush1.msra.mxu0 0.0
        %5052 = vmatprep.subr.mxu0 0.0
        %5053 = vmatpush1.msra.mxu0 0.0
        %5054 = vmatprep.subr.mxu0 0.0
        %5055 = vmatpush1.msra.mxu0 0.0
        %5056 = vmatprep.subr.mxu0 0.0
        %5057 = vmatpush1.msra.mxu0 0.0
        %5058 = vmatprep.subr.mxu0 0.0
        %5059 = vmatpush1.msra.mxu0 0.0
        %5060 = vmatprep.subr.mxu0 0.0
        %5061 = vmatpush1.msra.mxu0 0.0
        %5062 = vmatprep.subr.mxu0 0.0
        %5063 = vmatpush1.msra.mxu0 0.0
        %5064 = vmatprep.subr.mxu0 0.0
        %5065 = vmatpush1.msra.mxu0 0.0
        %5066 = vmatprep.subr.mxu0 0.0
        %5067 = vmatpush1.msra.mxu0 0.0
        %5068 = vmatprep.mubr.f32.mxu0 0.0
        %5069 = vmatmul.mubr.f32.gmra.mrb[0].mxu0 %v5002
        %v5070 = vpop.f32.mrb[0].mxu0
        %v5071 = vadd.f32 0.0, %v5070
        %v5072 = vpop.f32.mrb[0].mxu0
        %5073 = vdwg.mxu0
        %v5074 = vadd.f32 %v4989, %v5071
        %s5075 = scalar_lea.vmem %s5, 80
        %v5076 = vld [vmem:[%s5075] sm:$0xff]
        %v5077 = vld [vmem:[%s5075 + $0x8] sm:$0xff]
        %v5078 = vld [vmem:[%s5075 + $0x10] sm:$0xff]
        %v5079 = vld [vmem:[%s5075 + $0x18] sm:$0xff]
        %v5080 = vld [vmem:[%s5075 + $0x20] sm:$0xff]
        %v5081 = vld [vmem:[%s5075 + $0x28] sm:$0xff]
        %v5082 = vld [vmem:[%s5075 + $0x30] sm:$0xff]
        %v5083 = vld [vmem:[%s5075 + $0x38] sm:$0xff]
        %v5084 = vld [vmem:[%s5075 + $0x40] sm:$0xff]
        %v5085 = vld [vmem:[%s5075 + $0x48] sm:$0xff]
        %v5086 = vrot.slane %v4988, 1
        %v5087 = vsel %vm5000, %v5086, 0
        %5089 = vmatprep.subr.mxu0 0.0
        %5090 = vmatpush1.msra.mxu0 %v5076
        %5091 = vmatprep.subr.mxu0 0.0
        %5092 = vmatpush1.msra.mxu0 %v5077
        %5093 = vmatprep.subr.mxu0 0.0
        %5094 = vmatpush1.msra.mxu0 %v5078
        %5095 = vmatprep.subr.mxu0 0.0
        %5096 = vmatpush1.msra.mxu0 %v5079
        %5097 = vmatprep.subr.mxu0 0.0
        %5098 = vmatpush1.msra.mxu0 %v5080
        %5099 = vmatprep.subr.mxu0 0.0
        %5100 = vmatpush1.msra.mxu0 %v5081
        %5101 = vmatprep.subr.mxu0 0.0
        %5102 = vmatpush1.msra.mxu0 %v5082
        %5103 = vmatprep.subr.mxu0 0.0
        %5104 = vmatpush1.msra.mxu0 %v5083
        %5105 = vmatprep.subr.mxu0 0.0
        %5106 = vmatpush1.msra.mxu0 %v5084
        %5107 = vmatprep.subr.mxu0 0.0
        %5108 = vmatpush1.msra.mxu0 %v5085
        %5109 = vmatprep.subr.mxu0 0.0
        %5110 = vmatpush1.msra.mxu0 0.0
        %5111 = vmatprep.subr.mxu0 0.0
        %5112 = vmatpush1.msra.mxu0 0.0
        %5113 = vmatprep.subr.mxu0 0.0
        %5114 = vmatpush1.msra.mxu0 0.0
        %5115 = vmatprep.subr.mxu0 0.0
        %5116 = vmatpush1.msra.mxu0 0.0
        %5117 = vmatprep.subr.mxu0 0.0
        %5118 = vmatpush1.msra.mxu0 0.0
        %5119 = vmatprep.subr.mxu0 0.0
        %5120 = vmatpush1.msra.mxu0 0.0
        %5121 = vmatprep.subr.mxu0 0.0
        %5122 = vmatpush1.msra.mxu0 0.0
        %5123 = vmatprep.subr.mxu0 0.0
        %5124 = vmatpush1.msra.mxu0 0.0
        %5125 = vmatprep.subr.mxu0 0.0
        %5126 = vmatpush1.msra.mxu0 0.0
        %5127 = vmatprep.subr.mxu0 0.0
        %5128 = vmatpush1.msra.mxu0 0.0
        %5129 = vmatprep.subr.mxu0 0.0
        %5130 = vmatpush1.msra.mxu0 0.0
        %5131 = vmatprep.subr.mxu0 0.0
        %5132 = vmatpush1.msra.mxu0 0.0
        %5133 = vmatprep.subr.mxu0 0.0
        %5134 = vmatpush1.msra.mxu0 0.0
        %5135 = vmatprep.subr.mxu0 0.0
        %5136 = vmatpush1.msra.mxu0 0.0
        %5137 = vmatprep.subr.mxu0 0.0
        %5138 = vmatpush1.msra.mxu0 0.0
        %5139 = vmatprep.subr.mxu0 0.0
        %5140 = vmatpush1.msra.mxu0 0.0
        %5141 = vmatprep.subr.mxu0 0.0
        %5142 = vmatpush1.msra.mxu0 0.0
        %5143 = vmatprep.subr.mxu0 0.0
        %5144 = vmatpush1.msra.mxu0 0.0
        %5145 = vmatprep.subr.mxu0 0.0
        %5146 = vmatpush1.msra.mxu0 0.0
        %5147 = vmatprep.subr.mxu0 0.0
        %5148 = vmatpush1.msra.mxu0 0.0
        %5149 = vmatprep.subr.mxu0 0.0
        %5150 = vmatpush1.msra.mxu0 0.0
        %5151 = vmatprep.subr.mxu0 0.0
        %5152 = vmatpush1.msra.mxu0 0.0
        %5153 = vmatprep.mubr.f32.mxu0 0.0
        %5154 = vmatmul.mubr.f32.gmra.mrb[0].mxu0 %v5087
        %v5155 = vpop.f32.mrb[0].mxu0
        %v5156 = vadd.f32 0.0, %v5155
        %v5157 = vpop.f32.mrb[0].mxu0
        %5158 = vdwg.mxu0
        %v5159 = vadd.f32 %v5074, %v5156
        %s5160 = scalar_lea.vmem %s5, 160
        %v5161 = vld [vmem:[%s5160] sm:$0xff]
        %v5162 = vld [vmem:[%s5160 + $0x8] sm:$0xff]
        %v5163 = vld [vmem:[%s5160 + $0x10] sm:$0xff]
        %v5164 = vld [vmem:[%s5160 + $0x18] sm:$0xff]
        %v5165 = vld [vmem:[%s5160 + $0x20] sm:$0xff]
        %v5166 = vld [vmem:[%s5160 + $0x28] sm:$0xff]
        %v5167 = vld [vmem:[%s5160 + $0x30] sm:$0xff]
        %v5168 = vld [vmem:[%s5160 + $0x38] sm:$0xff]
        %v5169 = vld [vmem:[%s5160 + $0x40] sm:$0xff]
        %v5170 = vld [vmem:[%s5160 + $0x48] sm:$0xff]
        %v5171 = vrot.slane %v4988, 2
        %v5172 = vsel %vm5000, %v5171, 0
        %5174 = vmatprep.subr.mxu0 0.0
        %5175 = vmatpush1.msra.mxu0 %v5161
        %5176 = vmatprep.subr.mxu0 0.0
        %5177 = vmatpush1.msra.mxu0 %v5162
        %5178 = vmatprep.subr.mxu0 0.0
        %5179 = vmatpush1.msra.mxu0 %v5163
        %5180 = vmatprep.subr.mxu0 0.0
        %5181 = vmatpush1.msra.mxu0 %v5164
        %5182 = vmatprep.subr.mxu0 0.0
        %5183 = vmatpush1.msra.mxu0 %v5165
        %5184 = vmatprep.subr.mxu0 0.0
        %5185 = vmatpush1.msra.mxu0 %v5166
        %5186 = vmatprep.subr.mxu0 0.0
        %5187 = vmatpush1.msra.mxu0 %v5167
        %5188 = vmatprep.subr.mxu0 0.0
        %5189 = vmatpush1.msra.mxu0 %v5168
        %5190 = vmatprep.subr.mxu0 0.0
        %5191 = vmatpush1.msra.mxu0 %v5169
        %5192 = vmatprep.subr.mxu0 0.0
        %5193 = vmatpush1.msra.mxu0 %v5170
        %5194 = vmatprep.subr.mxu0 0.0
        %5195 = vmatpush1.msra.mxu0 0.0
        %5196 = vmatprep.subr.mxu0 0.0
        %5197 = vmatpush1.msra.mxu0 0.0
        %5198 = vmatprep.subr.mxu0 0.0
        %5199 = vmatpush1.msra.mxu0 0.0
        %5200 = vmatprep.subr.mxu0 0.0
        %5201 = vmatpush1.msra.mxu0 0.0
        %5202 = vmatprep.subr.mxu0 0.0
        %5203 = vmatpush1.msra.mxu0 0.0
        %5204 = vmatprep.subr.mxu0 0.0
        %5205 = vmatpush1.msra.mxu0 0.0
        %5206 = vmatprep.subr.mxu0 0.0
        %5207 = vmatpush1.msra.mxu0 0.0
        %5208 = vmatprep.subr.mxu0 0.0
        %5209 = vmatpush1.msra.mxu0 0.0
        %5210 = vmatprep.subr.mxu0 0.0
        %5211 = vmatpush1.msra.mxu0 0.0
        %5212 = vmatprep.subr.mxu0 0.0
        %5213 = vmatpush1.msra.mxu0 0.0
        %5214 = vmatprep.subr.mxu0 0.0
        %5215 = vmatpush1.msra.mxu0 0.0
        %5216 = vmatprep.subr.mxu0 0.0
        %5217 = vmatpush1.msra.mxu0 0.0
        %5218 = vmatprep.subr.mxu0 0.0
        %5219 = vmatpush1.msra.mxu0 0.0
        %5220 = vmatprep.subr.mxu0 0.0
        %5221 = vmatpush1.msra.mxu0 0.0
        %5222 = vmatprep.subr.mxu0 0.0
        %5223 = vmatpush1.msra.mxu0 0.0
        %5224 = vmatprep.subr.mxu0 0.0
        %5225 = vmatpush1.msra.mxu0 0.0
        %5226 = vmatprep.subr.mxu0 0.0
        %5227 = vmatpush1.msra.mxu0 0.0
        %5228 = vmatprep.subr.mxu0 0.0
        %5229 = vmatpush1.msra.mxu0 0.0
        %5230 = vmatprep.subr.mxu0 0.0
        %5231 = vmatpush1.msra.mxu0 0.0
        %5232 = vmatprep.subr.mxu0 0.0
        %5233 = vmatpush1.msra.mxu0 0.0
        %5234 = vmatprep.subr.mxu0 0.0
        %5235 = vmatpush1.msra.mxu0 0.0
        %5236 = vmatprep.subr.mxu0 0.0
        %5237 = vmatpush1.msra.mxu0 0.0
        %5238 = vmatprep.mubr.f32.mxu0 0.0
        %5239 = vmatmul.mubr.f32.gmra.mrb[0].mxu0 %v5172
        %v5240 = vpop.f32.mrb[0].mxu0
        %v5241 = vadd.f32 0.0, %v5240
        %v5242 = vpop.f32.mrb[0].mxu0
        %5243 = vdwg.mxu0
        %v5244 = vadd.f32 %v5159, %v5241
        %s5245 = scalar_lea.vmem %s5, 240
        %v5246 = vld [vmem:[%s5245] sm:$0xff]
        %v5247 = vld [vmem:[%s5245 + $0x8] sm:$0xff]
        %v5248 = vld [vmem:[%s5245 + $0x10] sm:$0xff]
        %v5249 = vld [vmem:[%s5245 + $0x18] sm:$0xff]
        %v5250 = vld [vmem:[%s5245 + $0x20] sm:$0xff]
        %v5251 = vld [vmem:[%s5245 + $0x28] sm:$0xff]
        %v5252 = vld [vmem:[%s5245 + $0x30] sm:$0xff]
        %v5253 = vld [vmem:[%s5245 + $0x38] sm:$0xff]
        %v5254 = vld [vmem:[%s5245 + $0x40] sm:$0xff]
        %v5255 = vld [vmem:[%s5245 + $0x48] sm:$0xff]
        %v5256 = vrot.slane %v4988, 3
        %v5257 = vsel %vm5000, %v5256, 0
        %5259 = vmatprep.subr.mxu0 0.0
        %5260 = vmatpush1.msra.mxu0 %v5246
        %5261 = vmatprep.subr.mxu0 0.0
        %5262 = vmatpush1.msra.mxu0 %v5247
        %5263 = vmatprep.subr.mxu0 0.0
        %5264 = vmatpush1.msra.mxu0 %v5248
        %5265 = vmatprep.subr.mxu0 0.0
        %5266 = vmatpush1.msra.mxu0 %v5249
        %5267 = vmatprep.subr.mxu0 0.0
        %5268 = vmatpush1.msra.mxu0 %v5250
        %5269 = vmatprep.subr.mxu0 0.0
        %5270 = vmatpush1.msra.mxu0 %v5251
        %5271 = vmatprep.subr.mxu0 0.0
        %5272 = vmatpush1.msra.mxu0 %v5252
        %5273 = vmatprep.subr.mxu0 0.0
        %5274 = vmatpush1.msra.mxu0 %v5253
        %5275 = vmatprep.subr.mxu0 0.0
        %5276 = vmatpush1.msra.mxu0 %v5254
        %5277 = vmatprep.subr.mxu0 0.0
        %5278 = vmatpush1.msra.mxu0 %v5255
        %5279 = vmatprep.subr.mxu0 0.0
        %5280 = vmatpush1.msra.mxu0 0.0
        %5281 = vmatprep.subr.mxu0 0.0
        %5282 = vmatpush1.msra.mxu0 0.0
        %5283 = vmatprep.subr.mxu0 0.0
        %5284 = vmatpush1.msra.mxu0 0.0
        %5285 = vmatprep.subr.mxu0 0.0
        %5286 = vmatpush1.msra.mxu0 0.0
        %5287 = vmatprep.subr.mxu0 0.0
        %5288 = vmatpush1.msra.mxu0 0.0
        %5289 = vmatprep.subr.mxu0 0.0
        %5290 = vmatpush1.msra.mxu0 0.0
        %5291 = vmatprep.subr.mxu0 0.0
        %5292 = vmatpush1.msra.mxu0 0.0
        %5293 = vmatprep.subr.mxu0 0.0
        %5294 = vmatpush1.msra.mxu0 0.0
        %5295 = vmatprep.subr.mxu0 0.0
        %5296 = vmatpush1.msra.mxu0 0.0
        %5297 = vmatprep.subr.mxu0 0.0
        %5298 = vmatpush1.msra.mxu0 0.0
        %5299 = vmatprep.subr.mxu0 0.0
        %5300 = vmatpush1.msra.mxu0 0.0
        %5301 = vmatprep.subr.mxu0 0.0
        %5302 = vmatpush1.msra.mxu0 0.0
        %5303 = vmatprep.subr.mxu0 0.0
        %5304 = vmatpush1.msra.mxu0 0.0
        %5305 = vmatprep.subr.mxu0 0.0
        %5306 = vmatpush1.msra.mxu0 0.0
        %5307 = vmatprep.subr.mxu0 0.0
        %5308 = vmatpush1.msra.mxu0 0.0
        %5309 = vmatprep.subr.mxu0 0.0
        %5310 = vmatpush1.msra.mxu0 0.0
        %5311 = vmatprep.subr.mxu0 0.0
        %5312 = vmatpush1.msra.mxu0 0.0
        %5313 = vmatprep.subr.mxu0 0.0
        %5314 = vmatpush1.msra.mxu0 0.0
        %5315 = vmatprep.subr.mxu0 0.0
        %5316 = vmatpush1.msra.mxu0 0.0
        %5317 = vmatprep.subr.mxu0 0.0
        %5318 = vmatpush1.msra.mxu0 0.0
        %5319 = vmatprep.subr.mxu0 0.0
        %5320 = vmatpush1.msra.mxu0 0.0
        %5321 = vmatprep.subr.mxu0 0.0
        %5322 = vmatpush1.msra.mxu0 0.0
        %5323 = vmatprep.mubr.f32.mxu0 0.0
        %5324 = vmatmul.mubr.f32.gmra.mrb[0].mxu0 %v5257
        %v5325 = vpop.f32.mrb[0].mxu0
        %v5326 = vadd.f32 0.0, %v5325
        %v5327 = vpop.f32.mrb[0].mxu0
        %5328 = vdwg.mxu0
        %v5329 = vadd.f32 %v5244, %v5326
        %s5330 = scalar_lea.vmem %s5, 320
        %v5331 = vld [vmem:[%s5330] sm:$0xff]
        %v5332 = vld [vmem:[%s5330 + $0x8] sm:$0xff]
        %v5333 = vld [vmem:[%s5330 + $0x10] sm:$0xff]
        %v5334 = vld [vmem:[%s5330 + $0x18] sm:$0xff]
        %v5335 = vld [vmem:[%s5330 + $0x20] sm:$0xff]
        %v5336 = vld [vmem:[%s5330 + $0x28] sm:$0xff]
        %v5337 = vld [vmem:[%s5330 + $0x30] sm:$0xff]
        %v5338 = vld [vmem:[%s5330 + $0x38] sm:$0xff]
        %v5339 = vld [vmem:[%s5330 + $0x40] sm:$0xff]
        %v5340 = vld [vmem:[%s5330 + $0x48] sm:$0xff]
        %v5341 = vrot.slane %v4988, 4
        %v5342 = vsel %vm5000, %v5341, 0
        %5344 = vmatprep.subr.mxu0 0.0
        %5345 = vmatpush1.msra.mxu0 %v5331
        %5346 = vmatprep.subr.mxu0 0.0
        %5347 = vmatpush1.msra.mxu0 %v5332
        %5348 = vmatprep.subr.mxu0 0.0
        %5349 = vmatpush1.msra.mxu0 %v5333
        %5350 = vmatprep.subr.mxu0 0.0
        %5351 = vmatpush1.msra.mxu0 %v5334
        %5352 = vmatprep.subr.mxu0 0.0
        %5353 = vmatpush1.msra.mxu0 %v5335
        %5354 = vmatprep.subr.mxu0 0.0
        %5355 = vmatpush1.msra.mxu0 %v5336
        %5356 = vmatprep.subr.mxu0 0.0
        %5357 = vmatpush1.msra.mxu0 %v5337
        %5358 = vmatprep.subr.mxu0 0.0
        %5359 = vmatpush1.msra.mxu0 %v5338
        %5360 = vmatprep.subr.mxu0 0.0
        %5361 = vmatpush1.msra.mxu0 %v5339
        %5362 = vmatprep.subr.mxu0 0.0
        %5363 = vmatpush1.msra.mxu0 %v5340
        %5364 = vmatprep.subr.mxu0 0.0
        %5365 = vmatpush1.msra.mxu0 0.0
        %5366 = vmatprep.subr.mxu0 0.0
        %5367 = vmatpush1.msra.mxu0 0.0
        %5368 = vmatprep.subr.mxu0 0.0
        %5369 = vmatpush1.msra.mxu0 0.0
        %5370 = vmatprep.subr.mxu0 0.0
        %5371 = vmatpush1.msra.mxu0 0.0
        %5372 = vmatprep.subr.mxu0 0.0
        %5373 = vmatpush1.msra.mxu0 0.0
        %5374 = vmatprep.subr.mxu0 0.0
        %5375 = vmatpush1.msra.mxu0 0.0
        %5376 = vmatprep.subr.mxu0 0.0
        %5377 = vmatpush1.msra.mxu0 0.0
        %5378 = vmatprep.subr.mxu0 0.0
        %5379 = vmatpush1.msra.mxu0 0.0
        %5380 = vmatprep.subr.mxu0 0.0
        %5381 = vmatpush1.msra.mxu0 0.0
        %5382 = vmatprep.subr.mxu0 0.0
        %5383 = vmatpush1.msra.mxu0 0.0
        %5384 = vmatprep.subr.mxu0 0.0
        %5385 = vmatpush1.msra.mxu0 0.0
        %5386 = vmatprep.subr.mxu0 0.0
        %5387 = vmatpush1.msra.mxu0 0.0
        %5388 = vmatprep.subr.mxu0 0.0
        %5389 = vmatpush1.msra.mxu0 0.0
        %5390 = vmatprep.subr.mxu0 0.0
        %5391 = vmatpush1.msra.mxu0 0.0
        %5392 = vmatprep.subr.mxu0 0.0
        %5393 = vmatpush1.msra.mxu0 0.0
        %5394 = vmatprep.subr.mxu0 0.0
        %5395 = vmatpush1.msra.mxu0 0.0
        %5396 = vmatprep.subr.mxu0 0.0
        %5397 = vmatpush1.msra.mxu0 0.0
        %5398 = vmatprep.subr.mxu0 0.0
        %5399 = vmatpush1.msra.mxu0 0.0
        %5400 = vmatprep.subr.mxu0 0.0
        %5401 = vmatpush1.msra.mxu0 0.0
        %5402 = vmatprep.subr.mxu0 0.0
        %5403 = vmatpush1.msra.mxu0 0.0
        %5404 = vmatprep.subr.mxu0 0.0
        %5405 = vmatpush1.msra.mxu0 0.0
        %5406 = vmatprep.subr.mxu0 0.0
        %5407 = vmatpush1.msra.mxu0 0.0
        %5408 = vmatprep.mubr.f32.mxu0 0.0
        %5409 = vmatmul.mubr.f32.gmra.mrb[0].mxu0 %v5342
        %v5410 = vpop.f32.mrb[0].mxu0
        %v5411 = vadd.f32 0.0, %v5410
        %v5412 = vpop.f32.mrb[0].mxu0
        %5413 = vdwg.mxu0
        %v5414 = vadd.f32 %v5329, %v5411
        %v5415 = vmax.f32 %v5414, 0.0
        %v5416 = vld [vmem:[%s7] sm:$0xff]
        %v5417 = vld [vmem:[%s7 + $0x8] sm:$0xff]
        %v5418 = vld [vmem:[%s7 + $0x10] sm:$0xff]
        %v5419 = vld [vmem:[%s7 + $0x18] sm:$0xff]
        %v5420 = vld [vmem:[%s7 + $0x20] sm:$0xff]
        %v5421 = vld [vmem:[%s7 + $0x28] sm:$0xff]
        %v5422 = vld [vmem:[%s7 + $0x30] sm:$0xff]
        %v5423 = vld [vmem:[%s7 + $0x38] sm:$0xff]
        %v5424 = vld [vmem:[%s7 + $0x40] sm:$0xff]
        %v5425 = vld [vmem:[%s7 + $0x48] sm:$0xff]
        %v5426 = vld [vmem:[%s7 + $0x50] sm:$0xff]
        %v5427 = vld [vmem:[%s7 + $0x58] sm:$0xff]
        %v5428 = vld [vmem:[%s7 + $0x60] sm:$0xff]
        %v5429 = vld [vmem:[%s7 + $0x68] sm:$0xff]
        %v5430 = vld [vmem:[%s7 + $0x70] sm:$0xff]
        %v5431 = vld [vmem:[%s8] sm:$0x1]
        %vm5432 = vcmask 982016
        %v5434 = vsel %vm5432, %v5415, 0
        %5436 = vmatprep.subr.mxu0 0.0
        %5437 = vmatpush1.msra.mxu0 %v5416
        %5438 = vmatprep.subr.mxu0 0.0
        %5439 = vmatpush1.msra.mxu0 %v5417
        %5440 = vmatprep.subr.mxu0 0.0
        %5441 = vmatpush1.msra.mxu0 %v5418
        %5442 = vmatprep.subr.mxu0 0.0
        %5443 = vmatpush1.msra.mxu0 %v5419
        %5444 = vmatprep.subr.mxu0 0.0
        %5445 = vmatpush1.msra.mxu0 %v5420
        %5446 = vmatprep.subr.mxu0 0.0
        %5447 = vmatpush1.msra.mxu0 %v5421
        %5448 = vmatprep.subr.mxu0 0.0
        %5449 = vmatpush1.msra.mxu0 %v5422
        %5450 = vmatprep.subr.mxu0 0.0
        %5451 = vmatpush1.msra.mxu0 %v5423
        %5452 = vmatprep.subr.mxu0 0.0
        %5453 = vmatpush1.msra.mxu0 %v5424
        %5454 = vmatprep.subr.mxu0 0.0
        %5455 = vmatpush1.msra.mxu0 %v5425
        %5456 = vmatprep.subr.mxu0 0.0
        %5457 = vmatpush1.msra.mxu0 %v5426
        %5458 = vmatprep.subr.mxu0 0.0
        %5459 = vmatpush1.msra.mxu0 %v5427
        %5460 = vmatprep.subr.mxu0 0.0
        %5461 = vmatpush1.msra.mxu0 %v5428
        %5462 = vmatprep.subr.mxu0 0.0
        %5463 = vmatpush1.msra.mxu0 %v5429
        %5464 = vmatprep.subr.mxu0 0.0
        %5465 = vmatpush1.msra.mxu0 %v5430
        %5466 = vmatprep.subr.mxu0 0.0
        %5467 = vmatpush1.msra.mxu0 0.0
        %5468 = vmatprep.subr.mxu0 0.0
        %5469 = vmatpush1.msra.mxu0 0.0
        %5470 = vmatprep.subr.mxu0 0.0
        %5471 = vmatpush1.msra.mxu0 0.0
        %5472 = vmatprep.subr.mxu0 0.0
        %5473 = vmatpush1.msra.mxu0 0.0
        %5474 = vmatprep.subr.mxu0 0.0
        %5475 = vmatpush1.msra.mxu0 0.0
        %5476 = vmatprep.subr.mxu0 0.0
        %5477 = vmatpush1.msra.mxu0 0.0
        %5478 = vmatprep.subr.mxu0 0.0
        %5479 = vmatpush1.msra.mxu0 0.0
        %5480 = vmatprep.subr.mxu0 0.0
        %5481 = vmatpush1.msra.mxu0 0.0
        %5482 = vmatprep.subr.mxu0 0.0
        %5483 = vmatpush1.msra.mxu0 0.0
        %5484 = vmatprep.subr.mxu0 0.0
        %5485 = vmatpush1.msra.mxu0 0.0
        %5486 = vmatprep.subr.mxu0 0.0
        %5487 = vmatpush1.msra.mxu0 0.0
        %5488 = vmatprep.subr.mxu0 0.0
        %5489 = vmatpush1.msra.mxu0 0.0
        %5490 = vmatprep.subr.mxu0 0.0
        %5491 = vmatpush1.msra.mxu0 0.0
        %5492 = vmatprep.subr.mxu0 0.0
        %5493 = vmatpush1.msra.mxu0 0.0
        %5494 = vmatprep.subr.mxu0 0.0
        %5495 = vmatpush1.msra.mxu0 0.0
        %5496 = vmatprep.subr.mxu0 0.0
        %5497 = vmatpush1.msra.mxu0 0.0
        %5498 = vmatprep.subr.mxu0 0.0
        %5499 = vmatpush1.msra.mxu0 0.0
        %5500 = vmatprep.mubr.f32.mxu0 0.0
        %5501 = vmatmul.mubr.f32.gmra.mrb[0].mxu0 %v5434
        %v5502 = vpop.f32.mrb[0].mxu0
        %v5503 = vadd.f32 %v5431, %v5502
        %v5504 = vpop.f32.mrb[0].mxu0
        %5505 = vdwg.mxu0
        %v5506 = vmax.f32 %v5503, 0.0
        %v5507 = vld [vmem:[%s9] sm:$0xff]
        %v5508 = vld [vmem:[%s9 + $0x8] sm:$0xff]
        %v5509 = vld [vmem:[%s9 + $0x10] sm:$0xff]
        %v5510 = vld [vmem:[%s9 + $0x18] sm:$0xff]
        %v5511 = vld [vmem:[%s9 + $0x20] sm:$0xff]
        %v5512 = vld [vmem:[%s9 + $0x28] sm:$0xff]
        %v5513 = vld [vmem:[%s9 + $0x30] sm:$0xff]
        %v5514 = vld [vmem:[%s9 + $0x38] sm:$0xff]
        %v5515 = vld [vmem:[%s9 + $0x40] sm:$0xff]
        %v5516 = vld [vmem:[%s9 + $0x48] sm:$0xff]
        %v5517 = vld [vmem:[%s9 + $0x50] sm:$0xf]
        %v5518 = vld [vmem:[%s10] sm:$0x1]
        %v5520 = vsel %vm3429, %v5506, 0
        %v5523 = vsel %vm3433, %v5517, 0
        %5525 = vmatprep.subr.mxu0 0.0
        %5526 = vmatpush1.msra.mxu0 %v5507
        %5527 = vmatprep.subr.mxu0 0.0
        %5528 = vmatpush1.msra.mxu0 %v5508
        %5529 = vmatprep.subr.mxu0 0.0
        %5530 = vmatpush1.msra.mxu0 %v5509
        %5531 = vmatprep.subr.mxu0 0.0
        %5532 = vmatpush1.msra.mxu0 %v5510
        %5533 = vmatprep.subr.mxu0 0.0
        %5534 = vmatpush1.msra.mxu0 %v5511
        %5535 = vmatprep.subr.mxu0 0.0
        %5536 = vmatpush1.msra.mxu0 %v5512
        %5537 = vmatprep.subr.mxu0 0.0
        %5538 = vmatpush1.msra.mxu0 %v5513
        %5539 = vmatprep.subr.mxu0 0.0
        %5540 = vmatpush1.msra.mxu0 %v5514
        %5541 = vmatprep.subr.mxu0 0.0
        %5542 = vmatpush1.msra.mxu0 %v5515
        %5543 = vmatprep.subr.mxu0 0.0
        %5544 = vmatpush1.msra.mxu0 %v5516
        %5545 = vmatprep.subr.mxu0 0.0
        %5546 = vmatpush1.msra.mxu0 %v5523
        %5547 = vmatprep.subr.mxu0 0.0
        %5548 = vmatpush1.msra.mxu0 0.0
        %5549 = vmatprep.subr.mxu0 0.0
        %5550 = vmatpush1.msra.mxu0 0.0
        %5551 = vmatprep.subr.mxu0 0.0
        %5552 = vmatpush1.msra.mxu0 0.0
        %5553 = vmatprep.subr.mxu0 0.0
        %5554 = vmatpush1.msra.mxu0 0.0
        %5555 = vmatprep.subr.mxu0 0.0
        %5556 = vmatpush1.msra.mxu0 0.0
        %5557 = vmatprep.subr.mxu0 0.0
        %5558 = vmatpush1.msra.mxu0 0.0
        %5559 = vmatprep.subr.mxu0 0.0
        %5560 = vmatpush1.msra.mxu0 0.0
        %5561 = vmatprep.subr.mxu0 0.0
        %5562 = vmatpush1.msra.mxu0 0.0
        %5563 = vmatprep.subr.mxu0 0.0
        %5564 = vmatpush1.msra.mxu0 0.0
        %5565 = vmatprep.subr.mxu0 0.0
        %5566 = vmatpush1.msra.mxu0 0.0
        %5567 = vmatprep.subr.mxu0 0.0
        %5568 = vmatpush1.msra.mxu0 0.0
        %5569 = vmatprep.subr.mxu0 0.0
        %5570 = vmatpush1.msra.mxu0 0.0
        %5571 = vmatprep.subr.mxu0 0.0
        %5572 = vmatpush1.msra.mxu0 0.0
        %5573 = vmatprep.subr.mxu0 0.0
        %5574 = vmatpush1.msra.mxu0 0.0
        %5575 = vmatprep.subr.mxu0 0.0
        %5576 = vmatpush1.msra.mxu0 0.0
        %5577 = vmatprep.subr.mxu0 0.0
        %5578 = vmatpush1.msra.mxu0 0.0
        %5579 = vmatprep.subr.mxu0 0.0
        %5580 = vmatpush1.msra.mxu0 0.0
        %5581 = vmatprep.subr.mxu0 0.0
        %5582 = vmatpush1.msra.mxu0 0.0
        %5583 = vmatprep.subr.mxu0 0.0
        %5584 = vmatpush1.msra.mxu0 0.0
        %5585 = vmatprep.subr.mxu0 0.0
        %5586 = vmatpush1.msra.mxu0 0.0
        %5587 = vmatprep.subr.mxu0 0.0
        %5588 = vmatpush1.msra.mxu0 0.0
        %5589 = vmatprep.mubr.f32.mxu0 0.0
        %5590 = vmatmul.mubr.f32.gmra.mrb[0].mxu0 %v5520
        %v5591 = vpop.f32.mrb[0].mxu0
        %v5592 = vadd.f32 %v5518, %v5591
        %v5593 = vpop.f32.mrb[0].mxu0
        %5594 = vdwg.mxu0
        %5595 = vst [vmem:[%s378] sm:$0x1] %v5592
        %s5596 = sand.u32 %s269, 1
        %s5597 = scalar_lea.sflag [#allocation3], %s5596
        %s5598 = sand.u32 %s269, 1
        %s5599 = scalar_lea.vmem [#allocation2], %s5598
        // Predicated region
        $region65: #{habs_cnn_forward.1} parent=63 // pred_check
          %p5600 = pneg %p279
        $region66: #{habs_cnn_forward.1} parent=63 // pred_check_branch
          %5602 = sbr.rel (%p5600) target = $region68
        $region67: #{habs_cnn_forward.1} parent=63 // pred_region
          %s5604 = ssub.s32 16, 16
          %5605 = vsyncadd %s5597, %s5604
          %s5606 = smul.addr %s25, 16
          %s5607 = scalar_lea.hbm %s11, %s5606
          %s5609 = sshll.u32 %s5599, 4
          %s5610 = int_to_ptr.vmem [resolvable:$true] %s5609
          %5612 = dma.vmem_to_hbm [thread:$0]  %s5610, 16, %s5607, %s5597
        $region68: #{habs_cnn_forward.1} parent=63 // pred_fallthru
          _
      $region64: #{habs_cnn_forward.1} parent=5 // pred_fallthru
        _
      %p5613 = scmp.le.s32.totalorder 2, %s20
      // Predicated region
      $region69: #{habs_cnn_forward.1} parent=5 // pred_check
        %p5614 = pneg %p5613
      $region70: #{habs_cnn_forward.1} parent=5 // pred_check_branch
        %5616 = sbr.rel (%p5614) target = $region72
      $region71: #{habs_cnn_forward.1} parent=5 // pred_region
        %s5617 = ssub.s32 %s20, 2
        // Predicated region
        $region73: #{habs_cnn_forward.1} parent=71 // pred_check
          %p5618 = pneg %p285
        $region74: #{habs_cnn_forward.1} parent=71 // pred_check_branch
          %5620 = sbr.rel (%p5618) target = $region76
        $region75: #{habs_cnn_forward.1} parent=71 // pred_region
          %s5621 = sand.u32 %s270, 1
          %s5622 = scalar_lea.sflag [#allocation3], %s5621
          %s5623 = sand.u32 %s270, 1
          %s5624 = scalar_lea.vmem [#allocation2], %s5623
          %5625 = dma.done %s5622, 16
        $region76: #{habs_cnn_forward.1} parent=71 // pred_fallthru
          _
      $region72: #{habs_cnn_forward.1} parent=5 // pred_fallthru
        _
    $region6: #{habs_cnn_forward.1} parent=1 // loop_footer
      %s24 = sadd.s32 1, %s20
    $region7: #{habs_cnn_forward.1} parent=1 // loop_footer_branch
      %19 = sbr.rel target = $region3
    $region8: #{habs_cnn_forward.1} parent=1 // loop_exit
      _
    %5626 = vsyncpa [#allocation3], 1
    %s5627 = scalar_lea.sflag [#allocation3], 1
    %5628 = vsyncpa %s5627, 1

</llo_original>
